<compile_context>
chip_gen: v5e
topology: v5e:2x2
jax: 0.10.0
libtpu: 0.0.40
codegen_flags: <defaults>
</compile_context>

<pallas_src>
import functools

import jax
import jax.numpy as jnp
from jax.experimental import pallas as pl
from jax.experimental.pallas import tpu as pltpu


def _round_up(x, m):
    return (x + m - 1) // m * m


# -------------------- conv (im2col matmul) + scale/shift (+ReLU) ------------
def _conv_mm_kernel(x_ref, w_ref, scale_ref, shift_ref, o_ref, *, apply_relu):
    y = jnp.dot(x_ref[...], w_ref[...], preferred_element_type=jnp.float32)
    y = y * scale_ref[...] + shift_ref[...]
    if apply_relu:
        y = jnp.maximum(y, 0.0)
    o_ref[...] = y


def conv2d_fused(x_nhwc, w2d, scale, shift, *, k, stride, padding, apply_relu,
                 tile_m=512):
    """Conv2d on NHWC input with fused per-channel scale/shift and optional ReLU.

    x_nhwc : (B, H, W, Cin_pad)      (padded channels are exactly zero)
    w2d    : (K*K*Cin_pad, Cout_pad) (kh, kw, cin) row order, zero-padded
    scale, shift : (Cout_pad,)
    Returns (B, OH, OW, Cout_pad) float32; padded output channels stay zero.
    """
    b, h, w, cin = x_nhwc.shape
    kk_cin, cout = w2d.shape
    assert kk_cin == k * k * cin
    oh = (h + 2 * padding - k) // stride + 1
    ow = (w + 2 * padding - k) // stride + 1

    xp = jnp.pad(x_nhwc, ((0, 0), (padding, padding), (padding, padding), (0, 0)))
    patches = []
    for kh in range(k):
        for kw in range(k):
            patches.append(
                xp[:, kh:kh + stride * oh:stride, kw:kw + stride * ow:stride, :])
    cols = jnp.concatenate(patches, axis=-1).reshape(b * oh * ow, kk_cin)

    m = b * oh * ow
    # Tile sized to fit v7x's 64 MiB VMEM comfortably in bf16 (double-buffered).
    tm = min(tile_m, _round_up(m, 8))
    m_pad = _round_up(m, tm)
    if m_pad != m:
        cols = jnp.pad(cols, ((0, m_pad - m), (0, 0)))
    cols = cols.astype(jnp.bfloat16)
    w2d = w2d.astype(jnp.bfloat16)

    out = pl.pallas_call(
        functools.partial(_conv_mm_kernel, apply_relu=apply_relu),
        grid=(m_pad // tm,),
        out_shape=jax.ShapeDtypeStruct((m_pad, cout), jnp.float32),
        in_specs=[
            pl.BlockSpec((tm, kk_cin), lambda i: (i, 0)),
            pl.BlockSpec((kk_cin, cout), lambda i: (0, 0)),
            pl.BlockSpec((1, cout), lambda i: (0, 0)),
            pl.BlockSpec((1, cout), lambda i: (0, 0)),
        ],
        out_specs=pl.BlockSpec((tm, cout), lambda i: (i, 0)),
        compiler_params=pltpu.CompilerParams(
            dimension_semantics=("parallel",),
            vmem_limit_bytes=32 * 1024 * 1024),
    )(cols, w2d, scale.reshape(1, cout), shift.reshape(1, cout))
    return out[:m].reshape(b, oh, ow, cout)


# -------------------- class caps: fused primary squash + dynamic routing ----
def _class_caps_kernel(u_ref, w_ref, m_ref, mt_ref, o_ref, *, n_iterations):
    eps = 1e-6
    u = u_ref[0]                                          # (D, N)
    d = u.shape[0]

    # Fused primary-capsule squash over the capsule dim D (lane-dense over N).
    sqr_u = jnp.sum(u * u, axis=0, keepdims=True)         # (1, N)
    u = u * (sqr_u * jax.lax.rsqrt(sqr_u + eps) / (1.0 + sqr_u))

    # u_hat[k, n] = sum_d W[d, k, n] * u[d, n]  (unrolled FMA over D)
    u_hat = w_ref[0] * u[0:1]
    for di in range(1, d):
        u_hat = u_hat + w_ref[di] * u[di:di + 1]          # (K, N)

    m = m_ref[...]                                        # (K, J) indicator
    mt = mt_ref[...]                                      # (J, K) indicator
    n_out = mt.shape[0]
    n = u_hat.shape[1]

    b = jnp.zeros((n_out, n), jnp.float32)                # routing logits (J, N)
    v = jnp.zeros((u_hat.shape[0], 1), jnp.float32)
    for r in range(n_iterations):
        # softmax over the output-capsule axis J; lane-dense over N
        e = jnp.exp(b - jnp.max(b, axis=0, keepdims=True))
        c = e / jnp.sum(e, axis=0, keepdims=True)                       # (J, N)
        c_k = jnp.dot(m, c, preferred_element_type=jnp.float32)        # (K, N)
        s = jnp.sum(c_k * u_hat, axis=1, keepdims=True)                 # (K, 1)
        # squash per output capsule (groups of out_dim rows of s)
        sqr = jnp.dot(mt, s * s, preferred_element_type=jnp.float32)    # (J, 1)
        factor = sqr * jax.lax.rsqrt(sqr + eps) / (1.0 + sqr)           # (J, 1)
        v = s * jnp.dot(m, factor, preferred_element_type=jnp.float32)  # (K, 1)
        if r < n_iterations - 1:
            b = b + jnp.dot(mt, v * u_hat, preferred_element_type=jnp.float32)
    o_ref[0] = v


def class_caps_pallas(u_t, w_kn, m, mt, *, n_iterations=3):
    # u_t: (B, D, N) unsquashed primary caps ; w_kn: (D, K, N) ; m: (K, J)
    bsz, d, n = u_t.shape
    _, k, _ = w_kn.shape
    j = mt.shape[0]
    out = pl.pallas_call(
        functools.partial(_class_caps_kernel, n_iterations=n_iterations),
        grid=(bsz,),
        out_shape=jax.ShapeDtypeStruct((bsz, k, 1), jnp.float32),
        in_specs=[
            pl.BlockSpec((1, d, n), lambda i: (i, 0, 0)),
            pl.BlockSpec((d, k, n), lambda i: (0, 0, 0)),
            pl.BlockSpec((k, j), lambda i: (0, 0)),
            pl.BlockSpec((j, k), lambda i: (0, 0)),
        ],
        out_specs=pl.BlockSpec((1, k, 1), lambda i: (i, 0, 0)),
        compiler_params=pltpu.CompilerParams(
            dimension_semantics=("parallel",),
            vmem_limit_bytes=32 * 1024 * 1024),
    )(u_t, w_kn, m, mt)
    return out.reshape(bsz, j, k // j)


# -------------------- parameter packing (host-side, once) -------------------
def pack_conv_params(weight, scale, shift, cin_pad, cout_pad):
    cout, cin, k, _ = weight.shape
    w = jnp.pad(weight, ((0, cout_pad - cout), (0, cin_pad - cin), (0, 0), (0, 0)))
    # row order (kh, kw, cin) to match the NHWC im2col patch concatenation
    w2d = jnp.transpose(w, (2, 3, 1, 0)).reshape(k * k * cin_pad, cout_pad)
    return (w2d,
            jnp.pad(scale, (0, cout_pad - cout)),
            jnp.pad(shift, (0, cout_pad - cout)))


def pack_class_caps_params(weights):
    # weights: (N, J, O, D)  ->  W_kn: (D, K=J*O, N) plus group indicators
    n, j, o, d = weights.shape
    k = j * o
    w_kn = jnp.transpose(weights, (3, 1, 2, 0)).reshape(d, k, n)
    grp = (jnp.arange(k)[:, None] // o) == jnp.arange(j)[None, :]
    m = grp.astype(jnp.float32)                           # (K, J)
    return w_kn, m, m.T


def pack_params(p, cfg):
    in_c = cfg["in_img_c"]
    pcd, pcc = cfg["prim_caps_dim"], cfg["prim_caps_channels"]
    prim_in = pcd * pcc
    couts = (prim_in // 4, prim_in // 2, prim_in, pcc * pcd)
    cout_pads = tuple(_round_up(c, 128) for c in couts)   # lane-dense stores
    cin_pads = (in_c,) + cout_pads[:3]
    scales = [p["scale1"], p["scale2"], p["scale3"],
              jnp.ones((couts[3],), jnp.float32)]
    shifts = [p["shift1"], p["shift2"], p["shift3"], p["b4"]]
    packed = {}
    for i in range(4):
        w2d, s, t = pack_conv_params(p[f"w{i+1}"], scales[i], shifts[i],
                                     cin_pads[i], cout_pads[i])
        packed[f"w{i+1}"], packed[f"scale{i+1}"], packed[f"shift{i+1}"] = w2d, s, t
    packed["w_caps"], packed["m"], packed["mt"] = pack_class_caps_params(p["w_caps"])
    return packed


# -------------------- full CapsuleNetwork forward ----------------------------
def capsule_network_forward(x_nchw, packed, cfg):
    ks, st, pd = cfg["kernel_size"], cfg["stride"], cfg["padding"]
    h = jnp.transpose(x_nchw, (0, 2, 3, 1))               # to NHWC once
    for i in range(3):
        h = conv2d_fused(h, packed[f"w{i+1}"], packed[f"scale{i+1}"],
                         packed[f"shift{i+1}"], k=ks[i], stride=st[i],
                         padding=pd[i], apply_relu=True)
    # primary capsule conv: bias, no BN, no ReLU
    caps = conv2d_fused(h, packed["w4"], packed["scale4"], packed["shift4"],
                        k=ks[3], stride=st[3], padding=pd[3], apply_relu=False)

    b = x_nchw.shape[0]
    pcd, pcc = cfg["prim_caps_dim"], cfg["prim_caps_channels"]
    c_prim = pcd * pcc
    oh, ow = caps.shape[1], caps.shape[2]
    n_prim_caps = oh * ow * pcc
    # reproduce torch's NCHW caps_output.view(B, n_prim_caps, -1) exactly
    caps_nchw = jnp.transpose(caps[..., :c_prim], (0, 3, 1, 2))
    u = caps_nchw.reshape(b, n_prim_caps, pcd)
    u_t = jnp.transpose(u, (0, 2, 1))                     # (B, D, N); squash fused
    pred = class_caps_pallas(u_t, packed["w_caps"], packed["m"], packed["mt"],
                             n_iterations=3)
    return None, pred, []


def init_params(key, cfg):
    in_c = cfg["in_img_c"]
    pcd, pcc = cfg["prim_caps_dim"], cfg["prim_caps_channels"]
    prim_in = pcd * pcc                   # 192
    c1, c2, c3 = prim_in // 4, prim_in // 2, prim_in
    ks = cfg["kernel_size"]

    keys = jax.random.split(key, 20)
    p = {}
    # conv weights (PyTorch layout: Cout, Cin, KH, KW)
    p["w1"] = 0.1 * jax.random.normal(keys[0], (c1, in_c, ks[0], ks[0]), jnp.float32)
    p["w2"] = 0.1 * jax.random.normal(keys[1], (c2, c1, ks[1], ks[1]), jnp.float32)
    p["w3"] = 0.1 * jax.random.normal(keys[2], (c3, c2, ks[2], ks[2]), jnp.float32)
    p["w4"] = 0.1 * jax.random.normal(keys[3], (pcc * pcd, c3, ks[3], ks[3]), jnp.float32)
    p["b4"] = 0.1 * jax.random.normal(keys[4], (pcc * pcd,), jnp.float32)

    # folded BatchNorm (eval mode): scale = gamma/sqrt(var+eps), shift = beta - mean*scale
    eps = 1e-5
    for i, (kbase, cout) in enumerate(zip(range(5, 20, 4), (c1, c2, c3)), start=1):
        gamma = 1.0 + 0.1 * jax.random.normal(keys[kbase], (cout,), jnp.float32)
        beta = 0.1 * jax.random.normal(keys[kbase + 1], (cout,), jnp.float32)
        mean = 0.1 * jax.random.normal(keys[kbase + 2], (cout,), jnp.float32)
        var = 0.5 + jax.random.uniform(keys[kbase + 3], (cout,), jnp.float32)
        scale = gamma / jnp.sqrt(var + eps)
        p[f"scale{i}"] = scale
        p[f"shift{i}"] = beta - mean * scale

    # class-capsule weights (n_in_caps, n_out_caps, out_caps_dim, in_caps_dim)
    total_caps = cfg["total_caps"]
    p["w_caps"] = 0.1 * jax.random.normal(
        keys[17], (total_caps, cfg["n_class"], 16, pcd), jnp.float32)
    return p


if __name__ == "__main__":
    key = jax.random.PRNGKey(0)
    k_x, k_p = jax.random.split(key)

    B, C, H, W = 2, 4, 16, 16
    n_class = 4
    cfg = {
        "in_img_c": C,
        "prim_caps_dim": 12,
        "prim_caps_channels": 16,
        "n_class": n_class,
        "kernel_size": [3, 3, 3, 3],
        "stride": [1, 2, 1, 2],
        "padding": [1, 1, 1, 0],
    }
    # 16x16 -> 16x16 -> 8x8 -> 8x8 -> 3x3 ; total_caps = 16 * 3 * 3 = 144
    cfg["total_caps"] = cfg["prim_caps_channels"] * 3 * 3

    x = jax.random.normal(k_x, (B, C, H, W), jnp.float32)
    params = init_params(k_p, cfg)
    packed = pack_params(params, cfg)

    fwd = jax.jit(functools.partial(capsule_network_forward, cfg=cfg))
    _, pred, fmaps = fwd(x, packed)
    pred = jax.block_until_ready(pred)
    assert pred.shape == (B, n_class, 16), pred.shape
    assert bool(jnp.all(jnp.isfinite(pred)))
    print("KERNEL_OK")
</pallas_src>

<mosaic_0001>
module attributes {stable_mosaic.version = 11 : i64} {
  func.func @_conv_mm_kernel(%arg0: i32, %arg1: memref<512x36xbf16, #tpu.memory_space<vmem>>, %arg2: memref<36x128xbf16, #tpu.memory_space<vmem>>, %arg3: memref<1x128xf32, #tpu.memory_space<vmem>>, %arg4: memref<1x128xf32, #tpu.memory_space<vmem>>, %arg5: memref<512x128xf32, #tpu.memory_space<vmem>>) attributes {dimension_semantics = [#tpu.dimension_semantics<parallel>], iteration_bounds = array<i64: 1>, scalar_prefetch = 0 : i64, scratch_operands = 0 : i64, tpu.core_type = #tpu.core_type<tc>, window_params = [{transform_indices = @transform_0, window_bounds = array<i64: 512, 36>}, {pipeline_mode = #tpu.pipeline_mode<synchronous>, transform_indices = @transform_1, window_bounds = array<i64: 36, 128>}, {pipeline_mode = #tpu.pipeline_mode<synchronous>, transform_indices = @transform_2, window_bounds = array<i64: 1, 128>}, {pipeline_mode = #tpu.pipeline_mode<synchronous>, transform_indices = @transform_3, window_bounds = array<i64: 1, 128>}, {transform_indices = @transform_4, window_bounds = array<i64: 512, 128>}]} {
    %c0 = arith.constant 0 : index
    %c0_0 = arith.constant 0 : index
    %0 = vector.load %arg1[%c0, %c0_0] : memref<512x36xbf16, #tpu.memory_space<vmem>>, vector<512x36xbf16>
    %c0_1 = arith.constant 0 : index
    %c0_2 = arith.constant 0 : index
    %1 = vector.load %arg2[%c0_1, %c0_2] : memref<36x128xbf16, #tpu.memory_space<vmem>>, vector<36x128xbf16>
    %cst = arith.constant dense<0.000000e+00> : vector<512x128xf32>
    %2 = tpu.matmul %0, %1, %cst {dimension_numbers = #tpu.dot_dimension_numbers<[1], [0], [0], [1], [0, 0, 1, 1], [], []>} : vector<512x36xbf16>, vector<36x128xbf16>, vector<512x128xf32> -> vector<512x128xf32>
    %c0_3 = arith.constant 0 : index
    %c0_4 = arith.constant 0 : index
    %3 = vector.load %arg3[%c0_3, %c0_4] : memref<1x128xf32, #tpu.memory_space<vmem>>, vector<1x128xf32>
    %4 = vector.broadcast %3 : vector<1x128xf32> to vector<512x128xf32>
    %5 = arith.mulf %2, %4 : vector<512x128xf32>
    %c0_5 = arith.constant 0 : index
    %c0_6 = arith.constant 0 : index
    %6 = vector.load %arg4[%c0_5, %c0_6] : memref<1x128xf32, #tpu.memory_space<vmem>>, vector<1x128xf32>
    %7 = vector.broadcast %6 : vector<1x128xf32> to vector<512x128xf32>
    %8 = arith.addf %5, %7 : vector<512x128xf32>
    %cst_7 = arith.constant 0.000000e+00 : f32
    %9 = vector.broadcast %cst_7 : f32 to vector<512x128xf32>
    %10 = arith.maximumf %8, %9 : vector<512x128xf32>
    %c0_8 = arith.constant 0 : index
    %c0_9 = arith.constant 0 : index
    %11 = vector.load %arg5[%c0_8, %c0_9] : memref<512x128xf32, #tpu.memory_space<vmem>>, vector<512x128xf32>
    tpu.vector_store %arg5[%c0_8, %c0_9], %10 {strides = array<i32>} : memref<512x128xf32, #tpu.memory_space<vmem>>, vector<512x128xf32>,
    return
  }
  func.func @transform_0(%arg0: i32) -> (i32, i32) {
    %c0_i32 = arith.constant 0 : i32
    %c0_i32_0 = arith.constant 0 : i32
    return %arg0, %c0_i32 : i32, i32
  }
  func.func @transform_1(%arg0: i32) -> (i32, i32) {
    %c0_i32 = arith.constant 0 : i32
    %c0_i32_0 = arith.constant 0 : i32
    %c0_i32_1 = arith.constant 0 : i32
    return %c0_i32, %c0_i32_0 : i32, i32
  }
  func.func @transform_2(%arg0: i32) -> (i32, i32) {
    %c0_i32 = arith.constant 0 : i32
    %c0_i32_0 = arith.constant 0 : i32
    %c0_i32_1 = arith.constant 0 : i32
    return %c0_i32, %c0_i32_0 : i32, i32
  }
  func.func @transform_3(%arg0: i32) -> (i32, i32) {
    %c0_i32 = arith.constant 0 : i32
    %c0_i32_0 = arith.constant 0 : i32
    %c0_i32_1 = arith.constant 0 : i32
    return %c0_i32, %c0_i32_0 : i32, i32
  }
  func.func @transform_4(%arg0: i32) -> (i32, i32) {
    %c0_i32 = arith.constant 0 : i32
    %c0_i32_0 = arith.constant 0 : i32
    return %arg0, %c0_i32 : i32, i32
  }
}

module attributes {stable_mosaic.version = 11 : i64} {
  func.func @_conv_mm_kernel(%arg0: i32, %arg1: memref<128x1152xbf16, #tpu.memory_space<vmem>>, %arg2: memref<1152x128xbf16, #tpu.memory_space<vmem>>, %arg3: memref<1x128xf32, #tpu.memory_space<vmem>>, %arg4: memref<1x128xf32, #tpu.memory_space<vmem>>, %arg5: memref<128x128xf32, #tpu.memory_space<vmem>>) attributes {dimension_semantics = [#tpu.dimension_semantics<parallel>], iteration_bounds = array<i64: 1>, scalar_prefetch = 0 : i64, scratch_operands = 0 : i64, tpu.core_type = #tpu.core_type<tc>, window_params = [{transform_indices = @transform_0, window_bounds = array<i64: 128, 1152>}, {pipeline_mode = #tpu.pipeline_mode<synchronous>, transform_indices = @transform_1, window_bounds = array<i64: 1152, 128>}, {pipeline_mode = #tpu.pipeline_mode<synchronous>, transform_indices = @transform_2, window_bounds = array<i64: 1, 128>}, {pipeline_mode = #tpu.pipeline_mode<synchronous>, transform_indices = @transform_3, window_bounds = array<i64: 1, 128>}, {transform_indices = @transform_4, window_bounds = array<i64: 128, 128>}]} {
    %c0 = arith.constant 0 : index
    %c0_0 = arith.constant 0 : index
    %0 = vector.load %arg1[%c0, %c0_0] : memref<128x1152xbf16, #tpu.memory_space<vmem>>, vector<128x1152xbf16>
    %c0_1 = arith.constant 0 : index
    %c0_2 = arith.constant 0 : index
    %1 = vector.load %arg2[%c0_1, %c0_2] : memref<1152x128xbf16, #tpu.memory_space<vmem>>, vector<1152x128xbf16>
    %cst = arith.constant dense<0.000000e+00> : vector<128x128xf32>
    %2 = tpu.matmul %0, %1, %cst {dimension_numbers = #tpu.dot_dimension_numbers<[1], [0], [0], [1], [0, 0, 1, 1], [], []>} : vector<128x1152xbf16>, vector<1152x128xbf16>, vector<128x128xf32> -> vector<128x128xf32>
    %c0_3 = arith.constant 0 : index
    %c0_4 = arith.constant 0 : index
    %3 = vector.load %arg3[%c0_3, %c0_4] : memref<1x128xf32, #tpu.memory_space<vmem>>, vector<1x128xf32>
    %4 = vector.broadcast %3 : vector<1x128xf32> to vector<128x128xf32>
    %5 = arith.mulf %2, %4 : vector<128x128xf32>
    %c0_5 = arith.constant 0 : index
    %c0_6 = arith.constant 0 : index
    %6 = vector.load %arg4[%c0_5, %c0_6] : memref<1x128xf32, #tpu.memory_space<vmem>>, vector<1x128xf32>
    %7 = vector.broadcast %6 : vector<1x128xf32> to vector<128x128xf32>
    %8 = arith.addf %5, %7 : vector<128x128xf32>
    %cst_7 = arith.constant 0.000000e+00 : f32
    %9 = vector.broadcast %cst_7 : f32 to vector<128x128xf32>
    %10 = arith.maximumf %8, %9 : vector<128x128xf32>
    %c0_8 = arith.constant 0 : index
    %c0_9 = arith.constant 0 : index
    %11 = vector.load %arg5[%c0_8, %c0_9] : memref<128x128xf32, #tpu.memory_space<vmem>>, vector<128x128xf32>
    tpu.vector_store %arg5[%c0_8, %c0_9], %10 {strides = array<i32>} : memref<128x128xf32, #tpu.memory_space<vmem>>, vector<128x128xf32>,
    return
  }
  func.func @transform_0(%arg0: i32) -> (i32, i32) {
    %c0_i32 = arith.constant 0 : i32
    %c0_i32_0 = arith.constant 0 : i32
    return %arg0, %c0_i32 : i32, i32
  }
  func.func @transform_1(%arg0: i32) -> (i32, i32) {
    %c0_i32 = arith.constant 0 : i32
    %c0_i32_0 = arith.constant 0 : i32
    %c0_i32_1 = arith.constant 0 : i32
    return %c0_i32, %c0_i32_0 : i32, i32
  }
  func.func @transform_2(%arg0: i32) -> (i32, i32) {
    %c0_i32 = arith.constant 0 : i32
    %c0_i32_0 = arith.constant 0 : i32
    %c0_i32_1 = arith.constant 0 : i32
    return %c0_i32, %c0_i32_0 : i32, i32
  }
  func.func @transform_3(%arg0: i32) -> (i32, i32) {
    %c0_i32 = arith.constant 0 : i32
    %c0_i32_0 = arith.constant 0 : i32
    %c0_i32_1 = arith.constant 0 : i32
    return %c0_i32, %c0_i32_0 : i32, i32
  }
  func.func @transform_4(%arg0: i32) -> (i32, i32) {
    %c0_i32 = arith.constant 0 : i32
    %c0_i32_0 = arith.constant 0 : i32
    return %arg0, %c0_i32 : i32, i32
  }
}

module attributes {stable_mosaic.version = 11 : i64} {
  func.func @_conv_mm_kernel(%arg0: i32, %arg1: memref<128x1152xbf16, #tpu.memory_space<vmem>>, %arg2: memref<1152x256xbf16, #tpu.memory_space<vmem>>, %arg3: memref<1x256xf32, #tpu.memory_space<vmem>>, %arg4: memref<1x256xf32, #tpu.memory_space<vmem>>, %arg5: memref<128x256xf32, #tpu.memory_space<vmem>>) attributes {dimension_semantics = [#tpu.dimension_semantics<parallel>], iteration_bounds = array<i64: 1>, scalar_prefetch = 0 : i64, scratch_operands = 0 : i64, tpu.core_type = #tpu.core_type<tc>, window_params = [{transform_indices = @transform_0, window_bounds = array<i64: 128, 1152>}, {pipeline_mode = #tpu.pipeline_mode<synchronous>, transform_indices = @transform_1, window_bounds = array<i64: 1152, 256>}, {pipeline_mode = #tpu.pipeline_mode<synchronous>, transform_indices = @transform_2, window_bounds = array<i64: 1, 256>}, {pipeline_mode = #tpu.pipeline_mode<synchronous>, transform_indices = @transform_3, window_bounds = array<i64: 1, 256>}, {transform_indices = @transform_4, window_bounds = array<i64: 128, 256>}]} {
    %c0 = arith.constant 0 : index
    %c0_0 = arith.constant 0 : index
    %0 = vector.load %arg1[%c0, %c0_0] : memref<128x1152xbf16, #tpu.memory_space<vmem>>, vector<128x1152xbf16>
    %c0_1 = arith.constant 0 : index
    %c0_2 = arith.constant 0 : index
    %1 = vector.load %arg2[%c0_1, %c0_2] : memref<1152x256xbf16, #tpu.memory_space<vmem>>, vector<1152x256xbf16>
    %cst = arith.constant dense<0.000000e+00> : vector<128x256xf32>
    %2 = tpu.matmul %0, %1, %cst {dimension_numbers = #tpu.dot_dimension_numbers<[1], [0], [0], [1], [0, 0, 1, 1], [], []>} : vector<128x1152xbf16>, vector<1152x256xbf16>, vector<128x256xf32> -> vector<128x256xf32>
    %c0_3 = arith.constant 0 : index
    %c0_4 = arith.constant 0 : index
    %3 = vector.load %arg3[%c0_3, %c0_4] : memref<1x256xf32, #tpu.memory_space<vmem>>, vector<1x256xf32>
    %4 = vector.broadcast %3 : vector<1x256xf32> to vector<128x256xf32>
    %5 = arith.mulf %2, %4 : vector<128x256xf32>
    %c0_5 = arith.constant 0 : index
    %c0_6 = arith.constant 0 : index
    %6 = vector.load %arg4[%c0_5, %c0_6] : memref<1x256xf32, #tpu.memory_space<vmem>>, vector<1x256xf32>
    %7 = vector.broadcast %6 : vector<1x256xf32> to vector<128x256xf32>
    %8 = arith.addf %5, %7 : vector<128x256xf32>
    %cst_7 = arith.constant 0.000000e+00 : f32
    %9 = vector.broadcast %cst_7 : f32 to vector<128x256xf32>
    %10 = arith.maximumf %8, %9 : vector<128x256xf32>
    %c0_8 = arith.constant 0 : index
    %c0_9 = arith.constant 0 : index
    %11 = vector.load %arg5[%c0_8, %c0_9] : memref<128x256xf32, #tpu.memory_space<vmem>>, vector<128x256xf32>
    tpu.vector_store %arg5[%c0_8, %c0_9], %10 {strides = array<i32>} : memref<128x256xf32, #tpu.memory_space<vmem>>, vector<128x256xf32>,
    return
  }
  func.func @transform_0(%arg0: i32) -> (i32, i32) {
    %c0_i32 = arith.constant 0 : i32
    %c0_i32_0 = arith.constant 0 : i32
    return %arg0, %c0_i32 : i32, i32
  }
  func.func @transform_1(%arg0: i32) -> (i32, i32) {
    %c0_i32 = arith.constant 0 : i32
    %c0_i32_0 = arith.constant 0 : i32
    %c0_i32_1 = arith.constant 0 : i32
    return %c0_i32, %c0_i32_0 : i32, i32
  }
  func.func @transform_2(%arg0: i32) -> (i32, i32) {
    %c0_i32 = arith.constant 0 : i32
    %c0_i32_0 = arith.constant 0 : i32
    %c0_i32_1 = arith.constant 0 : i32
    return %c0_i32, %c0_i32_0 : i32, i32
  }
  func.func @transform_3(%arg0: i32) -> (i32, i32) {
    %c0_i32 = arith.constant 0 : i32
    %c0_i32_0 = arith.constant 0 : i32
    %c0_i32_1 = arith.constant 0 : i32
    return %c0_i32, %c0_i32_0 : i32, i32
  }
  func.func @transform_4(%arg0: i32) -> (i32, i32) {
    %c0_i32 = arith.constant 0 : i32
    %c0_i32_0 = arith.constant 0 : i32
    return %arg0, %c0_i32 : i32, i32
  }
}

module attributes {stable_mosaic.version = 11 : i64} {
  func.func @_conv_mm_kernel(%arg0: i32, %arg1: memref<24x2304xbf16, #tpu.memory_space<vmem>>, %arg2: memref<2304x256xbf16, #tpu.memory_space<vmem>>, %arg3: memref<1x256xf32, #tpu.memory_space<vmem>>, %arg4: memref<1x256xf32, #tpu.memory_space<vmem>>, %arg5: memref<24x256xf32, #tpu.memory_space<vmem>>) attributes {dimension_semantics = [#tpu.dimension_semantics<parallel>], iteration_bounds = array<i64: 1>, scalar_prefetch = 0 : i64, scratch_operands = 0 : i64, tpu.core_type = #tpu.core_type<tc>, window_params = [{transform_indices = @transform_0, window_bounds = array<i64: 24, 2304>}, {pipeline_mode = #tpu.pipeline_mode<synchronous>, transform_indices = @transform_1, window_bounds = array<i64: 2304, 256>}, {pipeline_mode = #tpu.pipeline_mode<synchronous>, transform_indices = @transform_2, window_bounds = array<i64: 1, 256>}, {pipeline_mode = #tpu.pipeline_mode<synchronous>, transform_indices = @transform_3, window_bounds = array<i64: 1, 256>}, {transform_indices = @transform_4, window_bounds = array<i64: 24, 256>}]} {
    %c0 = arith.constant 0 : index
    %c0_0 = arith.constant 0 : index
    %0 = vector.load %arg1[%c0, %c0_0] : memref<24x2304xbf16, #tpu.memory_space<vmem>>, vector<24x2304xbf16>
    %c0_1 = arith.constant 0 : index
    %c0_2 = arith.constant 0 : index
    %1 = vector.load %arg2[%c0_1, %c0_2] : memref<2304x256xbf16, #tpu.memory_space<vmem>>, vector<2304x256xbf16>
    %cst = arith.constant dense<0.000000e+00> : vector<24x256xf32>
    %2 = tpu.matmul %0, %1, %cst {dimension_numbers = #tpu.dot_dimension_numbers<[1], [0], [0], [1], [0, 0, 1, 1], [], []>} : vector<24x2304xbf16>, vector<2304x256xbf16>, vector<24x256xf32> -> vector<24x256xf32>
    %c0_3 = arith.constant 0 : index
    %c0_4 = arith.constant 0 : index
    %3 = vector.load %arg3[%c0_3, %c0_4] : memref<1x256xf32, #tpu.memory_space<vmem>>, vector<1x256xf32>
    %4 = vector.broadcast %3 : vector<1x256xf32> to vector<24x256xf32>
    %5 = arith.mulf %2, %4 : vector<24x256xf32>
    %c0_5 = arith.constant 0 : index
    %c0_6 = arith.constant 0 : index
    %6 = vector.load %arg4[%c0_5, %c0_6] : memref<1x256xf32, #tpu.memory_space<vmem>>, vector<1x256xf32>
    %7 = vector.broadcast %6 : vector<1x256xf32> to vector<24x256xf32>
    %8 = arith.addf %5, %7 : vector<24x256xf32>
    %c0_7 = arith.constant 0 : index
    %c0_8 = arith.constant 0 : index
    %9 = vector.load %arg5[%c0_7, %c0_8] : memref<24x256xf32, #tpu.memory_space<vmem>>, vector<24x256xf32>
    tpu.vector_store %arg5[%c0_7, %c0_8], %8 {strides = array<i32>} : memref<24x256xf32, #tpu.memory_space<vmem>>, vector<24x256xf32>,
    return
  }
  func.func @transform_0(%arg0: i32) -> (i32, i32) {
    %c0_i32 = arith.constant 0 : i32
    %c0_i32_0 = arith.constant 0 : i32
    return %arg0, %c0_i32 : i32, i32
  }
  func.func @transform_1(%arg0: i32) -> (i32, i32) {
    %c0_i32 = arith.constant 0 : i32
    %c0_i32_0 = arith.constant 0 : i32
    %c0_i32_1 = arith.constant 0 : i32
    return %c0_i32, %c0_i32_0 : i32, i32
  }
  func.func @transform_2(%arg0: i32) -> (i32, i32) {
    %c0_i32 = arith.constant 0 : i32
    %c0_i32_0 = arith.constant 0 : i32
    %c0_i32_1 = arith.constant 0 : i32
    return %c0_i32, %c0_i32_0 : i32, i32
  }
  func.func @transform_3(%arg0: i32) -> (i32, i32) {
    %c0_i32 = arith.constant 0 : i32
    %c0_i32_0 = arith.constant 0 : i32
    %c0_i32_1 = arith.constant 0 : i32
    return %c0_i32, %c0_i32_0 : i32, i32
  }
  func.func @transform_4(%arg0: i32) -> (i32, i32) {
    %c0_i32 = arith.constant 0 : i32
    %c0_i32_0 = arith.constant 0 : i32
    return %arg0, %c0_i32 : i32, i32
  }
}

module attributes {stable_mosaic.version = 11 : i64} {
  func.func @_class_caps_kernel(%arg0: i32, %arg1: memref<1x12x144xf32, #tpu.memory_space<vmem>>, %arg2: memref<12x64x144xf32, #tpu.memory_space<vmem>>, %arg3: memref<64x4xf32, #tpu.memory_space<vmem>>, %arg4: memref<4x64xf32, #tpu.memory_space<vmem>>, %arg5: memref<1x64x1xf32, #tpu.memory_space<vmem>>) attributes {dimension_semantics = [#tpu.dimension_semantics<parallel>], iteration_bounds = array<i64: 2>, scalar_prefetch = 0 : i64, scratch_operands = 0 : i64, tpu.core_type = #tpu.core_type<tc>, window_params = [{transform_indices = @transform_0, window_bounds = array<i64: 1, 12, 144>}, {pipeline_mode = #tpu.pipeline_mode<synchronous>, transform_indices = @transform_1, window_bounds = array<i64: 12, 64, 144>}, {pipeline_mode = #tpu.pipeline_mode<synchronous>, transform_indices = @transform_2, window_bounds = array<i64: 64, 4>}, {pipeline_mode = #tpu.pipeline_mode<synchronous>, transform_indices = @transform_3, window_bounds = array<i64: 4, 64>}, {transform_indices = @transform_4, window_bounds = array<i64: 1, 64, 1>}]} {
    %c0 = arith.constant 0 : index
    %c0_0 = arith.constant 0 : index
    %c0_1 = arith.constant 0 : index
    %0 = vector.load %arg1[%c0, %c0_0, %c0_1] : memref<1x12x144xf32, #tpu.memory_space<vmem>>, vector<1x12x144xf32>
    %1 = vector.shape_cast %0 : vector<1x12x144xf32> to vector<12x144xf32>
    %2 = arith.mulf %1, %1 : vector<12x144xf32>
    %cst = arith.constant dense<0.000000e+00> : vector<144xf32>
    %3 = vector.multi_reduction <add>, %2, %cst [0] : vector<12x144xf32> to vector<144xf32>
    %4 = vector.shape_cast %3 : vector<144xf32> to vector<1x144xf32>
    %cst_2 = arith.constant 9.99999997E-7 : f32
    %5 = vector.broadcast %cst_2 : f32 to vector<1x144xf32>
    %6 = arith.addf %4, %5 : vector<1x144xf32>
    %7 = math.rsqrt %6 : vector<1x144xf32>
    %8 = arith.mulf %4, %7 : vector<1x144xf32>
    %cst_3 = arith.constant 1.000000e+00 : f32
    %9 = vector.broadcast %cst_3 : f32 to vector<1x144xf32>
    %10 = arith.addf %9, %4 : vector<1x144xf32>
    %11 = arith.divf %8, %10 : vector<1x144xf32>
    %12 = vector.broadcast %11 : vector<1x144xf32> to vector<12x144xf32>
    %13 = arith.mulf %1, %12 : vector<12x144xf32>
    %c0_4 = arith.constant 0 : index
    %c0_5 = arith.constant 0 : index
    %c0_6 = arith.constant 0 : index
    %14 = vector.load %arg2[%c0_4, %c0_5, %c0_6] : memref<12x64x144xf32, #tpu.memory_space<vmem>>, vector<1x64x144xf32>
    %15 = vector.shape_cast %14 : vector<1x64x144xf32> to vector<64x144xf32>
    %16 = vector.extract_strided_slice %13 {offsets = [0, 0], sizes = [1, 144], strides = [1, 1]} : vector<12x144xf32> to vector<1x144xf32>
    %17 = vector.broadcast %16 : vector<1x144xf32> to vector<64x144xf32>
    %18 = arith.mulf %15, %17 : vector<64x144xf32>
    %c1 = arith.constant 1 : index
    %c0_7 = arith.constant 0 : index
    %c0_8 = arith.constant 0 : index
    %19 = vector.load %arg2[%c1, %c0_7, %c0_8] : memref<12x64x144xf32, #tpu.memory_space<vmem>>, vector<1x64x144xf32>
    %20 = vector.shape_cast %19 : vector<1x64x144xf32> to vector<64x144xf32>
    %21 = vector.extract_strided_slice %13 {offsets = [1, 0], sizes = [1, 144], strides = [1, 1]} : vector<12x144xf32> to vector<1x144xf32>
    %22 = vector.broadcast %21 : vector<1x144xf32> to vector<64x144xf32>
    %23 = arith.mulf %20, %22 : vector<64x144xf32>
    %24 = arith.addf %18, %23 : vector<64x144xf32>
    %c2 = arith.constant 2 : index
    %c0_9 = arith.constant 0 : index
    %c0_10 = arith.constant 0 : index
    %25 = vector.load %arg2[%c2, %c0_9, %c0_10] : memref<12x64x144xf32, #tpu.memory_space<vmem>>, vector<1x64x144xf32>
    %26 = vector.shape_cast %25 : vector<1x64x144xf32> to vector<64x144xf32>
    %27 = vector.extract_strided_slice %13 {offsets = [2, 0], sizes = [1, 144], strides = [1, 1]} : vector<12x144xf32> to vector<1x144xf32>
    %28 = vector.broadcast %27 : vector<1x144xf32> to vector<64x144xf32>
    %29 = arith.mulf %26, %28 : vector<64x144xf32>
    %30 = arith.addf %24, %29 : vector<64x144xf32>
    %c3 = arith.constant 3 : index
    %c0_11 = arith.constant 0 : index
    %c0_12 = arith.constant 0 : index
    %31 = vector.load %arg2[%c3, %c0_11, %c0_12] : memref<12x64x144xf32, #tpu.memory_space<vmem>>, vector<1x64x144xf32>
    %32 = vector.shape_cast %31 : vector<1x64x144xf32> to vector<64x144xf32>
    %33 = vector.extract_strided_slice %13 {offsets = [3, 0], sizes = [1, 144], strides = [1, 1]} : vector<12x144xf32> to vector<1x144xf32>
    %34 = vector.broadcast %33 : vector<1x144xf32> to vector<64x144xf32>
    %35 = arith.mulf %32, %34 : vector<64x144xf32>
    %36 = arith.addf %30, %35 : vector<64x144xf32>
    %c4 = arith.constant 4 : index
    %c0_13 = arith.constant 0 : index
    %c0_14 = arith.constant 0 : index
    %37 = vector.load %arg2[%c4, %c0_13, %c0_14] : memref<12x64x144xf32, #tpu.memory_space<vmem>>, vector<1x64x144xf32>
    %38 = vector.shape_cast %37 : vector<1x64x144xf32> to vector<64x144xf32>
    %39 = vector.extract_strided_slice %13 {offsets = [4, 0], sizes = [1, 144], strides = [1, 1]} : vector<12x144xf32> to vector<1x144xf32>
    %40 = vector.broadcast %39 : vector<1x144xf32> to vector<64x144xf32>
    %41 = arith.mulf %38, %40 : vector<64x144xf32>
    %42 = arith.addf %36, %41 : vector<64x144xf32>
    %c5 = arith.constant 5 : index
    %c0_15 = arith.constant 0 : index
    %c0_16 = arith.constant 0 : index
    %43 = vector.load %arg2[%c5, %c0_15, %c0_16] : memref<12x64x144xf32, #tpu.memory_space<vmem>>, vector<1x64x144xf32>
    %44 = vector.shape_cast %43 : vector<1x64x144xf32> to vector<64x144xf32>
    %45 = vector.extract_strided_slice %13 {offsets = [5, 0], sizes = [1, 144], strides = [1, 1]} : vector<12x144xf32> to vector<1x144xf32>
    %46 = vector.broadcast %45 : vector<1x144xf32> to vector<64x144xf32>
    %47 = arith.mulf %44, %46 : vector<64x144xf32>
    %48 = arith.addf %42, %47 : vector<64x144xf32>
    %c6 = arith.constant 6 : index
    %c0_17 = arith.constant 0 : index
    %c0_18 = arith.constant 0 : index
    %49 = vector.load %arg2[%c6, %c0_17, %c0_18] : memref<12x64x144xf32, #tpu.memory_space<vmem>>, vector<1x64x144xf32>
    %50 = vector.shape_cast %49 : vector<1x64x144xf32> to vector<64x144xf32>
    %51 = vector.extract_strided_slice %13 {offsets = [6, 0], sizes = [1, 144], strides = [1, 1]} : vector<12x144xf32> to vector<1x144xf32>
    %52 = vector.broadcast %51 : vector<1x144xf32> to vector<64x144xf32>
    %53 = arith.mulf %50, %52 : vector<64x144xf32>
    %54 = arith.addf %48, %53 : vector<64x144xf32>
    %c7 = arith.constant 7 : index
    %c0_19 = arith.constant 0 : index
    %c0_20 = arith.constant 0 : index
    %55 = vector.load %arg2[%c7, %c0_19, %c0_20] : memref<12x64x144xf32, #tpu.memory_space<vmem>>, vector<1x64x144xf32>
    %56 = vector.shape_cast %55 : vector<1x64x144xf32> to vector<64x144xf32>
    %57 = vector.extract_strided_slice %13 {offsets = [7, 0], sizes = [1, 144], strides = [1, 1]} : vector<12x144xf32> to vector<1x144xf32>
    %58 = vector.broadcast %57 : vector<1x144xf32> to vector<64x144xf32>
    %59 = arith.mulf %56, %58 : vector<64x144xf32>
    %60 = arith.addf %54, %59 : vector<64x144xf32>
    %c8 = arith.constant 8 : index
    %c0_21 = arith.constant 0 : index
    %c0_22 = arith.constant 0 : index
    %61 = vector.load %arg2[%c8, %c0_21, %c0_22] : memref<12x64x144xf32, #tpu.memory_space<vmem>>, vector<1x64x144xf32>
    %62 = vector.shape_cast %61 : vector<1x64x144xf32> to vector<64x144xf32>
    %63 = vector.extract_strided_slice %13 {offsets = [8, 0], sizes = [1, 144], strides = [1, 1]} : vector<12x144xf32> to vector<1x144xf32>
    %64 = vector.broadcast %63 : vector<1x144xf32> to vector<64x144xf32>
    %65 = arith.mulf %62, %64 : vector<64x144xf32>
    %66 = arith.addf %60, %65 : vector<64x144xf32>
    %c9 = arith.constant 9 : index
    %c0_23 = arith.constant 0 : index
    %c0_24 = arith.constant 0 : index
    %67 = vector.load %arg2[%c9, %c0_23, %c0_24] : memref<12x64x144xf32, #tpu.memory_space<vmem>>, vector<1x64x144xf32>
    %68 = vector.shape_cast %67 : vector<1x64x144xf32> to vector<64x144xf32>
    %69 = vector.extract_strided_slice %13 {offsets = [9, 0], sizes = [1, 144], strides = [1, 1]} : vector<12x144xf32> to vector<1x144xf32>
    %70 = vector.broadcast %69 : vector<1x144xf32> to vector<64x144xf32>
    %71 = arith.mulf %68, %70 : vector<64x144xf32>
    %72 = arith.addf %66, %71 : vector<64x144xf32>
    %c10 = arith.constant 10 : index
    %c0_25 = arith.constant 0 : index
    %c0_26 = arith.constant 0 : index
    %73 = vector.load %arg2[%c10, %c0_25, %c0_26] : memref<12x64x144xf32, #tpu.memory_space<vmem>>, vector<1x64x144xf32>
    %74 = vector.shape_cast %73 : vector<1x64x144xf32> to vector<64x144xf32>
    %75 = vector.extract_strided_slice %13 {offsets = [10, 0], sizes = [1, 144], strides = [1, 1]} : vector<12x144xf32> to vector<1x144xf32>
    %76 = vector.broadcast %75 : vector<1x144xf32> to vector<64x144xf32>
    %77 = arith.mulf %74, %76 : vector<64x144xf32>
    %78 = arith.addf %72, %77 : vector<64x144xf32>
    %c11 = arith.constant 11 : index
    %c0_27 = arith.constant 0 : index
    %c0_28 = arith.constant 0 : index
    %79 = vector.load %arg2[%c11, %c0_27, %c0_28] : memref<12x64x144xf32, #tpu.memory_space<vmem>>, vector<1x64x144xf32>
    %80 = vector.shape_cast %79 : vector<1x64x144xf32> to vector<64x144xf32>
    %81 = vector.extract_strided_slice %13 {offsets = [11, 0], sizes = [1, 144], strides = [1, 1]} : vector<12x144xf32> to vector<1x144xf32>
    %82 = vector.broadcast %81 : vector<1x144xf32> to vector<64x144xf32>
    %83 = arith.mulf %80, %82 : vector<64x144xf32>
    %84 = arith.addf %78, %83 : vector<64x144xf32>
    %c0_29 = arith.constant 0 : index
    %c0_30 = arith.constant 0 : index
    %85 = vector.load %arg3[%c0_29, %c0_30] : memref<64x4xf32, #tpu.memory_space<vmem>>, vector<64x4xf32>
    %c0_31 = arith.constant 0 : index
    %c0_32 = arith.constant 0 : index
    %86 = vector.load %arg4[%c0_31, %c0_32] : memref<4x64xf32, #tpu.memory_space<vmem>>, vector<4x64xf32>
    %cst_33 = arith.constant 0.000000e+00 : f32
    %87 = vector.broadcast %cst_33 : f32 to vector<4x144xf32>
    %cst_34 = arith.constant dense<0xFF800000> : vector<144xf32>
    %88 = vector.multi_reduction <maximumf>, %87, %cst_34 [0] : vector<4x144xf32> to vector<144xf32>
    %89 = vector.shape_cast %88 : vector<144xf32> to vector<1x144xf32>
    %90 = vector.broadcast %89 : vector<1x144xf32> to vector<4x144xf32>
    %91 = arith.subf %87, %90 : vector<4x144xf32>
    %92 = math.exp %91 : vector<4x144xf32>
    %cst_35 = arith.constant dense<0.000000e+00> : vector<144xf32>
    %93 = vector.multi_reduction <add>, %92, %cst_35 [0] : vector<4x144xf32> to vector<144xf32>
    %94 = vector.shape_cast %93 : vector<144xf32> to vector<1x144xf32>
    %95 = vector.broadcast %94 : vector<1x144xf32> to vector<4x144xf32>
    %96 = arith.divf %92, %95 : vector<4x144xf32>
    %cst_36 = arith.constant dense<0.000000e+00> : vector<64x144xf32>
    %97 = tpu.matmul %85, %96, %cst_36 {dimension_numbers = #tpu.dot_dimension_numbers<[1], [0], [0], [1], [0, 0, 1, 1], [], []>} : vector<64x4xf32>, vector<4x144xf32>, vector<64x144xf32> -> vector<64x144xf32>
    %98 = arith.mulf %97, %84 : vector<64x144xf32>
    %cst_37 = arith.constant dense<0.000000e+00> : vector<64xf32>
    %99 = vector.multi_reduction <add>, %98, %cst_37 [1] : vector<64x144xf32> to vector<64xf32>
    %100 = vector.shape_cast %99 : vector<64xf32> to vector<64x1xf32>
    %101 = arith.mulf %100, %100 : vector<64x1xf32>
    %cst_38 = arith.constant dense<0.000000e+00> : vector<4x1xf32>
    %102 = tpu.matmul %86, %101, %cst_38 {dimension_numbers = #tpu.dot_dimension_numbers<[1], [0], [0], [1], [0, 0, 1, 1], [], []>} : vector<4x64xf32>, vector<64x1xf32>, vector<4x1xf32> -> vector<4x1xf32>
    %cst_39 = arith.constant 9.99999997E-7 : f32
    %103 = vector.broadcast %cst_39 : f32 to vector<4x1xf32>
    %104 = arith.addf %102, %103 : vector<4x1xf32>
    %105 = math.rsqrt %104 : vector<4x1xf32>
    %106 = arith.mulf %102, %105 : vector<4x1xf32>
    %cst_40 = arith.constant 1.000000e+00 : f32
    %107 = vector.broadcast %cst_40 : f32 to vector<4x1xf32>
    %108 = arith.addf %107, %102 : vector<4x1xf32>
    %109 = arith.divf %106, %108 : vector<4x1xf32>
    %cst_41 = arith.constant dense<0.000000e+00> : vector<64x1xf32>
    %110 = tpu.matmul %85, %109, %cst_41 {dimension_numbers = #tpu.dot_dimension_numbers<[1], [0], [0], [1], [0, 0, 1, 1], [], []>} : vector<64x4xf32>, vector<4x1xf32>, vector<64x1xf32> -> vector<64x1xf32>
    %111 = arith.mulf %100, %110 : vector<64x1xf32>
    %112 = vector.broadcast %111 : vector<64x1xf32> to vector<64x144xf32>
    %113 = arith.mulf %112, %84 : vector<64x144xf32>
    %cst_42 = arith.constant dense<0.000000e+00> : vector<4x144xf32>
    %114 = tpu.matmul %86, %113, %cst_42 {dimension_numbers = #tpu.dot_dimension_numbers<[1], [0], [0], [1], [0, 0, 1, 1], [], []>} : vector<4x64xf32>, vector<64x144xf32>, vector<4x144xf32> -> vector<4x144xf32>
    %115 = arith.addf %87, %114 : vector<4x144xf32>
    %cst_43 = arith.constant dense<0xFF800000> : vector<144xf32>
    %116 = vector.multi_reduction <maximumf>, %115, %cst_43 [0] : vector<4x144xf32> to vector<144xf32>
    %117 = vector.shape_cast %116 : vector<144xf32> to vector<1x144xf32>
    %118 = vector.broadcast %117 : vector<1x144xf32> to vector<4x144xf32>
    %119 = arith.subf %115, %118 : vector<4x144xf32>
    %120 = math.exp %119 : vector<4x144xf32>
    %cst_44 = arith.constant dense<0.000000e+00> : vector<144xf32>
    %121 = vector.multi_reduction <add>, %120, %cst_44 [0] : vector<4x144xf32> to vector<144xf32>
    %122 = vector.shape_cast %121 : vector<144xf32> to vector<1x144xf32>
    %123 = vector.broadcast %122 : vector<1x144xf32> to vector<4x144xf32>
    %124 = arith.divf %120, %123 : vector<4x144xf32>
    %cst_45 = arith.constant dense<0.000000e+00> : vector<64x144xf32>
    %125 = tpu.matmul %85, %124, %cst_45 {dimension_numbers = #tpu.dot_dimension_numbers<[1], [0], [0], [1], [0, 0, 1, 1], [], []>} : vector<64x4xf32>, vector<4x144xf32>, vector<64x144xf32> -> vector<64x144xf32>
    %126 = arith.mulf %125, %84 : vector<64x144xf32>
    %cst_46 = arith.constant dense<0.000000e+00> : vector<64xf32>
    %127 = vector.multi_reduction <add>, %126, %cst_46 [1] : vector<64x144xf32> to vector<64xf32>
    %128 = vector.shape_cast %127 : vector<64xf32> to vector<64x1xf32>
    %129 = arith.mulf %128, %128 : vector<64x1xf32>
    %cst_47 = arith.constant dense<0.000000e+00> : vector<4x1xf32>
    %130 = tpu.matmul %86, %129, %cst_47 {dimension_numbers = #tpu.dot_dimension_numbers<[1], [0], [0], [1], [0, 0, 1, 1], [], []>} : vector<4x64xf32>, vector<64x1xf32>, vector<4x1xf32> -> vector<4x1xf32>
    %cst_48 = arith.constant 9.99999997E-7 : f32
    %131 = vector.broadcast %cst_48 : f32 to vector<4x1xf32>
    %132 = arith.addf %130, %131 : vector<4x1xf32>
    %133 = math.rsqrt %132 : vector<4x1xf32>
    %134 = arith.mulf %130, %133 : vector<4x1xf32>
    %cst_49 = arith.constant 1.000000e+00 : f32
    %135 = vector.broadcast %cst_49 : f32 to vector<4x1xf32>
    %136 = arith.addf %135, %130 : vector<4x1xf32>
    %137 = arith.divf %134, %136 : vector<4x1xf32>
    %cst_50 = arith.constant dense<0.000000e+00> : vector<64x1xf32>
    %138 = tpu.matmul %85, %137, %cst_50 {dimension_numbers = #tpu.dot_dimension_numbers<[1], [0], [0], [1], [0, 0, 1, 1], [], []>} : vector<64x4xf32>, vector<4x1xf32>, vector<64x1xf32> -> vector<64x1xf32>
    %139 = arith.mulf %128, %138 : vector<64x1xf32>
    %140 = vector.broadcast %139 : vector<64x1xf32> to vector<64x144xf32>
    %141 = arith.mulf %140, %84 : vector<64x144xf32>
    %cst_51 = arith.constant dense<0.000000e+00> : vector<4x144xf32>
    %142 = tpu.matmul %86, %141, %cst_51 {dimension_numbers = #tpu.dot_dimension_numbers<[1], [0], [0], [1], [0, 0, 1, 1], [], []>} : vector<4x64xf32>, vector<64x144xf32>, vector<4x144xf32> -> vector<4x144xf32>
    %143 = arith.addf %115, %142 : vector<4x144xf32>
    %cst_52 = arith.constant dense<0xFF800000> : vector<144xf32>
    %144 = vector.multi_reduction <maximumf>, %143, %cst_52 [0] : vector<4x144xf32> to vector<144xf32>
    %145 = vector.shape_cast %144 : vector<144xf32> to vector<1x144xf32>
    %146 = vector.broadcast %145 : vector<1x144xf32> to vector<4x144xf32>
    %147 = arith.subf %143, %146 : vector<4x144xf32>
    %148 = math.exp %147 : vector<4x144xf32>
    %cst_53 = arith.constant dense<0.000000e+00> : vector<144xf32>
    %149 = vector.multi_reduction <add>, %148, %cst_53 [0] : vector<4x144xf32> to vector<144xf32>
    %150 = vector.shape_cast %149 : vector<144xf32> to vector<1x144xf32>
    %151 = vector.broadcast %150 : vector<1x144xf32> to vector<4x144xf32>
    %152 = arith.divf %148, %151 : vector<4x144xf32>
    %cst_54 = arith.constant dense<0.000000e+00> : vector<64x144xf32>
    %153 = tpu.matmul %85, %152, %cst_54 {dimension_numbers = #tpu.dot_dimension_numbers<[1], [0], [0], [1], [0, 0, 1, 1], [], []>} : vector<64x4xf32>, vector<4x144xf32>, vector<64x144xf32> -> vector<64x144xf32>
    %154 = arith.mulf %153, %84 : vector<64x144xf32>
    %cst_55 = arith.constant dense<0.000000e+00> : vector<64xf32>
    %155 = vector.multi_reduction <add>, %154, %cst_55 [1] : vector<64x144xf32> to vector<64xf32>
    %156 = vector.shape_cast %155 : vector<64xf32> to vector<64x1xf32>
    %157 = arith.mulf %156, %156 : vector<64x1xf32>
    %cst_56 = arith.constant dense<0.000000e+00> : vector<4x1xf32>
    %158 = tpu.matmul %86, %157, %cst_56 {dimension_numbers = #tpu.dot_dimension_numbers<[1], [0], [0], [1], [0, 0, 1, 1], [], []>} : vector<4x64xf32>, vector<64x1xf32>, vector<4x1xf32> -> vector<4x1xf32>
    %cst_57 = arith.constant 9.99999997E-7 : f32
    %159 = vector.broadcast %cst_57 : f32 to vector<4x1xf32>
    %160 = arith.addf %158, %159 : vector<4x1xf32>
    %161 = math.rsqrt %160 : vector<4x1xf32>
    %162 = arith.mulf %158, %161 : vector<4x1xf32>
    %cst_58 = arith.constant 1.000000e+00 : f32
    %163 = vector.broadcast %cst_58 : f32 to vector<4x1xf32>
    %164 = arith.addf %163, %158 : vector<4x1xf32>
    %165 = arith.divf %162, %164 : vector<4x1xf32>
    %cst_59 = arith.constant dense<0.000000e+00> : vector<64x1xf32>
    %166 = tpu.matmul %85, %165, %cst_59 {dimension_numbers = #tpu.dot_dimension_numbers<[1], [0], [0], [1], [0, 0, 1, 1], [], []>} : vector<64x4xf32>, vector<4x1xf32>, vector<64x1xf32> -> vector<64x1xf32>
    %167 = arith.mulf %156, %166 : vector<64x1xf32>
    %c0_60 = arith.constant 0 : index
    %c0_61 = arith.constant 0 : index
    %c0_62 = arith.constant 0 : index
    %168 = vector.load %arg5[%c0_60, %c0_61, %c0_62] : memref<1x64x1xf32, #tpu.memory_space<vmem>>, vector<1x64x1xf32>
    %169 = vector.shape_cast %168 : vector<1x64x1xf32> to vector<64x1xf32>
    %170 = vector.shape_cast %167 : vector<64x1xf32> to vector<1x64x1xf32>
    tpu.vector_store %arg5[%c0_60, %c0_61, %c0_62], %170 {strides = array<i32>} : memref<1x64x1xf32, #tpu.memory_space<vmem>>, vector<1x64x1xf32>,
    return
  }
  func.func @transform_0(%arg0: i32) -> (i32, i32, i32) {
    %c0_i32 = arith.constant 0 : i32
    %c0_i32_0 = arith.constant 0 : i32
    %c0_i32_1 = arith.constant 0 : i32
    return %arg0, %c0_i32, %c0_i32_0 : i32, i32, i32
  }
  func.func @transform_1(%arg0: i32) -> (i32, i32, i32) {
    %c0_i32 = arith.constant 0 : i32
    %c0_i32_0 = arith.constant 0 : i32
    %c0_i32_1 = arith.constant 0 : i32
    %c0_i32_2 = arith.constant 0 : i32
    return %c0_i32, %c0_i32_0, %c0_i32_1 : i32, i32, i32
  }
  func.func @transform_2(%arg0: i32) -> (i32, i32) {
    %c0_i32 = arith.constant 0 : i32
    %c0_i32_0 = arith.constant 0 : i32
    %c0_i32_1 = arith.constant 0 : i32
    return %c0_i32, %c0_i32_0 : i32, i32
  }
  func.func @transform_3(%arg0: i32) -> (i32, i32) {
    %c0_i32 = arith.constant 0 : i32
    %c0_i32_0 = arith.constant 0 : i32
    %c0_i32_1 = arith.constant 0 : i32
    return %c0_i32, %c0_i32_0 : i32, i32
  }
  func.func @transform_4(%arg0: i32) -> (i32, i32, i32) {
    %c0_i32 = arith.constant 0 : i32
    %c0_i32_0 = arith.constant 0 : i32
    %c0_i32_1 = arith.constant 0 : i32
    return %arg0, %c0_i32, %c0_i32_0 : i32, i32, i32
  }
}

</mosaic_0001>

<llo_original>
// kernel: capsule_network_forward.5
$region0: #{capsule_network_forward.5}
  #allocation0 [shape = 'u32[]', space=smem, size = 0x4, offset = 0x4, fixed_abs, tag = 'smem constant byte address 0x4 - core index']
  #allocation1 [shape = 'u32[72,128]{1,0:T(1,128)}', space=vmem, size = 0x9000, scoped, tag = 'internal scratch']
  %s0 = inlined_call_operand.vmem [shape: bf16[512,36], index: 0, kind: input, shape index: {}]
  %s1 = inlined_call_operand.vmem [shape: bf16[36,128], index: 1, kind: input, shape index: {}]
  %s2 = inlined_call_operand.vmem [shape: f32[1,128], index: 2, kind: input, shape index: {}]
  %s3 = inlined_call_operand.vmem [shape: f32[1,128], index: 3, kind: input, shape index: {}]
  %s4 = inlined_call_operand.vmem [shape: f32[512,128], index: 4, kind: output, shape index: {}]
  %s5 = sld [smem:[#allocation0]]
  $region26: #{capsule_network_forward.5} parent=0
    _
  %s7 = ssub.s32 1, %s5
  %s8 = scalar_select 0, %s7, %s5
  // Predicated region
  $region2: #{capsule_network_forward.5} parent=0 // pred_check
    _
  $region3: #{capsule_network_forward.5} parent=0 // pred_check_branch
    %10 = sbr.rel (0) target = $region5
  $region4: #{capsule_network_forward.5} parent=0 // pred_region
    _
  $region5: #{capsule_network_forward.5} parent=0 // pred_fallthru
    _
  // Predicated region
  $region6: #{capsule_network_forward.5} parent=0 // pred_check
    _
  $region7: #{capsule_network_forward.5} parent=0 // pred_check_branch
    %12 = sbr.rel (0) target = $region9
  $region8: #{capsule_network_forward.5} parent=0 // pred_region
    _
  $region9: #{capsule_network_forward.5} parent=0 // pred_fallthru
    _
  // Predicated region
  $region10: #{capsule_network_forward.5} parent=0 // pred_check
    _
  $region11: #{capsule_network_forward.5} parent=0 // pred_check_branch
    %14 = sbr.rel (0) target = $region13
  $region12: #{capsule_network_forward.5} parent=0 // pred_region
    _
  $region13: #{capsule_network_forward.5} parent=0 // pred_fallthru
    _
  // Predicated region
  $region14: #{capsule_network_forward.5} parent=0 // pred_check
    _
  $region15: #{capsule_network_forward.5} parent=0 // pred_check_branch
    %16 = sbr.rel (0) target = $region17
  $region16: #{capsule_network_forward.5} parent=0 // pred_region
    _
  $region17: #{capsule_network_forward.5} parent=0 // pred_fallthru
    _
  %v18 = vld [vmem:[%s0] sm:$0xf]
  %v19 = vld [vmem:[%s0 + $0x4] sm:$0xf]
  %v20 = vld [vmem:[%s0 + $0x8] sm:$0xf]
  %v21 = vld [vmem:[%s0 + $0xc] sm:$0xf]
  %v22 = vld [vmem:[%s0 + $0x10] sm:$0xf]
  %v23 = vld [vmem:[%s0 + $0x14] sm:$0xf]
  %v24 = vld [vmem:[%s0 + $0x18] sm:$0xf]
  %v25 = vld [vmem:[%s0 + $0x1c] sm:$0xf]
  %v26 = vld [vmem:[%s0 + $0x20] sm:$0xf]
  %v27 = vld [vmem:[%s0 + $0x24] sm:$0xf]
  %v28 = vld [vmem:[%s0 + $0x28] sm:$0xf]
  %v29 = vld [vmem:[%s0 + $0x2c] sm:$0xf]
  %v30 = vld [vmem:[%s0 + $0x30] sm:$0xf]
  %v31 = vld [vmem:[%s0 + $0x34] sm:$0xf]
  %v32 = vld [vmem:[%s0 + $0x38] sm:$0xf]
  %v33 = vld [vmem:[%s0 + $0x3c] sm:$0xf]
  %v34 = vld [vmem:[%s0 + $0x40] sm:$0xf]
  %v35 = vld [vmem:[%s0 + $0x44] sm:$0xf]
  %v36 = vld [vmem:[%s0 + $0x48] sm:$0xf]
  %v37 = vld [vmem:[%s0 + $0x4c] sm:$0xf]
  %v38 = vld [vmem:[%s0 + $0x50] sm:$0xf]
  %v39 = vld [vmem:[%s0 + $0x54] sm:$0xf]
  %v40 = vld [vmem:[%s0 + $0x58] sm:$0xf]
  %v41 = vld [vmem:[%s0 + $0x5c] sm:$0xf]
  %v42 = vld [vmem:[%s0 + $0x60] sm:$0xf]
  %v43 = vld [vmem:[%s0 + $0x64] sm:$0xf]
  %v44 = vld [vmem:[%s0 + $0x68] sm:$0xf]
  %v45 = vld [vmem:[%s0 + $0x6c] sm:$0xf]
  %v46 = vld [vmem:[%s0 + $0x70] sm:$0xf]
  %v47 = vld [vmem:[%s0 + $0x74] sm:$0xf]
  %v48 = vld [vmem:[%s0 + $0x78] sm:$0xf]
  %v49 = vld [vmem:[%s0 + $0x7c] sm:$0xf]
  %v50 = vld [vmem:[%s0 + $0x80] sm:$0xf]
  %v51 = vld [vmem:[%s0 + $0x84] sm:$0xf]
  %v52 = vld [vmem:[%s0 + $0x88] sm:$0xf]
  %v53 = vld [vmem:[%s0 + $0x8c] sm:$0xf]
  %v54 = vld [vmem:[%s0 + $0x90] sm:$0xf]
  %v55 = vld [vmem:[%s0 + $0x94] sm:$0xf]
  %v56 = vld [vmem:[%s0 + $0x98] sm:$0xf]
  %v57 = vld [vmem:[%s0 + $0x9c] sm:$0xf]
  %v58 = vld [vmem:[%s0 + $0xa0] sm:$0xf]
  %v59 = vld [vmem:[%s0 + $0xa4] sm:$0xf]
  %v60 = vld [vmem:[%s0 + $0xa8] sm:$0xf]
  %v61 = vld [vmem:[%s0 + $0xac] sm:$0xf]
  %v62 = vld [vmem:[%s0 + $0xb0] sm:$0xf]
  %v63 = vld [vmem:[%s0 + $0xb4] sm:$0xf]
  %v64 = vld [vmem:[%s0 + $0xb8] sm:$0xf]
  %v65 = vld [vmem:[%s0 + $0xbc] sm:$0xf]
  %v66 = vld [vmem:[%s0 + $0xc0] sm:$0xf]
  %v67 = vld [vmem:[%s0 + $0xc4] sm:$0xf]
  %v68 = vld [vmem:[%s0 + $0xc8] sm:$0xf]
  %v69 = vld [vmem:[%s0 + $0xcc] sm:$0xf]
  %v70 = vld [vmem:[%s0 + $0xd0] sm:$0xf]
  %v71 = vld [vmem:[%s0 + $0xd4] sm:$0xf]
  %v72 = vld [vmem:[%s0 + $0xd8] sm:$0xf]
  %v73 = vld [vmem:[%s0 + $0xdc] sm:$0xf]
  %v74 = vld [vmem:[%s0 + $0xe0] sm:$0xf]
  %v75 = vld [vmem:[%s0 + $0xe4] sm:$0xf]
  %v76 = vld [vmem:[%s0 + $0xe8] sm:$0xf]
  %v77 = vld [vmem:[%s0 + $0xec] sm:$0xf]
  %v78 = vld [vmem:[%s0 + $0xf0] sm:$0xf]
  %v79 = vld [vmem:[%s0 + $0xf4] sm:$0xf]
  %v80 = vld [vmem:[%s0 + $0xf8] sm:$0xf]
  %v81 = vld [vmem:[%s0 + $0xfc] sm:$0xf]
  %v82 = vld [vmem:[%s1] sm:$0xf]
  %v83 = vld [vmem:[%s1 + $0x4] sm:$0xf]
  %v84 = vld [vmem:[%s1 + $0x8] sm:$0xf]
  %v85 = vld [vmem:[%s1 + $0xc] sm:$0xf]
  %v86 = vld [vmem:[%s1 + $0x10] sm:$0x3]
  %v151 = vunpack.c.l.b16 %v18
  %v152 = vunpack.c.l.b16 %v19
  %v153 = vunpack.c.l.b16 %v20
  %v154 = vunpack.c.l.b16 %v21
  %v155 = vunpack.c.l.b16 %v22
  %v156 = vunpack.c.l.b16 %v23
  %v157 = vunpack.c.l.b16 %v24
  %v158 = vunpack.c.l.b16 %v25
  %v159 = vunpack.c.l.b16 %v26
  %v160 = vunpack.c.l.b16 %v27
  %v161 = vunpack.c.l.b16 %v28
  %v162 = vunpack.c.l.b16 %v29
  %v163 = vunpack.c.l.b16 %v30
  %v164 = vunpack.c.l.b16 %v31
  %v165 = vunpack.c.l.b16 %v32
  %v166 = vunpack.c.l.b16 %v33
  %v167 = vunpack.c.l.b16 %v34
  %v168 = vunpack.c.l.b16 %v35
  %v169 = vunpack.c.l.b16 %v36
  %v170 = vunpack.c.l.b16 %v37
  %v171 = vunpack.c.l.b16 %v38
  %v172 = vunpack.c.l.b16 %v39
  %v173 = vunpack.c.l.b16 %v40
  %v174 = vunpack.c.l.b16 %v41
  %v175 = vunpack.c.l.b16 %v42
  %v176 = vunpack.c.l.b16 %v43
  %v177 = vunpack.c.l.b16 %v44
  %v178 = vunpack.c.l.b16 %v45
  %v179 = vunpack.c.l.b16 %v46
  %v180 = vunpack.c.l.b16 %v47
  %v181 = vunpack.c.l.b16 %v48
  %v182 = vunpack.c.l.b16 %v49
  %v183 = vunpack.c.l.b16 %v50
  %v184 = vunpack.c.l.b16 %v51
  %v185 = vunpack.c.l.b16 %v52
  %v186 = vunpack.c.l.b16 %v53
  %v187 = vunpack.c.l.b16 %v54
  %v188 = vunpack.c.l.b16 %v55
  %v189 = vunpack.c.l.b16 %v56
  %v190 = vunpack.c.l.b16 %v57
  %v191 = vunpack.c.l.b16 %v58
  %v192 = vunpack.c.l.b16 %v59
  %v193 = vunpack.c.l.b16 %v60
  %v194 = vunpack.c.l.b16 %v61
  %v195 = vunpack.c.l.b16 %v62
  %v196 = vunpack.c.l.b16 %v63
  %v197 = vunpack.c.l.b16 %v64
  %v198 = vunpack.c.l.b16 %v65
  %v199 = vunpack.c.l.b16 %v66
  %v200 = vunpack.c.l.b16 %v67
  %v201 = vunpack.c.l.b16 %v68
  %v202 = vunpack.c.l.b16 %v69
  %v203 = vunpack.c.l.b16 %v70
  %v204 = vunpack.c.l.b16 %v71
  %v205 = vunpack.c.l.b16 %v72
  %v206 = vunpack.c.l.b16 %v73
  %v207 = vunpack.c.l.b16 %v74
  %v208 = vunpack.c.l.b16 %v75
  %v209 = vunpack.c.l.b16 %v76
  %v210 = vunpack.c.l.b16 %v77
  %v211 = vunpack.c.l.b16 %v78
  %v212 = vunpack.c.l.b16 %v79
  %v213 = vunpack.c.l.b16 %v80
  %v214 = vunpack.c.l.b16 %v81
  %v215 = vpack.c.b16 %v152, %v151
  %v216 = vpack.c.b16 %v154, %v153
  %v217 = vpack.c.b16 %v156, %v155
  %v218 = vpack.c.b16 %v158, %v157
  %v219 = vpack.c.b16 %v160, %v159
  %v220 = vpack.c.b16 %v162, %v161
  %v221 = vpack.c.b16 %v164, %v163
  %v222 = vpack.c.b16 %v166, %v165
  %v223 = vpack.c.b16 %v168, %v167
  %v224 = vpack.c.b16 %v170, %v169
  %v225 = vpack.c.b16 %v172, %v171
  %v226 = vpack.c.b16 %v174, %v173
  %v227 = vpack.c.b16 %v176, %v175
  %v228 = vpack.c.b16 %v178, %v177
  %v229 = vpack.c.b16 %v180, %v179
  %v230 = vpack.c.b16 %v182, %v181
  %v231 = vpack.c.b16 %v184, %v183
  %v232 = vpack.c.b16 %v186, %v185
  %v233 = vpack.c.b16 %v188, %v187
  %v234 = vpack.c.b16 %v190, %v189
  %v235 = vpack.c.b16 %v192, %v191
  %v236 = vpack.c.b16 %v194, %v193
  %v237 = vpack.c.b16 %v196, %v195
  %v238 = vpack.c.b16 %v198, %v197
  %v239 = vpack.c.b16 %v200, %v199
  %v240 = vpack.c.b16 %v202, %v201
  %v241 = vpack.c.b16 %v204, %v203
  %v242 = vpack.c.b16 %v206, %v205
  %v243 = vpack.c.b16 %v208, %v207
  %v244 = vpack.c.b16 %v210, %v209
  %v245 = vpack.c.b16 %v212, %v211
  %v246 = vpack.c.b16 %v214, %v213
  %v252 = vunpack.c.l.b16 %v82
  %v253 = vunpack.c.l.b16 %v83
  %v254 = vunpack.c.l.b16 %v84
  %v255 = vunpack.c.l.b16 %v85
  %v256 = vunpack.c.l.b16 %v86
  %v257 = vpack.c.b16 %v253, %v252
  %v258 = vpack.c.b16 %v255, %v254
  %v259 = vpack.c.b16 %v256, %v256
  %vm262 = vcmask 293888
  %v264 = vsel %vm262, %v215, 0
  %v267 = vsel %vm262, %v216, 0
  %v270 = vsel %vm262, %v217, 0
  %v273 = vsel %vm262, %v218, 0
  %v276 = vsel %vm262, %v219, 0
  %v279 = vsel %vm262, %v220, 0
  %v282 = vsel %vm262, %v221, 0
  %v285 = vsel %vm262, %v222, 0
  %v288 = vsel %vm262, %v223, 0
  %v291 = vsel %vm262, %v224, 0
  %v294 = vsel %vm262, %v225, 0
  %v297 = vsel %vm262, %v226, 0
  %v300 = vsel %vm262, %v227, 0
  %v303 = vsel %vm262, %v228, 0
  %v306 = vsel %vm262, %v229, 0
  %v309 = vsel %vm262, %v230, 0
  %v312 = vsel %vm262, %v231, 0
  %v315 = vsel %vm262, %v232, 0
  %v318 = vsel %vm262, %v233, 0
  %v321 = vsel %vm262, %v234, 0
  %v324 = vsel %vm262, %v235, 0
  %v327 = vsel %vm262, %v236, 0
  %v330 = vsel %vm262, %v237, 0
  %v333 = vsel %vm262, %v238, 0
  %v336 = vsel %vm262, %v239, 0
  %v339 = vsel %vm262, %v240, 0
  %v342 = vsel %vm262, %v241, 0
  %v345 = vsel %vm262, %v242, 0
  %v348 = vsel %vm262, %v243, 0
  %v351 = vsel %vm262, %v244, 0
  %v354 = vsel %vm262, %v245, 0
  %v357 = vsel %vm262, %v246, 0
  %vm359 = vcmask 1041408
  %v361 = vsel %vm359, %v259, 0
  %363 = vmatpush.bf16.msra.mxu0 0
  %364 = vmatpush.bf16.msra.mxu0 0
  %365 = vmatpush.bf16.msra.mxu0 0
  %366 = vmatpush.bf16.msra.mxu0 0
  %367 = vmatpush.bf16.msra.mxu0 0
  %368 = vmatpush.bf16.msra.mxu0 %v361
  %369 = vmatpush.bf16.msra.mxu0 %v258
  %370 = vmatpush.bf16.msra.mxu0 %v257
  %371 = vmatmul.bf16.gmra.mxu0 %v264
  %v372 = vpop.f32.mrf.mxu0
  %v373 = vadd.f32 0.0, %v372
  %v374 = vpop.f32.mrf.mxu0
  %v375 = vadd.f32 0.0, %v374
  %376 = vmatmul.bf16.gmra.mxu0 %v267
  %v377 = vpop.f32.mrf.mxu0
  %v378 = vadd.f32 0.0, %v377
  %v379 = vpop.f32.mrf.mxu0
  %v380 = vadd.f32 0.0, %v379
  %381 = vmatmul.bf16.gmra.mxu0 %v270
  %v382 = vpop.f32.mrf.mxu0
  %v383 = vadd.f32 0.0, %v382
  %v384 = vpop.f32.mrf.mxu0
  %v385 = vadd.f32 0.0, %v384
  %386 = vmatmul.bf16.gmra.mxu0 %v273
  %v387 = vpop.f32.mrf.mxu0
  %v388 = vadd.f32 0.0, %v387
  %v389 = vpop.f32.mrf.mxu0
  %v390 = vadd.f32 0.0, %v389
  %391 = vmatmul.bf16.gmra.mxu0 %v276
  %v392 = vpop.f32.mrf.mxu0
  %v393 = vadd.f32 0.0, %v392
  %v394 = vpop.f32.mrf.mxu0
  %v395 = vadd.f32 0.0, %v394
  %396 = vmatmul.bf16.gmra.mxu0 %v279
  %v397 = vpop.f32.mrf.mxu0
  %v398 = vadd.f32 0.0, %v397
  %v399 = vpop.f32.mrf.mxu0
  %v400 = vadd.f32 0.0, %v399
  %401 = vmatmul.bf16.gmra.mxu0 %v282
  %v402 = vpop.f32.mrf.mxu0
  %v403 = vadd.f32 0.0, %v402
  %v404 = vpop.f32.mrf.mxu0
  %v405 = vadd.f32 0.0, %v404
  %406 = vmatmul.bf16.gmra.mxu0 %v285
  %v407 = vpop.f32.mrf.mxu0
  %v408 = vadd.f32 0.0, %v407
  %v409 = vpop.f32.mrf.mxu0
  %v410 = vadd.f32 0.0, %v409
  %411 = vmatmul.bf16.gmra.mxu0 %v288
  %v412 = vpop.f32.mrf.mxu0
  %v413 = vadd.f32 0.0, %v412
  %v414 = vpop.f32.mrf.mxu0
  %v415 = vadd.f32 0.0, %v414
  %416 = vmatmul.bf16.gmra.mxu0 %v291
  %v417 = vpop.f32.mrf.mxu0
  %v418 = vadd.f32 0.0, %v417
  %v419 = vpop.f32.mrf.mxu0
  %v420 = vadd.f32 0.0, %v419
  %421 = vmatmul.bf16.gmra.mxu0 %v294
  %v422 = vpop.f32.mrf.mxu0
  %v423 = vadd.f32 0.0, %v422
  %v424 = vpop.f32.mrf.mxu0
  %v425 = vadd.f32 0.0, %v424
  %426 = vmatmul.bf16.gmra.mxu0 %v297
  %v427 = vpop.f32.mrf.mxu0
  %v428 = vadd.f32 0.0, %v427
  %v429 = vpop.f32.mrf.mxu0
  %v430 = vadd.f32 0.0, %v429
  %431 = vmatmul.bf16.gmra.mxu0 %v300
  %v432 = vpop.f32.mrf.mxu0
  %v433 = vadd.f32 0.0, %v432
  %v434 = vpop.f32.mrf.mxu0
  %v435 = vadd.f32 0.0, %v434
  %436 = vmatmul.bf16.gmra.mxu0 %v303
  %v437 = vpop.f32.mrf.mxu0
  %v438 = vadd.f32 0.0, %v437
  %v439 = vpop.f32.mrf.mxu0
  %v440 = vadd.f32 0.0, %v439
  %441 = vmatmul.bf16.gmra.mxu0 %v306
  %v442 = vpop.f32.mrf.mxu0
  %v443 = vadd.f32 0.0, %v442
  %v444 = vpop.f32.mrf.mxu0
  %v445 = vadd.f32 0.0, %v444
  %446 = vmatmul.bf16.gmra.mxu0 %v309
  %v447 = vpop.f32.mrf.mxu0
  %v448 = vadd.f32 0.0, %v447
  %v449 = vpop.f32.mrf.mxu0
  %v450 = vadd.f32 0.0, %v449
  %451 = vmatmul.bf16.gmra.mxu0 %v312
  %v452 = vpop.f32.mrf.mxu0
  %v453 = vadd.f32 0.0, %v452
  %v454 = vpop.f32.mrf.mxu0
  %v455 = vadd.f32 0.0, %v454
  %456 = vmatmul.bf16.gmra.mxu0 %v315
  %v457 = vpop.f32.mrf.mxu0
  %v458 = vadd.f32 0.0, %v457
  %v459 = vpop.f32.mrf.mxu0
  %v460 = vadd.f32 0.0, %v459
  %461 = vmatmul.bf16.gmra.mxu0 %v318
  %v462 = vpop.f32.mrf.mxu0
  %v463 = vadd.f32 0.0, %v462
  %v464 = vpop.f32.mrf.mxu0
  %v465 = vadd.f32 0.0, %v464
  %466 = vmatmul.bf16.gmra.mxu0 %v321
  %v467 = vpop.f32.mrf.mxu0
  %v468 = vadd.f32 0.0, %v467
  %v469 = vpop.f32.mrf.mxu0
  %v470 = vadd.f32 0.0, %v469
  %471 = vmatmul.bf16.gmra.mxu0 %v324
  %v472 = vpop.f32.mrf.mxu0
  %v473 = vadd.f32 0.0, %v472
  %v474 = vpop.f32.mrf.mxu0
  %v475 = vadd.f32 0.0, %v474
  %476 = vmatmul.bf16.gmra.mxu0 %v327
  %v477 = vpop.f32.mrf.mxu0
  %v478 = vadd.f32 0.0, %v477
  %v479 = vpop.f32.mrf.mxu0
  %v480 = vadd.f32 0.0, %v479
  %481 = vmatmul.bf16.gmra.mxu0 %v330
  %v482 = vpop.f32.mrf.mxu0
  %v483 = vadd.f32 0.0, %v482
  %v484 = vpop.f32.mrf.mxu0
  %v485 = vadd.f32 0.0, %v484
  %486 = vmatmul.bf16.gmra.mxu0 %v333
  %v487 = vpop.f32.mrf.mxu0
  %v488 = vadd.f32 0.0, %v487
  %v489 = vpop.f32.mrf.mxu0
  %v490 = vadd.f32 0.0, %v489
  %491 = vmatmul.bf16.gmra.mxu0 %v336
  %v492 = vpop.f32.mrf.mxu0
  %v493 = vadd.f32 0.0, %v492
  %v494 = vpop.f32.mrf.mxu0
  %v495 = vadd.f32 0.0, %v494
  %496 = vmatmul.bf16.gmra.mxu0 %v339
  %v497 = vpop.f32.mrf.mxu0
  %v498 = vadd.f32 0.0, %v497
  %v499 = vpop.f32.mrf.mxu0
  %v500 = vadd.f32 0.0, %v499
  %501 = vmatmul.bf16.gmra.mxu0 %v342
  %v502 = vpop.f32.mrf.mxu0
  %v503 = vadd.f32 0.0, %v502
  %v504 = vpop.f32.mrf.mxu0
  %v505 = vadd.f32 0.0, %v504
  %506 = vmatmul.bf16.gmra.mxu0 %v345
  %v507 = vpop.f32.mrf.mxu0
  %v508 = vadd.f32 0.0, %v507
  %v509 = vpop.f32.mrf.mxu0
  %v510 = vadd.f32 0.0, %v509
  %511 = vmatmul.bf16.gmra.mxu0 %v348
  %v512 = vpop.f32.mrf.mxu0
  %v513 = vadd.f32 0.0, %v512
  %v514 = vpop.f32.mrf.mxu0
  %v515 = vadd.f32 0.0, %v514
  %516 = vmatmul.bf16.gmra.mxu0 %v351
  %v517 = vpop.f32.mrf.mxu0
  %v518 = vadd.f32 0.0, %v517
  %v519 = vpop.f32.mrf.mxu0
  %v520 = vadd.f32 0.0, %v519
  %521 = vmatmul.bf16.gmra.mxu0 %v354
  %v522 = vpop.f32.mrf.mxu0
  %v523 = vadd.f32 0.0, %v522
  %v524 = vpop.f32.mrf.mxu0
  %v525 = vadd.f32 0.0, %v524
  %526 = vmatmul.bf16.gmra.mxu0 %v357
  %v527 = vpop.f32.mrf.mxu0
  %v528 = vadd.f32 0.0, %v527
  %v529 = vpop.f32.mrf.mxu0
  %v530 = vadd.f32 0.0, %v529
  %531 = vdwg.mxu0
  %v532 = vld [vmem:[%s2] sm:$0x1]
  %v534 = vperm.slane %v532, 0
  %v536 = vmul.f32 %v373, %v534
  %v537 = vmul.f32 %v375, %v534
  %v538 = vmul.f32 %v378, %v534
  %v539 = vmul.f32 %v380, %v534
  %v540 = vmul.f32 %v383, %v534
  %v541 = vmul.f32 %v385, %v534
  %v542 = vmul.f32 %v388, %v534
  %v543 = vmul.f32 %v390, %v534
  %v544 = vmul.f32 %v393, %v534
  %v545 = vmul.f32 %v395, %v534
  %v546 = vmul.f32 %v398, %v534
  %v547 = vmul.f32 %v400, %v534
  %v548 = vmul.f32 %v403, %v534
  %v549 = vmul.f32 %v405, %v534
  %v550 = vmul.f32 %v408, %v534
  %v551 = vmul.f32 %v410, %v534
  %v552 = vmul.f32 %v413, %v534
  %v553 = vmul.f32 %v415, %v534
  %v554 = vmul.f32 %v418, %v534
  %v555 = vmul.f32 %v420, %v534
  %v556 = vmul.f32 %v423, %v534
  %v557 = vmul.f32 %v425, %v534
  %v558 = vmul.f32 %v428, %v534
  %v559 = vmul.f32 %v430, %v534
  %v560 = vmul.f32 %v433, %v534
  %v561 = vmul.f32 %v435, %v534
  %v562 = vmul.f32 %v438, %v534
  %v563 = vmul.f32 %v440, %v534
  %v564 = vmul.f32 %v443, %v534
  %v565 = vmul.f32 %v445, %v534
  %v566 = vmul.f32 %v448, %v534
  %v567 = vmul.f32 %v450, %v534
  %v568 = vmul.f32 %v453, %v534
  %v569 = vmul.f32 %v455, %v534
  %v570 = vmul.f32 %v458, %v534
  %v571 = vmul.f32 %v460, %v534
  %v572 = vmul.f32 %v463, %v534
  %v573 = vmul.f32 %v465, %v534
  %v574 = vmul.f32 %v468, %v534
  %v575 = vmul.f32 %v470, %v534
  %v576 = vmul.f32 %v473, %v534
  %v577 = vmul.f32 %v475, %v534
  %v578 = vmul.f32 %v478, %v534
  %v579 = vmul.f32 %v480, %v534
  %v580 = vmul.f32 %v483, %v534
  %v581 = vmul.f32 %v485, %v534
  %v582 = vmul.f32 %v488, %v534
  %v583 = vmul.f32 %v490, %v534
  %v584 = vmul.f32 %v493, %v534
  %v585 = vmul.f32 %v495, %v534
  %v586 = vmul.f32 %v498, %v534
  %v587 = vmul.f32 %v500, %v534
  %v588 = vmul.f32 %v503, %v534
  %v589 = vmul.f32 %v505, %v534
  %v590 = vmul.f32 %v508, %v534
  %v591 = vmul.f32 %v510, %v534
  %v592 = vmul.f32 %v513, %v534
  %v593 = vmul.f32 %v515, %v534
  %v594 = vmul.f32 %v518, %v534
  %v595 = vmul.f32 %v520, %v534
  %v596 = vmul.f32 %v523, %v534
  %v597 = vmul.f32 %v525, %v534
  %v598 = vmul.f32 %v528, %v534
  %v599 = vmul.f32 %v530, %v534
  %v600 = vld [vmem:[%s3] sm:$0x1]
  %v602 = vperm.slane %v600, 0
  %v604 = vadd.f32 %v536, %v602
  %v605 = vadd.f32 %v537, %v602
  %v606 = vadd.f32 %v538, %v602
  %v607 = vadd.f32 %v539, %v602
  %v608 = vadd.f32 %v540, %v602
  %v609 = vadd.f32 %v541, %v602
  %v610 = vadd.f32 %v542, %v602
  %v611 = vadd.f32 %v543, %v602
  %v612 = vadd.f32 %v544, %v602
  %v613 = vadd.f32 %v545, %v602
  %v614 = vadd.f32 %v546, %v602
  %v615 = vadd.f32 %v547, %v602
  %v616 = vadd.f32 %v548, %v602
  %v617 = vadd.f32 %v549, %v602
  %v618 = vadd.f32 %v550, %v602
  %v619 = vadd.f32 %v551, %v602
  %v620 = vadd.f32 %v552, %v602
  %v621 = vadd.f32 %v553, %v602
  %v622 = vadd.f32 %v554, %v602
  %v623 = vadd.f32 %v555, %v602
  %v624 = vadd.f32 %v556, %v602
  %v625 = vadd.f32 %v557, %v602
  %v626 = vadd.f32 %v558, %v602
  %v627 = vadd.f32 %v559, %v602
  %v628 = vadd.f32 %v560, %v602
  %v629 = vadd.f32 %v561, %v602
  %v630 = vadd.f32 %v562, %v602
  %v631 = vadd.f32 %v563, %v602
  %v632 = vadd.f32 %v564, %v602
  %v633 = vadd.f32 %v565, %v602
  %v634 = vadd.f32 %v566, %v602
  %v635 = vadd.f32 %v567, %v602
  %v636 = vadd.f32 %v568, %v602
  %v637 = vadd.f32 %v569, %v602
  %v638 = vadd.f32 %v570, %v602
  %v639 = vadd.f32 %v571, %v602
  %v640 = vadd.f32 %v572, %v602
  %v641 = vadd.f32 %v573, %v602
  %v642 = vadd.f32 %v574, %v602
  %v643 = vadd.f32 %v575, %v602
  %v644 = vadd.f32 %v576, %v602
  %v645 = vadd.f32 %v577, %v602
  %v646 = vadd.f32 %v578, %v602
  %v647 = vadd.f32 %v579, %v602
  %v648 = vadd.f32 %v580, %v602
  %v649 = vadd.f32 %v581, %v602
  %v650 = vadd.f32 %v582, %v602
  %v651 = vadd.f32 %v583, %v602
  %v652 = vadd.f32 %v584, %v602
  %v653 = vadd.f32 %v585, %v602
  %v654 = vadd.f32 %v586, %v602
  %v655 = vadd.f32 %v587, %v602
  %v656 = vadd.f32 %v588, %v602
  %v657 = vadd.f32 %v589, %v602
  %v658 = vadd.f32 %v590, %v602
  %v659 = vadd.f32 %v591, %v602
  %v660 = vadd.f32 %v592, %v602
  %v661 = vadd.f32 %v593, %v602
  %v662 = vadd.f32 %v594, %v602
  %v663 = vadd.f32 %v595, %v602
  %v664 = vadd.f32 %v596, %v602
  %v665 = vadd.f32 %v597, %v602
  %v666 = vadd.f32 %v598, %v602
  %v667 = vadd.f32 %v599, %v602
  %v668 = vmax.f32 %v604, 0.0
  %v669 = vmax.f32 %v605, 0.0
  %v670 = vmax.f32 %v606, 0.0
  %v671 = vmax.f32 %v607, 0.0
  %v672 = vmax.f32 %v608, 0.0
  %v673 = vmax.f32 %v609, 0.0
  %v674 = vmax.f32 %v610, 0.0
  %v675 = vmax.f32 %v611, 0.0
  %v676 = vmax.f32 %v612, 0.0
  %v677 = vmax.f32 %v613, 0.0
  %v678 = vmax.f32 %v614, 0.0
  %v679 = vmax.f32 %v615, 0.0
  %v680 = vmax.f32 %v616, 0.0
  %v681 = vmax.f32 %v617, 0.0
  %v682 = vmax.f32 %v618, 0.0
  %v683 = vmax.f32 %v619, 0.0
  %v684 = vmax.f32 %v620, 0.0
  %v685 = vmax.f32 %v621, 0.0
  %v686 = vmax.f32 %v622, 0.0
  %v687 = vmax.f32 %v623, 0.0
  %v688 = vmax.f32 %v624, 0.0
  %v689 = vmax.f32 %v625, 0.0
  %v690 = vmax.f32 %v626, 0.0
  %v691 = vmax.f32 %v627, 0.0
  %v692 = vmax.f32 %v628, 0.0
  %v693 = vmax.f32 %v629, 0.0
  %v694 = vmax.f32 %v630, 0.0
  %v695 = vmax.f32 %v631, 0.0
  %v696 = vmax.f32 %v632, 0.0
  %v697 = vmax.f32 %v633, 0.0
  %v698 = vmax.f32 %v634, 0.0
  %v699 = vmax.f32 %v635, 0.0
  %v700 = vmax.f32 %v636, 0.0
  %v701 = vmax.f32 %v637, 0.0
  %v702 = vmax.f32 %v638, 0.0
  %v703 = vmax.f32 %v639, 0.0
  %v704 = vmax.f32 %v640, 0.0
  %v705 = vmax.f32 %v641, 0.0
  %v706 = vmax.f32 %v642, 0.0
  %v707 = vmax.f32 %v643, 0.0
  %v708 = vmax.f32 %v644, 0.0
  %v709 = vmax.f32 %v645, 0.0
  %v710 = vmax.f32 %v646, 0.0
  %v711 = vmax.f32 %v647, 0.0
  %v712 = vmax.f32 %v648, 0.0
  %v713 = vmax.f32 %v649, 0.0
  %v714 = vmax.f32 %v650, 0.0
  %v715 = vmax.f32 %v651, 0.0
  %v716 = vmax.f32 %v652, 0.0
  %v717 = vmax.f32 %v653, 0.0
  %v718 = vmax.f32 %v654, 0.0
  %v719 = vmax.f32 %v655, 0.0
  %v720 = vmax.f32 %v656, 0.0
  %v721 = vmax.f32 %v657, 0.0
  %v722 = vmax.f32 %v658, 0.0
  %v723 = vmax.f32 %v659, 0.0
  %v724 = vmax.f32 %v660, 0.0
  %v725 = vmax.f32 %v661, 0.0
  %v726 = vmax.f32 %v662, 0.0
  %v727 = vmax.f32 %v663, 0.0
  %v728 = vmax.f32 %v664, 0.0
  %v729 = vmax.f32 %v665, 0.0
  %v730 = vmax.f32 %v666, 0.0
  %v731 = vmax.f32 %v667, 0.0
  %732 = vst [vmem:[%s4] sm:$0xff] %v668
  %733 = vst [vmem:[%s4 + $0x8] sm:$0xff] %v669
  %734 = vst [vmem:[%s4 + $0x10] sm:$0xff] %v670
  %735 = vst [vmem:[%s4 + $0x18] sm:$0xff] %v671
  %736 = vst [vmem:[%s4 + $0x20] sm:$0xff] %v672
  %737 = vst [vmem:[%s4 + $0x28] sm:$0xff] %v673
  %738 = vst [vmem:[%s4 + $0x30] sm:$0xff] %v674
  %739 = vst [vmem:[%s4 + $0x38] sm:$0xff] %v675
  %740 = vst [vmem:[%s4 + $0x40] sm:$0xff] %v676
  %741 = vst [vmem:[%s4 + $0x48] sm:$0xff] %v677
  %742 = vst [vmem:[%s4 + $0x50] sm:$0xff] %v678
  %743 = vst [vmem:[%s4 + $0x58] sm:$0xff] %v679
  %744 = vst [vmem:[%s4 + $0x60] sm:$0xff] %v680
  %745 = vst [vmem:[%s4 + $0x68] sm:$0xff] %v681
  %746 = vst [vmem:[%s4 + $0x70] sm:$0xff] %v682
  %747 = vst [vmem:[%s4 + $0x78] sm:$0xff] %v683
  %748 = vst [vmem:[%s4 + $0x80] sm:$0xff] %v684
  %749 = vst [vmem:[%s4 + $0x88] sm:$0xff] %v685
  %750 = vst [vmem:[%s4 + $0x90] sm:$0xff] %v686
  %751 = vst [vmem:[%s4 + $0x98] sm:$0xff] %v687
  %752 = vst [vmem:[%s4 + $0xa0] sm:$0xff] %v688
  %753 = vst [vmem:[%s4 + $0xa8] sm:$0xff] %v689
  %754 = vst [vmem:[%s4 + $0xb0] sm:$0xff] %v690
  %755 = vst [vmem:[%s4 + $0xb8] sm:$0xff] %v691
  %756 = vst [vmem:[%s4 + $0xc0] sm:$0xff] %v692
  %757 = vst [vmem:[%s4 + $0xc8] sm:$0xff] %v693
  %758 = vst [vmem:[%s4 + $0xd0] sm:$0xff] %v694
  %759 = vst [vmem:[%s4 + $0xd8] sm:$0xff] %v695
  %760 = vst [vmem:[%s4 + $0xe0] sm:$0xff] %v696
  %761 = vst [vmem:[%s4 + $0xe8] sm:$0xff] %v697
  %762 = vst [vmem:[%s4 + $0xf0] sm:$0xff] %v698
  %763 = vst [vmem:[%s4 + $0xf8] sm:$0xff] %v699
  %764 = vst [vmem:[%s4 + $0x100] sm:$0xff] %v700
  %765 = vst [vmem:[%s4 + $0x108] sm:$0xff] %v701
  %766 = vst [vmem:[%s4 + $0x110] sm:$0xff] %v702
  %767 = vst [vmem:[%s4 + $0x118] sm:$0xff] %v703
  %768 = vst [vmem:[%s4 + $0x120] sm:$0xff] %v704
  %769 = vst [vmem:[%s4 + $0x128] sm:$0xff] %v705
  %770 = vst [vmem:[%s4 + $0x130] sm:$0xff] %v706
  %771 = vst [vmem:[%s4 + $0x138] sm:$0xff] %v707
  %772 = vst [vmem:[%s4 + $0x140] sm:$0xff] %v708
  %773 = vst [vmem:[%s4 + $0x148] sm:$0xff] %v709
  %774 = vst [vmem:[%s4 + $0x150] sm:$0xff] %v710
  %775 = vst [vmem:[%s4 + $0x158] sm:$0xff] %v711
  %776 = vst [vmem:[%s4 + $0x160] sm:$0xff] %v712
  %777 = vst [vmem:[%s4 + $0x168] sm:$0xff] %v713
  %778 = vst [vmem:[%s4 + $0x170] sm:$0xff] %v714
  %779 = vst [vmem:[%s4 + $0x178] sm:$0xff] %v715
  %780 = vst [vmem:[%s4 + $0x180] sm:$0xff] %v716
  %781 = vst [vmem:[%s4 + $0x188] sm:$0xff] %v717
  %782 = vst [vmem:[%s4 + $0x190] sm:$0xff] %v718
  %783 = vst [vmem:[%s4 + $0x198] sm:$0xff] %v719
  %784 = vst [vmem:[%s4 + $0x1a0] sm:$0xff] %v720
  %785 = vst [vmem:[%s4 + $0x1a8] sm:$0xff] %v721
  %786 = vst [vmem:[%s4 + $0x1b0] sm:$0xff] %v722
  %787 = vst [vmem:[%s4 + $0x1b8] sm:$0xff] %v723
  %788 = vst [vmem:[%s4 + $0x1c0] sm:$0xff] %v724
  %789 = vst [vmem:[%s4 + $0x1c8] sm:$0xff] %v725
  %790 = vst [vmem:[%s4 + $0x1d0] sm:$0xff] %v726
  %791 = vst [vmem:[%s4 + $0x1d8] sm:$0xff] %v727
  %792 = vst [vmem:[%s4 + $0x1e0] sm:$0xff] %v728
  %793 = vst [vmem:[%s4 + $0x1e8] sm:$0xff] %v729
  %794 = vst [vmem:[%s4 + $0x1f0] sm:$0xff] %v730
  %795 = vst [vmem:[%s4 + $0x1f8] sm:$0xff] %v731
  // Predicated region
  $region18: #{capsule_network_forward.5} parent=0 // pred_check
    _
  $region19: #{capsule_network_forward.5} parent=0 // pred_check_branch
    %797 = sbr.rel (0) target = $region21
  $region20: #{capsule_network_forward.5} parent=0 // pred_region
    _
  $region21: #{capsule_network_forward.5} parent=0 // pred_fallthru
    _
  // Predicated region
  $region22: #{capsule_network_forward.5} parent=0 // pred_check
    _
  $region23: #{capsule_network_forward.5} parent=0 // pred_check_branch
    %799 = sbr.rel (0) target = $region25
  $region24: #{capsule_network_forward.5} parent=0 // pred_region
    _
  $region25: #{capsule_network_forward.5} parent=0 // pred_fallthru
    _

// kernel: capsule_network_forward.6
$region0: #{capsule_network_forward.6}
  #allocation0 [shape = 'u32[]', space=smem, size = 0x4, offset = 0x4, fixed_abs, tag = 'smem constant byte address 0x4 - core index']
  #allocation1 [shape = 'u32[72,128]{1,0:T(1,128)}', space=vmem, size = 0x9000, scoped, tag = 'internal scratch']
  %s0 = inlined_call_operand.vmem [shape: bf16[128,1152], index: 0, kind: input, shape index: {}]
  %s1 = inlined_call_operand.vmem [shape: bf16[1152,128], index: 1, kind: input, shape index: {}]
  %s2 = inlined_call_operand.vmem [shape: f32[1,128], index: 2, kind: input, shape index: {}]
  %s3 = inlined_call_operand.vmem [shape: f32[1,128], index: 3, kind: input, shape index: {}]
  %s4 = inlined_call_operand.vmem [shape: f32[128,128], index: 4, kind: output, shape index: {}]
  %s5 = sld [smem:[#allocation0]]
  $region26: #{capsule_network_forward.6} parent=0
    _
  %s7 = ssub.s32 1, %s5
  %s8 = scalar_select 0, %s7, %s5
  // Predicated region
  $region2: #{capsule_network_forward.6} parent=0 // pred_check
    _
  $region3: #{capsule_network_forward.6} parent=0 // pred_check_branch
    %10 = sbr.rel (0) target = $region5
  $region4: #{capsule_network_forward.6} parent=0 // pred_region
    _
  $region5: #{capsule_network_forward.6} parent=0 // pred_fallthru
    _
  // Predicated region
  $region6: #{capsule_network_forward.6} parent=0 // pred_check
    _
  $region7: #{capsule_network_forward.6} parent=0 // pred_check_branch
    %12 = sbr.rel (0) target = $region9
  $region8: #{capsule_network_forward.6} parent=0 // pred_region
    _
  $region9: #{capsule_network_forward.6} parent=0 // pred_fallthru
    _
  // Predicated region
  $region10: #{capsule_network_forward.6} parent=0 // pred_check
    _
  $region11: #{capsule_network_forward.6} parent=0 // pred_check_branch
    %14 = sbr.rel (0) target = $region13
  $region12: #{capsule_network_forward.6} parent=0 // pred_region
    _
  $region13: #{capsule_network_forward.6} parent=0 // pred_fallthru
    _
  // Predicated region
  $region14: #{capsule_network_forward.6} parent=0 // pred_check
    _
  $region15: #{capsule_network_forward.6} parent=0 // pred_check_branch
    %16 = sbr.rel (0) target = $region17
  $region16: #{capsule_network_forward.6} parent=0 // pred_region
    _
  $region17: #{capsule_network_forward.6} parent=0 // pred_fallthru
    _
  %v17 = vld [vmem:[%s0] sm:$0xff]
  %v18 = vld [vmem:[%s0 + $0x8] sm:$0xff]
  %v19 = vld [vmem:[%s0 + $0x10] sm:$0xff]
  %v20 = vld [vmem:[%s0 + $0x18] sm:$0xff]
  %v21 = vld [vmem:[%s0 + $0x20] sm:$0xf]
  %v22 = vld [vmem:[%s0 + $0x24] sm:$0xff]
  %v23 = vld [vmem:[%s0 + $0x2c] sm:$0xff]
  %v24 = vld [vmem:[%s0 + $0x34] sm:$0xff]
  %v25 = vld [vmem:[%s0 + $0x3c] sm:$0xff]
  %v26 = vld [vmem:[%s0 + $0x44] sm:$0xf]
  %v27 = vld [vmem:[%s0 + $0x48] sm:$0xff]
  %v28 = vld [vmem:[%s0 + $0x50] sm:$0xff]
  %v29 = vld [vmem:[%s0 + $0x58] sm:$0xff]
  %v30 = vld [vmem:[%s0 + $0x60] sm:$0xff]
  %v31 = vld [vmem:[%s0 + $0x68] sm:$0xf]
  %v32 = vld [vmem:[%s0 + $0x6c] sm:$0xff]
  %v33 = vld [vmem:[%s0 + $0x74] sm:$0xff]
  %v34 = vld [vmem:[%s0 + $0x7c] sm:$0xff]
  %v35 = vld [vmem:[%s0 + $0x84] sm:$0xff]
  %v36 = vld [vmem:[%s0 + $0x8c] sm:$0xf]
  %v37 = vld [vmem:[%s0 + $0x90] sm:$0xff]
  %v38 = vld [vmem:[%s0 + $0x98] sm:$0xff]
  %v39 = vld [vmem:[%s0 + $0xa0] sm:$0xff]
  %v40 = vld [vmem:[%s0 + $0xa8] sm:$0xff]
  %v41 = vld [vmem:[%s0 + $0xb0] sm:$0xf]
  %v42 = vld [vmem:[%s0 + $0xb4] sm:$0xff]
  %v43 = vld [vmem:[%s0 + $0xbc] sm:$0xff]
  %v44 = vld [vmem:[%s0 + $0xc4] sm:$0xff]
  %v45 = vld [vmem:[%s0 + $0xcc] sm:$0xff]
  %v46 = vld [vmem:[%s0 + $0xd4] sm:$0xf]
  %v47 = vld [vmem:[%s0 + $0xd8] sm:$0xff]
  %v48 = vld [vmem:[%s0 + $0xe0] sm:$0xff]
  %v49 = vld [vmem:[%s0 + $0xe8] sm:$0xff]
  %v50 = vld [vmem:[%s0 + $0xf0] sm:$0xff]
  %v51 = vld [vmem:[%s0 + $0xf8] sm:$0xf]
  %v52 = vld [vmem:[%s0 + $0xfc] sm:$0xff]
  %v53 = vld [vmem:[%s0 + $0x104] sm:$0xff]
  %v54 = vld [vmem:[%s0 + $0x10c] sm:$0xff]
  %v55 = vld [vmem:[%s0 + $0x114] sm:$0xff]
  %v56 = vld [vmem:[%s0 + $0x11c] sm:$0xf]
  %v57 = vld [vmem:[%s0 + $0x120] sm:$0xff]
  %v58 = vld [vmem:[%s0 + $0x128] sm:$0xff]
  %v59 = vld [vmem:[%s0 + $0x130] sm:$0xff]
  %v60 = vld [vmem:[%s0 + $0x138] sm:$0xff]
  %v61 = vld [vmem:[%s0 + $0x140] sm:$0xf]
  %v62 = vld [vmem:[%s0 + $0x144] sm:$0xff]
  %v63 = vld [vmem:[%s0 + $0x14c] sm:$0xff]
  %v64 = vld [vmem:[%s0 + $0x154] sm:$0xff]
  %v65 = vld [vmem:[%s0 + $0x15c] sm:$0xff]
  %v66 = vld [vmem:[%s0 + $0x164] sm:$0xf]
  %v67 = vld [vmem:[%s0 + $0x168] sm:$0xff]
  %v68 = vld [vmem:[%s0 + $0x170] sm:$0xff]
  %v69 = vld [vmem:[%s0 + $0x178] sm:$0xff]
  %v70 = vld [vmem:[%s0 + $0x180] sm:$0xff]
  %v71 = vld [vmem:[%s0 + $0x188] sm:$0xf]
  %v72 = vld [vmem:[%s0 + $0x18c] sm:$0xff]
  %v73 = vld [vmem:[%s0 + $0x194] sm:$0xff]
  %v74 = vld [vmem:[%s0 + $0x19c] sm:$0xff]
  %v75 = vld [vmem:[%s0 + $0x1a4] sm:$0xff]
  %v76 = vld [vmem:[%s0 + $0x1ac] sm:$0xf]
  %v77 = vld [vmem:[%s0 + $0x1b0] sm:$0xff]
  %v78 = vld [vmem:[%s0 + $0x1b8] sm:$0xff]
  %v79 = vld [vmem:[%s0 + $0x1c0] sm:$0xff]
  %v80 = vld [vmem:[%s0 + $0x1c8] sm:$0xff]
  %v81 = vld [vmem:[%s0 + $0x1d0] sm:$0xf]
  %v82 = vld [vmem:[%s0 + $0x1d4] sm:$0xff]
  %v83 = vld [vmem:[%s0 + $0x1dc] sm:$0xff]
  %v84 = vld [vmem:[%s0 + $0x1e4] sm:$0xff]
  %v85 = vld [vmem:[%s0 + $0x1ec] sm:$0xff]
  %v86 = vld [vmem:[%s0 + $0x1f4] sm:$0xf]
  %v87 = vld [vmem:[%s0 + $0x1f8] sm:$0xff]
  %v88 = vld [vmem:[%s0 + $0x200] sm:$0xff]
  %v89 = vld [vmem:[%s0 + $0x208] sm:$0xff]
  %v90 = vld [vmem:[%s0 + $0x210] sm:$0xff]
  %v91 = vld [vmem:[%s0 + $0x218] sm:$0xf]
  %v92 = vld [vmem:[%s0 + $0x21c] sm:$0xff]
  %v93 = vld [vmem:[%s0 + $0x224] sm:$0xff]
  %v94 = vld [vmem:[%s0 + $0x22c] sm:$0xff]
  %v95 = vld [vmem:[%s0 + $0x234] sm:$0xff]
  %v96 = vld [vmem:[%s0 + $0x23c] sm:$0xf]
  %v97 = vld [vmem:[%s1] sm:$0xf]
  %v98 = vld [vmem:[%s1 + $0x4] sm:$0xf]
  %v99 = vld [vmem:[%s1 + $0x8] sm:$0xf]
  %v100 = vld [vmem:[%s1 + $0xc] sm:$0xf]
  %v101 = vld [vmem:[%s1 + $0x10] sm:$0xf]
  %v102 = vld [vmem:[%s1 + $0x14] sm:$0xf]
  %v103 = vld [vmem:[%s1 + $0x18] sm:$0xf]
  %v104 = vld [vmem:[%s1 + $0x1c] sm:$0xf]
  %v105 = vld [vmem:[%s1 + $0x20] sm:$0xf]
  %v106 = vld [vmem:[%s1 + $0x24] sm:$0xf]
  %v107 = vld [vmem:[%s1 + $0x28] sm:$0xf]
  %v108 = vld [vmem:[%s1 + $0x2c] sm:$0xf]
  %v109 = vld [vmem:[%s1 + $0x30] sm:$0xf]
  %v110 = vld [vmem:[%s1 + $0x34] sm:$0xf]
  %v111 = vld [vmem:[%s1 + $0x38] sm:$0xf]
  %v112 = vld [vmem:[%s1 + $0x3c] sm:$0xf]
  %v113 = vld [vmem:[%s1 + $0x40] sm:$0xf]
  %v114 = vld [vmem:[%s1 + $0x44] sm:$0xf]
  %v115 = vld [vmem:[%s1 + $0x48] sm:$0xf]
  %v116 = vld [vmem:[%s1 + $0x4c] sm:$0xf]
  %v117 = vld [vmem:[%s1 + $0x50] sm:$0xf]
  %v118 = vld [vmem:[%s1 + $0x54] sm:$0xf]
  %v119 = vld [vmem:[%s1 + $0x58] sm:$0xf]
  %v120 = vld [vmem:[%s1 + $0x5c] sm:$0xf]
  %v121 = vld [vmem:[%s1 + $0x60] sm:$0xf]
  %v122 = vld [vmem:[%s1 + $0x64] sm:$0xf]
  %v123 = vld [vmem:[%s1 + $0x68] sm:$0xf]
  %v124 = vld [vmem:[%s1 + $0x6c] sm:$0xf]
  %v125 = vld [vmem:[%s1 + $0x70] sm:$0xf]
  %v126 = vld [vmem:[%s1 + $0x74] sm:$0xf]
  %v127 = vld [vmem:[%s1 + $0x78] sm:$0xf]
  %v128 = vld [vmem:[%s1 + $0x7c] sm:$0xf]
  %v129 = vld [vmem:[%s1 + $0x80] sm:$0xf]
  %v130 = vld [vmem:[%s1 + $0x84] sm:$0xf]
  %v131 = vld [vmem:[%s1 + $0x88] sm:$0xf]
  %v132 = vld [vmem:[%s1 + $0x8c] sm:$0xf]
  %v133 = vld [vmem:[%s1 + $0x90] sm:$0xf]
  %v134 = vld [vmem:[%s1 + $0x94] sm:$0xf]
  %v135 = vld [vmem:[%s1 + $0x98] sm:$0xf]
  %v136 = vld [vmem:[%s1 + $0x9c] sm:$0xf]
  %v137 = vld [vmem:[%s1 + $0xa0] sm:$0xf]
  %v138 = vld [vmem:[%s1 + $0xa4] sm:$0xf]
  %v139 = vld [vmem:[%s1 + $0xa8] sm:$0xf]
  %v140 = vld [vmem:[%s1 + $0xac] sm:$0xf]
  %v141 = vld [vmem:[%s1 + $0xb0] sm:$0xf]
  %v142 = vld [vmem:[%s1 + $0xb4] sm:$0xf]
  %v143 = vld [vmem:[%s1 + $0xb8] sm:$0xf]
  %v144 = vld [vmem:[%s1 + $0xbc] sm:$0xf]
  %v145 = vld [vmem:[%s1 + $0xc0] sm:$0xf]
  %v146 = vld [vmem:[%s1 + $0xc4] sm:$0xf]
  %v147 = vld [vmem:[%s1 + $0xc8] sm:$0xf]
  %v148 = vld [vmem:[%s1 + $0xcc] sm:$0xf]
  %v149 = vld [vmem:[%s1 + $0xd0] sm:$0xf]
  %v150 = vld [vmem:[%s1 + $0xd4] sm:$0xf]
  %v151 = vld [vmem:[%s1 + $0xd8] sm:$0xf]
  %v152 = vld [vmem:[%s1 + $0xdc] sm:$0xf]
  %v153 = vld [vmem:[%s1 + $0xe0] sm:$0xf]
  %v154 = vld [vmem:[%s1 + $0xe4] sm:$0xf]
  %v155 = vld [vmem:[%s1 + $0xe8] sm:$0xf]
  %v156 = vld [vmem:[%s1 + $0xec] sm:$0xf]
  %v157 = vld [vmem:[%s1 + $0xf0] sm:$0xf]
  %v158 = vld [vmem:[%s1 + $0xf4] sm:$0xf]
  %v159 = vld [vmem:[%s1 + $0xf8] sm:$0xf]
  %v160 = vld [vmem:[%s1 + $0xfc] sm:$0xf]
  %v161 = vld [vmem:[%s1 + $0x100] sm:$0xf]
  %v162 = vld [vmem:[%s1 + $0x104] sm:$0xf]
  %v163 = vld [vmem:[%s1 + $0x108] sm:$0xf]
  %v164 = vld [vmem:[%s1 + $0x10c] sm:$0xf]
  %v165 = vld [vmem:[%s1 + $0x110] sm:$0xf]
  %v166 = vld [vmem:[%s1 + $0x114] sm:$0xf]
  %v167 = vld [vmem:[%s1 + $0x118] sm:$0xf]
  %v168 = vld [vmem:[%s1 + $0x11c] sm:$0xf]
  %v169 = vld [vmem:[%s1 + $0x120] sm:$0xf]
  %v170 = vld [vmem:[%s1 + $0x124] sm:$0xf]
  %v171 = vld [vmem:[%s1 + $0x128] sm:$0xf]
  %v172 = vld [vmem:[%s1 + $0x12c] sm:$0xf]
  %v173 = vld [vmem:[%s1 + $0x130] sm:$0xf]
  %v174 = vld [vmem:[%s1 + $0x134] sm:$0xf]
  %v175 = vld [vmem:[%s1 + $0x138] sm:$0xf]
  %v176 = vld [vmem:[%s1 + $0x13c] sm:$0xf]
  %v177 = vld [vmem:[%s1 + $0x140] sm:$0xf]
  %v178 = vld [vmem:[%s1 + $0x144] sm:$0xf]
  %v179 = vld [vmem:[%s1 + $0x148] sm:$0xf]
  %v180 = vld [vmem:[%s1 + $0x14c] sm:$0xf]
  %v181 = vld [vmem:[%s1 + $0x150] sm:$0xf]
  %v182 = vld [vmem:[%s1 + $0x154] sm:$0xf]
  %v183 = vld [vmem:[%s1 + $0x158] sm:$0xf]
  %v184 = vld [vmem:[%s1 + $0x15c] sm:$0xf]
  %v185 = vld [vmem:[%s1 + $0x160] sm:$0xf]
  %v186 = vld [vmem:[%s1 + $0x164] sm:$0xf]
  %v187 = vld [vmem:[%s1 + $0x168] sm:$0xf]
  %v188 = vld [vmem:[%s1 + $0x16c] sm:$0xf]
  %v189 = vld [vmem:[%s1 + $0x170] sm:$0xf]
  %v190 = vld [vmem:[%s1 + $0x174] sm:$0xf]
  %v191 = vld [vmem:[%s1 + $0x178] sm:$0xf]
  %v192 = vld [vmem:[%s1 + $0x17c] sm:$0xf]
  %v193 = vld [vmem:[%s1 + $0x180] sm:$0xf]
  %v194 = vld [vmem:[%s1 + $0x184] sm:$0xf]
  %v195 = vld [vmem:[%s1 + $0x188] sm:$0xf]
  %v196 = vld [vmem:[%s1 + $0x18c] sm:$0xf]
  %v197 = vld [vmem:[%s1 + $0x190] sm:$0xf]
  %v198 = vld [vmem:[%s1 + $0x194] sm:$0xf]
  %v199 = vld [vmem:[%s1 + $0x198] sm:$0xf]
  %v200 = vld [vmem:[%s1 + $0x19c] sm:$0xf]
  %v201 = vld [vmem:[%s1 + $0x1a0] sm:$0xf]
  %v202 = vld [vmem:[%s1 + $0x1a4] sm:$0xf]
  %v203 = vld [vmem:[%s1 + $0x1a8] sm:$0xf]
  %v204 = vld [vmem:[%s1 + $0x1ac] sm:$0xf]
  %v205 = vld [vmem:[%s1 + $0x1b0] sm:$0xf]
  %v206 = vld [vmem:[%s1 + $0x1b4] sm:$0xf]
  %v207 = vld [vmem:[%s1 + $0x1b8] sm:$0xf]
  %v208 = vld [vmem:[%s1 + $0x1bc] sm:$0xf]
  %v209 = vld [vmem:[%s1 + $0x1c0] sm:$0xf]
  %v210 = vld [vmem:[%s1 + $0x1c4] sm:$0xf]
  %v211 = vld [vmem:[%s1 + $0x1c8] sm:$0xf]
  %v212 = vld [vmem:[%s1 + $0x1cc] sm:$0xf]
  %v213 = vld [vmem:[%s1 + $0x1d0] sm:$0xf]
  %v214 = vld [vmem:[%s1 + $0x1d4] sm:$0xf]
  %v215 = vld [vmem:[%s1 + $0x1d8] sm:$0xf]
  %v216 = vld [vmem:[%s1 + $0x1dc] sm:$0xf]
  %v217 = vld [vmem:[%s1 + $0x1e0] sm:$0xf]
  %v218 = vld [vmem:[%s1 + $0x1e4] sm:$0xf]
  %v219 = vld [vmem:[%s1 + $0x1e8] sm:$0xf]
  %v220 = vld [vmem:[%s1 + $0x1ec] sm:$0xf]
  %v221 = vld [vmem:[%s1 + $0x1f0] sm:$0xf]
  %v222 = vld [vmem:[%s1 + $0x1f4] sm:$0xf]
  %v223 = vld [vmem:[%s1 + $0x1f8] sm:$0xf]
  %v224 = vld [vmem:[%s1 + $0x1fc] sm:$0xf]
  %v225 = vld [vmem:[%s1 + $0x200] sm:$0xf]
  %v226 = vld [vmem:[%s1 + $0x204] sm:$0xf]
  %v227 = vld [vmem:[%s1 + $0x208] sm:$0xf]
  %v228 = vld [vmem:[%s1 + $0x20c] sm:$0xf]
  %v229 = vld [vmem:[%s1 + $0x210] sm:$0xf]
  %v230 = vld [vmem:[%s1 + $0x214] sm:$0xf]
  %v231 = vld [vmem:[%s1 + $0x218] sm:$0xf]
  %v232 = vld [vmem:[%s1 + $0x21c] sm:$0xf]
  %v233 = vld [vmem:[%s1 + $0x220] sm:$0xf]
  %v234 = vld [vmem:[%s1 + $0x224] sm:$0xf]
  %v235 = vld [vmem:[%s1 + $0x228] sm:$0xf]
  %v236 = vld [vmem:[%s1 + $0x22c] sm:$0xf]
  %v237 = vld [vmem:[%s1 + $0x230] sm:$0xf]
  %v238 = vld [vmem:[%s1 + $0x234] sm:$0xf]
  %v239 = vld [vmem:[%s1 + $0x238] sm:$0xf]
  %v240 = vld [vmem:[%s1 + $0x23c] sm:$0xf]
  %v321 = vunpack.c.l.b16 %v17
  %v322 = vunpack.c.h.b16 %v17
  %v323 = vunpack.c.l.b16 %v18
  %v324 = vunpack.c.h.b16 %v18
  %v325 = vunpack.c.l.b16 %v19
  %v326 = vunpack.c.h.b16 %v19
  %v327 = vunpack.c.l.b16 %v20
  %v328 = vunpack.c.h.b16 %v20
  %v329 = vunpack.c.l.b16 %v21
  %v330 = vunpack.c.l.b16 %v22
  %v331 = vunpack.c.h.b16 %v22
  %v332 = vunpack.c.l.b16 %v23
  %v333 = vunpack.c.h.b16 %v23
  %v334 = vunpack.c.l.b16 %v24
  %v335 = vunpack.c.h.b16 %v24
  %v336 = vunpack.c.l.b16 %v25
  %v337 = vunpack.c.h.b16 %v25
  %v338 = vunpack.c.l.b16 %v26
  %v339 = vunpack.c.l.b16 %v27
  %v340 = vunpack.c.h.b16 %v27
  %v341 = vunpack.c.l.b16 %v28
  %v342 = vunpack.c.h.b16 %v28
  %v343 = vunpack.c.l.b16 %v29
  %v344 = vunpack.c.h.b16 %v29
  %v345 = vunpack.c.l.b16 %v30
  %v346 = vunpack.c.h.b16 %v30
  %v347 = vunpack.c.l.b16 %v31
  %v348 = vunpack.c.l.b16 %v32
  %v349 = vunpack.c.h.b16 %v32
  %v350 = vunpack.c.l.b16 %v33
  %v351 = vunpack.c.h.b16 %v33
  %v352 = vunpack.c.l.b16 %v34
  %v353 = vunpack.c.h.b16 %v34
  %v354 = vunpack.c.l.b16 %v35
  %v355 = vunpack.c.h.b16 %v35
  %v356 = vunpack.c.l.b16 %v36
  %v357 = vunpack.c.l.b16 %v37
  %v358 = vunpack.c.h.b16 %v37
  %v359 = vunpack.c.l.b16 %v38
  %v360 = vunpack.c.h.b16 %v38
  %v361 = vunpack.c.l.b16 %v39
  %v362 = vunpack.c.h.b16 %v39
  %v363 = vunpack.c.l.b16 %v40
  %v364 = vunpack.c.h.b16 %v40
  %v365 = vunpack.c.l.b16 %v41
  %v366 = vunpack.c.l.b16 %v42
  %v367 = vunpack.c.h.b16 %v42
  %v368 = vunpack.c.l.b16 %v43
  %v369 = vunpack.c.h.b16 %v43
  %v370 = vunpack.c.l.b16 %v44
  %v371 = vunpack.c.h.b16 %v44
  %v372 = vunpack.c.l.b16 %v45
  %v373 = vunpack.c.h.b16 %v45
  %v374 = vunpack.c.l.b16 %v46
  %v375 = vunpack.c.l.b16 %v47
  %v376 = vunpack.c.h.b16 %v47
  %v377 = vunpack.c.l.b16 %v48
  %v378 = vunpack.c.h.b16 %v48
  %v379 = vunpack.c.l.b16 %v49
  %v380 = vunpack.c.h.b16 %v49
  %v381 = vunpack.c.l.b16 %v50
  %v382 = vunpack.c.h.b16 %v50
  %v383 = vunpack.c.l.b16 %v51
  %v384 = vunpack.c.l.b16 %v52
  %v385 = vunpack.c.h.b16 %v52
  %v386 = vunpack.c.l.b16 %v53
  %v387 = vunpack.c.h.b16 %v53
  %v388 = vunpack.c.l.b16 %v54
  %v389 = vunpack.c.h.b16 %v54
  %v390 = vunpack.c.l.b16 %v55
  %v391 = vunpack.c.h.b16 %v55
  %v392 = vunpack.c.l.b16 %v56
  %v393 = vunpack.c.l.b16 %v57
  %v394 = vunpack.c.h.b16 %v57
  %v395 = vunpack.c.l.b16 %v58
  %v396 = vunpack.c.h.b16 %v58
  %v397 = vunpack.c.l.b16 %v59
  %v398 = vunpack.c.h.b16 %v59
  %v399 = vunpack.c.l.b16 %v60
  %v400 = vunpack.c.h.b16 %v60
  %v401 = vunpack.c.l.b16 %v61
  %v402 = vunpack.c.l.b16 %v62
  %v403 = vunpack.c.h.b16 %v62
  %v404 = vunpack.c.l.b16 %v63
  %v405 = vunpack.c.h.b16 %v63
  %v406 = vunpack.c.l.b16 %v64
  %v407 = vunpack.c.h.b16 %v64
  %v408 = vunpack.c.l.b16 %v65
  %v409 = vunpack.c.h.b16 %v65
  %v410 = vunpack.c.l.b16 %v66
  %v411 = vunpack.c.l.b16 %v67
  %v412 = vunpack.c.h.b16 %v67
  %v413 = vunpack.c.l.b16 %v68
  %v414 = vunpack.c.h.b16 %v68
  %v415 = vunpack.c.l.b16 %v69
  %v416 = vunpack.c.h.b16 %v69
  %v417 = vunpack.c.l.b16 %v70
  %v418 = vunpack.c.h.b16 %v70
  %v419 = vunpack.c.l.b16 %v71
  %v420 = vunpack.c.l.b16 %v72
  %v421 = vunpack.c.h.b16 %v72
  %v422 = vunpack.c.l.b16 %v73
  %v423 = vunpack.c.h.b16 %v73
  %v424 = vunpack.c.l.b16 %v74
  %v425 = vunpack.c.h.b16 %v74
  %v426 = vunpack.c.l.b16 %v75
  %v427 = vunpack.c.h.b16 %v75
  %v428 = vunpack.c.l.b16 %v76
  %v429 = vunpack.c.l.b16 %v77
  %v430 = vunpack.c.h.b16 %v77
  %v431 = vunpack.c.l.b16 %v78
  %v432 = vunpack.c.h.b16 %v78
  %v433 = vunpack.c.l.b16 %v79
  %v434 = vunpack.c.h.b16 %v79
  %v435 = vunpack.c.l.b16 %v80
  %v436 = vunpack.c.h.b16 %v80
  %v437 = vunpack.c.l.b16 %v81
  %v438 = vunpack.c.l.b16 %v82
  %v439 = vunpack.c.h.b16 %v82
  %v440 = vunpack.c.l.b16 %v83
  %v441 = vunpack.c.h.b16 %v83
  %v442 = vunpack.c.l.b16 %v84
  %v443 = vunpack.c.h.b16 %v84
  %v444 = vunpack.c.l.b16 %v85
  %v445 = vunpack.c.h.b16 %v85
  %v446 = vunpack.c.l.b16 %v86
  %v447 = vunpack.c.l.b16 %v87
  %v448 = vunpack.c.h.b16 %v87
  %v449 = vunpack.c.l.b16 %v88
  %v450 = vunpack.c.h.b16 %v88
  %v451 = vunpack.c.l.b16 %v89
  %v452 = vunpack.c.h.b16 %v89
  %v453 = vunpack.c.l.b16 %v90
  %v454 = vunpack.c.h.b16 %v90
  %v455 = vunpack.c.l.b16 %v91
  %v456 = vunpack.c.l.b16 %v92
  %v457 = vunpack.c.h.b16 %v92
  %v458 = vunpack.c.l.b16 %v93
  %v459 = vunpack.c.h.b16 %v93
  %v460 = vunpack.c.l.b16 %v94
  %v461 = vunpack.c.h.b16 %v94
  %v462 = vunpack.c.l.b16 %v95
  %v463 = vunpack.c.h.b16 %v95
  %v464 = vunpack.c.l.b16 %v96
  %v465 = vpack.c.b16 %v330, %v321
  %v466 = vpack.c.b16 %v331, %v322
  %v467 = vpack.c.b16 %v332, %v323
  %v468 = vpack.c.b16 %v333, %v324
  %v469 = vpack.c.b16 %v334, %v325
  %v470 = vpack.c.b16 %v335, %v326
  %v471 = vpack.c.b16 %v336, %v327
  %v472 = vpack.c.b16 %v337, %v328
  %v473 = vpack.c.b16 %v338, %v329
  %v474 = vpack.c.b16 %v348, %v339
  %v475 = vpack.c.b16 %v349, %v340
  %v476 = vpack.c.b16 %v350, %v341
  %v477 = vpack.c.b16 %v351, %v342
  %v478 = vpack.c.b16 %v352, %v343
  %v479 = vpack.c.b16 %v353, %v344
  %v480 = vpack.c.b16 %v354, %v345
  %v481 = vpack.c.b16 %v355, %v346
  %v482 = vpack.c.b16 %v356, %v347
  %v483 = vpack.c.b16 %v366, %v357
  %v484 = vpack.c.b16 %v367, %v358
  %v485 = vpack.c.b16 %v368, %v359
  %v486 = vpack.c.b16 %v369, %v360
  %v487 = vpack.c.b16 %v370, %v361
  %v488 = vpack.c.b16 %v371, %v362
  %v489 = vpack.c.b16 %v372, %v363
  %v490 = vpack.c.b16 %v373, %v364
  %v491 = vpack.c.b16 %v374, %v365
  %v492 = vpack.c.b16 %v384, %v375
  %v493 = vpack.c.b16 %v385, %v376
  %v494 = vpack.c.b16 %v386, %v377
  %v495 = vpack.c.b16 %v387, %v378
  %v496 = vpack.c.b16 %v388, %v379
  %v497 = vpack.c.b16 %v389, %v380
  %v498 = vpack.c.b16 %v390, %v381
  %v499 = vpack.c.b16 %v391, %v382
  %v500 = vpack.c.b16 %v392, %v383
  %v501 = vpack.c.b16 %v402, %v393
  %v502 = vpack.c.b16 %v403, %v394
  %v503 = vpack.c.b16 %v404, %v395
  %v504 = vpack.c.b16 %v405, %v396
  %v505 = vpack.c.b16 %v406, %v397
  %v506 = vpack.c.b16 %v407, %v398
  %v507 = vpack.c.b16 %v408, %v399
  %v508 = vpack.c.b16 %v409, %v400
  %v509 = vpack.c.b16 %v410, %v401
  %v510 = vpack.c.b16 %v420, %v411
  %v511 = vpack.c.b16 %v421, %v412
  %v512 = vpack.c.b16 %v422, %v413
  %v513 = vpack.c.b16 %v423, %v414
  %v514 = vpack.c.b16 %v424, %v415
  %v515 = vpack.c.b16 %v425, %v416
  %v516 = vpack.c.b16 %v426, %v417
  %v517 = vpack.c.b16 %v427, %v418
  %v518 = vpack.c.b16 %v428, %v419
  %v519 = vpack.c.b16 %v438, %v429
  %v520 = vpack.c.b16 %v439, %v430
  %v521 = vpack.c.b16 %v440, %v431
  %v522 = vpack.c.b16 %v441, %v432
  %v523 = vpack.c.b16 %v442, %v433
  %v524 = vpack.c.b16 %v443, %v434
  %v525 = vpack.c.b16 %v444, %v435
  %v526 = vpack.c.b16 %v445, %v436
  %v527 = vpack.c.b16 %v446, %v437
  %v528 = vpack.c.b16 %v456, %v447
  %v529 = vpack.c.b16 %v457, %v448
  %v530 = vpack.c.b16 %v458, %v449
  %v531 = vpack.c.b16 %v459, %v450
  %v532 = vpack.c.b16 %v460, %v451
  %v533 = vpack.c.b16 %v461, %v452
  %v534 = vpack.c.b16 %v462, %v453
  %v535 = vpack.c.b16 %v463, %v454
  %v536 = vpack.c.b16 %v464, %v455
  %v753 = vunpack.c.l.b16 %v97
  %v754 = vunpack.c.l.b16 %v98
  %v755 = vunpack.c.l.b16 %v99
  %v756 = vunpack.c.l.b16 %v100
  %v757 = vunpack.c.l.b16 %v101
  %v758 = vunpack.c.l.b16 %v102
  %v759 = vunpack.c.l.b16 %v103
  %v760 = vunpack.c.l.b16 %v104
  %v761 = vunpack.c.l.b16 %v105
  %v762 = vunpack.c.l.b16 %v106
  %v763 = vunpack.c.l.b16 %v107
  %v764 = vunpack.c.l.b16 %v108
  %v765 = vunpack.c.l.b16 %v109
  %v766 = vunpack.c.l.b16 %v110
  %v767 = vunpack.c.l.b16 %v111
  %v768 = vunpack.c.l.b16 %v112
  %v769 = vunpack.c.l.b16 %v113
  %v770 = vunpack.c.l.b16 %v114
  %v771 = vunpack.c.l.b16 %v115
  %v772 = vunpack.c.l.b16 %v116
  %v773 = vunpack.c.l.b16 %v117
  %v774 = vunpack.c.l.b16 %v118
  %v775 = vunpack.c.l.b16 %v119
  %v776 = vunpack.c.l.b16 %v120
  %v777 = vunpack.c.l.b16 %v121
  %v778 = vunpack.c.l.b16 %v122
  %v779 = vunpack.c.l.b16 %v123
  %v780 = vunpack.c.l.b16 %v124
  %v781 = vunpack.c.l.b16 %v125
  %v782 = vunpack.c.l.b16 %v126
  %v783 = vunpack.c.l.b16 %v127
  %v784 = vunpack.c.l.b16 %v128
  %v785 = vunpack.c.l.b16 %v129
  %v786 = vunpack.c.l.b16 %v130
  %v787 = vunpack.c.l.b16 %v131
  %v788 = vunpack.c.l.b16 %v132
  %v789 = vunpack.c.l.b16 %v133
  %v790 = vunpack.c.l.b16 %v134
  %v791 = vunpack.c.l.b16 %v135
  %v792 = vunpack.c.l.b16 %v136
  %v793 = vunpack.c.l.b16 %v137
  %v794 = vunpack.c.l.b16 %v138
  %v795 = vunpack.c.l.b16 %v139
  %v796 = vunpack.c.l.b16 %v140
  %v797 = vunpack.c.l.b16 %v141
  %v798 = vunpack.c.l.b16 %v142
  %v799 = vunpack.c.l.b16 %v143
  %v800 = vunpack.c.l.b16 %v144
  %v801 = vunpack.c.l.b16 %v145
  %v802 = vunpack.c.l.b16 %v146
  %v803 = vunpack.c.l.b16 %v147
  %v804 = vunpack.c.l.b16 %v148
  %v805 = vunpack.c.l.b16 %v149
  %v806 = vunpack.c.l.b16 %v150
  %v807 = vunpack.c.l.b16 %v151
  %v808 = vunpack.c.l.b16 %v152
  %v809 = vunpack.c.l.b16 %v153
  %v810 = vunpack.c.l.b16 %v154
  %v811 = vunpack.c.l.b16 %v155
  %v812 = vunpack.c.l.b16 %v156
  %v813 = vunpack.c.l.b16 %v157
  %v814 = vunpack.c.l.b16 %v158
  %v815 = vunpack.c.l.b16 %v159
  %v816 = vunpack.c.l.b16 %v160
  %v817 = vunpack.c.l.b16 %v161
  %v818 = vunpack.c.l.b16 %v162
  %v819 = vunpack.c.l.b16 %v163
  %v820 = vunpack.c.l.b16 %v164
  %v821 = vunpack.c.l.b16 %v165
  %v822 = vunpack.c.l.b16 %v166
  %v823 = vunpack.c.l.b16 %v167
  %v824 = vunpack.c.l.b16 %v168
  %v825 = vunpack.c.l.b16 %v169
  %v826 = vunpack.c.l.b16 %v170
  %v827 = vunpack.c.l.b16 %v171
  %v828 = vunpack.c.l.b16 %v172
  %v829 = vunpack.c.l.b16 %v173
  %v830 = vunpack.c.l.b16 %v174
  %v831 = vunpack.c.l.b16 %v175
  %v832 = vunpack.c.l.b16 %v176
  %v833 = vunpack.c.l.b16 %v177
  %v834 = vunpack.c.l.b16 %v178
  %v835 = vunpack.c.l.b16 %v179
  %v836 = vunpack.c.l.b16 %v180
  %v837 = vunpack.c.l.b16 %v181
  %v838 = vunpack.c.l.b16 %v182
  %v839 = vunpack.c.l.b16 %v183
  %v840 = vunpack.c.l.b16 %v184
  %v841 = vunpack.c.l.b16 %v185
  %v842 = vunpack.c.l.b16 %v186
  %v843 = vunpack.c.l.b16 %v187
  %v844 = vunpack.c.l.b16 %v188
  %v845 = vunpack.c.l.b16 %v189
  %v846 = vunpack.c.l.b16 %v190
  %v847 = vunpack.c.l.b16 %v191
  %v848 = vunpack.c.l.b16 %v192
  %v849 = vunpack.c.l.b16 %v193
  %v850 = vunpack.c.l.b16 %v194
  %v851 = vunpack.c.l.b16 %v195
  %v852 = vunpack.c.l.b16 %v196
  %v853 = vunpack.c.l.b16 %v197
  %v854 = vunpack.c.l.b16 %v198
  %v855 = vunpack.c.l.b16 %v199
  %v856 = vunpack.c.l.b16 %v200
  %v857 = vunpack.c.l.b16 %v201
  %v858 = vunpack.c.l.b16 %v202
  %v859 = vunpack.c.l.b16 %v203
  %v860 = vunpack.c.l.b16 %v204
  %v861 = vunpack.c.l.b16 %v205
  %v862 = vunpack.c.l.b16 %v206
  %v863 = vunpack.c.l.b16 %v207
  %v864 = vunpack.c.l.b16 %v208
  %v865 = vunpack.c.l.b16 %v209
  %v866 = vunpack.c.l.b16 %v210
  %v867 = vunpack.c.l.b16 %v211
  %v868 = vunpack.c.l.b16 %v212
  %v869 = vunpack.c.l.b16 %v213
  %v870 = vunpack.c.l.b16 %v214
  %v871 = vunpack.c.l.b16 %v215
  %v872 = vunpack.c.l.b16 %v216
  %v873 = vunpack.c.l.b16 %v217
  %v874 = vunpack.c.l.b16 %v218
  %v875 = vunpack.c.l.b16 %v219
  %v876 = vunpack.c.l.b16 %v220
  %v877 = vunpack.c.l.b16 %v221
  %v878 = vunpack.c.l.b16 %v222
  %v879 = vunpack.c.l.b16 %v223
  %v880 = vunpack.c.l.b16 %v224
  %v881 = vunpack.c.l.b16 %v225
  %v882 = vunpack.c.l.b16 %v226
  %v883 = vunpack.c.l.b16 %v227
  %v884 = vunpack.c.l.b16 %v228
  %v885 = vunpack.c.l.b16 %v229
  %v886 = vunpack.c.l.b16 %v230
  %v887 = vunpack.c.l.b16 %v231
  %v888 = vunpack.c.l.b16 %v232
  %v889 = vunpack.c.l.b16 %v233
  %v890 = vunpack.c.l.b16 %v234
  %v891 = vunpack.c.l.b16 %v235
  %v892 = vunpack.c.l.b16 %v236
  %v893 = vunpack.c.l.b16 %v237
  %v894 = vunpack.c.l.b16 %v238
  %v895 = vunpack.c.l.b16 %v239
  %v896 = vunpack.c.l.b16 %v240
  %v897 = vpack.c.b16 %v754, %v753
  %v898 = vpack.c.b16 %v756, %v755
  %v899 = vpack.c.b16 %v758, %v757
  %v900 = vpack.c.b16 %v760, %v759
  %v901 = vpack.c.b16 %v762, %v761
  %v902 = vpack.c.b16 %v764, %v763
  %v903 = vpack.c.b16 %v766, %v765
  %v904 = vpack.c.b16 %v768, %v767
  %v905 = vpack.c.b16 %v770, %v769
  %v906 = vpack.c.b16 %v772, %v771
  %v907 = vpack.c.b16 %v774, %v773
  %v908 = vpack.c.b16 %v776, %v775
  %v909 = vpack.c.b16 %v778, %v777
  %v910 = vpack.c.b16 %v780, %v779
  %v911 = vpack.c.b16 %v782, %v781
  %v912 = vpack.c.b16 %v784, %v783
  %v913 = vpack.c.b16 %v786, %v785
  %v914 = vpack.c.b16 %v788, %v787
  %v915 = vpack.c.b16 %v790, %v789
  %v916 = vpack.c.b16 %v792, %v791
  %v917 = vpack.c.b16 %v794, %v793
  %v918 = vpack.c.b16 %v796, %v795
  %v919 = vpack.c.b16 %v798, %v797
  %v920 = vpack.c.b16 %v800, %v799
  %v921 = vpack.c.b16 %v802, %v801
  %v922 = vpack.c.b16 %v804, %v803
  %v923 = vpack.c.b16 %v806, %v805
  %v924 = vpack.c.b16 %v808, %v807
  %v925 = vpack.c.b16 %v810, %v809
  %v926 = vpack.c.b16 %v812, %v811
  %v927 = vpack.c.b16 %v814, %v813
  %v928 = vpack.c.b16 %v816, %v815
  %v929 = vpack.c.b16 %v818, %v817
  %v930 = vpack.c.b16 %v820, %v819
  %v931 = vpack.c.b16 %v822, %v821
  %v932 = vpack.c.b16 %v824, %v823
  %v933 = vpack.c.b16 %v826, %v825
  %v934 = vpack.c.b16 %v828, %v827
  %v935 = vpack.c.b16 %v830, %v829
  %v936 = vpack.c.b16 %v832, %v831
  %v937 = vpack.c.b16 %v834, %v833
  %v938 = vpack.c.b16 %v836, %v835
  %v939 = vpack.c.b16 %v838, %v837
  %v940 = vpack.c.b16 %v840, %v839
  %v941 = vpack.c.b16 %v842, %v841
  %v942 = vpack.c.b16 %v844, %v843
  %v943 = vpack.c.b16 %v846, %v845
  %v944 = vpack.c.b16 %v848, %v847
  %v945 = vpack.c.b16 %v850, %v849
  %v946 = vpack.c.b16 %v852, %v851
  %v947 = vpack.c.b16 %v854, %v853
  %v948 = vpack.c.b16 %v856, %v855
  %v949 = vpack.c.b16 %v858, %v857
  %v950 = vpack.c.b16 %v860, %v859
  %v951 = vpack.c.b16 %v862, %v861
  %v952 = vpack.c.b16 %v864, %v863
  %v953 = vpack.c.b16 %v866, %v865
  %v954 = vpack.c.b16 %v868, %v867
  %v955 = vpack.c.b16 %v870, %v869
  %v956 = vpack.c.b16 %v872, %v871
  %v957 = vpack.c.b16 %v874, %v873
  %v958 = vpack.c.b16 %v876, %v875
  %v959 = vpack.c.b16 %v878, %v877
  %v960 = vpack.c.b16 %v880, %v879
  %v961 = vpack.c.b16 %v882, %v881
  %v962 = vpack.c.b16 %v884, %v883
  %v963 = vpack.c.b16 %v886, %v885
  %v964 = vpack.c.b16 %v888, %v887
  %v965 = vpack.c.b16 %v890, %v889
  %v966 = vpack.c.b16 %v892, %v891
  %v967 = vpack.c.b16 %v894, %v893
  %v968 = vpack.c.b16 %v896, %v895
  %1041 = vmatpush.bf16.msra.mxu0 %v904
  %1042 = vmatpush.bf16.msra.mxu0 %v903
  %1043 = vmatpush.bf16.msra.mxu0 %v902
  %1044 = vmatpush.bf16.msra.mxu0 %v901
  %1045 = vmatpush.bf16.msra.mxu0 %v900
  %1046 = vmatpush.bf16.msra.mxu0 %v899
  %1047 = vmatpush.bf16.msra.mxu0 %v898
  %1048 = vmatpush.bf16.msra.mxu0 %v897
  %1049 = vmatmul.bf16.gmra.mxu0 %v465
  %v1050 = vpop.f32.mrf.mxu0
  %v1051 = vadd.f32 0.0, %v1050
  %v1052 = vpop.f32.mrf.mxu0
  %v1053 = vadd.f32 0.0, %v1052
  %1054 = vmatmul.bf16.gmra.mxu0 %v474
  %v1055 = vpop.f32.mrf.mxu0
  %v1056 = vadd.f32 0.0, %v1055
  %v1057 = vpop.f32.mrf.mxu0
  %v1058 = vadd.f32 0.0, %v1057
  %1059 = vmatmul.bf16.gmra.mxu0 %v483
  %v1060 = vpop.f32.mrf.mxu0
  %v1061 = vadd.f32 0.0, %v1060
  %v1062 = vpop.f32.mrf.mxu0
  %v1063 = vadd.f32 0.0, %v1062
  %1064 = vmatmul.bf16.gmra.mxu0 %v492
  %v1065 = vpop.f32.mrf.mxu0
  %v1066 = vadd.f32 0.0, %v1065
  %v1067 = vpop.f32.mrf.mxu0
  %v1068 = vadd.f32 0.0, %v1067
  %1069 = vmatmul.bf16.gmra.mxu0 %v501
  %v1070 = vpop.f32.mrf.mxu0
  %v1071 = vadd.f32 0.0, %v1070
  %v1072 = vpop.f32.mrf.mxu0
  %v1073 = vadd.f32 0.0, %v1072
  %1074 = vmatmul.bf16.gmra.mxu0 %v510
  %v1075 = vpop.f32.mrf.mxu0
  %v1076 = vadd.f32 0.0, %v1075
  %v1077 = vpop.f32.mrf.mxu0
  %v1078 = vadd.f32 0.0, %v1077
  %1079 = vmatmul.bf16.gmra.mxu0 %v519
  %v1080 = vpop.f32.mrf.mxu0
  %v1081 = vadd.f32 0.0, %v1080
  %v1082 = vpop.f32.mrf.mxu0
  %v1083 = vadd.f32 0.0, %v1082
  %1084 = vmatmul.bf16.gmra.mxu0 %v528
  %v1085 = vpop.f32.mrf.mxu0
  %v1086 = vadd.f32 0.0, %v1085
  %v1087 = vpop.f32.mrf.mxu0
  %v1088 = vadd.f32 0.0, %v1087
  %1089 = vdwg.mxu0
  %1090 = vmatpush.bf16.msra.mxu0 %v912
  %1091 = vmatpush.bf16.msra.mxu0 %v911
  %1092 = vmatpush.bf16.msra.mxu0 %v910
  %1093 = vmatpush.bf16.msra.mxu0 %v909
  %1094 = vmatpush.bf16.msra.mxu0 %v908
  %1095 = vmatpush.bf16.msra.mxu0 %v907
  %1096 = vmatpush.bf16.msra.mxu0 %v906
  %1097 = vmatpush.bf16.msra.mxu0 %v905
  %1098 = vmatmul.bf16.gmra.mxu0 %v466
  %v1099 = vpop.f32.mrf.mxu0
  %v1100 = vadd.f32 %v1051, %v1099
  %v1101 = vpop.f32.mrf.mxu0
  %v1102 = vadd.f32 %v1053, %v1101
  %1103 = vmatmul.bf16.gmra.mxu0 %v475
  %v1104 = vpop.f32.mrf.mxu0
  %v1105 = vadd.f32 %v1056, %v1104
  %v1106 = vpop.f32.mrf.mxu0
  %v1107 = vadd.f32 %v1058, %v1106
  %1108 = vmatmul.bf16.gmra.mxu0 %v484
  %v1109 = vpop.f32.mrf.mxu0
  %v1110 = vadd.f32 %v1061, %v1109
  %v1111 = vpop.f32.mrf.mxu0
  %v1112 = vadd.f32 %v1063, %v1111
  %1113 = vmatmul.bf16.gmra.mxu0 %v493
  %v1114 = vpop.f32.mrf.mxu0
  %v1115 = vadd.f32 %v1066, %v1114
  %v1116 = vpop.f32.mrf.mxu0
  %v1117 = vadd.f32 %v1068, %v1116
  %1118 = vmatmul.bf16.gmra.mxu0 %v502
  %v1119 = vpop.f32.mrf.mxu0
  %v1120 = vadd.f32 %v1071, %v1119
  %v1121 = vpop.f32.mrf.mxu0
  %v1122 = vadd.f32 %v1073, %v1121
  %1123 = vmatmul.bf16.gmra.mxu0 %v511
  %v1124 = vpop.f32.mrf.mxu0
  %v1125 = vadd.f32 %v1076, %v1124
  %v1126 = vpop.f32.mrf.mxu0
  %v1127 = vadd.f32 %v1078, %v1126
  %1128 = vmatmul.bf16.gmra.mxu0 %v520
  %v1129 = vpop.f32.mrf.mxu0
  %v1130 = vadd.f32 %v1081, %v1129
  %v1131 = vpop.f32.mrf.mxu0
  %v1132 = vadd.f32 %v1083, %v1131
  %1133 = vmatmul.bf16.gmra.mxu0 %v529
  %v1134 = vpop.f32.mrf.mxu0
  %v1135 = vadd.f32 %v1086, %v1134
  %v1136 = vpop.f32.mrf.mxu0
  %v1137 = vadd.f32 %v1088, %v1136
  %1138 = vdwg.mxu0
  %1139 = vmatpush.bf16.msra.mxu0 %v920
  %1140 = vmatpush.bf16.msra.mxu0 %v919
  %1141 = vmatpush.bf16.msra.mxu0 %v918
  %1142 = vmatpush.bf16.msra.mxu0 %v917
  %1143 = vmatpush.bf16.msra.mxu0 %v916
  %1144 = vmatpush.bf16.msra.mxu0 %v915
  %1145 = vmatpush.bf16.msra.mxu0 %v914
  %1146 = vmatpush.bf16.msra.mxu0 %v913
  %1147 = vmatmul.bf16.gmra.mxu0 %v467
  %v1148 = vpop.f32.mrf.mxu0
  %v1149 = vadd.f32 %v1100, %v1148
  %v1150 = vpop.f32.mrf.mxu0
  %v1151 = vadd.f32 %v1102, %v1150
  %1152 = vmatmul.bf16.gmra.mxu0 %v476
  %v1153 = vpop.f32.mrf.mxu0
  %v1154 = vadd.f32 %v1105, %v1153
  %v1155 = vpop.f32.mrf.mxu0
  %v1156 = vadd.f32 %v1107, %v1155
  %1157 = vmatmul.bf16.gmra.mxu0 %v485
  %v1158 = vpop.f32.mrf.mxu0
  %v1159 = vadd.f32 %v1110, %v1158
  %v1160 = vpop.f32.mrf.mxu0
  %v1161 = vadd.f32 %v1112, %v1160
  %1162 = vmatmul.bf16.gmra.mxu0 %v494
  %v1163 = vpop.f32.mrf.mxu0
  %v1164 = vadd.f32 %v1115, %v1163
  %v1165 = vpop.f32.mrf.mxu0
  %v1166 = vadd.f32 %v1117, %v1165
  %1167 = vmatmul.bf16.gmra.mxu0 %v503
  %v1168 = vpop.f32.mrf.mxu0
  %v1169 = vadd.f32 %v1120, %v1168
  %v1170 = vpop.f32.mrf.mxu0
  %v1171 = vadd.f32 %v1122, %v1170
  %1172 = vmatmul.bf16.gmra.mxu0 %v512
  %v1173 = vpop.f32.mrf.mxu0
  %v1174 = vadd.f32 %v1125, %v1173
  %v1175 = vpop.f32.mrf.mxu0
  %v1176 = vadd.f32 %v1127, %v1175
  %1177 = vmatmul.bf16.gmra.mxu0 %v521
  %v1178 = vpop.f32.mrf.mxu0
  %v1179 = vadd.f32 %v1130, %v1178
  %v1180 = vpop.f32.mrf.mxu0
  %v1181 = vadd.f32 %v1132, %v1180
  %1182 = vmatmul.bf16.gmra.mxu0 %v530
  %v1183 = vpop.f32.mrf.mxu0
  %v1184 = vadd.f32 %v1135, %v1183
  %v1185 = vpop.f32.mrf.mxu0
  %v1186 = vadd.f32 %v1137, %v1185
  %1187 = vdwg.mxu0
  %1188 = vmatpush.bf16.msra.mxu0 %v928
  %1189 = vmatpush.bf16.msra.mxu0 %v927
  %1190 = vmatpush.bf16.msra.mxu0 %v926
  %1191 = vmatpush.bf16.msra.mxu0 %v925
  %1192 = vmatpush.bf16.msra.mxu0 %v924
  %1193 = vmatpush.bf16.msra.mxu0 %v923
  %1194 = vmatpush.bf16.msra.mxu0 %v922
  %1195 = vmatpush.bf16.msra.mxu0 %v921
  %1196 = vmatmul.bf16.gmra.mxu0 %v468
  %v1197 = vpop.f32.mrf.mxu0
  %v1198 = vadd.f32 %v1149, %v1197
  %v1199 = vpop.f32.mrf.mxu0
  %v1200 = vadd.f32 %v1151, %v1199
  %1201 = vmatmul.bf16.gmra.mxu0 %v477
  %v1202 = vpop.f32.mrf.mxu0
  %v1203 = vadd.f32 %v1154, %v1202
  %v1204 = vpop.f32.mrf.mxu0
  %v1205 = vadd.f32 %v1156, %v1204
  %1206 = vmatmul.bf16.gmra.mxu0 %v486
  %v1207 = vpop.f32.mrf.mxu0
  %v1208 = vadd.f32 %v1159, %v1207
  %v1209 = vpop.f32.mrf.mxu0
  %v1210 = vadd.f32 %v1161, %v1209
  %1211 = vmatmul.bf16.gmra.mxu0 %v495
  %v1212 = vpop.f32.mrf.mxu0
  %v1213 = vadd.f32 %v1164, %v1212
  %v1214 = vpop.f32.mrf.mxu0
  %v1215 = vadd.f32 %v1166, %v1214
  %1216 = vmatmul.bf16.gmra.mxu0 %v504
  %v1217 = vpop.f32.mrf.mxu0
  %v1218 = vadd.f32 %v1169, %v1217
  %v1219 = vpop.f32.mrf.mxu0
  %v1220 = vadd.f32 %v1171, %v1219
  %1221 = vmatmul.bf16.gmra.mxu0 %v513
  %v1222 = vpop.f32.mrf.mxu0
  %v1223 = vadd.f32 %v1174, %v1222
  %v1224 = vpop.f32.mrf.mxu0
  %v1225 = vadd.f32 %v1176, %v1224
  %1226 = vmatmul.bf16.gmra.mxu0 %v522
  %v1227 = vpop.f32.mrf.mxu0
  %v1228 = vadd.f32 %v1179, %v1227
  %v1229 = vpop.f32.mrf.mxu0
  %v1230 = vadd.f32 %v1181, %v1229
  %1231 = vmatmul.bf16.gmra.mxu0 %v531
  %v1232 = vpop.f32.mrf.mxu0
  %v1233 = vadd.f32 %v1184, %v1232
  %v1234 = vpop.f32.mrf.mxu0
  %v1235 = vadd.f32 %v1186, %v1234
  %1236 = vdwg.mxu0
  %1237 = vmatpush.bf16.msra.mxu0 %v936
  %1238 = vmatpush.bf16.msra.mxu0 %v935
  %1239 = vmatpush.bf16.msra.mxu0 %v934
  %1240 = vmatpush.bf16.msra.mxu0 %v933
  %1241 = vmatpush.bf16.msra.mxu0 %v932
  %1242 = vmatpush.bf16.msra.mxu0 %v931
  %1243 = vmatpush.bf16.msra.mxu0 %v930
  %1244 = vmatpush.bf16.msra.mxu0 %v929
  %1245 = vmatmul.bf16.gmra.mxu0 %v469
  %v1246 = vpop.f32.mrf.mxu0
  %v1247 = vadd.f32 %v1198, %v1246
  %v1248 = vpop.f32.mrf.mxu0
  %v1249 = vadd.f32 %v1200, %v1248
  %1250 = vmatmul.bf16.gmra.mxu0 %v478
  %v1251 = vpop.f32.mrf.mxu0
  %v1252 = vadd.f32 %v1203, %v1251
  %v1253 = vpop.f32.mrf.mxu0
  %v1254 = vadd.f32 %v1205, %v1253
  %1255 = vmatmul.bf16.gmra.mxu0 %v487
  %v1256 = vpop.f32.mrf.mxu0
  %v1257 = vadd.f32 %v1208, %v1256
  %v1258 = vpop.f32.mrf.mxu0
  %v1259 = vadd.f32 %v1210, %v1258
  %1260 = vmatmul.bf16.gmra.mxu0 %v496
  %v1261 = vpop.f32.mrf.mxu0
  %v1262 = vadd.f32 %v1213, %v1261
  %v1263 = vpop.f32.mrf.mxu0
  %v1264 = vadd.f32 %v1215, %v1263
  %1265 = vmatmul.bf16.gmra.mxu0 %v505
  %v1266 = vpop.f32.mrf.mxu0
  %v1267 = vadd.f32 %v1218, %v1266
  %v1268 = vpop.f32.mrf.mxu0
  %v1269 = vadd.f32 %v1220, %v1268
  %1270 = vmatmul.bf16.gmra.mxu0 %v514
  %v1271 = vpop.f32.mrf.mxu0
  %v1272 = vadd.f32 %v1223, %v1271
  %v1273 = vpop.f32.mrf.mxu0
  %v1274 = vadd.f32 %v1225, %v1273
  %1275 = vmatmul.bf16.gmra.mxu0 %v523
  %v1276 = vpop.f32.mrf.mxu0
  %v1277 = vadd.f32 %v1228, %v1276
  %v1278 = vpop.f32.mrf.mxu0
  %v1279 = vadd.f32 %v1230, %v1278
  %1280 = vmatmul.bf16.gmra.mxu0 %v532
  %v1281 = vpop.f32.mrf.mxu0
  %v1282 = vadd.f32 %v1233, %v1281
  %v1283 = vpop.f32.mrf.mxu0
  %v1284 = vadd.f32 %v1235, %v1283
  %1285 = vdwg.mxu0
  %1286 = vmatpush.bf16.msra.mxu0 %v944
  %1287 = vmatpush.bf16.msra.mxu0 %v943
  %1288 = vmatpush.bf16.msra.mxu0 %v942
  %1289 = vmatpush.bf16.msra.mxu0 %v941
  %1290 = vmatpush.bf16.msra.mxu0 %v940
  %1291 = vmatpush.bf16.msra.mxu0 %v939
  %1292 = vmatpush.bf16.msra.mxu0 %v938
  %1293 = vmatpush.bf16.msra.mxu0 %v937
  %1294 = vmatmul.bf16.gmra.mxu0 %v470
  %v1295 = vpop.f32.mrf.mxu0
  %v1296 = vadd.f32 %v1247, %v1295
  %v1297 = vpop.f32.mrf.mxu0
  %v1298 = vadd.f32 %v1249, %v1297
  %1299 = vmatmul.bf16.gmra.mxu0 %v479
  %v1300 = vpop.f32.mrf.mxu0
  %v1301 = vadd.f32 %v1252, %v1300
  %v1302 = vpop.f32.mrf.mxu0
  %v1303 = vadd.f32 %v1254, %v1302
  %1304 = vmatmul.bf16.gmra.mxu0 %v488
  %v1305 = vpop.f32.mrf.mxu0
  %v1306 = vadd.f32 %v1257, %v1305
  %v1307 = vpop.f32.mrf.mxu0
  %v1308 = vadd.f32 %v1259, %v1307
  %1309 = vmatmul.bf16.gmra.mxu0 %v497
  %v1310 = vpop.f32.mrf.mxu0
  %v1311 = vadd.f32 %v1262, %v1310
  %v1312 = vpop.f32.mrf.mxu0
  %v1313 = vadd.f32 %v1264, %v1312
  %1314 = vmatmul.bf16.gmra.mxu0 %v506
  %v1315 = vpop.f32.mrf.mxu0
  %v1316 = vadd.f32 %v1267, %v1315
  %v1317 = vpop.f32.mrf.mxu0
  %v1318 = vadd.f32 %v1269, %v1317
  %1319 = vmatmul.bf16.gmra.mxu0 %v515
  %v1320 = vpop.f32.mrf.mxu0
  %v1321 = vadd.f32 %v1272, %v1320
  %v1322 = vpop.f32.mrf.mxu0
  %v1323 = vadd.f32 %v1274, %v1322
  %1324 = vmatmul.bf16.gmra.mxu0 %v524
  %v1325 = vpop.f32.mrf.mxu0
  %v1326 = vadd.f32 %v1277, %v1325
  %v1327 = vpop.f32.mrf.mxu0
  %v1328 = vadd.f32 %v1279, %v1327
  %1329 = vmatmul.bf16.gmra.mxu0 %v533
  %v1330 = vpop.f32.mrf.mxu0
  %v1331 = vadd.f32 %v1282, %v1330
  %v1332 = vpop.f32.mrf.mxu0
  %v1333 = vadd.f32 %v1284, %v1332
  %1334 = vdwg.mxu0
  %1335 = vmatpush.bf16.msra.mxu0 %v952
  %1336 = vmatpush.bf16.msra.mxu0 %v951
  %1337 = vmatpush.bf16.msra.mxu0 %v950
  %1338 = vmatpush.bf16.msra.mxu0 %v949
  %1339 = vmatpush.bf16.msra.mxu0 %v948
  %1340 = vmatpush.bf16.msra.mxu0 %v947
  %1341 = vmatpush.bf16.msra.mxu0 %v946
  %1342 = vmatpush.bf16.msra.mxu0 %v945
  %1343 = vmatmul.bf16.gmra.mxu0 %v471
  %v1344 = vpop.f32.mrf.mxu0
  %v1345 = vadd.f32 %v1296, %v1344
  %v1346 = vpop.f32.mrf.mxu0
  %v1347 = vadd.f32 %v1298, %v1346
  %1348 = vmatmul.bf16.gmra.mxu0 %v480
  %v1349 = vpop.f32.mrf.mxu0
  %v1350 = vadd.f32 %v1301, %v1349
  %v1351 = vpop.f32.mrf.mxu0
  %v1352 = vadd.f32 %v1303, %v1351
  %1353 = vmatmul.bf16.gmra.mxu0 %v489
  %v1354 = vpop.f32.mrf.mxu0
  %v1355 = vadd.f32 %v1306, %v1354
  %v1356 = vpop.f32.mrf.mxu0
  %v1357 = vadd.f32 %v1308, %v1356
  %1358 = vmatmul.bf16.gmra.mxu0 %v498
  %v1359 = vpop.f32.mrf.mxu0
  %v1360 = vadd.f32 %v1311, %v1359
  %v1361 = vpop.f32.mrf.mxu0
  %v1362 = vadd.f32 %v1313, %v1361
  %1363 = vmatmul.bf16.gmra.mxu0 %v507
  %v1364 = vpop.f32.mrf.mxu0
  %v1365 = vadd.f32 %v1316, %v1364
  %v1366 = vpop.f32.mrf.mxu0
  %v1367 = vadd.f32 %v1318, %v1366
  %1368 = vmatmul.bf16.gmra.mxu0 %v516
  %v1369 = vpop.f32.mrf.mxu0
  %v1370 = vadd.f32 %v1321, %v1369
  %v1371 = vpop.f32.mrf.mxu0
  %v1372 = vadd.f32 %v1323, %v1371
  %1373 = vmatmul.bf16.gmra.mxu0 %v525
  %v1374 = vpop.f32.mrf.mxu0
  %v1375 = vadd.f32 %v1326, %v1374
  %v1376 = vpop.f32.mrf.mxu0
  %v1377 = vadd.f32 %v1328, %v1376
  %1378 = vmatmul.bf16.gmra.mxu0 %v534
  %v1379 = vpop.f32.mrf.mxu0
  %v1380 = vadd.f32 %v1331, %v1379
  %v1381 = vpop.f32.mrf.mxu0
  %v1382 = vadd.f32 %v1333, %v1381
  %1383 = vdwg.mxu0
  %1384 = vmatpush.bf16.msra.mxu0 %v960
  %1385 = vmatpush.bf16.msra.mxu0 %v959
  %1386 = vmatpush.bf16.msra.mxu0 %v958
  %1387 = vmatpush.bf16.msra.mxu0 %v957
  %1388 = vmatpush.bf16.msra.mxu0 %v956
  %1389 = vmatpush.bf16.msra.mxu0 %v955
  %1390 = vmatpush.bf16.msra.mxu0 %v954
  %1391 = vmatpush.bf16.msra.mxu0 %v953
  %1392 = vmatmul.bf16.gmra.mxu0 %v472
  %v1393 = vpop.f32.mrf.mxu0
  %v1394 = vadd.f32 %v1345, %v1393
  %v1395 = vpop.f32.mrf.mxu0
  %v1396 = vadd.f32 %v1347, %v1395
  %1397 = vmatmul.bf16.gmra.mxu0 %v481
  %v1398 = vpop.f32.mrf.mxu0
  %v1399 = vadd.f32 %v1350, %v1398
  %v1400 = vpop.f32.mrf.mxu0
  %v1401 = vadd.f32 %v1352, %v1400
  %1402 = vmatmul.bf16.gmra.mxu0 %v490
  %v1403 = vpop.f32.mrf.mxu0
  %v1404 = vadd.f32 %v1355, %v1403
  %v1405 = vpop.f32.mrf.mxu0
  %v1406 = vadd.f32 %v1357, %v1405
  %1407 = vmatmul.bf16.gmra.mxu0 %v499
  %v1408 = vpop.f32.mrf.mxu0
  %v1409 = vadd.f32 %v1360, %v1408
  %v1410 = vpop.f32.mrf.mxu0
  %v1411 = vadd.f32 %v1362, %v1410
  %1412 = vmatmul.bf16.gmra.mxu0 %v508
  %v1413 = vpop.f32.mrf.mxu0
  %v1414 = vadd.f32 %v1365, %v1413
  %v1415 = vpop.f32.mrf.mxu0
  %v1416 = vadd.f32 %v1367, %v1415
  %1417 = vmatmul.bf16.gmra.mxu0 %v517
  %v1418 = vpop.f32.mrf.mxu0
  %v1419 = vadd.f32 %v1370, %v1418
  %v1420 = vpop.f32.mrf.mxu0
  %v1421 = vadd.f32 %v1372, %v1420
  %1422 = vmatmul.bf16.gmra.mxu0 %v526
  %v1423 = vpop.f32.mrf.mxu0
  %v1424 = vadd.f32 %v1375, %v1423
  %v1425 = vpop.f32.mrf.mxu0
  %v1426 = vadd.f32 %v1377, %v1425
  %1427 = vmatmul.bf16.gmra.mxu0 %v535
  %v1428 = vpop.f32.mrf.mxu0
  %v1429 = vadd.f32 %v1380, %v1428
  %v1430 = vpop.f32.mrf.mxu0
  %v1431 = vadd.f32 %v1382, %v1430
  %1432 = vdwg.mxu0
  %1433 = vmatpush.bf16.msra.mxu0 %v968
  %1434 = vmatpush.bf16.msra.mxu0 %v967
  %1435 = vmatpush.bf16.msra.mxu0 %v966
  %1436 = vmatpush.bf16.msra.mxu0 %v965
  %1437 = vmatpush.bf16.msra.mxu0 %v964
  %1438 = vmatpush.bf16.msra.mxu0 %v963
  %1439 = vmatpush.bf16.msra.mxu0 %v962
  %1440 = vmatpush.bf16.msra.mxu0 %v961
  %1441 = vmatmul.bf16.gmra.mxu0 %v473
  %v1442 = vpop.f32.mrf.mxu0
  %v1443 = vadd.f32 %v1394, %v1442
  %v1444 = vpop.f32.mrf.mxu0
  %v1445 = vadd.f32 %v1396, %v1444
  %1446 = vmatmul.bf16.gmra.mxu0 %v482
  %v1447 = vpop.f32.mrf.mxu0
  %v1448 = vadd.f32 %v1399, %v1447
  %v1449 = vpop.f32.mrf.mxu0
  %v1450 = vadd.f32 %v1401, %v1449
  %1451 = vmatmul.bf16.gmra.mxu0 %v491
  %v1452 = vpop.f32.mrf.mxu0
  %v1453 = vadd.f32 %v1404, %v1452
  %v1454 = vpop.f32.mrf.mxu0
  %v1455 = vadd.f32 %v1406, %v1454
  %1456 = vmatmul.bf16.gmra.mxu0 %v500
  %v1457 = vpop.f32.mrf.mxu0
  %v1458 = vadd.f32 %v1409, %v1457
  %v1459 = vpop.f32.mrf.mxu0
  %v1460 = vadd.f32 %v1411, %v1459
  %1461 = vmatmul.bf16.gmra.mxu0 %v509
  %v1462 = vpop.f32.mrf.mxu0
  %v1463 = vadd.f32 %v1414, %v1462
  %v1464 = vpop.f32.mrf.mxu0
  %v1465 = vadd.f32 %v1416, %v1464
  %1466 = vmatmul.bf16.gmra.mxu0 %v518
  %v1467 = vpop.f32.mrf.mxu0
  %v1468 = vadd.f32 %v1419, %v1467
  %v1469 = vpop.f32.mrf.mxu0
  %v1470 = vadd.f32 %v1421, %v1469
  %1471 = vmatmul.bf16.gmra.mxu0 %v527
  %v1472 = vpop.f32.mrf.mxu0
  %v1473 = vadd.f32 %v1424, %v1472
  %v1474 = vpop.f32.mrf.mxu0
  %v1475 = vadd.f32 %v1426, %v1474
  %1476 = vmatmul.bf16.gmra.mxu0 %v536
  %v1477 = vpop.f32.mrf.mxu0
  %v1478 = vadd.f32 %v1429, %v1477
  %v1479 = vpop.f32.mrf.mxu0
  %v1480 = vadd.f32 %v1431, %v1479
  %1481 = vdwg.mxu0
  %v1482 = vld [vmem:[%s2] sm:$0x1]
  %v1484 = vperm.slane %v1482, 0
  %v1486 = vmul.f32 %v1443, %v1484
  %v1487 = vmul.f32 %v1445, %v1484
  %v1488 = vmul.f32 %v1448, %v1484
  %v1489 = vmul.f32 %v1450, %v1484
  %v1490 = vmul.f32 %v1453, %v1484
  %v1491 = vmul.f32 %v1455, %v1484
  %v1492 = vmul.f32 %v1458, %v1484
  %v1493 = vmul.f32 %v1460, %v1484
  %v1494 = vmul.f32 %v1463, %v1484
  %v1495 = vmul.f32 %v1465, %v1484
  %v1496 = vmul.f32 %v1468, %v1484
  %v1497 = vmul.f32 %v1470, %v1484
  %v1498 = vmul.f32 %v1473, %v1484
  %v1499 = vmul.f32 %v1475, %v1484
  %v1500 = vmul.f32 %v1478, %v1484
  %v1501 = vmul.f32 %v1480, %v1484
  %v1502 = vld [vmem:[%s3] sm:$0x1]
  %v1504 = vperm.slane %v1502, 0
  %v1506 = vadd.f32 %v1486, %v1504
  %v1507 = vadd.f32 %v1487, %v1504
  %v1508 = vadd.f32 %v1488, %v1504
  %v1509 = vadd.f32 %v1489, %v1504
  %v1510 = vadd.f32 %v1490, %v1504
  %v1511 = vadd.f32 %v1491, %v1504
  %v1512 = vadd.f32 %v1492, %v1504
  %v1513 = vadd.f32 %v1493, %v1504
  %v1514 = vadd.f32 %v1494, %v1504
  %v1515 = vadd.f32 %v1495, %v1504
  %v1516 = vadd.f32 %v1496, %v1504
  %v1517 = vadd.f32 %v1497, %v1504
  %v1518 = vadd.f32 %v1498, %v1504
  %v1519 = vadd.f32 %v1499, %v1504
  %v1520 = vadd.f32 %v1500, %v1504
  %v1521 = vadd.f32 %v1501, %v1504
  %v1522 = vmax.f32 %v1506, 0.0
  %v1523 = vmax.f32 %v1507, 0.0
  %v1524 = vmax.f32 %v1508, 0.0
  %v1525 = vmax.f32 %v1509, 0.0
  %v1526 = vmax.f32 %v1510, 0.0
  %v1527 = vmax.f32 %v1511, 0.0
  %v1528 = vmax.f32 %v1512, 0.0
  %v1529 = vmax.f32 %v1513, 0.0
  %v1530 = vmax.f32 %v1514, 0.0
  %v1531 = vmax.f32 %v1515, 0.0
  %v1532 = vmax.f32 %v1516, 0.0
  %v1533 = vmax.f32 %v1517, 0.0
  %v1534 = vmax.f32 %v1518, 0.0
  %v1535 = vmax.f32 %v1519, 0.0
  %v1536 = vmax.f32 %v1520, 0.0
  %v1537 = vmax.f32 %v1521, 0.0
  %1538 = vst [vmem:[%s4] sm:$0xff] %v1522
  %1539 = vst [vmem:[%s4 + $0x8] sm:$0xff] %v1523
  %1540 = vst [vmem:[%s4 + $0x10] sm:$0xff] %v1524
  %1541 = vst [vmem:[%s4 + $0x18] sm:$0xff] %v1525
  %1542 = vst [vmem:[%s4 + $0x20] sm:$0xff] %v1526
  %1543 = vst [vmem:[%s4 + $0x28] sm:$0xff] %v1527
  %1544 = vst [vmem:[%s4 + $0x30] sm:$0xff] %v1528
  %1545 = vst [vmem:[%s4 + $0x38] sm:$0xff] %v1529
  %1546 = vst [vmem:[%s4 + $0x40] sm:$0xff] %v1530
  %1547 = vst [vmem:[%s4 + $0x48] sm:$0xff] %v1531
  %1548 = vst [vmem:[%s4 + $0x50] sm:$0xff] %v1532
  %1549 = vst [vmem:[%s4 + $0x58] sm:$0xff] %v1533
  %1550 = vst [vmem:[%s4 + $0x60] sm:$0xff] %v1534
  %1551 = vst [vmem:[%s4 + $0x68] sm:$0xff] %v1535
  %1552 = vst [vmem:[%s4 + $0x70] sm:$0xff] %v1536
  %1553 = vst [vmem:[%s4 + $0x78] sm:$0xff] %v1537
  // Predicated region
  $region18: #{capsule_network_forward.6} parent=0 // pred_check
    _
  $region19: #{capsule_network_forward.6} parent=0 // pred_check_branch
    %1555 = sbr.rel (0) target = $region21
  $region20: #{capsule_network_forward.6} parent=0 // pred_region
    _
  $region21: #{capsule_network_forward.6} parent=0 // pred_fallthru
    _
  // Predicated region
  $region22: #{capsule_network_forward.6} parent=0 // pred_check
    _
  $region23: #{capsule_network_forward.6} parent=0 // pred_check_branch
    %1557 = sbr.rel (0) target = $region25
  $region24: #{capsule_network_forward.6} parent=0 // pred_region
    _
  $region25: #{capsule_network_forward.6} parent=0 // pred_fallthru
    _

// kernel: capsule_network_forward.7
$region0: #{capsule_network_forward.7}
  #allocation0 [shape = 'u32[]', space=smem, size = 0x4, offset = 0x4, fixed_abs, tag = 'smem constant byte address 0x4 - core index']
  #allocation1 [shape = 'u32[72,128]{1,0:T(1,128)}', space=vmem, size = 0x9000, scoped, tag = 'internal scratch']
  %s0 = inlined_call_operand.vmem [shape: bf16[128,1152], index: 0, kind: input, shape index: {}]
  %s1 = inlined_call_operand.vmem [shape: bf16[1152,256], index: 1, kind: input, shape index: {}]
  %s2 = inlined_call_operand.vmem [shape: f32[1,256], index: 2, kind: input, shape index: {}]
  %s3 = inlined_call_operand.vmem [shape: f32[1,256], index: 3, kind: input, shape index: {}]
  %s4 = inlined_call_operand.vmem [shape: f32[128,256], index: 4, kind: output, shape index: {}]
  %s5 = sld [smem:[#allocation0]]
  $region26: #{capsule_network_forward.7} parent=0
    _
  %s7 = ssub.s32 1, %s5
  %s8 = scalar_select 0, %s7, %s5
  // Predicated region
  $region2: #{capsule_network_forward.7} parent=0 // pred_check
    _
  $region3: #{capsule_network_forward.7} parent=0 // pred_check_branch
    %10 = sbr.rel (0) target = $region5
  $region4: #{capsule_network_forward.7} parent=0 // pred_region
    _
  $region5: #{capsule_network_forward.7} parent=0 // pred_fallthru
    _
  // Predicated region
  $region6: #{capsule_network_forward.7} parent=0 // pred_check
    _
  $region7: #{capsule_network_forward.7} parent=0 // pred_check_branch
    %12 = sbr.rel (0) target = $region9
  $region8: #{capsule_network_forward.7} parent=0 // pred_region
    _
  $region9: #{capsule_network_forward.7} parent=0 // pred_fallthru
    _
  // Predicated region
  $region10: #{capsule_network_forward.7} parent=0 // pred_check
    _
  $region11: #{capsule_network_forward.7} parent=0 // pred_check_branch
    %14 = sbr.rel (0) target = $region13
  $region12: #{capsule_network_forward.7} parent=0 // pred_region
    _
  $region13: #{capsule_network_forward.7} parent=0 // pred_fallthru
    _
  // Predicated region
  $region14: #{capsule_network_forward.7} parent=0 // pred_check
    _
  $region15: #{capsule_network_forward.7} parent=0 // pred_check_branch
    %16 = sbr.rel (0) target = $region17
  $region16: #{capsule_network_forward.7} parent=0 // pred_region
    _
  $region17: #{capsule_network_forward.7} parent=0 // pred_fallthru
    _
  %v17 = vld [vmem:[%s0] sm:$0xff]
  %v18 = vld [vmem:[%s0 + $0x8] sm:$0xff]
  %v19 = vld [vmem:[%s0 + $0x10] sm:$0xff]
  %v20 = vld [vmem:[%s0 + $0x18] sm:$0xff]
  %v21 = vld [vmem:[%s0 + $0x20] sm:$0xf]
  %v22 = vld [vmem:[%s0 + $0x24] sm:$0xff]
  %v23 = vld [vmem:[%s0 + $0x2c] sm:$0xff]
  %v24 = vld [vmem:[%s0 + $0x34] sm:$0xff]
  %v25 = vld [vmem:[%s0 + $0x3c] sm:$0xff]
  %v26 = vld [vmem:[%s0 + $0x44] sm:$0xf]
  %v27 = vld [vmem:[%s0 + $0x48] sm:$0xff]
  %v28 = vld [vmem:[%s0 + $0x50] sm:$0xff]
  %v29 = vld [vmem:[%s0 + $0x58] sm:$0xff]
  %v30 = vld [vmem:[%s0 + $0x60] sm:$0xff]
  %v31 = vld [vmem:[%s0 + $0x68] sm:$0xf]
  %v32 = vld [vmem:[%s0 + $0x6c] sm:$0xff]
  %v33 = vld [vmem:[%s0 + $0x74] sm:$0xff]
  %v34 = vld [vmem:[%s0 + $0x7c] sm:$0xff]
  %v35 = vld [vmem:[%s0 + $0x84] sm:$0xff]
  %v36 = vld [vmem:[%s0 + $0x8c] sm:$0xf]
  %v37 = vld [vmem:[%s0 + $0x90] sm:$0xff]
  %v38 = vld [vmem:[%s0 + $0x98] sm:$0xff]
  %v39 = vld [vmem:[%s0 + $0xa0] sm:$0xff]
  %v40 = vld [vmem:[%s0 + $0xa8] sm:$0xff]
  %v41 = vld [vmem:[%s0 + $0xb0] sm:$0xf]
  %v42 = vld [vmem:[%s0 + $0xb4] sm:$0xff]
  %v43 = vld [vmem:[%s0 + $0xbc] sm:$0xff]
  %v44 = vld [vmem:[%s0 + $0xc4] sm:$0xff]
  %v45 = vld [vmem:[%s0 + $0xcc] sm:$0xff]
  %v46 = vld [vmem:[%s0 + $0xd4] sm:$0xf]
  %v47 = vld [vmem:[%s0 + $0xd8] sm:$0xff]
  %v48 = vld [vmem:[%s0 + $0xe0] sm:$0xff]
  %v49 = vld [vmem:[%s0 + $0xe8] sm:$0xff]
  %v50 = vld [vmem:[%s0 + $0xf0] sm:$0xff]
  %v51 = vld [vmem:[%s0 + $0xf8] sm:$0xf]
  %v52 = vld [vmem:[%s0 + $0xfc] sm:$0xff]
  %v53 = vld [vmem:[%s0 + $0x104] sm:$0xff]
  %v54 = vld [vmem:[%s0 + $0x10c] sm:$0xff]
  %v55 = vld [vmem:[%s0 + $0x114] sm:$0xff]
  %v56 = vld [vmem:[%s0 + $0x11c] sm:$0xf]
  %v57 = vld [vmem:[%s0 + $0x120] sm:$0xff]
  %v58 = vld [vmem:[%s0 + $0x128] sm:$0xff]
  %v59 = vld [vmem:[%s0 + $0x130] sm:$0xff]
  %v60 = vld [vmem:[%s0 + $0x138] sm:$0xff]
  %v61 = vld [vmem:[%s0 + $0x140] sm:$0xf]
  %v62 = vld [vmem:[%s0 + $0x144] sm:$0xff]
  %v63 = vld [vmem:[%s0 + $0x14c] sm:$0xff]
  %v64 = vld [vmem:[%s0 + $0x154] sm:$0xff]
  %v65 = vld [vmem:[%s0 + $0x15c] sm:$0xff]
  %v66 = vld [vmem:[%s0 + $0x164] sm:$0xf]
  %v67 = vld [vmem:[%s0 + $0x168] sm:$0xff]
  %v68 = vld [vmem:[%s0 + $0x170] sm:$0xff]
  %v69 = vld [vmem:[%s0 + $0x178] sm:$0xff]
  %v70 = vld [vmem:[%s0 + $0x180] sm:$0xff]
  %v71 = vld [vmem:[%s0 + $0x188] sm:$0xf]
  %v72 = vld [vmem:[%s0 + $0x18c] sm:$0xff]
  %v73 = vld [vmem:[%s0 + $0x194] sm:$0xff]
  %v74 = vld [vmem:[%s0 + $0x19c] sm:$0xff]
  %v75 = vld [vmem:[%s0 + $0x1a4] sm:$0xff]
  %v76 = vld [vmem:[%s0 + $0x1ac] sm:$0xf]
  %v77 = vld [vmem:[%s0 + $0x1b0] sm:$0xff]
  %v78 = vld [vmem:[%s0 + $0x1b8] sm:$0xff]
  %v79 = vld [vmem:[%s0 + $0x1c0] sm:$0xff]
  %v80 = vld [vmem:[%s0 + $0x1c8] sm:$0xff]
  %v81 = vld [vmem:[%s0 + $0x1d0] sm:$0xf]
  %v82 = vld [vmem:[%s0 + $0x1d4] sm:$0xff]
  %v83 = vld [vmem:[%s0 + $0x1dc] sm:$0xff]
  %v84 = vld [vmem:[%s0 + $0x1e4] sm:$0xff]
  %v85 = vld [vmem:[%s0 + $0x1ec] sm:$0xff]
  %v86 = vld [vmem:[%s0 + $0x1f4] sm:$0xf]
  %v87 = vld [vmem:[%s0 + $0x1f8] sm:$0xff]
  %v88 = vld [vmem:[%s0 + $0x200] sm:$0xff]
  %v89 = vld [vmem:[%s0 + $0x208] sm:$0xff]
  %v90 = vld [vmem:[%s0 + $0x210] sm:$0xff]
  %v91 = vld [vmem:[%s0 + $0x218] sm:$0xf]
  %v92 = vld [vmem:[%s0 + $0x21c] sm:$0xff]
  %v93 = vld [vmem:[%s0 + $0x224] sm:$0xff]
  %v94 = vld [vmem:[%s0 + $0x22c] sm:$0xff]
  %v95 = vld [vmem:[%s0 + $0x234] sm:$0xff]
  %v96 = vld [vmem:[%s0 + $0x23c] sm:$0xf]
  %v97 = vld [vmem:[%s1] sm:$0xff]
  %v98 = vld [vmem:[%s1 + $0x8] sm:$0xff]
  %v99 = vld [vmem:[%s1 + $0x10] sm:$0xff]
  %v100 = vld [vmem:[%s1 + $0x18] sm:$0xff]
  %v101 = vld [vmem:[%s1 + $0x20] sm:$0xff]
  %v102 = vld [vmem:[%s1 + $0x28] sm:$0xff]
  %v103 = vld [vmem:[%s1 + $0x30] sm:$0xff]
  %v104 = vld [vmem:[%s1 + $0x38] sm:$0xff]
  %v105 = vld [vmem:[%s1 + $0x40] sm:$0xff]
  %v106 = vld [vmem:[%s1 + $0x48] sm:$0xff]
  %v107 = vld [vmem:[%s1 + $0x50] sm:$0xff]
  %v108 = vld [vmem:[%s1 + $0x58] sm:$0xff]
  %v109 = vld [vmem:[%s1 + $0x60] sm:$0xff]
  %v110 = vld [vmem:[%s1 + $0x68] sm:$0xff]
  %v111 = vld [vmem:[%s1 + $0x70] sm:$0xff]
  %v112 = vld [vmem:[%s1 + $0x78] sm:$0xff]
  %v113 = vld [vmem:[%s1 + $0x80] sm:$0xff]
  %v114 = vld [vmem:[%s1 + $0x88] sm:$0xff]
  %v115 = vld [vmem:[%s1 + $0x90] sm:$0xff]
  %v116 = vld [vmem:[%s1 + $0x98] sm:$0xff]
  %v117 = vld [vmem:[%s1 + $0xa0] sm:$0xff]
  %v118 = vld [vmem:[%s1 + $0xa8] sm:$0xff]
  %v119 = vld [vmem:[%s1 + $0xb0] sm:$0xff]
  %v120 = vld [vmem:[%s1 + $0xb8] sm:$0xff]
  %v121 = vld [vmem:[%s1 + $0xc0] sm:$0xff]
  %v122 = vld [vmem:[%s1 + $0xc8] sm:$0xff]
  %v123 = vld [vmem:[%s1 + $0xd0] sm:$0xff]
  %v124 = vld [vmem:[%s1 + $0xd8] sm:$0xff]
  %v125 = vld [vmem:[%s1 + $0xe0] sm:$0xff]
  %v126 = vld [vmem:[%s1 + $0xe8] sm:$0xff]
  %v127 = vld [vmem:[%s1 + $0xf0] sm:$0xff]
  %v128 = vld [vmem:[%s1 + $0xf8] sm:$0xff]
  %v129 = vld [vmem:[%s1 + $0x100] sm:$0xff]
  %v130 = vld [vmem:[%s1 + $0x108] sm:$0xff]
  %v131 = vld [vmem:[%s1 + $0x110] sm:$0xff]
  %v132 = vld [vmem:[%s1 + $0x118] sm:$0xff]
  %v133 = vld [vmem:[%s1 + $0x120] sm:$0xff]
  %v134 = vld [vmem:[%s1 + $0x128] sm:$0xff]
  %v135 = vld [vmem:[%s1 + $0x130] sm:$0xff]
  %v136 = vld [vmem:[%s1 + $0x138] sm:$0xff]
  %v137 = vld [vmem:[%s1 + $0x140] sm:$0xff]
  %v138 = vld [vmem:[%s1 + $0x148] sm:$0xff]
  %v139 = vld [vmem:[%s1 + $0x150] sm:$0xff]
  %v140 = vld [vmem:[%s1 + $0x158] sm:$0xff]
  %v141 = vld [vmem:[%s1 + $0x160] sm:$0xff]
  %v142 = vld [vmem:[%s1 + $0x168] sm:$0xff]
  %v143 = vld [vmem:[%s1 + $0x170] sm:$0xff]
  %v144 = vld [vmem:[%s1 + $0x178] sm:$0xff]
  %v145 = vld [vmem:[%s1 + $0x180] sm:$0xff]
  %v146 = vld [vmem:[%s1 + $0x188] sm:$0xff]
  %v147 = vld [vmem:[%s1 + $0x190] sm:$0xff]
  %v148 = vld [vmem:[%s1 + $0x198] sm:$0xff]
  %v149 = vld [vmem:[%s1 + $0x1a0] sm:$0xff]
  %v150 = vld [vmem:[%s1 + $0x1a8] sm:$0xff]
  %v151 = vld [vmem:[%s1 + $0x1b0] sm:$0xff]
  %v152 = vld [vmem:[%s1 + $0x1b8] sm:$0xff]
  %v153 = vld [vmem:[%s1 + $0x1c0] sm:$0xff]
  %v154 = vld [vmem:[%s1 + $0x1c8] sm:$0xff]
  %v155 = vld [vmem:[%s1 + $0x1d0] sm:$0xff]
  %v156 = vld [vmem:[%s1 + $0x1d8] sm:$0xff]
  %v157 = vld [vmem:[%s1 + $0x1e0] sm:$0xff]
  %v158 = vld [vmem:[%s1 + $0x1e8] sm:$0xff]
  %v159 = vld [vmem:[%s1 + $0x1f0] sm:$0xff]
  %v160 = vld [vmem:[%s1 + $0x1f8] sm:$0xff]
  %v161 = vld [vmem:[%s1 + $0x200] sm:$0xff]
  %v162 = vld [vmem:[%s1 + $0x208] sm:$0xff]
  %v163 = vld [vmem:[%s1 + $0x210] sm:$0xff]
  %v164 = vld [vmem:[%s1 + $0x218] sm:$0xff]
  %v165 = vld [vmem:[%s1 + $0x220] sm:$0xff]
  %v166 = vld [vmem:[%s1 + $0x228] sm:$0xff]
  %v167 = vld [vmem:[%s1 + $0x230] sm:$0xff]
  %v168 = vld [vmem:[%s1 + $0x238] sm:$0xff]
  %v169 = vld [vmem:[%s1 + $0x240] sm:$0xff]
  %v170 = vld [vmem:[%s1 + $0x248] sm:$0xff]
  %v171 = vld [vmem:[%s1 + $0x250] sm:$0xff]
  %v172 = vld [vmem:[%s1 + $0x258] sm:$0xff]
  %v173 = vld [vmem:[%s1 + $0x260] sm:$0xff]
  %v174 = vld [vmem:[%s1 + $0x268] sm:$0xff]
  %v175 = vld [vmem:[%s1 + $0x270] sm:$0xff]
  %v176 = vld [vmem:[%s1 + $0x278] sm:$0xff]
  %v177 = vld [vmem:[%s1 + $0x280] sm:$0xff]
  %v178 = vld [vmem:[%s1 + $0x288] sm:$0xff]
  %v179 = vld [vmem:[%s1 + $0x290] sm:$0xff]
  %v180 = vld [vmem:[%s1 + $0x298] sm:$0xff]
  %v181 = vld [vmem:[%s1 + $0x2a0] sm:$0xff]
  %v182 = vld [vmem:[%s1 + $0x2a8] sm:$0xff]
  %v183 = vld [vmem:[%s1 + $0x2b0] sm:$0xff]
  %v184 = vld [vmem:[%s1 + $0x2b8] sm:$0xff]
  %v185 = vld [vmem:[%s1 + $0x2c0] sm:$0xff]
  %v186 = vld [vmem:[%s1 + $0x2c8] sm:$0xff]
  %v187 = vld [vmem:[%s1 + $0x2d0] sm:$0xff]
  %v188 = vld [vmem:[%s1 + $0x2d8] sm:$0xff]
  %v189 = vld [vmem:[%s1 + $0x2e0] sm:$0xff]
  %v190 = vld [vmem:[%s1 + $0x2e8] sm:$0xff]
  %v191 = vld [vmem:[%s1 + $0x2f0] sm:$0xff]
  %v192 = vld [vmem:[%s1 + $0x2f8] sm:$0xff]
  %v193 = vld [vmem:[%s1 + $0x300] sm:$0xff]
  %v194 = vld [vmem:[%s1 + $0x308] sm:$0xff]
  %v195 = vld [vmem:[%s1 + $0x310] sm:$0xff]
  %v196 = vld [vmem:[%s1 + $0x318] sm:$0xff]
  %v197 = vld [vmem:[%s1 + $0x320] sm:$0xff]
  %v198 = vld [vmem:[%s1 + $0x328] sm:$0xff]
  %v199 = vld [vmem:[%s1 + $0x330] sm:$0xff]
  %v200 = vld [vmem:[%s1 + $0x338] sm:$0xff]
  %v201 = vld [vmem:[%s1 + $0x340] sm:$0xff]
  %v202 = vld [vmem:[%s1 + $0x348] sm:$0xff]
  %v203 = vld [vmem:[%s1 + $0x350] sm:$0xff]
  %v204 = vld [vmem:[%s1 + $0x358] sm:$0xff]
  %v205 = vld [vmem:[%s1 + $0x360] sm:$0xff]
  %v206 = vld [vmem:[%s1 + $0x368] sm:$0xff]
  %v207 = vld [vmem:[%s1 + $0x370] sm:$0xff]
  %v208 = vld [vmem:[%s1 + $0x378] sm:$0xff]
  %v209 = vld [vmem:[%s1 + $0x380] sm:$0xff]
  %v210 = vld [vmem:[%s1 + $0x388] sm:$0xff]
  %v211 = vld [vmem:[%s1 + $0x390] sm:$0xff]
  %v212 = vld [vmem:[%s1 + $0x398] sm:$0xff]
  %v213 = vld [vmem:[%s1 + $0x3a0] sm:$0xff]
  %v214 = vld [vmem:[%s1 + $0x3a8] sm:$0xff]
  %v215 = vld [vmem:[%s1 + $0x3b0] sm:$0xff]
  %v216 = vld [vmem:[%s1 + $0x3b8] sm:$0xff]
  %v217 = vld [vmem:[%s1 + $0x3c0] sm:$0xff]
  %v218 = vld [vmem:[%s1 + $0x3c8] sm:$0xff]
  %v219 = vld [vmem:[%s1 + $0x3d0] sm:$0xff]
  %v220 = vld [vmem:[%s1 + $0x3d8] sm:$0xff]
  %v221 = vld [vmem:[%s1 + $0x3e0] sm:$0xff]
  %v222 = vld [vmem:[%s1 + $0x3e8] sm:$0xff]
  %v223 = vld [vmem:[%s1 + $0x3f0] sm:$0xff]
  %v224 = vld [vmem:[%s1 + $0x3f8] sm:$0xff]
  %v225 = vld [vmem:[%s1 + $0x400] sm:$0xff]
  %v226 = vld [vmem:[%s1 + $0x408] sm:$0xff]
  %v227 = vld [vmem:[%s1 + $0x410] sm:$0xff]
  %v228 = vld [vmem:[%s1 + $0x418] sm:$0xff]
  %v229 = vld [vmem:[%s1 + $0x420] sm:$0xff]
  %v230 = vld [vmem:[%s1 + $0x428] sm:$0xff]
  %v231 = vld [vmem:[%s1 + $0x430] sm:$0xff]
  %v232 = vld [vmem:[%s1 + $0x438] sm:$0xff]
  %v233 = vld [vmem:[%s1 + $0x440] sm:$0xff]
  %v234 = vld [vmem:[%s1 + $0x448] sm:$0xff]
  %v235 = vld [vmem:[%s1 + $0x450] sm:$0xff]
  %v236 = vld [vmem:[%s1 + $0x458] sm:$0xff]
  %v237 = vld [vmem:[%s1 + $0x460] sm:$0xff]
  %v238 = vld [vmem:[%s1 + $0x468] sm:$0xff]
  %v239 = vld [vmem:[%s1 + $0x470] sm:$0xff]
  %v240 = vld [vmem:[%s1 + $0x478] sm:$0xff]
  %v321 = vunpack.c.l.b16 %v17
  %v322 = vunpack.c.h.b16 %v17
  %v323 = vunpack.c.l.b16 %v18
  %v324 = vunpack.c.h.b16 %v18
  %v325 = vunpack.c.l.b16 %v19
  %v326 = vunpack.c.h.b16 %v19
  %v327 = vunpack.c.l.b16 %v20
  %v328 = vunpack.c.h.b16 %v20
  %v329 = vunpack.c.l.b16 %v21
  %v330 = vunpack.c.l.b16 %v22
  %v331 = vunpack.c.h.b16 %v22
  %v332 = vunpack.c.l.b16 %v23
  %v333 = vunpack.c.h.b16 %v23
  %v334 = vunpack.c.l.b16 %v24
  %v335 = vunpack.c.h.b16 %v24
  %v336 = vunpack.c.l.b16 %v25
  %v337 = vunpack.c.h.b16 %v25
  %v338 = vunpack.c.l.b16 %v26
  %v339 = vunpack.c.l.b16 %v27
  %v340 = vunpack.c.h.b16 %v27
  %v341 = vunpack.c.l.b16 %v28
  %v342 = vunpack.c.h.b16 %v28
  %v343 = vunpack.c.l.b16 %v29
  %v344 = vunpack.c.h.b16 %v29
  %v345 = vunpack.c.l.b16 %v30
  %v346 = vunpack.c.h.b16 %v30
  %v347 = vunpack.c.l.b16 %v31
  %v348 = vunpack.c.l.b16 %v32
  %v349 = vunpack.c.h.b16 %v32
  %v350 = vunpack.c.l.b16 %v33
  %v351 = vunpack.c.h.b16 %v33
  %v352 = vunpack.c.l.b16 %v34
  %v353 = vunpack.c.h.b16 %v34
  %v354 = vunpack.c.l.b16 %v35
  %v355 = vunpack.c.h.b16 %v35
  %v356 = vunpack.c.l.b16 %v36
  %v357 = vunpack.c.l.b16 %v37
  %v358 = vunpack.c.h.b16 %v37
  %v359 = vunpack.c.l.b16 %v38
  %v360 = vunpack.c.h.b16 %v38
  %v361 = vunpack.c.l.b16 %v39
  %v362 = vunpack.c.h.b16 %v39
  %v363 = vunpack.c.l.b16 %v40
  %v364 = vunpack.c.h.b16 %v40
  %v365 = vunpack.c.l.b16 %v41
  %v366 = vunpack.c.l.b16 %v42
  %v367 = vunpack.c.h.b16 %v42
  %v368 = vunpack.c.l.b16 %v43
  %v369 = vunpack.c.h.b16 %v43
  %v370 = vunpack.c.l.b16 %v44
  %v371 = vunpack.c.h.b16 %v44
  %v372 = vunpack.c.l.b16 %v45
  %v373 = vunpack.c.h.b16 %v45
  %v374 = vunpack.c.l.b16 %v46
  %v375 = vunpack.c.l.b16 %v47
  %v376 = vunpack.c.h.b16 %v47
  %v377 = vunpack.c.l.b16 %v48
  %v378 = vunpack.c.h.b16 %v48
  %v379 = vunpack.c.l.b16 %v49
  %v380 = vunpack.c.h.b16 %v49
  %v381 = vunpack.c.l.b16 %v50
  %v382 = vunpack.c.h.b16 %v50
  %v383 = vunpack.c.l.b16 %v51
  %v384 = vunpack.c.l.b16 %v52
  %v385 = vunpack.c.h.b16 %v52
  %v386 = vunpack.c.l.b16 %v53
  %v387 = vunpack.c.h.b16 %v53
  %v388 = vunpack.c.l.b16 %v54
  %v389 = vunpack.c.h.b16 %v54
  %v390 = vunpack.c.l.b16 %v55
  %v391 = vunpack.c.h.b16 %v55
  %v392 = vunpack.c.l.b16 %v56
  %v393 = vunpack.c.l.b16 %v57
  %v394 = vunpack.c.h.b16 %v57
  %v395 = vunpack.c.l.b16 %v58
  %v396 = vunpack.c.h.b16 %v58
  %v397 = vunpack.c.l.b16 %v59
  %v398 = vunpack.c.h.b16 %v59
  %v399 = vunpack.c.l.b16 %v60
  %v400 = vunpack.c.h.b16 %v60
  %v401 = vunpack.c.l.b16 %v61
  %v402 = vunpack.c.l.b16 %v62
  %v403 = vunpack.c.h.b16 %v62
  %v404 = vunpack.c.l.b16 %v63
  %v405 = vunpack.c.h.b16 %v63
  %v406 = vunpack.c.l.b16 %v64
  %v407 = vunpack.c.h.b16 %v64
  %v408 = vunpack.c.l.b16 %v65
  %v409 = vunpack.c.h.b16 %v65
  %v410 = vunpack.c.l.b16 %v66
  %v411 = vunpack.c.l.b16 %v67
  %v412 = vunpack.c.h.b16 %v67
  %v413 = vunpack.c.l.b16 %v68
  %v414 = vunpack.c.h.b16 %v68
  %v415 = vunpack.c.l.b16 %v69
  %v416 = vunpack.c.h.b16 %v69
  %v417 = vunpack.c.l.b16 %v70
  %v418 = vunpack.c.h.b16 %v70
  %v419 = vunpack.c.l.b16 %v71
  %v420 = vunpack.c.l.b16 %v72
  %v421 = vunpack.c.h.b16 %v72
  %v422 = vunpack.c.l.b16 %v73
  %v423 = vunpack.c.h.b16 %v73
  %v424 = vunpack.c.l.b16 %v74
  %v425 = vunpack.c.h.b16 %v74
  %v426 = vunpack.c.l.b16 %v75
  %v427 = vunpack.c.h.b16 %v75
  %v428 = vunpack.c.l.b16 %v76
  %v429 = vunpack.c.l.b16 %v77
  %v430 = vunpack.c.h.b16 %v77
  %v431 = vunpack.c.l.b16 %v78
  %v432 = vunpack.c.h.b16 %v78
  %v433 = vunpack.c.l.b16 %v79
  %v434 = vunpack.c.h.b16 %v79
  %v435 = vunpack.c.l.b16 %v80
  %v436 = vunpack.c.h.b16 %v80
  %v437 = vunpack.c.l.b16 %v81
  %v438 = vunpack.c.l.b16 %v82
  %v439 = vunpack.c.h.b16 %v82
  %v440 = vunpack.c.l.b16 %v83
  %v441 = vunpack.c.h.b16 %v83
  %v442 = vunpack.c.l.b16 %v84
  %v443 = vunpack.c.h.b16 %v84
  %v444 = vunpack.c.l.b16 %v85
  %v445 = vunpack.c.h.b16 %v85
  %v446 = vunpack.c.l.b16 %v86
  %v447 = vunpack.c.l.b16 %v87
  %v448 = vunpack.c.h.b16 %v87
  %v449 = vunpack.c.l.b16 %v88
  %v450 = vunpack.c.h.b16 %v88
  %v451 = vunpack.c.l.b16 %v89
  %v452 = vunpack.c.h.b16 %v89
  %v453 = vunpack.c.l.b16 %v90
  %v454 = vunpack.c.h.b16 %v90
  %v455 = vunpack.c.l.b16 %v91
  %v456 = vunpack.c.l.b16 %v92
  %v457 = vunpack.c.h.b16 %v92
  %v458 = vunpack.c.l.b16 %v93
  %v459 = vunpack.c.h.b16 %v93
  %v460 = vunpack.c.l.b16 %v94
  %v461 = vunpack.c.h.b16 %v94
  %v462 = vunpack.c.l.b16 %v95
  %v463 = vunpack.c.h.b16 %v95
  %v464 = vunpack.c.l.b16 %v96
  %v465 = vpack.c.b16 %v330, %v321
  %v466 = vpack.c.b16 %v331, %v322
  %v467 = vpack.c.b16 %v332, %v323
  %v468 = vpack.c.b16 %v333, %v324
  %v469 = vpack.c.b16 %v334, %v325
  %v470 = vpack.c.b16 %v335, %v326
  %v471 = vpack.c.b16 %v336, %v327
  %v472 = vpack.c.b16 %v337, %v328
  %v473 = vpack.c.b16 %v338, %v329
  %v474 = vpack.c.b16 %v348, %v339
  %v475 = vpack.c.b16 %v349, %v340
  %v476 = vpack.c.b16 %v350, %v341
  %v477 = vpack.c.b16 %v351, %v342
  %v478 = vpack.c.b16 %v352, %v343
  %v479 = vpack.c.b16 %v353, %v344
  %v480 = vpack.c.b16 %v354, %v345
  %v481 = vpack.c.b16 %v355, %v346
  %v482 = vpack.c.b16 %v356, %v347
  %v483 = vpack.c.b16 %v366, %v357
  %v484 = vpack.c.b16 %v367, %v358
  %v485 = vpack.c.b16 %v368, %v359
  %v486 = vpack.c.b16 %v369, %v360
  %v487 = vpack.c.b16 %v370, %v361
  %v488 = vpack.c.b16 %v371, %v362
  %v489 = vpack.c.b16 %v372, %v363
  %v490 = vpack.c.b16 %v373, %v364
  %v491 = vpack.c.b16 %v374, %v365
  %v492 = vpack.c.b16 %v384, %v375
  %v493 = vpack.c.b16 %v385, %v376
  %v494 = vpack.c.b16 %v386, %v377
  %v495 = vpack.c.b16 %v387, %v378
  %v496 = vpack.c.b16 %v388, %v379
  %v497 = vpack.c.b16 %v389, %v380
  %v498 = vpack.c.b16 %v390, %v381
  %v499 = vpack.c.b16 %v391, %v382
  %v500 = vpack.c.b16 %v392, %v383
  %v501 = vpack.c.b16 %v402, %v393
  %v502 = vpack.c.b16 %v403, %v394
  %v503 = vpack.c.b16 %v404, %v395
  %v504 = vpack.c.b16 %v405, %v396
  %v505 = vpack.c.b16 %v406, %v397
  %v506 = vpack.c.b16 %v407, %v398
  %v507 = vpack.c.b16 %v408, %v399
  %v508 = vpack.c.b16 %v409, %v400
  %v509 = vpack.c.b16 %v410, %v401
  %v510 = vpack.c.b16 %v420, %v411
  %v511 = vpack.c.b16 %v421, %v412
  %v512 = vpack.c.b16 %v422, %v413
  %v513 = vpack.c.b16 %v423, %v414
  %v514 = vpack.c.b16 %v424, %v415
  %v515 = vpack.c.b16 %v425, %v416
  %v516 = vpack.c.b16 %v426, %v417
  %v517 = vpack.c.b16 %v427, %v418
  %v518 = vpack.c.b16 %v428, %v419
  %v519 = vpack.c.b16 %v438, %v429
  %v520 = vpack.c.b16 %v439, %v430
  %v521 = vpack.c.b16 %v440, %v431
  %v522 = vpack.c.b16 %v441, %v432
  %v523 = vpack.c.b16 %v442, %v433
  %v524 = vpack.c.b16 %v443, %v434
  %v525 = vpack.c.b16 %v444, %v435
  %v526 = vpack.c.b16 %v445, %v436
  %v527 = vpack.c.b16 %v446, %v437
  %v528 = vpack.c.b16 %v456, %v447
  %v529 = vpack.c.b16 %v457, %v448
  %v530 = vpack.c.b16 %v458, %v449
  %v531 = vpack.c.b16 %v459, %v450
  %v532 = vpack.c.b16 %v460, %v451
  %v533 = vpack.c.b16 %v461, %v452
  %v534 = vpack.c.b16 %v462, %v453
  %v535 = vpack.c.b16 %v463, %v454
  %v536 = vpack.c.b16 %v464, %v455
  %v753 = vunpack.c.l.b16 %v97
  %v754 = vunpack.c.h.b16 %v97
  %v755 = vunpack.c.l.b16 %v98
  %v756 = vunpack.c.h.b16 %v98
  %v757 = vunpack.c.l.b16 %v99
  %v758 = vunpack.c.h.b16 %v99
  %v759 = vunpack.c.l.b16 %v100
  %v760 = vunpack.c.h.b16 %v100
  %v761 = vunpack.c.l.b16 %v101
  %v762 = vunpack.c.h.b16 %v101
  %v763 = vunpack.c.l.b16 %v102
  %v764 = vunpack.c.h.b16 %v102
  %v765 = vunpack.c.l.b16 %v103
  %v766 = vunpack.c.h.b16 %v103
  %v767 = vunpack.c.l.b16 %v104
  %v768 = vunpack.c.h.b16 %v104
  %v769 = vunpack.c.l.b16 %v105
  %v770 = vunpack.c.h.b16 %v105
  %v771 = vunpack.c.l.b16 %v106
  %v772 = vunpack.c.h.b16 %v106
  %v773 = vunpack.c.l.b16 %v107
  %v774 = vunpack.c.h.b16 %v107
  %v775 = vunpack.c.l.b16 %v108
  %v776 = vunpack.c.h.b16 %v108
  %v777 = vunpack.c.l.b16 %v109
  %v778 = vunpack.c.h.b16 %v109
  %v779 = vunpack.c.l.b16 %v110
  %v780 = vunpack.c.h.b16 %v110
  %v781 = vunpack.c.l.b16 %v111
  %v782 = vunpack.c.h.b16 %v111
  %v783 = vunpack.c.l.b16 %v112
  %v784 = vunpack.c.h.b16 %v112
  %v785 = vunpack.c.l.b16 %v113
  %v786 = vunpack.c.h.b16 %v113
  %v787 = vunpack.c.l.b16 %v114
  %v788 = vunpack.c.h.b16 %v114
  %v789 = vunpack.c.l.b16 %v115
  %v790 = vunpack.c.h.b16 %v115
  %v791 = vunpack.c.l.b16 %v116
  %v792 = vunpack.c.h.b16 %v116
  %v793 = vunpack.c.l.b16 %v117
  %v794 = vunpack.c.h.b16 %v117
  %v795 = vunpack.c.l.b16 %v118
  %v796 = vunpack.c.h.b16 %v118
  %v797 = vunpack.c.l.b16 %v119
  %v798 = vunpack.c.h.b16 %v119
  %v799 = vunpack.c.l.b16 %v120
  %v800 = vunpack.c.h.b16 %v120
  %v801 = vunpack.c.l.b16 %v121
  %v802 = vunpack.c.h.b16 %v121
  %v803 = vunpack.c.l.b16 %v122
  %v804 = vunpack.c.h.b16 %v122
  %v805 = vunpack.c.l.b16 %v123
  %v806 = vunpack.c.h.b16 %v123
  %v807 = vunpack.c.l.b16 %v124
  %v808 = vunpack.c.h.b16 %v124
  %v809 = vunpack.c.l.b16 %v125
  %v810 = vunpack.c.h.b16 %v125
  %v811 = vunpack.c.l.b16 %v126
  %v812 = vunpack.c.h.b16 %v126
  %v813 = vunpack.c.l.b16 %v127
  %v814 = vunpack.c.h.b16 %v127
  %v815 = vunpack.c.l.b16 %v128
  %v816 = vunpack.c.h.b16 %v128
  %v817 = vunpack.c.l.b16 %v129
  %v818 = vunpack.c.h.b16 %v129
  %v819 = vunpack.c.l.b16 %v130
  %v820 = vunpack.c.h.b16 %v130
  %v821 = vunpack.c.l.b16 %v131
  %v822 = vunpack.c.h.b16 %v131
  %v823 = vunpack.c.l.b16 %v132
  %v824 = vunpack.c.h.b16 %v132
  %v825 = vunpack.c.l.b16 %v133
  %v826 = vunpack.c.h.b16 %v133
  %v827 = vunpack.c.l.b16 %v134
  %v828 = vunpack.c.h.b16 %v134
  %v829 = vunpack.c.l.b16 %v135
  %v830 = vunpack.c.h.b16 %v135
  %v831 = vunpack.c.l.b16 %v136
  %v832 = vunpack.c.h.b16 %v136
  %v833 = vunpack.c.l.b16 %v137
  %v834 = vunpack.c.h.b16 %v137
  %v835 = vunpack.c.l.b16 %v138
  %v836 = vunpack.c.h.b16 %v138
  %v837 = vunpack.c.l.b16 %v139
  %v838 = vunpack.c.h.b16 %v139
  %v839 = vunpack.c.l.b16 %v140
  %v840 = vunpack.c.h.b16 %v140
  %v841 = vunpack.c.l.b16 %v141
  %v842 = vunpack.c.h.b16 %v141
  %v843 = vunpack.c.l.b16 %v142
  %v844 = vunpack.c.h.b16 %v142
  %v845 = vunpack.c.l.b16 %v143
  %v846 = vunpack.c.h.b16 %v143
  %v847 = vunpack.c.l.b16 %v144
  %v848 = vunpack.c.h.b16 %v144
  %v849 = vunpack.c.l.b16 %v145
  %v850 = vunpack.c.h.b16 %v145
  %v851 = vunpack.c.l.b16 %v146
  %v852 = vunpack.c.h.b16 %v146
  %v853 = vunpack.c.l.b16 %v147
  %v854 = vunpack.c.h.b16 %v147
  %v855 = vunpack.c.l.b16 %v148
  %v856 = vunpack.c.h.b16 %v148
  %v857 = vunpack.c.l.b16 %v149
  %v858 = vunpack.c.h.b16 %v149
  %v859 = vunpack.c.l.b16 %v150
  %v860 = vunpack.c.h.b16 %v150
  %v861 = vunpack.c.l.b16 %v151
  %v862 = vunpack.c.h.b16 %v151
  %v863 = vunpack.c.l.b16 %v152
  %v864 = vunpack.c.h.b16 %v152
  %v865 = vunpack.c.l.b16 %v153
  %v866 = vunpack.c.h.b16 %v153
  %v867 = vunpack.c.l.b16 %v154
  %v868 = vunpack.c.h.b16 %v154
  %v869 = vunpack.c.l.b16 %v155
  %v870 = vunpack.c.h.b16 %v155
  %v871 = vunpack.c.l.b16 %v156
  %v872 = vunpack.c.h.b16 %v156
  %v873 = vunpack.c.l.b16 %v157
  %v874 = vunpack.c.h.b16 %v157
  %v875 = vunpack.c.l.b16 %v158
  %v876 = vunpack.c.h.b16 %v158
  %v877 = vunpack.c.l.b16 %v159
  %v878 = vunpack.c.h.b16 %v159
  %v879 = vunpack.c.l.b16 %v160
  %v880 = vunpack.c.h.b16 %v160
  %v881 = vunpack.c.l.b16 %v161
  %v882 = vunpack.c.h.b16 %v161
  %v883 = vunpack.c.l.b16 %v162
  %v884 = vunpack.c.h.b16 %v162
  %v885 = vunpack.c.l.b16 %v163
  %v886 = vunpack.c.h.b16 %v163
  %v887 = vunpack.c.l.b16 %v164
  %v888 = vunpack.c.h.b16 %v164
  %v889 = vunpack.c.l.b16 %v165
  %v890 = vunpack.c.h.b16 %v165
  %v891 = vunpack.c.l.b16 %v166
  %v892 = vunpack.c.h.b16 %v166
  %v893 = vunpack.c.l.b16 %v167
  %v894 = vunpack.c.h.b16 %v167
  %v895 = vunpack.c.l.b16 %v168
  %v896 = vunpack.c.h.b16 %v168
  %v897 = vunpack.c.l.b16 %v169
  %v898 = vunpack.c.h.b16 %v169
  %v899 = vunpack.c.l.b16 %v170
  %v900 = vunpack.c.h.b16 %v170
  %v901 = vunpack.c.l.b16 %v171
  %v902 = vunpack.c.h.b16 %v171
  %v903 = vunpack.c.l.b16 %v172
  %v904 = vunpack.c.h.b16 %v172
  %v905 = vunpack.c.l.b16 %v173
  %v906 = vunpack.c.h.b16 %v173
  %v907 = vunpack.c.l.b16 %v174
  %v908 = vunpack.c.h.b16 %v174
  %v909 = vunpack.c.l.b16 %v175
  %v910 = vunpack.c.h.b16 %v175
  %v911 = vunpack.c.l.b16 %v176
  %v912 = vunpack.c.h.b16 %v176
  %v913 = vunpack.c.l.b16 %v177
  %v914 = vunpack.c.h.b16 %v177
  %v915 = vunpack.c.l.b16 %v178
  %v916 = vunpack.c.h.b16 %v178
  %v917 = vunpack.c.l.b16 %v179
  %v918 = vunpack.c.h.b16 %v179
  %v919 = vunpack.c.l.b16 %v180
  %v920 = vunpack.c.h.b16 %v180
  %v921 = vunpack.c.l.b16 %v181
  %v922 = vunpack.c.h.b16 %v181
  %v923 = vunpack.c.l.b16 %v182
  %v924 = vunpack.c.h.b16 %v182
  %v925 = vunpack.c.l.b16 %v183
  %v926 = vunpack.c.h.b16 %v183
  %v927 = vunpack.c.l.b16 %v184
  %v928 = vunpack.c.h.b16 %v184
  %v929 = vunpack.c.l.b16 %v185
  %v930 = vunpack.c.h.b16 %v185
  %v931 = vunpack.c.l.b16 %v186
  %v932 = vunpack.c.h.b16 %v186
  %v933 = vunpack.c.l.b16 %v187
  %v934 = vunpack.c.h.b16 %v187
  %v935 = vunpack.c.l.b16 %v188
  %v936 = vunpack.c.h.b16 %v188
  %v937 = vunpack.c.l.b16 %v189
  %v938 = vunpack.c.h.b16 %v189
  %v939 = vunpack.c.l.b16 %v190
  %v940 = vunpack.c.h.b16 %v190
  %v941 = vunpack.c.l.b16 %v191
  %v942 = vunpack.c.h.b16 %v191
  %v943 = vunpack.c.l.b16 %v192
  %v944 = vunpack.c.h.b16 %v192
  %v945 = vunpack.c.l.b16 %v193
  %v946 = vunpack.c.h.b16 %v193
  %v947 = vunpack.c.l.b16 %v194
  %v948 = vunpack.c.h.b16 %v194
  %v949 = vunpack.c.l.b16 %v195
  %v950 = vunpack.c.h.b16 %v195
  %v951 = vunpack.c.l.b16 %v196
  %v952 = vunpack.c.h.b16 %v196
  %v953 = vunpack.c.l.b16 %v197
  %v954 = vunpack.c.h.b16 %v197
  %v955 = vunpack.c.l.b16 %v198
  %v956 = vunpack.c.h.b16 %v198
  %v957 = vunpack.c.l.b16 %v199
  %v958 = vunpack.c.h.b16 %v199
  %v959 = vunpack.c.l.b16 %v200
  %v960 = vunpack.c.h.b16 %v200
  %v961 = vunpack.c.l.b16 %v201
  %v962 = vunpack.c.h.b16 %v201
  %v963 = vunpack.c.l.b16 %v202
  %v964 = vunpack.c.h.b16 %v202
  %v965 = vunpack.c.l.b16 %v203
  %v966 = vunpack.c.h.b16 %v203
  %v967 = vunpack.c.l.b16 %v204
  %v968 = vunpack.c.h.b16 %v204
  %v969 = vunpack.c.l.b16 %v205
  %v970 = vunpack.c.h.b16 %v205
  %v971 = vunpack.c.l.b16 %v206
  %v972 = vunpack.c.h.b16 %v206
  %v973 = vunpack.c.l.b16 %v207
  %v974 = vunpack.c.h.b16 %v207
  %v975 = vunpack.c.l.b16 %v208
  %v976 = vunpack.c.h.b16 %v208
  %v977 = vunpack.c.l.b16 %v209
  %v978 = vunpack.c.h.b16 %v209
  %v979 = vunpack.c.l.b16 %v210
  %v980 = vunpack.c.h.b16 %v210
  %v981 = vunpack.c.l.b16 %v211
  %v982 = vunpack.c.h.b16 %v211
  %v983 = vunpack.c.l.b16 %v212
  %v984 = vunpack.c.h.b16 %v212
  %v985 = vunpack.c.l.b16 %v213
  %v986 = vunpack.c.h.b16 %v213
  %v987 = vunpack.c.l.b16 %v214
  %v988 = vunpack.c.h.b16 %v214
  %v989 = vunpack.c.l.b16 %v215
  %v990 = vunpack.c.h.b16 %v215
  %v991 = vunpack.c.l.b16 %v216
  %v992 = vunpack.c.h.b16 %v216
  %v993 = vunpack.c.l.b16 %v217
  %v994 = vunpack.c.h.b16 %v217
  %v995 = vunpack.c.l.b16 %v218
  %v996 = vunpack.c.h.b16 %v218
  %v997 = vunpack.c.l.b16 %v219
  %v998 = vunpack.c.h.b16 %v219
  %v999 = vunpack.c.l.b16 %v220
  %v1000 = vunpack.c.h.b16 %v220
  %v1001 = vunpack.c.l.b16 %v221
  %v1002 = vunpack.c.h.b16 %v221
  %v1003 = vunpack.c.l.b16 %v222
  %v1004 = vunpack.c.h.b16 %v222
  %v1005 = vunpack.c.l.b16 %v223
  %v1006 = vunpack.c.h.b16 %v223
  %v1007 = vunpack.c.l.b16 %v224
  %v1008 = vunpack.c.h.b16 %v224
  %v1009 = vunpack.c.l.b16 %v225
  %v1010 = vunpack.c.h.b16 %v225
  %v1011 = vunpack.c.l.b16 %v226
  %v1012 = vunpack.c.h.b16 %v226
  %v1013 = vunpack.c.l.b16 %v227
  %v1014 = vunpack.c.h.b16 %v227
  %v1015 = vunpack.c.l.b16 %v228
  %v1016 = vunpack.c.h.b16 %v228
  %v1017 = vunpack.c.l.b16 %v229
  %v1018 = vunpack.c.h.b16 %v229
  %v1019 = vunpack.c.l.b16 %v230
  %v1020 = vunpack.c.h.b16 %v230
  %v1021 = vunpack.c.l.b16 %v231
  %v1022 = vunpack.c.h.b16 %v231
  %v1023 = vunpack.c.l.b16 %v232
  %v1024 = vunpack.c.h.b16 %v232
  %v1025 = vunpack.c.l.b16 %v233
  %v1026 = vunpack.c.h.b16 %v233
  %v1027 = vunpack.c.l.b16 %v234
  %v1028 = vunpack.c.h.b16 %v234
  %v1029 = vunpack.c.l.b16 %v235
  %v1030 = vunpack.c.h.b16 %v235
  %v1031 = vunpack.c.l.b16 %v236
  %v1032 = vunpack.c.h.b16 %v236
  %v1033 = vunpack.c.l.b16 %v237
  %v1034 = vunpack.c.h.b16 %v237
  %v1035 = vunpack.c.l.b16 %v238
  %v1036 = vunpack.c.h.b16 %v238
  %v1037 = vunpack.c.l.b16 %v239
  %v1038 = vunpack.c.h.b16 %v239
  %v1039 = vunpack.c.l.b16 %v240
  %v1040 = vunpack.c.h.b16 %v240
  %v1041 = vpack.c.b16 %v755, %v753
  %v1042 = vpack.c.b16 %v756, %v754
  %v1043 = vpack.c.b16 %v759, %v757
  %v1044 = vpack.c.b16 %v760, %v758
  %v1045 = vpack.c.b16 %v763, %v761
  %v1046 = vpack.c.b16 %v764, %v762
  %v1047 = vpack.c.b16 %v767, %v765
  %v1048 = vpack.c.b16 %v768, %v766
  %v1049 = vpack.c.b16 %v771, %v769
  %v1050 = vpack.c.b16 %v772, %v770
  %v1051 = vpack.c.b16 %v775, %v773
  %v1052 = vpack.c.b16 %v776, %v774
  %v1053 = vpack.c.b16 %v779, %v777
  %v1054 = vpack.c.b16 %v780, %v778
  %v1055 = vpack.c.b16 %v783, %v781
  %v1056 = vpack.c.b16 %v784, %v782
  %v1057 = vpack.c.b16 %v787, %v785
  %v1058 = vpack.c.b16 %v788, %v786
  %v1059 = vpack.c.b16 %v791, %v789
  %v1060 = vpack.c.b16 %v792, %v790
  %v1061 = vpack.c.b16 %v795, %v793
  %v1062 = vpack.c.b16 %v796, %v794
  %v1063 = vpack.c.b16 %v799, %v797
  %v1064 = vpack.c.b16 %v800, %v798
  %v1065 = vpack.c.b16 %v803, %v801
  %v1066 = vpack.c.b16 %v804, %v802
  %v1067 = vpack.c.b16 %v807, %v805
  %v1068 = vpack.c.b16 %v808, %v806
  %v1069 = vpack.c.b16 %v811, %v809
  %v1070 = vpack.c.b16 %v812, %v810
  %v1071 = vpack.c.b16 %v815, %v813
  %v1072 = vpack.c.b16 %v816, %v814
  %v1073 = vpack.c.b16 %v819, %v817
  %v1074 = vpack.c.b16 %v820, %v818
  %v1075 = vpack.c.b16 %v823, %v821
  %v1076 = vpack.c.b16 %v824, %v822
  %v1077 = vpack.c.b16 %v827, %v825
  %v1078 = vpack.c.b16 %v828, %v826
  %v1079 = vpack.c.b16 %v831, %v829
  %v1080 = vpack.c.b16 %v832, %v830
  %v1081 = vpack.c.b16 %v835, %v833
  %v1082 = vpack.c.b16 %v836, %v834
  %v1083 = vpack.c.b16 %v839, %v837
  %v1084 = vpack.c.b16 %v840, %v838
  %v1085 = vpack.c.b16 %v843, %v841
  %v1086 = vpack.c.b16 %v844, %v842
  %v1087 = vpack.c.b16 %v847, %v845
  %v1088 = vpack.c.b16 %v848, %v846
  %v1089 = vpack.c.b16 %v851, %v849
  %v1090 = vpack.c.b16 %v852, %v850
  %v1091 = vpack.c.b16 %v855, %v853
  %v1092 = vpack.c.b16 %v856, %v854
  %v1093 = vpack.c.b16 %v859, %v857
  %v1094 = vpack.c.b16 %v860, %v858
  %v1095 = vpack.c.b16 %v863, %v861
  %v1096 = vpack.c.b16 %v864, %v862
  %v1097 = vpack.c.b16 %v867, %v865
  %v1098 = vpack.c.b16 %v868, %v866
  %v1099 = vpack.c.b16 %v871, %v869
  %v1100 = vpack.c.b16 %v872, %v870
  %v1101 = vpack.c.b16 %v875, %v873
  %v1102 = vpack.c.b16 %v876, %v874
  %v1103 = vpack.c.b16 %v879, %v877
  %v1104 = vpack.c.b16 %v880, %v878
  %v1105 = vpack.c.b16 %v883, %v881
  %v1106 = vpack.c.b16 %v884, %v882
  %v1107 = vpack.c.b16 %v887, %v885
  %v1108 = vpack.c.b16 %v888, %v886
  %v1109 = vpack.c.b16 %v891, %v889
  %v1110 = vpack.c.b16 %v892, %v890
  %v1111 = vpack.c.b16 %v895, %v893
  %v1112 = vpack.c.b16 %v896, %v894
  %v1113 = vpack.c.b16 %v899, %v897
  %v1114 = vpack.c.b16 %v900, %v898
  %v1115 = vpack.c.b16 %v903, %v901
  %v1116 = vpack.c.b16 %v904, %v902
  %v1117 = vpack.c.b16 %v907, %v905
  %v1118 = vpack.c.b16 %v908, %v906
  %v1119 = vpack.c.b16 %v911, %v909
  %v1120 = vpack.c.b16 %v912, %v910
  %v1121 = vpack.c.b16 %v915, %v913
  %v1122 = vpack.c.b16 %v916, %v914
  %v1123 = vpack.c.b16 %v919, %v917
  %v1124 = vpack.c.b16 %v920, %v918
  %v1125 = vpack.c.b16 %v923, %v921
  %v1126 = vpack.c.b16 %v924, %v922
  %v1127 = vpack.c.b16 %v927, %v925
  %v1128 = vpack.c.b16 %v928, %v926
  %v1129 = vpack.c.b16 %v931, %v929
  %v1130 = vpack.c.b16 %v932, %v930
  %v1131 = vpack.c.b16 %v935, %v933
  %v1132 = vpack.c.b16 %v936, %v934
  %v1133 = vpack.c.b16 %v939, %v937
  %v1134 = vpack.c.b16 %v940, %v938
  %v1135 = vpack.c.b16 %v943, %v941
  %v1136 = vpack.c.b16 %v944, %v942
  %v1137 = vpack.c.b16 %v947, %v945
  %v1138 = vpack.c.b16 %v948, %v946
  %v1139 = vpack.c.b16 %v951, %v949
  %v1140 = vpack.c.b16 %v952, %v950
  %v1141 = vpack.c.b16 %v955, %v953
  %v1142 = vpack.c.b16 %v956, %v954
  %v1143 = vpack.c.b16 %v959, %v957
  %v1144 = vpack.c.b16 %v960, %v958
  %v1145 = vpack.c.b16 %v963, %v961
  %v1146 = vpack.c.b16 %v964, %v962
  %v1147 = vpack.c.b16 %v967, %v965
  %v1148 = vpack.c.b16 %v968, %v966
  %v1149 = vpack.c.b16 %v971, %v969
  %v1150 = vpack.c.b16 %v972, %v970
  %v1151 = vpack.c.b16 %v975, %v973
  %v1152 = vpack.c.b16 %v976, %v974
  %v1153 = vpack.c.b16 %v979, %v977
  %v1154 = vpack.c.b16 %v980, %v978
  %v1155 = vpack.c.b16 %v983, %v981
  %v1156 = vpack.c.b16 %v984, %v982
  %v1157 = vpack.c.b16 %v987, %v985
  %v1158 = vpack.c.b16 %v988, %v986
  %v1159 = vpack.c.b16 %v991, %v989
  %v1160 = vpack.c.b16 %v992, %v990
  %v1161 = vpack.c.b16 %v995, %v993
  %v1162 = vpack.c.b16 %v996, %v994
  %v1163 = vpack.c.b16 %v999, %v997
  %v1164 = vpack.c.b16 %v1000, %v998
  %v1165 = vpack.c.b16 %v1003, %v1001
  %v1166 = vpack.c.b16 %v1004, %v1002
  %v1167 = vpack.c.b16 %v1007, %v1005
  %v1168 = vpack.c.b16 %v1008, %v1006
  %v1169 = vpack.c.b16 %v1011, %v1009
  %v1170 = vpack.c.b16 %v1012, %v1010
  %v1171 = vpack.c.b16 %v1015, %v1013
  %v1172 = vpack.c.b16 %v1016, %v1014
  %v1173 = vpack.c.b16 %v1019, %v1017
  %v1174 = vpack.c.b16 %v1020, %v1018
  %v1175 = vpack.c.b16 %v1023, %v1021
  %v1176 = vpack.c.b16 %v1024, %v1022
  %v1177 = vpack.c.b16 %v1027, %v1025
  %v1178 = vpack.c.b16 %v1028, %v1026
  %v1179 = vpack.c.b16 %v1031, %v1029
  %v1180 = vpack.c.b16 %v1032, %v1030
  %v1181 = vpack.c.b16 %v1035, %v1033
  %v1182 = vpack.c.b16 %v1036, %v1034
  %v1183 = vpack.c.b16 %v1039, %v1037
  %v1184 = vpack.c.b16 %v1040, %v1038
  %1329 = vmatpush.bf16.msra.mxu0 %v1055
  %1330 = vmatpush.bf16.msra.mxu0 %v1053
  %1331 = vmatpush.bf16.msra.mxu0 %v1051
  %1332 = vmatpush.bf16.msra.mxu0 %v1049
  %1333 = vmatpush.bf16.msra.mxu0 %v1047
  %1334 = vmatpush.bf16.msra.mxu0 %v1045
  %1335 = vmatpush.bf16.msra.mxu0 %v1043
  %1336 = vmatpush.bf16.msra.mxu0 %v1041
  %1337 = vmatmul.bf16.gmra.mxu0 %v465
  %v1338 = vpop.f32.mrf.mxu0
  %v1339 = vadd.f32 0.0, %v1338
  %v1340 = vpop.f32.mrf.mxu0
  %v1341 = vadd.f32 0.0, %v1340
  %1342 = vmatmul.bf16.gmra.mxu0 %v474
  %v1343 = vpop.f32.mrf.mxu0
  %v1344 = vadd.f32 0.0, %v1343
  %v1345 = vpop.f32.mrf.mxu0
  %v1346 = vadd.f32 0.0, %v1345
  %1347 = vmatmul.bf16.gmra.mxu0 %v483
  %v1348 = vpop.f32.mrf.mxu0
  %v1349 = vadd.f32 0.0, %v1348
  %v1350 = vpop.f32.mrf.mxu0
  %v1351 = vadd.f32 0.0, %v1350
  %1352 = vmatmul.bf16.gmra.mxu0 %v492
  %v1353 = vpop.f32.mrf.mxu0
  %v1354 = vadd.f32 0.0, %v1353
  %v1355 = vpop.f32.mrf.mxu0
  %v1356 = vadd.f32 0.0, %v1355
  %1357 = vmatmul.bf16.gmra.mxu0 %v501
  %v1358 = vpop.f32.mrf.mxu0
  %v1359 = vadd.f32 0.0, %v1358
  %v1360 = vpop.f32.mrf.mxu0
  %v1361 = vadd.f32 0.0, %v1360
  %1362 = vmatmul.bf16.gmra.mxu0 %v510
  %v1363 = vpop.f32.mrf.mxu0
  %v1364 = vadd.f32 0.0, %v1363
  %v1365 = vpop.f32.mrf.mxu0
  %v1366 = vadd.f32 0.0, %v1365
  %1367 = vmatmul.bf16.gmra.mxu0 %v519
  %v1368 = vpop.f32.mrf.mxu0
  %v1369 = vadd.f32 0.0, %v1368
  %v1370 = vpop.f32.mrf.mxu0
  %v1371 = vadd.f32 0.0, %v1370
  %1372 = vmatmul.bf16.gmra.mxu0 %v528
  %v1373 = vpop.f32.mrf.mxu0
  %v1374 = vadd.f32 0.0, %v1373
  %v1375 = vpop.f32.mrf.mxu0
  %v1376 = vadd.f32 0.0, %v1375
  %1377 = vdwg.mxu0
  %1378 = vmatpush.bf16.msra.mxu0 %v1071
  %1379 = vmatpush.bf16.msra.mxu0 %v1069
  %1380 = vmatpush.bf16.msra.mxu0 %v1067
  %1381 = vmatpush.bf16.msra.mxu0 %v1065
  %1382 = vmatpush.bf16.msra.mxu0 %v1063
  %1383 = vmatpush.bf16.msra.mxu0 %v1061
  %1384 = vmatpush.bf16.msra.mxu0 %v1059
  %1385 = vmatpush.bf16.msra.mxu0 %v1057
  %1386 = vmatmul.bf16.gmra.mxu0 %v466
  %v1387 = vpop.f32.mrf.mxu0
  %v1388 = vadd.f32 %v1339, %v1387
  %v1389 = vpop.f32.mrf.mxu0
  %v1390 = vadd.f32 %v1341, %v1389
  %1391 = vmatmul.bf16.gmra.mxu0 %v475
  %v1392 = vpop.f32.mrf.mxu0
  %v1393 = vadd.f32 %v1344, %v1392
  %v1394 = vpop.f32.mrf.mxu0
  %v1395 = vadd.f32 %v1346, %v1394
  %1396 = vmatmul.bf16.gmra.mxu0 %v484
  %v1397 = vpop.f32.mrf.mxu0
  %v1398 = vadd.f32 %v1349, %v1397
  %v1399 = vpop.f32.mrf.mxu0
  %v1400 = vadd.f32 %v1351, %v1399
  %1401 = vmatmul.bf16.gmra.mxu0 %v493
  %v1402 = vpop.f32.mrf.mxu0
  %v1403 = vadd.f32 %v1354, %v1402
  %v1404 = vpop.f32.mrf.mxu0
  %v1405 = vadd.f32 %v1356, %v1404
  %1406 = vmatmul.bf16.gmra.mxu0 %v502
  %v1407 = vpop.f32.mrf.mxu0
  %v1408 = vadd.f32 %v1359, %v1407
  %v1409 = vpop.f32.mrf.mxu0
  %v1410 = vadd.f32 %v1361, %v1409
  %1411 = vmatmul.bf16.gmra.mxu0 %v511
  %v1412 = vpop.f32.mrf.mxu0
  %v1413 = vadd.f32 %v1364, %v1412
  %v1414 = vpop.f32.mrf.mxu0
  %v1415 = vadd.f32 %v1366, %v1414
  %1416 = vmatmul.bf16.gmra.mxu0 %v520
  %v1417 = vpop.f32.mrf.mxu0
  %v1418 = vadd.f32 %v1369, %v1417
  %v1419 = vpop.f32.mrf.mxu0
  %v1420 = vadd.f32 %v1371, %v1419
  %1421 = vmatmul.bf16.gmra.mxu0 %v529
  %v1422 = vpop.f32.mrf.mxu0
  %v1423 = vadd.f32 %v1374, %v1422
  %v1424 = vpop.f32.mrf.mxu0
  %v1425 = vadd.f32 %v1376, %v1424
  %1426 = vdwg.mxu0
  %1427 = vmatpush.bf16.msra.mxu0 %v1087
  %1428 = vmatpush.bf16.msra.mxu0 %v1085
  %1429 = vmatpush.bf16.msra.mxu0 %v1083
  %1430 = vmatpush.bf16.msra.mxu0 %v1081
  %1431 = vmatpush.bf16.msra.mxu0 %v1079
  %1432 = vmatpush.bf16.msra.mxu0 %v1077
  %1433 = vmatpush.bf16.msra.mxu0 %v1075
  %1434 = vmatpush.bf16.msra.mxu0 %v1073
  %1435 = vmatmul.bf16.gmra.mxu0 %v467
  %v1436 = vpop.f32.mrf.mxu0
  %v1437 = vadd.f32 %v1388, %v1436
  %v1438 = vpop.f32.mrf.mxu0
  %v1439 = vadd.f32 %v1390, %v1438
  %1440 = vmatmul.bf16.gmra.mxu0 %v476
  %v1441 = vpop.f32.mrf.mxu0
  %v1442 = vadd.f32 %v1393, %v1441
  %v1443 = vpop.f32.mrf.mxu0
  %v1444 = vadd.f32 %v1395, %v1443
  %1445 = vmatmul.bf16.gmra.mxu0 %v485
  %v1446 = vpop.f32.mrf.mxu0
  %v1447 = vadd.f32 %v1398, %v1446
  %v1448 = vpop.f32.mrf.mxu0
  %v1449 = vadd.f32 %v1400, %v1448
  %1450 = vmatmul.bf16.gmra.mxu0 %v494
  %v1451 = vpop.f32.mrf.mxu0
  %v1452 = vadd.f32 %v1403, %v1451
  %v1453 = vpop.f32.mrf.mxu0
  %v1454 = vadd.f32 %v1405, %v1453
  %1455 = vmatmul.bf16.gmra.mxu0 %v503
  %v1456 = vpop.f32.mrf.mxu0
  %v1457 = vadd.f32 %v1408, %v1456
  %v1458 = vpop.f32.mrf.mxu0
  %v1459 = vadd.f32 %v1410, %v1458
  %1460 = vmatmul.bf16.gmra.mxu0 %v512
  %v1461 = vpop.f32.mrf.mxu0
  %v1462 = vadd.f32 %v1413, %v1461
  %v1463 = vpop.f32.mrf.mxu0
  %v1464 = vadd.f32 %v1415, %v1463
  %1465 = vmatmul.bf16.gmra.mxu0 %v521
  %v1466 = vpop.f32.mrf.mxu0
  %v1467 = vadd.f32 %v1418, %v1466
  %v1468 = vpop.f32.mrf.mxu0
  %v1469 = vadd.f32 %v1420, %v1468
  %1470 = vmatmul.bf16.gmra.mxu0 %v530
  %v1471 = vpop.f32.mrf.mxu0
  %v1472 = vadd.f32 %v1423, %v1471
  %v1473 = vpop.f32.mrf.mxu0
  %v1474 = vadd.f32 %v1425, %v1473
  %1475 = vdwg.mxu0
  %1476 = vmatpush.bf16.msra.mxu0 %v1103
  %1477 = vmatpush.bf16.msra.mxu0 %v1101
  %1478 = vmatpush.bf16.msra.mxu0 %v1099
  %1479 = vmatpush.bf16.msra.mxu0 %v1097
  %1480 = vmatpush.bf16.msra.mxu0 %v1095
  %1481 = vmatpush.bf16.msra.mxu0 %v1093
  %1482 = vmatpush.bf16.msra.mxu0 %v1091
  %1483 = vmatpush.bf16.msra.mxu0 %v1089
  %1484 = vmatmul.bf16.gmra.mxu0 %v468
  %v1485 = vpop.f32.mrf.mxu0
  %v1486 = vadd.f32 %v1437, %v1485
  %v1487 = vpop.f32.mrf.mxu0
  %v1488 = vadd.f32 %v1439, %v1487
  %1489 = vmatmul.bf16.gmra.mxu0 %v477
  %v1490 = vpop.f32.mrf.mxu0
  %v1491 = vadd.f32 %v1442, %v1490
  %v1492 = vpop.f32.mrf.mxu0
  %v1493 = vadd.f32 %v1444, %v1492
  %1494 = vmatmul.bf16.gmra.mxu0 %v486
  %v1495 = vpop.f32.mrf.mxu0
  %v1496 = vadd.f32 %v1447, %v1495
  %v1497 = vpop.f32.mrf.mxu0
  %v1498 = vadd.f32 %v1449, %v1497
  %1499 = vmatmul.bf16.gmra.mxu0 %v495
  %v1500 = vpop.f32.mrf.mxu0
  %v1501 = vadd.f32 %v1452, %v1500
  %v1502 = vpop.f32.mrf.mxu0
  %v1503 = vadd.f32 %v1454, %v1502
  %1504 = vmatmul.bf16.gmra.mxu0 %v504
  %v1505 = vpop.f32.mrf.mxu0
  %v1506 = vadd.f32 %v1457, %v1505
  %v1507 = vpop.f32.mrf.mxu0
  %v1508 = vadd.f32 %v1459, %v1507
  %1509 = vmatmul.bf16.gmra.mxu0 %v513
  %v1510 = vpop.f32.mrf.mxu0
  %v1511 = vadd.f32 %v1462, %v1510
  %v1512 = vpop.f32.mrf.mxu0
  %v1513 = vadd.f32 %v1464, %v1512
  %1514 = vmatmul.bf16.gmra.mxu0 %v522
  %v1515 = vpop.f32.mrf.mxu0
  %v1516 = vadd.f32 %v1467, %v1515
  %v1517 = vpop.f32.mrf.mxu0
  %v1518 = vadd.f32 %v1469, %v1517
  %1519 = vmatmul.bf16.gmra.mxu0 %v531
  %v1520 = vpop.f32.mrf.mxu0
  %v1521 = vadd.f32 %v1472, %v1520
  %v1522 = vpop.f32.mrf.mxu0
  %v1523 = vadd.f32 %v1474, %v1522
  %1524 = vdwg.mxu0
  %1525 = vmatpush.bf16.msra.mxu0 %v1119
  %1526 = vmatpush.bf16.msra.mxu0 %v1117
  %1527 = vmatpush.bf16.msra.mxu0 %v1115
  %1528 = vmatpush.bf16.msra.mxu0 %v1113
  %1529 = vmatpush.bf16.msra.mxu0 %v1111
  %1530 = vmatpush.bf16.msra.mxu0 %v1109
  %1531 = vmatpush.bf16.msra.mxu0 %v1107
  %1532 = vmatpush.bf16.msra.mxu0 %v1105
  %1533 = vmatmul.bf16.gmra.mxu0 %v469
  %v1534 = vpop.f32.mrf.mxu0
  %v1535 = vadd.f32 %v1486, %v1534
  %v1536 = vpop.f32.mrf.mxu0
  %v1537 = vadd.f32 %v1488, %v1536
  %1538 = vmatmul.bf16.gmra.mxu0 %v478
  %v1539 = vpop.f32.mrf.mxu0
  %v1540 = vadd.f32 %v1491, %v1539
  %v1541 = vpop.f32.mrf.mxu0
  %v1542 = vadd.f32 %v1493, %v1541
  %1543 = vmatmul.bf16.gmra.mxu0 %v487
  %v1544 = vpop.f32.mrf.mxu0
  %v1545 = vadd.f32 %v1496, %v1544
  %v1546 = vpop.f32.mrf.mxu0
  %v1547 = vadd.f32 %v1498, %v1546
  %1548 = vmatmul.bf16.gmra.mxu0 %v496
  %v1549 = vpop.f32.mrf.mxu0
  %v1550 = vadd.f32 %v1501, %v1549
  %v1551 = vpop.f32.mrf.mxu0
  %v1552 = vadd.f32 %v1503, %v1551
  %1553 = vmatmul.bf16.gmra.mxu0 %v505
  %v1554 = vpop.f32.mrf.mxu0
  %v1555 = vadd.f32 %v1506, %v1554
  %v1556 = vpop.f32.mrf.mxu0
  %v1557 = vadd.f32 %v1508, %v1556
  %1558 = vmatmul.bf16.gmra.mxu0 %v514
  %v1559 = vpop.f32.mrf.mxu0
  %v1560 = vadd.f32 %v1511, %v1559
  %v1561 = vpop.f32.mrf.mxu0
  %v1562 = vadd.f32 %v1513, %v1561
  %1563 = vmatmul.bf16.gmra.mxu0 %v523
  %v1564 = vpop.f32.mrf.mxu0
  %v1565 = vadd.f32 %v1516, %v1564
  %v1566 = vpop.f32.mrf.mxu0
  %v1567 = vadd.f32 %v1518, %v1566
  %1568 = vmatmul.bf16.gmra.mxu0 %v532
  %v1569 = vpop.f32.mrf.mxu0
  %v1570 = vadd.f32 %v1521, %v1569
  %v1571 = vpop.f32.mrf.mxu0
  %v1572 = vadd.f32 %v1523, %v1571
  %1573 = vdwg.mxu0
  %1574 = vmatpush.bf16.msra.mxu0 %v1135
  %1575 = vmatpush.bf16.msra.mxu0 %v1133
  %1576 = vmatpush.bf16.msra.mxu0 %v1131
  %1577 = vmatpush.bf16.msra.mxu0 %v1129
  %1578 = vmatpush.bf16.msra.mxu0 %v1127
  %1579 = vmatpush.bf16.msra.mxu0 %v1125
  %1580 = vmatpush.bf16.msra.mxu0 %v1123
  %1581 = vmatpush.bf16.msra.mxu0 %v1121
  %1582 = vmatmul.bf16.gmra.mxu0 %v470
  %v1583 = vpop.f32.mrf.mxu0
  %v1584 = vadd.f32 %v1535, %v1583
  %v1585 = vpop.f32.mrf.mxu0
  %v1586 = vadd.f32 %v1537, %v1585
  %1587 = vmatmul.bf16.gmra.mxu0 %v479
  %v1588 = vpop.f32.mrf.mxu0
  %v1589 = vadd.f32 %v1540, %v1588
  %v1590 = vpop.f32.mrf.mxu0
  %v1591 = vadd.f32 %v1542, %v1590
  %1592 = vmatmul.bf16.gmra.mxu0 %v488
  %v1593 = vpop.f32.mrf.mxu0
  %v1594 = vadd.f32 %v1545, %v1593
  %v1595 = vpop.f32.mrf.mxu0
  %v1596 = vadd.f32 %v1547, %v1595
  %1597 = vmatmul.bf16.gmra.mxu0 %v497
  %v1598 = vpop.f32.mrf.mxu0
  %v1599 = vadd.f32 %v1550, %v1598
  %v1600 = vpop.f32.mrf.mxu0
  %v1601 = vadd.f32 %v1552, %v1600
  %1602 = vmatmul.bf16.gmra.mxu0 %v506
  %v1603 = vpop.f32.mrf.mxu0
  %v1604 = vadd.f32 %v1555, %v1603
  %v1605 = vpop.f32.mrf.mxu0
  %v1606 = vadd.f32 %v1557, %v1605
  %1607 = vmatmul.bf16.gmra.mxu0 %v515
  %v1608 = vpop.f32.mrf.mxu0
  %v1609 = vadd.f32 %v1560, %v1608
  %v1610 = vpop.f32.mrf.mxu0
  %v1611 = vadd.f32 %v1562, %v1610
  %1612 = vmatmul.bf16.gmra.mxu0 %v524
  %v1613 = vpop.f32.mrf.mxu0
  %v1614 = vadd.f32 %v1565, %v1613
  %v1615 = vpop.f32.mrf.mxu0
  %v1616 = vadd.f32 %v1567, %v1615
  %1617 = vmatmul.bf16.gmra.mxu0 %v533
  %v1618 = vpop.f32.mrf.mxu0
  %v1619 = vadd.f32 %v1570, %v1618
  %v1620 = vpop.f32.mrf.mxu0
  %v1621 = vadd.f32 %v1572, %v1620
  %1622 = vdwg.mxu0
  %1623 = vmatpush.bf16.msra.mxu0 %v1151
  %1624 = vmatpush.bf16.msra.mxu0 %v1149
  %1625 = vmatpush.bf16.msra.mxu0 %v1147
  %1626 = vmatpush.bf16.msra.mxu0 %v1145
  %1627 = vmatpush.bf16.msra.mxu0 %v1143
  %1628 = vmatpush.bf16.msra.mxu0 %v1141
  %1629 = vmatpush.bf16.msra.mxu0 %v1139
  %1630 = vmatpush.bf16.msra.mxu0 %v1137
  %1631 = vmatmul.bf16.gmra.mxu0 %v471
  %v1632 = vpop.f32.mrf.mxu0
  %v1633 = vadd.f32 %v1584, %v1632
  %v1634 = vpop.f32.mrf.mxu0
  %v1635 = vadd.f32 %v1586, %v1634
  %1636 = vmatmul.bf16.gmra.mxu0 %v480
  %v1637 = vpop.f32.mrf.mxu0
  %v1638 = vadd.f32 %v1589, %v1637
  %v1639 = vpop.f32.mrf.mxu0
  %v1640 = vadd.f32 %v1591, %v1639
  %1641 = vmatmul.bf16.gmra.mxu0 %v489
  %v1642 = vpop.f32.mrf.mxu0
  %v1643 = vadd.f32 %v1594, %v1642
  %v1644 = vpop.f32.mrf.mxu0
  %v1645 = vadd.f32 %v1596, %v1644
  %1646 = vmatmul.bf16.gmra.mxu0 %v498
  %v1647 = vpop.f32.mrf.mxu0
  %v1648 = vadd.f32 %v1599, %v1647
  %v1649 = vpop.f32.mrf.mxu0
  %v1650 = vadd.f32 %v1601, %v1649
  %1651 = vmatmul.bf16.gmra.mxu0 %v507
  %v1652 = vpop.f32.mrf.mxu0
  %v1653 = vadd.f32 %v1604, %v1652
  %v1654 = vpop.f32.mrf.mxu0
  %v1655 = vadd.f32 %v1606, %v1654
  %1656 = vmatmul.bf16.gmra.mxu0 %v516
  %v1657 = vpop.f32.mrf.mxu0
  %v1658 = vadd.f32 %v1609, %v1657
  %v1659 = vpop.f32.mrf.mxu0
  %v1660 = vadd.f32 %v1611, %v1659
  %1661 = vmatmul.bf16.gmra.mxu0 %v525
  %v1662 = vpop.f32.mrf.mxu0
  %v1663 = vadd.f32 %v1614, %v1662
  %v1664 = vpop.f32.mrf.mxu0
  %v1665 = vadd.f32 %v1616, %v1664
  %1666 = vmatmul.bf16.gmra.mxu0 %v534
  %v1667 = vpop.f32.mrf.mxu0
  %v1668 = vadd.f32 %v1619, %v1667
  %v1669 = vpop.f32.mrf.mxu0
  %v1670 = vadd.f32 %v1621, %v1669
  %1671 = vdwg.mxu0
  %1672 = vmatpush.bf16.msra.mxu0 %v1167
  %1673 = vmatpush.bf16.msra.mxu0 %v1165
  %1674 = vmatpush.bf16.msra.mxu0 %v1163
  %1675 = vmatpush.bf16.msra.mxu0 %v1161
  %1676 = vmatpush.bf16.msra.mxu0 %v1159
  %1677 = vmatpush.bf16.msra.mxu0 %v1157
  %1678 = vmatpush.bf16.msra.mxu0 %v1155
  %1679 = vmatpush.bf16.msra.mxu0 %v1153
  %1680 = vmatmul.bf16.gmra.mxu0 %v472
  %v1681 = vpop.f32.mrf.mxu0
  %v1682 = vadd.f32 %v1633, %v1681
  %v1683 = vpop.f32.mrf.mxu0
  %v1684 = vadd.f32 %v1635, %v1683
  %1685 = vmatmul.bf16.gmra.mxu0 %v481
  %v1686 = vpop.f32.mrf.mxu0
  %v1687 = vadd.f32 %v1638, %v1686
  %v1688 = vpop.f32.mrf.mxu0
  %v1689 = vadd.f32 %v1640, %v1688
  %1690 = vmatmul.bf16.gmra.mxu0 %v490
  %v1691 = vpop.f32.mrf.mxu0
  %v1692 = vadd.f32 %v1643, %v1691
  %v1693 = vpop.f32.mrf.mxu0
  %v1694 = vadd.f32 %v1645, %v1693
  %1695 = vmatmul.bf16.gmra.mxu0 %v499
  %v1696 = vpop.f32.mrf.mxu0
  %v1697 = vadd.f32 %v1648, %v1696
  %v1698 = vpop.f32.mrf.mxu0
  %v1699 = vadd.f32 %v1650, %v1698
  %1700 = vmatmul.bf16.gmra.mxu0 %v508
  %v1701 = vpop.f32.mrf.mxu0
  %v1702 = vadd.f32 %v1653, %v1701
  %v1703 = vpop.f32.mrf.mxu0
  %v1704 = vadd.f32 %v1655, %v1703
  %1705 = vmatmul.bf16.gmra.mxu0 %v517
  %v1706 = vpop.f32.mrf.mxu0
  %v1707 = vadd.f32 %v1658, %v1706
  %v1708 = vpop.f32.mrf.mxu0
  %v1709 = vadd.f32 %v1660, %v1708
  %1710 = vmatmul.bf16.gmra.mxu0 %v526
  %v1711 = vpop.f32.mrf.mxu0
  %v1712 = vadd.f32 %v1663, %v1711
  %v1713 = vpop.f32.mrf.mxu0
  %v1714 = vadd.f32 %v1665, %v1713
  %1715 = vmatmul.bf16.gmra.mxu0 %v535
  %v1716 = vpop.f32.mrf.mxu0
  %v1717 = vadd.f32 %v1668, %v1716
  %v1718 = vpop.f32.mrf.mxu0
  %v1719 = vadd.f32 %v1670, %v1718
  %1720 = vdwg.mxu0
  %1721 = vmatpush.bf16.msra.mxu0 %v1183
  %1722 = vmatpush.bf16.msra.mxu0 %v1181
  %1723 = vmatpush.bf16.msra.mxu0 %v1179
  %1724 = vmatpush.bf16.msra.mxu0 %v1177
  %1725 = vmatpush.bf16.msra.mxu0 %v1175
  %1726 = vmatpush.bf16.msra.mxu0 %v1173
  %1727 = vmatpush.bf16.msra.mxu0 %v1171
  %1728 = vmatpush.bf16.msra.mxu0 %v1169
  %1729 = vmatmul.bf16.gmra.mxu0 %v473
  %v1730 = vpop.f32.mrf.mxu0
  %v1731 = vadd.f32 %v1682, %v1730
  %v1732 = vpop.f32.mrf.mxu0
  %v1733 = vadd.f32 %v1684, %v1732
  %1734 = vmatmul.bf16.gmra.mxu0 %v482
  %v1735 = vpop.f32.mrf.mxu0
  %v1736 = vadd.f32 %v1687, %v1735
  %v1737 = vpop.f32.mrf.mxu0
  %v1738 = vadd.f32 %v1689, %v1737
  %1739 = vmatmul.bf16.gmra.mxu0 %v491
  %v1740 = vpop.f32.mrf.mxu0
  %v1741 = vadd.f32 %v1692, %v1740
  %v1742 = vpop.f32.mrf.mxu0
  %v1743 = vadd.f32 %v1694, %v1742
  %1744 = vmatmul.bf16.gmra.mxu0 %v500
  %v1745 = vpop.f32.mrf.mxu0
  %v1746 = vadd.f32 %v1697, %v1745
  %v1747 = vpop.f32.mrf.mxu0
  %v1748 = vadd.f32 %v1699, %v1747
  %1749 = vmatmul.bf16.gmra.mxu0 %v509
  %v1750 = vpop.f32.mrf.mxu0
  %v1751 = vadd.f32 %v1702, %v1750
  %v1752 = vpop.f32.mrf.mxu0
  %v1753 = vadd.f32 %v1704, %v1752
  %1754 = vmatmul.bf16.gmra.mxu0 %v518
  %v1755 = vpop.f32.mrf.mxu0
  %v1756 = vadd.f32 %v1707, %v1755
  %v1757 = vpop.f32.mrf.mxu0
  %v1758 = vadd.f32 %v1709, %v1757
  %1759 = vmatmul.bf16.gmra.mxu0 %v527
  %v1760 = vpop.f32.mrf.mxu0
  %v1761 = vadd.f32 %v1712, %v1760
  %v1762 = vpop.f32.mrf.mxu0
  %v1763 = vadd.f32 %v1714, %v1762
  %1764 = vmatmul.bf16.gmra.mxu0 %v536
  %v1765 = vpop.f32.mrf.mxu0
  %v1766 = vadd.f32 %v1717, %v1765
  %v1767 = vpop.f32.mrf.mxu0
  %v1768 = vadd.f32 %v1719, %v1767
  %1769 = vdwg.mxu0
  %1770 = vmatpush.bf16.msra.mxu0 %v1056
  %1771 = vmatpush.bf16.msra.mxu0 %v1054
  %1772 = vmatpush.bf16.msra.mxu0 %v1052
  %1773 = vmatpush.bf16.msra.mxu0 %v1050
  %1774 = vmatpush.bf16.msra.mxu0 %v1048
  %1775 = vmatpush.bf16.msra.mxu0 %v1046
  %1776 = vmatpush.bf16.msra.mxu0 %v1044
  %1777 = vmatpush.bf16.msra.mxu0 %v1042
  %1778 = vmatmul.bf16.gmra.mxu0 %v465
  %v1779 = vpop.f32.mrf.mxu0
  %v1780 = vadd.f32 0.0, %v1779
  %v1781 = vpop.f32.mrf.mxu0
  %v1782 = vadd.f32 0.0, %v1781
  %1783 = vmatmul.bf16.gmra.mxu0 %v474
  %v1784 = vpop.f32.mrf.mxu0
  %v1785 = vadd.f32 0.0, %v1784
  %v1786 = vpop.f32.mrf.mxu0
  %v1787 = vadd.f32 0.0, %v1786
  %1788 = vmatmul.bf16.gmra.mxu0 %v483
  %v1789 = vpop.f32.mrf.mxu0
  %v1790 = vadd.f32 0.0, %v1789
  %v1791 = vpop.f32.mrf.mxu0
  %v1792 = vadd.f32 0.0, %v1791
  %1793 = vmatmul.bf16.gmra.mxu0 %v492
  %v1794 = vpop.f32.mrf.mxu0
  %v1795 = vadd.f32 0.0, %v1794
  %v1796 = vpop.f32.mrf.mxu0
  %v1797 = vadd.f32 0.0, %v1796
  %1798 = vmatmul.bf16.gmra.mxu0 %v501
  %v1799 = vpop.f32.mrf.mxu0
  %v1800 = vadd.f32 0.0, %v1799
  %v1801 = vpop.f32.mrf.mxu0
  %v1802 = vadd.f32 0.0, %v1801
  %1803 = vmatmul.bf16.gmra.mxu0 %v510
  %v1804 = vpop.f32.mrf.mxu0
  %v1805 = vadd.f32 0.0, %v1804
  %v1806 = vpop.f32.mrf.mxu0
  %v1807 = vadd.f32 0.0, %v1806
  %1808 = vmatmul.bf16.gmra.mxu0 %v519
  %v1809 = vpop.f32.mrf.mxu0
  %v1810 = vadd.f32 0.0, %v1809
  %v1811 = vpop.f32.mrf.mxu0
  %v1812 = vadd.f32 0.0, %v1811
  %1813 = vmatmul.bf16.gmra.mxu0 %v528
  %v1814 = vpop.f32.mrf.mxu0
  %v1815 = vadd.f32 0.0, %v1814
  %v1816 = vpop.f32.mrf.mxu0
  %v1817 = vadd.f32 0.0, %v1816
  %1818 = vdwg.mxu0
  %1819 = vmatpush.bf16.msra.mxu0 %v1072
  %1820 = vmatpush.bf16.msra.mxu0 %v1070
  %1821 = vmatpush.bf16.msra.mxu0 %v1068
  %1822 = vmatpush.bf16.msra.mxu0 %v1066
  %1823 = vmatpush.bf16.msra.mxu0 %v1064
  %1824 = vmatpush.bf16.msra.mxu0 %v1062
  %1825 = vmatpush.bf16.msra.mxu0 %v1060
  %1826 = vmatpush.bf16.msra.mxu0 %v1058
  %1827 = vmatmul.bf16.gmra.mxu0 %v466
  %v1828 = vpop.f32.mrf.mxu0
  %v1829 = vadd.f32 %v1780, %v1828
  %v1830 = vpop.f32.mrf.mxu0
  %v1831 = vadd.f32 %v1782, %v1830
  %1832 = vmatmul.bf16.gmra.mxu0 %v475
  %v1833 = vpop.f32.mrf.mxu0
  %v1834 = vadd.f32 %v1785, %v1833
  %v1835 = vpop.f32.mrf.mxu0
  %v1836 = vadd.f32 %v1787, %v1835
  %1837 = vmatmul.bf16.gmra.mxu0 %v484
  %v1838 = vpop.f32.mrf.mxu0
  %v1839 = vadd.f32 %v1790, %v1838
  %v1840 = vpop.f32.mrf.mxu0
  %v1841 = vadd.f32 %v1792, %v1840
  %1842 = vmatmul.bf16.gmra.mxu0 %v493
  %v1843 = vpop.f32.mrf.mxu0
  %v1844 = vadd.f32 %v1795, %v1843
  %v1845 = vpop.f32.mrf.mxu0
  %v1846 = vadd.f32 %v1797, %v1845
  %1847 = vmatmul.bf16.gmra.mxu0 %v502
  %v1848 = vpop.f32.mrf.mxu0
  %v1849 = vadd.f32 %v1800, %v1848
  %v1850 = vpop.f32.mrf.mxu0
  %v1851 = vadd.f32 %v1802, %v1850
  %1852 = vmatmul.bf16.gmra.mxu0 %v511
  %v1853 = vpop.f32.mrf.mxu0
  %v1854 = vadd.f32 %v1805, %v1853
  %v1855 = vpop.f32.mrf.mxu0
  %v1856 = vadd.f32 %v1807, %v1855
  %1857 = vmatmul.bf16.gmra.mxu0 %v520
  %v1858 = vpop.f32.mrf.mxu0
  %v1859 = vadd.f32 %v1810, %v1858
  %v1860 = vpop.f32.mrf.mxu0
  %v1861 = vadd.f32 %v1812, %v1860
  %1862 = vmatmul.bf16.gmra.mxu0 %v529
  %v1863 = vpop.f32.mrf.mxu0
  %v1864 = vadd.f32 %v1815, %v1863
  %v1865 = vpop.f32.mrf.mxu0
  %v1866 = vadd.f32 %v1817, %v1865
  %1867 = vdwg.mxu0
  %1868 = vmatpush.bf16.msra.mxu0 %v1088
  %1869 = vmatpush.bf16.msra.mxu0 %v1086
  %1870 = vmatpush.bf16.msra.mxu0 %v1084
  %1871 = vmatpush.bf16.msra.mxu0 %v1082
  %1872 = vmatpush.bf16.msra.mxu0 %v1080
  %1873 = vmatpush.bf16.msra.mxu0 %v1078
  %1874 = vmatpush.bf16.msra.mxu0 %v1076
  %1875 = vmatpush.bf16.msra.mxu0 %v1074
  %1876 = vmatmul.bf16.gmra.mxu0 %v467
  %v1877 = vpop.f32.mrf.mxu0
  %v1878 = vadd.f32 %v1829, %v1877
  %v1879 = vpop.f32.mrf.mxu0
  %v1880 = vadd.f32 %v1831, %v1879
  %1881 = vmatmul.bf16.gmra.mxu0 %v476
  %v1882 = vpop.f32.mrf.mxu0
  %v1883 = vadd.f32 %v1834, %v1882
  %v1884 = vpop.f32.mrf.mxu0
  %v1885 = vadd.f32 %v1836, %v1884
  %1886 = vmatmul.bf16.gmra.mxu0 %v485
  %v1887 = vpop.f32.mrf.mxu0
  %v1888 = vadd.f32 %v1839, %v1887
  %v1889 = vpop.f32.mrf.mxu0
  %v1890 = vadd.f32 %v1841, %v1889
  %1891 = vmatmul.bf16.gmra.mxu0 %v494
  %v1892 = vpop.f32.mrf.mxu0
  %v1893 = vadd.f32 %v1844, %v1892
  %v1894 = vpop.f32.mrf.mxu0
  %v1895 = vadd.f32 %v1846, %v1894
  %1896 = vmatmul.bf16.gmra.mxu0 %v503
  %v1897 = vpop.f32.mrf.mxu0
  %v1898 = vadd.f32 %v1849, %v1897
  %v1899 = vpop.f32.mrf.mxu0
  %v1900 = vadd.f32 %v1851, %v1899
  %1901 = vmatmul.bf16.gmra.mxu0 %v512
  %v1902 = vpop.f32.mrf.mxu0
  %v1903 = vadd.f32 %v1854, %v1902
  %v1904 = vpop.f32.mrf.mxu0
  %v1905 = vadd.f32 %v1856, %v1904
  %1906 = vmatmul.bf16.gmra.mxu0 %v521
  %v1907 = vpop.f32.mrf.mxu0
  %v1908 = vadd.f32 %v1859, %v1907
  %v1909 = vpop.f32.mrf.mxu0
  %v1910 = vadd.f32 %v1861, %v1909
  %1911 = vmatmul.bf16.gmra.mxu0 %v530
  %v1912 = vpop.f32.mrf.mxu0
  %v1913 = vadd.f32 %v1864, %v1912
  %v1914 = vpop.f32.mrf.mxu0
  %v1915 = vadd.f32 %v1866, %v1914
  %1916 = vdwg.mxu0
  %1917 = vmatpush.bf16.msra.mxu0 %v1104
  %1918 = vmatpush.bf16.msra.mxu0 %v1102
  %1919 = vmatpush.bf16.msra.mxu0 %v1100
  %1920 = vmatpush.bf16.msra.mxu0 %v1098
  %1921 = vmatpush.bf16.msra.mxu0 %v1096
  %1922 = vmatpush.bf16.msra.mxu0 %v1094
  %1923 = vmatpush.bf16.msra.mxu0 %v1092
  %1924 = vmatpush.bf16.msra.mxu0 %v1090
  %1925 = vmatmul.bf16.gmra.mxu0 %v468
  %v1926 = vpop.f32.mrf.mxu0
  %v1927 = vadd.f32 %v1878, %v1926
  %v1928 = vpop.f32.mrf.mxu0
  %v1929 = vadd.f32 %v1880, %v1928
  %1930 = vmatmul.bf16.gmra.mxu0 %v477
  %v1931 = vpop.f32.mrf.mxu0
  %v1932 = vadd.f32 %v1883, %v1931
  %v1933 = vpop.f32.mrf.mxu0
  %v1934 = vadd.f32 %v1885, %v1933
  %1935 = vmatmul.bf16.gmra.mxu0 %v486
  %v1936 = vpop.f32.mrf.mxu0
  %v1937 = vadd.f32 %v1888, %v1936
  %v1938 = vpop.f32.mrf.mxu0
  %v1939 = vadd.f32 %v1890, %v1938
  %1940 = vmatmul.bf16.gmra.mxu0 %v495
  %v1941 = vpop.f32.mrf.mxu0
  %v1942 = vadd.f32 %v1893, %v1941
  %v1943 = vpop.f32.mrf.mxu0
  %v1944 = vadd.f32 %v1895, %v1943
  %1945 = vmatmul.bf16.gmra.mxu0 %v504
  %v1946 = vpop.f32.mrf.mxu0
  %v1947 = vadd.f32 %v1898, %v1946
  %v1948 = vpop.f32.mrf.mxu0
  %v1949 = vadd.f32 %v1900, %v1948
  %1950 = vmatmul.bf16.gmra.mxu0 %v513
  %v1951 = vpop.f32.mrf.mxu0
  %v1952 = vadd.f32 %v1903, %v1951
  %v1953 = vpop.f32.mrf.mxu0
  %v1954 = vadd.f32 %v1905, %v1953
  %1955 = vmatmul.bf16.gmra.mxu0 %v522
  %v1956 = vpop.f32.mrf.mxu0
  %v1957 = vadd.f32 %v1908, %v1956
  %v1958 = vpop.f32.mrf.mxu0
  %v1959 = vadd.f32 %v1910, %v1958
  %1960 = vmatmul.bf16.gmra.mxu0 %v531
  %v1961 = vpop.f32.mrf.mxu0
  %v1962 = vadd.f32 %v1913, %v1961
  %v1963 = vpop.f32.mrf.mxu0
  %v1964 = vadd.f32 %v1915, %v1963
  %1965 = vdwg.mxu0
  %1966 = vmatpush.bf16.msra.mxu0 %v1120
  %1967 = vmatpush.bf16.msra.mxu0 %v1118
  %1968 = vmatpush.bf16.msra.mxu0 %v1116
  %1969 = vmatpush.bf16.msra.mxu0 %v1114
  %1970 = vmatpush.bf16.msra.mxu0 %v1112
  %1971 = vmatpush.bf16.msra.mxu0 %v1110
  %1972 = vmatpush.bf16.msra.mxu0 %v1108
  %1973 = vmatpush.bf16.msra.mxu0 %v1106
  %1974 = vmatmul.bf16.gmra.mxu0 %v469
  %v1975 = vpop.f32.mrf.mxu0
  %v1976 = vadd.f32 %v1927, %v1975
  %v1977 = vpop.f32.mrf.mxu0
  %v1978 = vadd.f32 %v1929, %v1977
  %1979 = vmatmul.bf16.gmra.mxu0 %v478
  %v1980 = vpop.f32.mrf.mxu0
  %v1981 = vadd.f32 %v1932, %v1980
  %v1982 = vpop.f32.mrf.mxu0
  %v1983 = vadd.f32 %v1934, %v1982
  %1984 = vmatmul.bf16.gmra.mxu0 %v487
  %v1985 = vpop.f32.mrf.mxu0
  %v1986 = vadd.f32 %v1937, %v1985
  %v1987 = vpop.f32.mrf.mxu0
  %v1988 = vadd.f32 %v1939, %v1987
  %1989 = vmatmul.bf16.gmra.mxu0 %v496
  %v1990 = vpop.f32.mrf.mxu0
  %v1991 = vadd.f32 %v1942, %v1990
  %v1992 = vpop.f32.mrf.mxu0
  %v1993 = vadd.f32 %v1944, %v1992
  %1994 = vmatmul.bf16.gmra.mxu0 %v505
  %v1995 = vpop.f32.mrf.mxu0
  %v1996 = vadd.f32 %v1947, %v1995
  %v1997 = vpop.f32.mrf.mxu0
  %v1998 = vadd.f32 %v1949, %v1997
  %1999 = vmatmul.bf16.gmra.mxu0 %v514
  %v2000 = vpop.f32.mrf.mxu0
  %v2001 = vadd.f32 %v1952, %v2000
  %v2002 = vpop.f32.mrf.mxu0
  %v2003 = vadd.f32 %v1954, %v2002
  %2004 = vmatmul.bf16.gmra.mxu0 %v523
  %v2005 = vpop.f32.mrf.mxu0
  %v2006 = vadd.f32 %v1957, %v2005
  %v2007 = vpop.f32.mrf.mxu0
  %v2008 = vadd.f32 %v1959, %v2007
  %2009 = vmatmul.bf16.gmra.mxu0 %v532
  %v2010 = vpop.f32.mrf.mxu0
  %v2011 = vadd.f32 %v1962, %v2010
  %v2012 = vpop.f32.mrf.mxu0
  %v2013 = vadd.f32 %v1964, %v2012
  %2014 = vdwg.mxu0
  %2015 = vmatpush.bf16.msra.mxu0 %v1136
  %2016 = vmatpush.bf16.msra.mxu0 %v1134
  %2017 = vmatpush.bf16.msra.mxu0 %v1132
  %2018 = vmatpush.bf16.msra.mxu0 %v1130
  %2019 = vmatpush.bf16.msra.mxu0 %v1128
  %2020 = vmatpush.bf16.msra.mxu0 %v1126
  %2021 = vmatpush.bf16.msra.mxu0 %v1124
  %2022 = vmatpush.bf16.msra.mxu0 %v1122
  %2023 = vmatmul.bf16.gmra.mxu0 %v470
  %v2024 = vpop.f32.mrf.mxu0
  %v2025 = vadd.f32 %v1976, %v2024
  %v2026 = vpop.f32.mrf.mxu0
  %v2027 = vadd.f32 %v1978, %v2026
  %2028 = vmatmul.bf16.gmra.mxu0 %v479
  %v2029 = vpop.f32.mrf.mxu0
  %v2030 = vadd.f32 %v1981, %v2029
  %v2031 = vpop.f32.mrf.mxu0
  %v2032 = vadd.f32 %v1983, %v2031
  %2033 = vmatmul.bf16.gmra.mxu0 %v488
  %v2034 = vpop.f32.mrf.mxu0
  %v2035 = vadd.f32 %v1986, %v2034
  %v2036 = vpop.f32.mrf.mxu0
  %v2037 = vadd.f32 %v1988, %v2036
  %2038 = vmatmul.bf16.gmra.mxu0 %v497
  %v2039 = vpop.f32.mrf.mxu0
  %v2040 = vadd.f32 %v1991, %v2039
  %v2041 = vpop.f32.mrf.mxu0
  %v2042 = vadd.f32 %v1993, %v2041
  %2043 = vmatmul.bf16.gmra.mxu0 %v506
  %v2044 = vpop.f32.mrf.mxu0
  %v2045 = vadd.f32 %v1996, %v2044
  %v2046 = vpop.f32.mrf.mxu0
  %v2047 = vadd.f32 %v1998, %v2046
  %2048 = vmatmul.bf16.gmra.mxu0 %v515
  %v2049 = vpop.f32.mrf.mxu0
  %v2050 = vadd.f32 %v2001, %v2049
  %v2051 = vpop.f32.mrf.mxu0
  %v2052 = vadd.f32 %v2003, %v2051
  %2053 = vmatmul.bf16.gmra.mxu0 %v524
  %v2054 = vpop.f32.mrf.mxu0
  %v2055 = vadd.f32 %v2006, %v2054
  %v2056 = vpop.f32.mrf.mxu0
  %v2057 = vadd.f32 %v2008, %v2056
  %2058 = vmatmul.bf16.gmra.mxu0 %v533
  %v2059 = vpop.f32.mrf.mxu0
  %v2060 = vadd.f32 %v2011, %v2059
  %v2061 = vpop.f32.mrf.mxu0
  %v2062 = vadd.f32 %v2013, %v2061
  %2063 = vdwg.mxu0
  %2064 = vmatpush.bf16.msra.mxu0 %v1152
  %2065 = vmatpush.bf16.msra.mxu0 %v1150
  %2066 = vmatpush.bf16.msra.mxu0 %v1148
  %2067 = vmatpush.bf16.msra.mxu0 %v1146
  %2068 = vmatpush.bf16.msra.mxu0 %v1144
  %2069 = vmatpush.bf16.msra.mxu0 %v1142
  %2070 = vmatpush.bf16.msra.mxu0 %v1140
  %2071 = vmatpush.bf16.msra.mxu0 %v1138
  %2072 = vmatmul.bf16.gmra.mxu0 %v471
  %v2073 = vpop.f32.mrf.mxu0
  %v2074 = vadd.f32 %v2025, %v2073
  %v2075 = vpop.f32.mrf.mxu0
  %v2076 = vadd.f32 %v2027, %v2075
  %2077 = vmatmul.bf16.gmra.mxu0 %v480
  %v2078 = vpop.f32.mrf.mxu0
  %v2079 = vadd.f32 %v2030, %v2078
  %v2080 = vpop.f32.mrf.mxu0
  %v2081 = vadd.f32 %v2032, %v2080
  %2082 = vmatmul.bf16.gmra.mxu0 %v489
  %v2083 = vpop.f32.mrf.mxu0
  %v2084 = vadd.f32 %v2035, %v2083
  %v2085 = vpop.f32.mrf.mxu0
  %v2086 = vadd.f32 %v2037, %v2085
  %2087 = vmatmul.bf16.gmra.mxu0 %v498
  %v2088 = vpop.f32.mrf.mxu0
  %v2089 = vadd.f32 %v2040, %v2088
  %v2090 = vpop.f32.mrf.mxu0
  %v2091 = vadd.f32 %v2042, %v2090
  %2092 = vmatmul.bf16.gmra.mxu0 %v507
  %v2093 = vpop.f32.mrf.mxu0
  %v2094 = vadd.f32 %v2045, %v2093
  %v2095 = vpop.f32.mrf.mxu0
  %v2096 = vadd.f32 %v2047, %v2095
  %2097 = vmatmul.bf16.gmra.mxu0 %v516
  %v2098 = vpop.f32.mrf.mxu0
  %v2099 = vadd.f32 %v2050, %v2098
  %v2100 = vpop.f32.mrf.mxu0
  %v2101 = vadd.f32 %v2052, %v2100
  %2102 = vmatmul.bf16.gmra.mxu0 %v525
  %v2103 = vpop.f32.mrf.mxu0
  %v2104 = vadd.f32 %v2055, %v2103
  %v2105 = vpop.f32.mrf.mxu0
  %v2106 = vadd.f32 %v2057, %v2105
  %2107 = vmatmul.bf16.gmra.mxu0 %v534
  %v2108 = vpop.f32.mrf.mxu0
  %v2109 = vadd.f32 %v2060, %v2108
  %v2110 = vpop.f32.mrf.mxu0
  %v2111 = vadd.f32 %v2062, %v2110
  %2112 = vdwg.mxu0
  %2113 = vmatpush.bf16.msra.mxu0 %v1168
  %2114 = vmatpush.bf16.msra.mxu0 %v1166
  %2115 = vmatpush.bf16.msra.mxu0 %v1164
  %2116 = vmatpush.bf16.msra.mxu0 %v1162
  %2117 = vmatpush.bf16.msra.mxu0 %v1160
  %2118 = vmatpush.bf16.msra.mxu0 %v1158
  %2119 = vmatpush.bf16.msra.mxu0 %v1156
  %2120 = vmatpush.bf16.msra.mxu0 %v1154
  %2121 = vmatmul.bf16.gmra.mxu0 %v472
  %v2122 = vpop.f32.mrf.mxu0
  %v2123 = vadd.f32 %v2074, %v2122
  %v2124 = vpop.f32.mrf.mxu0
  %v2125 = vadd.f32 %v2076, %v2124
  %2126 = vmatmul.bf16.gmra.mxu0 %v481
  %v2127 = vpop.f32.mrf.mxu0
  %v2128 = vadd.f32 %v2079, %v2127
  %v2129 = vpop.f32.mrf.mxu0
  %v2130 = vadd.f32 %v2081, %v2129
  %2131 = vmatmul.bf16.gmra.mxu0 %v490
  %v2132 = vpop.f32.mrf.mxu0
  %v2133 = vadd.f32 %v2084, %v2132
  %v2134 = vpop.f32.mrf.mxu0
  %v2135 = vadd.f32 %v2086, %v2134
  %2136 = vmatmul.bf16.gmra.mxu0 %v499
  %v2137 = vpop.f32.mrf.mxu0
  %v2138 = vadd.f32 %v2089, %v2137
  %v2139 = vpop.f32.mrf.mxu0
  %v2140 = vadd.f32 %v2091, %v2139
  %2141 = vmatmul.bf16.gmra.mxu0 %v508
  %v2142 = vpop.f32.mrf.mxu0
  %v2143 = vadd.f32 %v2094, %v2142
  %v2144 = vpop.f32.mrf.mxu0
  %v2145 = vadd.f32 %v2096, %v2144
  %2146 = vmatmul.bf16.gmra.mxu0 %v517
  %v2147 = vpop.f32.mrf.mxu0
  %v2148 = vadd.f32 %v2099, %v2147
  %v2149 = vpop.f32.mrf.mxu0
  %v2150 = vadd.f32 %v2101, %v2149
  %2151 = vmatmul.bf16.gmra.mxu0 %v526
  %v2152 = vpop.f32.mrf.mxu0
  %v2153 = vadd.f32 %v2104, %v2152
  %v2154 = vpop.f32.mrf.mxu0
  %v2155 = vadd.f32 %v2106, %v2154
  %2156 = vmatmul.bf16.gmra.mxu0 %v535
  %v2157 = vpop.f32.mrf.mxu0
  %v2158 = vadd.f32 %v2109, %v2157
  %v2159 = vpop.f32.mrf.mxu0
  %v2160 = vadd.f32 %v2111, %v2159
  %2161 = vdwg.mxu0
  %2162 = vmatpush.bf16.msra.mxu0 %v1184
  %2163 = vmatpush.bf16.msra.mxu0 %v1182
  %2164 = vmatpush.bf16.msra.mxu0 %v1180
  %2165 = vmatpush.bf16.msra.mxu0 %v1178
  %2166 = vmatpush.bf16.msra.mxu0 %v1176
  %2167 = vmatpush.bf16.msra.mxu0 %v1174
  %2168 = vmatpush.bf16.msra.mxu0 %v1172
  %2169 = vmatpush.bf16.msra.mxu0 %v1170
  %2170 = vmatmul.bf16.gmra.mxu0 %v473
  %v2171 = vpop.f32.mrf.mxu0
  %v2172 = vadd.f32 %v2123, %v2171
  %v2173 = vpop.f32.mrf.mxu0
  %v2174 = vadd.f32 %v2125, %v2173
  %2175 = vmatmul.bf16.gmra.mxu0 %v482
  %v2176 = vpop.f32.mrf.mxu0
  %v2177 = vadd.f32 %v2128, %v2176
  %v2178 = vpop.f32.mrf.mxu0
  %v2179 = vadd.f32 %v2130, %v2178
  %2180 = vmatmul.bf16.gmra.mxu0 %v491
  %v2181 = vpop.f32.mrf.mxu0
  %v2182 = vadd.f32 %v2133, %v2181
  %v2183 = vpop.f32.mrf.mxu0
  %v2184 = vadd.f32 %v2135, %v2183
  %2185 = vmatmul.bf16.gmra.mxu0 %v500
  %v2186 = vpop.f32.mrf.mxu0
  %v2187 = vadd.f32 %v2138, %v2186
  %v2188 = vpop.f32.mrf.mxu0
  %v2189 = vadd.f32 %v2140, %v2188
  %2190 = vmatmul.bf16.gmra.mxu0 %v509
  %v2191 = vpop.f32.mrf.mxu0
  %v2192 = vadd.f32 %v2143, %v2191
  %v2193 = vpop.f32.mrf.mxu0
  %v2194 = vadd.f32 %v2145, %v2193
  %2195 = vmatmul.bf16.gmra.mxu0 %v518
  %v2196 = vpop.f32.mrf.mxu0
  %v2197 = vadd.f32 %v2148, %v2196
  %v2198 = vpop.f32.mrf.mxu0
  %v2199 = vadd.f32 %v2150, %v2198
  %2200 = vmatmul.bf16.gmra.mxu0 %v527
  %v2201 = vpop.f32.mrf.mxu0
  %v2202 = vadd.f32 %v2153, %v2201
  %v2203 = vpop.f32.mrf.mxu0
  %v2204 = vadd.f32 %v2155, %v2203
  %2205 = vmatmul.bf16.gmra.mxu0 %v536
  %v2206 = vpop.f32.mrf.mxu0
  %v2207 = vadd.f32 %v2158, %v2206
  %v2208 = vpop.f32.mrf.mxu0
  %v2209 = vadd.f32 %v2160, %v2208
  %2210 = vdwg.mxu0
  %v2211 = vld [vmem:[%s2] sm:$0x3]
  %v2213 = vperm.slane %v2211, 0
  %v2214 = vperm.slane %v2211, 1
  %v2217 = vmul.f32 %v1731, %v2213
  %v2218 = vmul.f32 %v2172, %v2214
  %v2219 = vmul.f32 %v1733, %v2213
  %v2220 = vmul.f32 %v2174, %v2214
  %v2221 = vmul.f32 %v1736, %v2213
  %v2222 = vmul.f32 %v2177, %v2214
  %v2223 = vmul.f32 %v1738, %v2213
  %v2224 = vmul.f32 %v2179, %v2214
  %v2225 = vmul.f32 %v1741, %v2213
  %v2226 = vmul.f32 %v2182, %v2214
  %v2227 = vmul.f32 %v1743, %v2213
  %v2228 = vmul.f32 %v2184, %v2214
  %v2229 = vmul.f32 %v1746, %v2213
  %v2230 = vmul.f32 %v2187, %v2214
  %v2231 = vmul.f32 %v1748, %v2213
  %v2232 = vmul.f32 %v2189, %v2214
  %v2233 = vmul.f32 %v1751, %v2213
  %v2234 = vmul.f32 %v2192, %v2214
  %v2235 = vmul.f32 %v1753, %v2213
  %v2236 = vmul.f32 %v2194, %v2214
  %v2237 = vmul.f32 %v1756, %v2213
  %v2238 = vmul.f32 %v2197, %v2214
  %v2239 = vmul.f32 %v1758, %v2213
  %v2240 = vmul.f32 %v2199, %v2214
  %v2241 = vmul.f32 %v1761, %v2213
  %v2242 = vmul.f32 %v2202, %v2214
  %v2243 = vmul.f32 %v1763, %v2213
  %v2244 = vmul.f32 %v2204, %v2214
  %v2245 = vmul.f32 %v1766, %v2213
  %v2246 = vmul.f32 %v2207, %v2214
  %v2247 = vmul.f32 %v1768, %v2213
  %v2248 = vmul.f32 %v2209, %v2214
  %v2249 = vld [vmem:[%s3] sm:$0x3]
  %v2251 = vperm.slane %v2249, 0
  %v2252 = vperm.slane %v2249, 1
  %v2255 = vadd.f32 %v2217, %v2251
  %v2256 = vadd.f32 %v2218, %v2252
  %v2257 = vadd.f32 %v2219, %v2251
  %v2258 = vadd.f32 %v2220, %v2252
  %v2259 = vadd.f32 %v2221, %v2251
  %v2260 = vadd.f32 %v2222, %v2252
  %v2261 = vadd.f32 %v2223, %v2251
  %v2262 = vadd.f32 %v2224, %v2252
  %v2263 = vadd.f32 %v2225, %v2251
  %v2264 = vadd.f32 %v2226, %v2252
  %v2265 = vadd.f32 %v2227, %v2251
  %v2266 = vadd.f32 %v2228, %v2252
  %v2267 = vadd.f32 %v2229, %v2251
  %v2268 = vadd.f32 %v2230, %v2252
  %v2269 = vadd.f32 %v2231, %v2251
  %v2270 = vadd.f32 %v2232, %v2252
  %v2271 = vadd.f32 %v2233, %v2251
  %v2272 = vadd.f32 %v2234, %v2252
  %v2273 = vadd.f32 %v2235, %v2251
  %v2274 = vadd.f32 %v2236, %v2252
  %v2275 = vadd.f32 %v2237, %v2251
  %v2276 = vadd.f32 %v2238, %v2252
  %v2277 = vadd.f32 %v2239, %v2251
  %v2278 = vadd.f32 %v2240, %v2252
  %v2279 = vadd.f32 %v2241, %v2251
  %v2280 = vadd.f32 %v2242, %v2252
  %v2281 = vadd.f32 %v2243, %v2251
  %v2282 = vadd.f32 %v2244, %v2252
  %v2283 = vadd.f32 %v2245, %v2251
  %v2284 = vadd.f32 %v2246, %v2252
  %v2285 = vadd.f32 %v2247, %v2251
  %v2286 = vadd.f32 %v2248, %v2252
  %v2287 = vmax.f32 %v2255, 0.0
  %v2288 = vmax.f32 %v2256, 0.0
  %v2289 = vmax.f32 %v2257, 0.0
  %v2290 = vmax.f32 %v2258, 0.0
  %v2291 = vmax.f32 %v2259, 0.0
  %v2292 = vmax.f32 %v2260, 0.0
  %v2293 = vmax.f32 %v2261, 0.0
  %v2294 = vmax.f32 %v2262, 0.0
  %v2295 = vmax.f32 %v2263, 0.0
  %v2296 = vmax.f32 %v2264, 0.0
  %v2297 = vmax.f32 %v2265, 0.0
  %v2298 = vmax.f32 %v2266, 0.0
  %v2299 = vmax.f32 %v2267, 0.0
  %v2300 = vmax.f32 %v2268, 0.0
  %v2301 = vmax.f32 %v2269, 0.0
  %v2302 = vmax.f32 %v2270, 0.0
  %v2303 = vmax.f32 %v2271, 0.0
  %v2304 = vmax.f32 %v2272, 0.0
  %v2305 = vmax.f32 %v2273, 0.0
  %v2306 = vmax.f32 %v2274, 0.0
  %v2307 = vmax.f32 %v2275, 0.0
  %v2308 = vmax.f32 %v2276, 0.0
  %v2309 = vmax.f32 %v2277, 0.0
  %v2310 = vmax.f32 %v2278, 0.0
  %v2311 = vmax.f32 %v2279, 0.0
  %v2312 = vmax.f32 %v2280, 0.0
  %v2313 = vmax.f32 %v2281, 0.0
  %v2314 = vmax.f32 %v2282, 0.0
  %v2315 = vmax.f32 %v2283, 0.0
  %v2316 = vmax.f32 %v2284, 0.0
  %v2317 = vmax.f32 %v2285, 0.0
  %v2318 = vmax.f32 %v2286, 0.0
  %2319 = vst [vmem:[%s4] sm:$0xff] %v2287
  %2320 = vst [vmem:[%s4 + $0x8] sm:$0xff] %v2288
  %2321 = vst [vmem:[%s4 + $0x10] sm:$0xff] %v2289
  %2322 = vst [vmem:[%s4 + $0x18] sm:$0xff] %v2290
  %2323 = vst [vmem:[%s4 + $0x20] sm:$0xff] %v2291
  %2324 = vst [vmem:[%s4 + $0x28] sm:$0xff] %v2292
  %2325 = vst [vmem:[%s4 + $0x30] sm:$0xff] %v2293
  %2326 = vst [vmem:[%s4 + $0x38] sm:$0xff] %v2294
  %2327 = vst [vmem:[%s4 + $0x40] sm:$0xff] %v2295
  %2328 = vst [vmem:[%s4 + $0x48] sm:$0xff] %v2296
  %2329 = vst [vmem:[%s4 + $0x50] sm:$0xff] %v2297
  %2330 = vst [vmem:[%s4 + $0x58] sm:$0xff] %v2298
  %2331 = vst [vmem:[%s4 + $0x60] sm:$0xff] %v2299
  %2332 = vst [vmem:[%s4 + $0x68] sm:$0xff] %v2300
  %2333 = vst [vmem:[%s4 + $0x70] sm:$0xff] %v2301
  %2334 = vst [vmem:[%s4 + $0x78] sm:$0xff] %v2302
  %2335 = vst [vmem:[%s4 + $0x80] sm:$0xff] %v2303
  %2336 = vst [vmem:[%s4 + $0x88] sm:$0xff] %v2304
  %2337 = vst [vmem:[%s4 + $0x90] sm:$0xff] %v2305
  %2338 = vst [vmem:[%s4 + $0x98] sm:$0xff] %v2306
  %2339 = vst [vmem:[%s4 + $0xa0] sm:$0xff] %v2307
  %2340 = vst [vmem:[%s4 + $0xa8] sm:$0xff] %v2308
  %2341 = vst [vmem:[%s4 + $0xb0] sm:$0xff] %v2309
  %2342 = vst [vmem:[%s4 + $0xb8] sm:$0xff] %v2310
  %2343 = vst [vmem:[%s4 + $0xc0] sm:$0xff] %v2311
  %2344 = vst [vmem:[%s4 + $0xc8] sm:$0xff] %v2312
  %2345 = vst [vmem:[%s4 + $0xd0] sm:$0xff] %v2313
  %2346 = vst [vmem:[%s4 + $0xd8] sm:$0xff] %v2314
  %2347 = vst [vmem:[%s4 + $0xe0] sm:$0xff] %v2315
  %2348 = vst [vmem:[%s4 + $0xe8] sm:$0xff] %v2316
  %2349 = vst [vmem:[%s4 + $0xf0] sm:$0xff] %v2317
  %2350 = vst [vmem:[%s4 + $0xf8] sm:$0xff] %v2318
  // Predicated region
  $region18: #{capsule_network_forward.7} parent=0 // pred_check
    _
  $region19: #{capsule_network_forward.7} parent=0 // pred_check_branch
    %2352 = sbr.rel (0) target = $region21
  $region20: #{capsule_network_forward.7} parent=0 // pred_region
    _
  $region21: #{capsule_network_forward.7} parent=0 // pred_fallthru
    _
  // Predicated region
  $region22: #{capsule_network_forward.7} parent=0 // pred_check
    _
  $region23: #{capsule_network_forward.7} parent=0 // pred_check_branch
    %2354 = sbr.rel (0) target = $region25
  $region24: #{capsule_network_forward.7} parent=0 // pred_region
    _
  $region25: #{capsule_network_forward.7} parent=0 // pred_fallthru
    _

// kernel: capsule_network_forward.8
$region0: #{capsule_network_forward.8}
  #allocation0 [shape = 'u32[]', space=smem, size = 0x4, offset = 0x4, fixed_abs, tag = 'smem constant byte address 0x4 - core index']
  #allocation1 [shape = 'u32[72,128]{1,0:T(1,128)}', space=vmem, size = 0x9000, scoped, tag = 'internal scratch']
  %s0 = inlined_call_operand.vmem [shape: bf16[24,2304], index: 0, kind: input, shape index: {}]
  %s1 = inlined_call_operand.vmem [shape: bf16[2304,256], index: 1, kind: input, shape index: {}]
  %s2 = inlined_call_operand.vmem [shape: f32[1,256], index: 2, kind: input, shape index: {}]
  %s3 = inlined_call_operand.vmem [shape: f32[1,256], index: 3, kind: input, shape index: {}]
  %s4 = inlined_call_operand.vmem [shape: f32[24,256], index: 4, kind: output, shape index: {}]
  %s5 = sld [smem:[#allocation0]]
  $region26: #{capsule_network_forward.8} parent=0
    _
  %s7 = ssub.s32 1, %s5
  %s8 = scalar_select 0, %s7, %s5
  // Predicated region
  $region2: #{capsule_network_forward.8} parent=0 // pred_check
    _
  $region3: #{capsule_network_forward.8} parent=0 // pred_check_branch
    %10 = sbr.rel (0) target = $region5
  $region4: #{capsule_network_forward.8} parent=0 // pred_region
    _
  $region5: #{capsule_network_forward.8} parent=0 // pred_fallthru
    _
  // Predicated region
  $region6: #{capsule_network_forward.8} parent=0 // pred_check
    _
  $region7: #{capsule_network_forward.8} parent=0 // pred_check_branch
    %12 = sbr.rel (0) target = $region9
  $region8: #{capsule_network_forward.8} parent=0 // pred_region
    _
  $region9: #{capsule_network_forward.8} parent=0 // pred_fallthru
    _
  // Predicated region
  $region10: #{capsule_network_forward.8} parent=0 // pred_check
    _
  $region11: #{capsule_network_forward.8} parent=0 // pred_check_branch
    %14 = sbr.rel (0) target = $region13
  $region12: #{capsule_network_forward.8} parent=0 // pred_region
    _
  $region13: #{capsule_network_forward.8} parent=0 // pred_fallthru
    _
  // Predicated region
  $region14: #{capsule_network_forward.8} parent=0 // pred_check
    _
  $region15: #{capsule_network_forward.8} parent=0 // pred_check_branch
    %16 = sbr.rel (0) target = $region17
  $region16: #{capsule_network_forward.8} parent=0 // pred_region
    _
  $region17: #{capsule_network_forward.8} parent=0 // pred_fallthru
    _
  %v17 = vld [vmem:[%s0] sm:$0xff]
  %v18 = vld [vmem:[%s0 + $0x8] sm:$0xff]
  %v19 = vld [vmem:[%s0 + $0x10] sm:$0xff]
  %v20 = vld [vmem:[%s0 + $0x18] sm:$0xff]
  %v21 = vld [vmem:[%s0 + $0x20] sm:$0xff]
  %v22 = vld [vmem:[%s0 + $0x28] sm:$0xff]
  %v23 = vld [vmem:[%s0 + $0x30] sm:$0xff]
  %v24 = vld [vmem:[%s0 + $0x38] sm:$0xff]
  %v25 = vld [vmem:[%s0 + $0x40] sm:$0xff]
  %v26 = vld [vmem:[%s0 + $0x48] sm:$0xff]
  %v27 = vld [vmem:[%s0 + $0x50] sm:$0xff]
  %v28 = vld [vmem:[%s0 + $0x58] sm:$0xff]
  %v29 = vld [vmem:[%s0 + $0x60] sm:$0xff]
  %v30 = vld [vmem:[%s0 + $0x68] sm:$0xff]
  %v31 = vld [vmem:[%s0 + $0x70] sm:$0xff]
  %v32 = vld [vmem:[%s0 + $0x78] sm:$0xff]
  %v33 = vld [vmem:[%s0 + $0x80] sm:$0xff]
  %v34 = vld [vmem:[%s0 + $0x88] sm:$0xff]
  %v35 = vld [vmem:[%s0 + $0x90] sm:$0xff]
  %v36 = vld [vmem:[%s0 + $0x98] sm:$0xff]
  %v37 = vld [vmem:[%s0 + $0xa0] sm:$0xff]
  %v38 = vld [vmem:[%s0 + $0xa8] sm:$0xff]
  %v39 = vld [vmem:[%s0 + $0xb0] sm:$0xff]
  %v40 = vld [vmem:[%s0 + $0xb8] sm:$0xff]
  %v41 = vld [vmem:[%s0 + $0xc0] sm:$0xff]
  %v42 = vld [vmem:[%s0 + $0xc8] sm:$0xff]
  %v43 = vld [vmem:[%s0 + $0xd0] sm:$0xff]
  %v44 = vld [vmem:[%s1] sm:$0xff]
  %v45 = vld [vmem:[%s1 + $0x8] sm:$0xff]
  %v46 = vld [vmem:[%s1 + $0x10] sm:$0xff]
  %v47 = vld [vmem:[%s1 + $0x18] sm:$0xff]
  %v48 = vld [vmem:[%s1 + $0x20] sm:$0xff]
  %v49 = vld [vmem:[%s1 + $0x28] sm:$0xff]
  %v50 = vld [vmem:[%s1 + $0x30] sm:$0xff]
  %v51 = vld [vmem:[%s1 + $0x38] sm:$0xff]
  %v52 = vld [vmem:[%s1 + $0x40] sm:$0xff]
  %v53 = vld [vmem:[%s1 + $0x48] sm:$0xff]
  %v54 = vld [vmem:[%s1 + $0x50] sm:$0xff]
  %v55 = vld [vmem:[%s1 + $0x58] sm:$0xff]
  %v56 = vld [vmem:[%s1 + $0x60] sm:$0xff]
  %v57 = vld [vmem:[%s1 + $0x68] sm:$0xff]
  %v58 = vld [vmem:[%s1 + $0x70] sm:$0xff]
  %v59 = vld [vmem:[%s1 + $0x78] sm:$0xff]
  %v60 = vld [vmem:[%s1 + $0x80] sm:$0xff]
  %v61 = vld [vmem:[%s1 + $0x88] sm:$0xff]
  %v62 = vld [vmem:[%s1 + $0x90] sm:$0xff]
  %v63 = vld [vmem:[%s1 + $0x98] sm:$0xff]
  %v64 = vld [vmem:[%s1 + $0xa0] sm:$0xff]
  %v65 = vld [vmem:[%s1 + $0xa8] sm:$0xff]
  %v66 = vld [vmem:[%s1 + $0xb0] sm:$0xff]
  %v67 = vld [vmem:[%s1 + $0xb8] sm:$0xff]
  %v68 = vld [vmem:[%s1 + $0xc0] sm:$0xff]
  %v69 = vld [vmem:[%s1 + $0xc8] sm:$0xff]
  %v70 = vld [vmem:[%s1 + $0xd0] sm:$0xff]
  %v71 = vld [vmem:[%s1 + $0xd8] sm:$0xff]
  %v72 = vld [vmem:[%s1 + $0xe0] sm:$0xff]
  %v73 = vld [vmem:[%s1 + $0xe8] sm:$0xff]
  %v74 = vld [vmem:[%s1 + $0xf0] sm:$0xff]
  %v75 = vld [vmem:[%s1 + $0xf8] sm:$0xff]
  %v76 = vld [vmem:[%s1 + $0x100] sm:$0xff]
  %v77 = vld [vmem:[%s1 + $0x108] sm:$0xff]
  %v78 = vld [vmem:[%s1 + $0x110] sm:$0xff]
  %v79 = vld [vmem:[%s1 + $0x118] sm:$0xff]
  %v80 = vld [vmem:[%s1 + $0x120] sm:$0xff]
  %v81 = vld [vmem:[%s1 + $0x128] sm:$0xff]
  %v82 = vld [vmem:[%s1 + $0x130] sm:$0xff]
  %v83 = vld [vmem:[%s1 + $0x138] sm:$0xff]
  %v84 = vld [vmem:[%s1 + $0x140] sm:$0xff]
  %v85 = vld [vmem:[%s1 + $0x148] sm:$0xff]
  %v86 = vld [vmem:[%s1 + $0x150] sm:$0xff]
  %v87 = vld [vmem:[%s1 + $0x158] sm:$0xff]
  %v88 = vld [vmem:[%s1 + $0x160] sm:$0xff]
  %v89 = vld [vmem:[%s1 + $0x168] sm:$0xff]
  %v90 = vld [vmem:[%s1 + $0x170] sm:$0xff]
  %v91 = vld [vmem:[%s1 + $0x178] sm:$0xff]
  %v92 = vld [vmem:[%s1 + $0x180] sm:$0xff]
  %v93 = vld [vmem:[%s1 + $0x188] sm:$0xff]
  %v94 = vld [vmem:[%s1 + $0x190] sm:$0xff]
  %v95 = vld [vmem:[%s1 + $0x198] sm:$0xff]
  %v96 = vld [vmem:[%s1 + $0x1a0] sm:$0xff]
  %v97 = vld [vmem:[%s1 + $0x1a8] sm:$0xff]
  %v98 = vld [vmem:[%s1 + $0x1b0] sm:$0xff]
  %v99 = vld [vmem:[%s1 + $0x1b8] sm:$0xff]
  %v100 = vld [vmem:[%s1 + $0x1c0] sm:$0xff]
  %v101 = vld [vmem:[%s1 + $0x1c8] sm:$0xff]
  %v102 = vld [vmem:[%s1 + $0x1d0] sm:$0xff]
  %v103 = vld [vmem:[%s1 + $0x1d8] sm:$0xff]
  %v104 = vld [vmem:[%s1 + $0x1e0] sm:$0xff]
  %v105 = vld [vmem:[%s1 + $0x1e8] sm:$0xff]
  %v106 = vld [vmem:[%s1 + $0x1f0] sm:$0xff]
  %v107 = vld [vmem:[%s1 + $0x1f8] sm:$0xff]
  %v108 = vld [vmem:[%s1 + $0x200] sm:$0xff]
  %v109 = vld [vmem:[%s1 + $0x208] sm:$0xff]
  %v110 = vld [vmem:[%s1 + $0x210] sm:$0xff]
  %v111 = vld [vmem:[%s1 + $0x218] sm:$0xff]
  %v112 = vld [vmem:[%s1 + $0x220] sm:$0xff]
  %v113 = vld [vmem:[%s1 + $0x228] sm:$0xff]
  %v114 = vld [vmem:[%s1 + $0x230] sm:$0xff]
  %v115 = vld [vmem:[%s1 + $0x238] sm:$0xff]
  %v116 = vld [vmem:[%s1 + $0x240] sm:$0xff]
  %v117 = vld [vmem:[%s1 + $0x248] sm:$0xff]
  %v118 = vld [vmem:[%s1 + $0x250] sm:$0xff]
  %v119 = vld [vmem:[%s1 + $0x258] sm:$0xff]
  %v120 = vld [vmem:[%s1 + $0x260] sm:$0xff]
  %v121 = vld [vmem:[%s1 + $0x268] sm:$0xff]
  %v122 = vld [vmem:[%s1 + $0x270] sm:$0xff]
  %v123 = vld [vmem:[%s1 + $0x278] sm:$0xff]
  %v124 = vld [vmem:[%s1 + $0x280] sm:$0xff]
  %v125 = vld [vmem:[%s1 + $0x288] sm:$0xff]
  %v126 = vld [vmem:[%s1 + $0x290] sm:$0xff]
  %v127 = vld [vmem:[%s1 + $0x298] sm:$0xff]
  %v128 = vld [vmem:[%s1 + $0x2a0] sm:$0xff]
  %v129 = vld [vmem:[%s1 + $0x2a8] sm:$0xff]
  %v130 = vld [vmem:[%s1 + $0x2b0] sm:$0xff]
  %v131 = vld [vmem:[%s1 + $0x2b8] sm:$0xff]
  %v132 = vld [vmem:[%s1 + $0x2c0] sm:$0xff]
  %v133 = vld [vmem:[%s1 + $0x2c8] sm:$0xff]
  %v134 = vld [vmem:[%s1 + $0x2d0] sm:$0xff]
  %v135 = vld [vmem:[%s1 + $0x2d8] sm:$0xff]
  %v136 = vld [vmem:[%s1 + $0x2e0] sm:$0xff]
  %v137 = vld [vmem:[%s1 + $0x2e8] sm:$0xff]
  %v138 = vld [vmem:[%s1 + $0x2f0] sm:$0xff]
  %v139 = vld [vmem:[%s1 + $0x2f8] sm:$0xff]
  %v140 = vld [vmem:[%s1 + $0x300] sm:$0xff]
  %v141 = vld [vmem:[%s1 + $0x308] sm:$0xff]
  %v142 = vld [vmem:[%s1 + $0x310] sm:$0xff]
  %v143 = vld [vmem:[%s1 + $0x318] sm:$0xff]
  %v144 = vld [vmem:[%s1 + $0x320] sm:$0xff]
  %v145 = vld [vmem:[%s1 + $0x328] sm:$0xff]
  %v146 = vld [vmem:[%s1 + $0x330] sm:$0xff]
  %v147 = vld [vmem:[%s1 + $0x338] sm:$0xff]
  %v148 = vld [vmem:[%s1 + $0x340] sm:$0xff]
  %v149 = vld [vmem:[%s1 + $0x348] sm:$0xff]
  %v150 = vld [vmem:[%s1 + $0x350] sm:$0xff]
  %v151 = vld [vmem:[%s1 + $0x358] sm:$0xff]
  %v152 = vld [vmem:[%s1 + $0x360] sm:$0xff]
  %v153 = vld [vmem:[%s1 + $0x368] sm:$0xff]
  %v154 = vld [vmem:[%s1 + $0x370] sm:$0xff]
  %v155 = vld [vmem:[%s1 + $0x378] sm:$0xff]
  %v156 = vld [vmem:[%s1 + $0x380] sm:$0xff]
  %v157 = vld [vmem:[%s1 + $0x388] sm:$0xff]
  %v158 = vld [vmem:[%s1 + $0x390] sm:$0xff]
  %v159 = vld [vmem:[%s1 + $0x398] sm:$0xff]
  %v160 = vld [vmem:[%s1 + $0x3a0] sm:$0xff]
  %v161 = vld [vmem:[%s1 + $0x3a8] sm:$0xff]
  %v162 = vld [vmem:[%s1 + $0x3b0] sm:$0xff]
  %v163 = vld [vmem:[%s1 + $0x3b8] sm:$0xff]
  %v164 = vld [vmem:[%s1 + $0x3c0] sm:$0xff]
  %v165 = vld [vmem:[%s1 + $0x3c8] sm:$0xff]
  %v166 = vld [vmem:[%s1 + $0x3d0] sm:$0xff]
  %v167 = vld [vmem:[%s1 + $0x3d8] sm:$0xff]
  %v168 = vld [vmem:[%s1 + $0x3e0] sm:$0xff]
  %v169 = vld [vmem:[%s1 + $0x3e8] sm:$0xff]
  %v170 = vld [vmem:[%s1 + $0x3f0] sm:$0xff]
  %v171 = vld [vmem:[%s1 + $0x3f8] sm:$0xff]
  %v172 = vld [vmem:[%s1 + $0x400] sm:$0xff]
  %v173 = vld [vmem:[%s1 + $0x408] sm:$0xff]
  %v174 = vld [vmem:[%s1 + $0x410] sm:$0xff]
  %v175 = vld [vmem:[%s1 + $0x418] sm:$0xff]
  %v176 = vld [vmem:[%s1 + $0x420] sm:$0xff]
  %v177 = vld [vmem:[%s1 + $0x428] sm:$0xff]
  %v178 = vld [vmem:[%s1 + $0x430] sm:$0xff]
  %v179 = vld [vmem:[%s1 + $0x438] sm:$0xff]
  %v180 = vld [vmem:[%s1 + $0x440] sm:$0xff]
  %v181 = vld [vmem:[%s1 + $0x448] sm:$0xff]
  %v182 = vld [vmem:[%s1 + $0x450] sm:$0xff]
  %v183 = vld [vmem:[%s1 + $0x458] sm:$0xff]
  %v184 = vld [vmem:[%s1 + $0x460] sm:$0xff]
  %v185 = vld [vmem:[%s1 + $0x468] sm:$0xff]
  %v186 = vld [vmem:[%s1 + $0x470] sm:$0xff]
  %v187 = vld [vmem:[%s1 + $0x478] sm:$0xff]
  %v188 = vld [vmem:[%s1 + $0x480] sm:$0xff]
  %v189 = vld [vmem:[%s1 + $0x488] sm:$0xff]
  %v190 = vld [vmem:[%s1 + $0x490] sm:$0xff]
  %v191 = vld [vmem:[%s1 + $0x498] sm:$0xff]
  %v192 = vld [vmem:[%s1 + $0x4a0] sm:$0xff]
  %v193 = vld [vmem:[%s1 + $0x4a8] sm:$0xff]
  %v194 = vld [vmem:[%s1 + $0x4b0] sm:$0xff]
  %v195 = vld [vmem:[%s1 + $0x4b8] sm:$0xff]
  %v196 = vld [vmem:[%s1 + $0x4c0] sm:$0xff]
  %v197 = vld [vmem:[%s1 + $0x4c8] sm:$0xff]
  %v198 = vld [vmem:[%s1 + $0x4d0] sm:$0xff]
  %v199 = vld [vmem:[%s1 + $0x4d8] sm:$0xff]
  %v200 = vld [vmem:[%s1 + $0x4e0] sm:$0xff]
  %v201 = vld [vmem:[%s1 + $0x4e8] sm:$0xff]
  %v202 = vld [vmem:[%s1 + $0x4f0] sm:$0xff]
  %v203 = vld [vmem:[%s1 + $0x4f8] sm:$0xff]
  %v204 = vld [vmem:[%s1 + $0x500] sm:$0xff]
  %v205 = vld [vmem:[%s1 + $0x508] sm:$0xff]
  %v206 = vld [vmem:[%s1 + $0x510] sm:$0xff]
  %v207 = vld [vmem:[%s1 + $0x518] sm:$0xff]
  %v208 = vld [vmem:[%s1 + $0x520] sm:$0xff]
  %v209 = vld [vmem:[%s1 + $0x528] sm:$0xff]
  %v210 = vld [vmem:[%s1 + $0x530] sm:$0xff]
  %v211 = vld [vmem:[%s1 + $0x538] sm:$0xff]
  %v212 = vld [vmem:[%s1 + $0x540] sm:$0xff]
  %v213 = vld [vmem:[%s1 + $0x548] sm:$0xff]
  %v214 = vld [vmem:[%s1 + $0x550] sm:$0xff]
  %v215 = vld [vmem:[%s1 + $0x558] sm:$0xff]
  %v216 = vld [vmem:[%s1 + $0x560] sm:$0xff]
  %v217 = vld [vmem:[%s1 + $0x568] sm:$0xff]
  %v218 = vld [vmem:[%s1 + $0x570] sm:$0xff]
  %v219 = vld [vmem:[%s1 + $0x578] sm:$0xff]
  %v220 = vld [vmem:[%s1 + $0x580] sm:$0xff]
  %v221 = vld [vmem:[%s1 + $0x588] sm:$0xff]
  %v222 = vld [vmem:[%s1 + $0x590] sm:$0xff]
  %v223 = vld [vmem:[%s1 + $0x598] sm:$0xff]
  %v224 = vld [vmem:[%s1 + $0x5a0] sm:$0xff]
  %v225 = vld [vmem:[%s1 + $0x5a8] sm:$0xff]
  %v226 = vld [vmem:[%s1 + $0x5b0] sm:$0xff]
  %v227 = vld [vmem:[%s1 + $0x5b8] sm:$0xff]
  %v228 = vld [vmem:[%s1 + $0x5c0] sm:$0xff]
  %v229 = vld [vmem:[%s1 + $0x5c8] sm:$0xff]
  %v230 = vld [vmem:[%s1 + $0x5d0] sm:$0xff]
  %v231 = vld [vmem:[%s1 + $0x5d8] sm:$0xff]
  %v232 = vld [vmem:[%s1 + $0x5e0] sm:$0xff]
  %v233 = vld [vmem:[%s1 + $0x5e8] sm:$0xff]
  %v234 = vld [vmem:[%s1 + $0x5f0] sm:$0xff]
  %v235 = vld [vmem:[%s1 + $0x5f8] sm:$0xff]
  %v236 = vld [vmem:[%s1 + $0x600] sm:$0xff]
  %v237 = vld [vmem:[%s1 + $0x608] sm:$0xff]
  %v238 = vld [vmem:[%s1 + $0x610] sm:$0xff]
  %v239 = vld [vmem:[%s1 + $0x618] sm:$0xff]
  %v240 = vld [vmem:[%s1 + $0x620] sm:$0xff]
  %v241 = vld [vmem:[%s1 + $0x628] sm:$0xff]
  %v242 = vld [vmem:[%s1 + $0x630] sm:$0xff]
  %v243 = vld [vmem:[%s1 + $0x638] sm:$0xff]
  %v244 = vld [vmem:[%s1 + $0x640] sm:$0xff]
  %v245 = vld [vmem:[%s1 + $0x648] sm:$0xff]
  %v246 = vld [vmem:[%s1 + $0x650] sm:$0xff]
  %v247 = vld [vmem:[%s1 + $0x658] sm:$0xff]
  %v248 = vld [vmem:[%s1 + $0x660] sm:$0xff]
  %v249 = vld [vmem:[%s1 + $0x668] sm:$0xff]
  %v250 = vld [vmem:[%s1 + $0x670] sm:$0xff]
  %v251 = vld [vmem:[%s1 + $0x678] sm:$0xff]
  %v252 = vld [vmem:[%s1 + $0x680] sm:$0xff]
  %v253 = vld [vmem:[%s1 + $0x688] sm:$0xff]
  %v254 = vld [vmem:[%s1 + $0x690] sm:$0xff]
  %v255 = vld [vmem:[%s1 + $0x698] sm:$0xff]
  %v256 = vld [vmem:[%s1 + $0x6a0] sm:$0xff]
  %v257 = vld [vmem:[%s1 + $0x6a8] sm:$0xff]
  %v258 = vld [vmem:[%s1 + $0x6b0] sm:$0xff]
  %v259 = vld [vmem:[%s1 + $0x6b8] sm:$0xff]
  %v260 = vld [vmem:[%s1 + $0x6c0] sm:$0xff]
  %v261 = vld [vmem:[%s1 + $0x6c8] sm:$0xff]
  %v262 = vld [vmem:[%s1 + $0x6d0] sm:$0xff]
  %v263 = vld [vmem:[%s1 + $0x6d8] sm:$0xff]
  %v264 = vld [vmem:[%s1 + $0x6e0] sm:$0xff]
  %v265 = vld [vmem:[%s1 + $0x6e8] sm:$0xff]
  %v266 = vld [vmem:[%s1 + $0x6f0] sm:$0xff]
  %v267 = vld [vmem:[%s1 + $0x6f8] sm:$0xff]
  %v268 = vld [vmem:[%s1 + $0x700] sm:$0xff]
  %v269 = vld [vmem:[%s1 + $0x708] sm:$0xff]
  %v270 = vld [vmem:[%s1 + $0x710] sm:$0xff]
  %v271 = vld [vmem:[%s1 + $0x718] sm:$0xff]
  %v272 = vld [vmem:[%s1 + $0x720] sm:$0xff]
  %v273 = vld [vmem:[%s1 + $0x728] sm:$0xff]
  %v274 = vld [vmem:[%s1 + $0x730] sm:$0xff]
  %v275 = vld [vmem:[%s1 + $0x738] sm:$0xff]
  %v276 = vld [vmem:[%s1 + $0x740] sm:$0xff]
  %v277 = vld [vmem:[%s1 + $0x748] sm:$0xff]
  %v278 = vld [vmem:[%s1 + $0x750] sm:$0xff]
  %v279 = vld [vmem:[%s1 + $0x758] sm:$0xff]
  %v280 = vld [vmem:[%s1 + $0x760] sm:$0xff]
  %v281 = vld [vmem:[%s1 + $0x768] sm:$0xff]
  %v282 = vld [vmem:[%s1 + $0x770] sm:$0xff]
  %v283 = vld [vmem:[%s1 + $0x778] sm:$0xff]
  %v284 = vld [vmem:[%s1 + $0x780] sm:$0xff]
  %v285 = vld [vmem:[%s1 + $0x788] sm:$0xff]
  %v286 = vld [vmem:[%s1 + $0x790] sm:$0xff]
  %v287 = vld [vmem:[%s1 + $0x798] sm:$0xff]
  %v288 = vld [vmem:[%s1 + $0x7a0] sm:$0xff]
  %v289 = vld [vmem:[%s1 + $0x7a8] sm:$0xff]
  %v290 = vld [vmem:[%s1 + $0x7b0] sm:$0xff]
  %v291 = vld [vmem:[%s1 + $0x7b8] sm:$0xff]
  %v292 = vld [vmem:[%s1 + $0x7c0] sm:$0xff]
  %v293 = vld [vmem:[%s1 + $0x7c8] sm:$0xff]
  %v294 = vld [vmem:[%s1 + $0x7d0] sm:$0xff]
  %v295 = vld [vmem:[%s1 + $0x7d8] sm:$0xff]
  %v296 = vld [vmem:[%s1 + $0x7e0] sm:$0xff]
  %v297 = vld [vmem:[%s1 + $0x7e8] sm:$0xff]
  %v298 = vld [vmem:[%s1 + $0x7f0] sm:$0xff]
  %v299 = vld [vmem:[%s1 + $0x7f8] sm:$0xff]
  %v300 = vld [vmem:[%s1 + $0x800] sm:$0xff]
  %v301 = vld [vmem:[%s1 + $0x808] sm:$0xff]
  %v302 = vld [vmem:[%s1 + $0x810] sm:$0xff]
  %v303 = vld [vmem:[%s1 + $0x818] sm:$0xff]
  %v304 = vld [vmem:[%s1 + $0x820] sm:$0xff]
  %v305 = vld [vmem:[%s1 + $0x828] sm:$0xff]
  %v306 = vld [vmem:[%s1 + $0x830] sm:$0xff]
  %v307 = vld [vmem:[%s1 + $0x838] sm:$0xff]
  %v308 = vld [vmem:[%s1 + $0x840] sm:$0xff]
  %v309 = vld [vmem:[%s1 + $0x848] sm:$0xff]
  %v310 = vld [vmem:[%s1 + $0x850] sm:$0xff]
  %v311 = vld [vmem:[%s1 + $0x858] sm:$0xff]
  %v312 = vld [vmem:[%s1 + $0x860] sm:$0xff]
  %v313 = vld [vmem:[%s1 + $0x868] sm:$0xff]
  %v314 = vld [vmem:[%s1 + $0x870] sm:$0xff]
  %v315 = vld [vmem:[%s1 + $0x878] sm:$0xff]
  %v316 = vld [vmem:[%s1 + $0x880] sm:$0xff]
  %v317 = vld [vmem:[%s1 + $0x888] sm:$0xff]
  %v318 = vld [vmem:[%s1 + $0x890] sm:$0xff]
  %v319 = vld [vmem:[%s1 + $0x898] sm:$0xff]
  %v320 = vld [vmem:[%s1 + $0x8a0] sm:$0xff]
  %v321 = vld [vmem:[%s1 + $0x8a8] sm:$0xff]
  %v322 = vld [vmem:[%s1 + $0x8b0] sm:$0xff]
  %v323 = vld [vmem:[%s1 + $0x8b8] sm:$0xff]
  %v324 = vld [vmem:[%s1 + $0x8c0] sm:$0xff]
  %v325 = vld [vmem:[%s1 + $0x8c8] sm:$0xff]
  %v326 = vld [vmem:[%s1 + $0x8d0] sm:$0xff]
  %v327 = vld [vmem:[%s1 + $0x8d8] sm:$0xff]
  %v328 = vld [vmem:[%s1 + $0x8e0] sm:$0xff]
  %v329 = vld [vmem:[%s1 + $0x8e8] sm:$0xff]
  %v330 = vld [vmem:[%s1 + $0x8f0] sm:$0xff]
  %v331 = vld [vmem:[%s1 + $0x8f8] sm:$0xff]
  %v359 = vunpack.c.l.b16 %v17
  %v360 = vunpack.c.h.b16 %v17
  %v361 = vunpack.c.l.b16 %v18
  %v362 = vunpack.c.h.b16 %v18
  %v363 = vunpack.c.l.b16 %v19
  %v364 = vunpack.c.h.b16 %v19
  %v365 = vunpack.c.l.b16 %v20
  %v366 = vunpack.c.h.b16 %v20
  %v367 = vunpack.c.l.b16 %v21
  %v368 = vunpack.c.h.b16 %v21
  %v369 = vunpack.c.l.b16 %v22
  %v370 = vunpack.c.h.b16 %v22
  %v371 = vunpack.c.l.b16 %v23
  %v372 = vunpack.c.h.b16 %v23
  %v373 = vunpack.c.l.b16 %v24
  %v374 = vunpack.c.h.b16 %v24
  %v375 = vunpack.c.l.b16 %v25
  %v376 = vunpack.c.h.b16 %v25
  %v377 = vunpack.c.l.b16 %v26
  %v378 = vunpack.c.h.b16 %v26
  %v379 = vunpack.c.l.b16 %v27
  %v380 = vunpack.c.h.b16 %v27
  %v381 = vunpack.c.l.b16 %v28
  %v382 = vunpack.c.h.b16 %v28
  %v383 = vunpack.c.l.b16 %v29
  %v384 = vunpack.c.h.b16 %v29
  %v385 = vunpack.c.l.b16 %v30
  %v386 = vunpack.c.h.b16 %v30
  %v387 = vunpack.c.l.b16 %v31
  %v388 = vunpack.c.h.b16 %v31
  %v389 = vunpack.c.l.b16 %v32
  %v390 = vunpack.c.h.b16 %v32
  %v391 = vunpack.c.l.b16 %v33
  %v392 = vunpack.c.h.b16 %v33
  %v393 = vunpack.c.l.b16 %v34
  %v394 = vunpack.c.h.b16 %v34
  %v395 = vunpack.c.l.b16 %v35
  %v396 = vunpack.c.h.b16 %v35
  %v397 = vunpack.c.l.b16 %v36
  %v398 = vunpack.c.h.b16 %v36
  %v399 = vunpack.c.l.b16 %v37
  %v400 = vunpack.c.h.b16 %v37
  %v401 = vunpack.c.l.b16 %v38
  %v402 = vunpack.c.h.b16 %v38
  %v403 = vunpack.c.l.b16 %v39
  %v404 = vunpack.c.h.b16 %v39
  %v405 = vunpack.c.l.b16 %v40
  %v406 = vunpack.c.h.b16 %v40
  %v407 = vunpack.c.l.b16 %v41
  %v408 = vunpack.c.h.b16 %v41
  %v409 = vunpack.c.l.b16 %v42
  %v410 = vunpack.c.h.b16 %v42
  %v411 = vunpack.c.l.b16 %v43
  %v412 = vunpack.c.h.b16 %v43
  %v413 = vpack.c.b16 %v377, %v359
  %v414 = vpack.c.b16 %v378, %v360
  %v415 = vpack.c.b16 %v379, %v361
  %v416 = vpack.c.b16 %v380, %v362
  %v417 = vpack.c.b16 %v381, %v363
  %v418 = vpack.c.b16 %v382, %v364
  %v419 = vpack.c.b16 %v383, %v365
  %v420 = vpack.c.b16 %v384, %v366
  %v421 = vpack.c.b16 %v385, %v367
  %v422 = vpack.c.b16 %v386, %v368
  %v423 = vpack.c.b16 %v387, %v369
  %v424 = vpack.c.b16 %v388, %v370
  %v425 = vpack.c.b16 %v389, %v371
  %v426 = vpack.c.b16 %v390, %v372
  %v427 = vpack.c.b16 %v391, %v373
  %v428 = vpack.c.b16 %v392, %v374
  %v429 = vpack.c.b16 %v393, %v375
  %v430 = vpack.c.b16 %v394, %v376
  %v431 = vpack.c.b16 %v395, %v395
  %v432 = vpack.c.b16 %v396, %v396
  %v433 = vpack.c.b16 %v397, %v397
  %v434 = vpack.c.b16 %v398, %v398
  %v435 = vpack.c.b16 %v399, %v399
  %v436 = vpack.c.b16 %v400, %v400
  %v437 = vpack.c.b16 %v401, %v401
  %v438 = vpack.c.b16 %v402, %v402
  %v439 = vpack.c.b16 %v403, %v403
  %v440 = vpack.c.b16 %v404, %v404
  %v441 = vpack.c.b16 %v405, %v405
  %v442 = vpack.c.b16 %v406, %v406
  %v443 = vpack.c.b16 %v407, %v407
  %v444 = vpack.c.b16 %v408, %v408
  %v445 = vpack.c.b16 %v409, %v409
  %v446 = vpack.c.b16 %v410, %v410
  %v447 = vpack.c.b16 %v411, %v411
  %v448 = vpack.c.b16 %v412, %v412
  %v773 = vunpack.c.l.b16 %v44
  %v774 = vunpack.c.h.b16 %v44
  %v775 = vunpack.c.l.b16 %v45
  %v776 = vunpack.c.h.b16 %v45
  %v777 = vunpack.c.l.b16 %v46
  %v778 = vunpack.c.h.b16 %v46
  %v779 = vunpack.c.l.b16 %v47
  %v780 = vunpack.c.h.b16 %v47
  %v781 = vunpack.c.l.b16 %v48
  %v782 = vunpack.c.h.b16 %v48
  %v783 = vunpack.c.l.b16 %v49
  %v784 = vunpack.c.h.b16 %v49
  %v785 = vunpack.c.l.b16 %v50
  %v786 = vunpack.c.h.b16 %v50
  %v787 = vunpack.c.l.b16 %v51
  %v788 = vunpack.c.h.b16 %v51
  %v789 = vunpack.c.l.b16 %v52
  %v790 = vunpack.c.h.b16 %v52
  %v791 = vunpack.c.l.b16 %v53
  %v792 = vunpack.c.h.b16 %v53
  %v793 = vunpack.c.l.b16 %v54
  %v794 = vunpack.c.h.b16 %v54
  %v795 = vunpack.c.l.b16 %v55
  %v796 = vunpack.c.h.b16 %v55
  %v797 = vunpack.c.l.b16 %v56
  %v798 = vunpack.c.h.b16 %v56
  %v799 = vunpack.c.l.b16 %v57
  %v800 = vunpack.c.h.b16 %v57
  %v801 = vunpack.c.l.b16 %v58
  %v802 = vunpack.c.h.b16 %v58
  %v803 = vunpack.c.l.b16 %v59
  %v804 = vunpack.c.h.b16 %v59
  %v805 = vunpack.c.l.b16 %v60
  %v806 = vunpack.c.h.b16 %v60
  %v807 = vunpack.c.l.b16 %v61
  %v808 = vunpack.c.h.b16 %v61
  %v809 = vunpack.c.l.b16 %v62
  %v810 = vunpack.c.h.b16 %v62
  %v811 = vunpack.c.l.b16 %v63
  %v812 = vunpack.c.h.b16 %v63
  %v813 = vunpack.c.l.b16 %v64
  %v814 = vunpack.c.h.b16 %v64
  %v815 = vunpack.c.l.b16 %v65
  %v816 = vunpack.c.h.b16 %v65
  %v817 = vunpack.c.l.b16 %v66
  %v818 = vunpack.c.h.b16 %v66
  %v819 = vunpack.c.l.b16 %v67
  %v820 = vunpack.c.h.b16 %v67
  %v821 = vunpack.c.l.b16 %v68
  %v822 = vunpack.c.h.b16 %v68
  %v823 = vunpack.c.l.b16 %v69
  %v824 = vunpack.c.h.b16 %v69
  %v825 = vunpack.c.l.b16 %v70
  %v826 = vunpack.c.h.b16 %v70
  %v827 = vunpack.c.l.b16 %v71
  %v828 = vunpack.c.h.b16 %v71
  %v829 = vunpack.c.l.b16 %v72
  %v830 = vunpack.c.h.b16 %v72
  %v831 = vunpack.c.l.b16 %v73
  %v832 = vunpack.c.h.b16 %v73
  %v833 = vunpack.c.l.b16 %v74
  %v834 = vunpack.c.h.b16 %v74
  %v835 = vunpack.c.l.b16 %v75
  %v836 = vunpack.c.h.b16 %v75
  %v837 = vunpack.c.l.b16 %v76
  %v838 = vunpack.c.h.b16 %v76
  %v839 = vunpack.c.l.b16 %v77
  %v840 = vunpack.c.h.b16 %v77
  %v841 = vunpack.c.l.b16 %v78
  %v842 = vunpack.c.h.b16 %v78
  %v843 = vunpack.c.l.b16 %v79
  %v844 = vunpack.c.h.b16 %v79
  %v845 = vunpack.c.l.b16 %v80
  %v846 = vunpack.c.h.b16 %v80
  %v847 = vunpack.c.l.b16 %v81
  %v848 = vunpack.c.h.b16 %v81
  %v849 = vunpack.c.l.b16 %v82
  %v850 = vunpack.c.h.b16 %v82
  %v851 = vunpack.c.l.b16 %v83
  %v852 = vunpack.c.h.b16 %v83
  %v853 = vunpack.c.l.b16 %v84
  %v854 = vunpack.c.h.b16 %v84
  %v855 = vunpack.c.l.b16 %v85
  %v856 = vunpack.c.h.b16 %v85
  %v857 = vunpack.c.l.b16 %v86
  %v858 = vunpack.c.h.b16 %v86
  %v859 = vunpack.c.l.b16 %v87
  %v860 = vunpack.c.h.b16 %v87
  %v861 = vunpack.c.l.b16 %v88
  %v862 = vunpack.c.h.b16 %v88
  %v863 = vunpack.c.l.b16 %v89
  %v864 = vunpack.c.h.b16 %v89
  %v865 = vunpack.c.l.b16 %v90
  %v866 = vunpack.c.h.b16 %v90
  %v867 = vunpack.c.l.b16 %v91
  %v868 = vunpack.c.h.b16 %v91
  %v869 = vunpack.c.l.b16 %v92
  %v870 = vunpack.c.h.b16 %v92
  %v871 = vunpack.c.l.b16 %v93
  %v872 = vunpack.c.h.b16 %v93
  %v873 = vunpack.c.l.b16 %v94
  %v874 = vunpack.c.h.b16 %v94
  %v875 = vunpack.c.l.b16 %v95
  %v876 = vunpack.c.h.b16 %v95
  %v877 = vunpack.c.l.b16 %v96
  %v878 = vunpack.c.h.b16 %v96
  %v879 = vunpack.c.l.b16 %v97
  %v880 = vunpack.c.h.b16 %v97
  %v881 = vunpack.c.l.b16 %v98
  %v882 = vunpack.c.h.b16 %v98
  %v883 = vunpack.c.l.b16 %v99
  %v884 = vunpack.c.h.b16 %v99
  %v885 = vunpack.c.l.b16 %v100
  %v886 = vunpack.c.h.b16 %v100
  %v887 = vunpack.c.l.b16 %v101
  %v888 = vunpack.c.h.b16 %v101
  %v889 = vunpack.c.l.b16 %v102
  %v890 = vunpack.c.h.b16 %v102
  %v891 = vunpack.c.l.b16 %v103
  %v892 = vunpack.c.h.b16 %v103
  %v893 = vunpack.c.l.b16 %v104
  %v894 = vunpack.c.h.b16 %v104
  %v895 = vunpack.c.l.b16 %v105
  %v896 = vunpack.c.h.b16 %v105
  %v897 = vunpack.c.l.b16 %v106
  %v898 = vunpack.c.h.b16 %v106
  %v899 = vunpack.c.l.b16 %v107
  %v900 = vunpack.c.h.b16 %v107
  %v901 = vunpack.c.l.b16 %v108
  %v902 = vunpack.c.h.b16 %v108
  %v903 = vunpack.c.l.b16 %v109
  %v904 = vunpack.c.h.b16 %v109
  %v905 = vunpack.c.l.b16 %v110
  %v906 = vunpack.c.h.b16 %v110
  %v907 = vunpack.c.l.b16 %v111
  %v908 = vunpack.c.h.b16 %v111
  %v909 = vunpack.c.l.b16 %v112
  %v910 = vunpack.c.h.b16 %v112
  %v911 = vunpack.c.l.b16 %v113
  %v912 = vunpack.c.h.b16 %v113
  %v913 = vunpack.c.l.b16 %v114
  %v914 = vunpack.c.h.b16 %v114
  %v915 = vunpack.c.l.b16 %v115
  %v916 = vunpack.c.h.b16 %v115
  %v917 = vunpack.c.l.b16 %v116
  %v918 = vunpack.c.h.b16 %v116
  %v919 = vunpack.c.l.b16 %v117
  %v920 = vunpack.c.h.b16 %v117
  %v921 = vunpack.c.l.b16 %v118
  %v922 = vunpack.c.h.b16 %v118
  %v923 = vunpack.c.l.b16 %v119
  %v924 = vunpack.c.h.b16 %v119
  %v925 = vunpack.c.l.b16 %v120
  %v926 = vunpack.c.h.b16 %v120
  %v927 = vunpack.c.l.b16 %v121
  %v928 = vunpack.c.h.b16 %v121
  %v929 = vunpack.c.l.b16 %v122
  %v930 = vunpack.c.h.b16 %v122
  %v931 = vunpack.c.l.b16 %v123
  %v932 = vunpack.c.h.b16 %v123
  %v933 = vunpack.c.l.b16 %v124
  %v934 = vunpack.c.h.b16 %v124
  %v935 = vunpack.c.l.b16 %v125
  %v936 = vunpack.c.h.b16 %v125
  %v937 = vunpack.c.l.b16 %v126
  %v938 = vunpack.c.h.b16 %v126
  %v939 = vunpack.c.l.b16 %v127
  %v940 = vunpack.c.h.b16 %v127
  %v941 = vunpack.c.l.b16 %v128
  %v942 = vunpack.c.h.b16 %v128
  %v943 = vunpack.c.l.b16 %v129
  %v944 = vunpack.c.h.b16 %v129
  %v945 = vunpack.c.l.b16 %v130
  %v946 = vunpack.c.h.b16 %v130
  %v947 = vunpack.c.l.b16 %v131
  %v948 = vunpack.c.h.b16 %v131
  %v949 = vunpack.c.l.b16 %v132
  %v950 = vunpack.c.h.b16 %v132
  %v951 = vunpack.c.l.b16 %v133
  %v952 = vunpack.c.h.b16 %v133
  %v953 = vunpack.c.l.b16 %v134
  %v954 = vunpack.c.h.b16 %v134
  %v955 = vunpack.c.l.b16 %v135
  %v956 = vunpack.c.h.b16 %v135
  %v957 = vunpack.c.l.b16 %v136
  %v958 = vunpack.c.h.b16 %v136
  %v959 = vunpack.c.l.b16 %v137
  %v960 = vunpack.c.h.b16 %v137
  %v961 = vunpack.c.l.b16 %v138
  %v962 = vunpack.c.h.b16 %v138
  %v963 = vunpack.c.l.b16 %v139
  %v964 = vunpack.c.h.b16 %v139
  %v965 = vunpack.c.l.b16 %v140
  %v966 = vunpack.c.h.b16 %v140
  %v967 = vunpack.c.l.b16 %v141
  %v968 = vunpack.c.h.b16 %v141
  %v969 = vunpack.c.l.b16 %v142
  %v970 = vunpack.c.h.b16 %v142
  %v971 = vunpack.c.l.b16 %v143
  %v972 = vunpack.c.h.b16 %v143
  %v973 = vunpack.c.l.b16 %v144
  %v974 = vunpack.c.h.b16 %v144
  %v975 = vunpack.c.l.b16 %v145
  %v976 = vunpack.c.h.b16 %v145
  %v977 = vunpack.c.l.b16 %v146
  %v978 = vunpack.c.h.b16 %v146
  %v979 = vunpack.c.l.b16 %v147
  %v980 = vunpack.c.h.b16 %v147
  %v981 = vunpack.c.l.b16 %v148
  %v982 = vunpack.c.h.b16 %v148
  %v983 = vunpack.c.l.b16 %v149
  %v984 = vunpack.c.h.b16 %v149
  %v985 = vunpack.c.l.b16 %v150
  %v986 = vunpack.c.h.b16 %v150
  %v987 = vunpack.c.l.b16 %v151
  %v988 = vunpack.c.h.b16 %v151
  %v989 = vunpack.c.l.b16 %v152
  %v990 = vunpack.c.h.b16 %v152
  %v991 = vunpack.c.l.b16 %v153
  %v992 = vunpack.c.h.b16 %v153
  %v993 = vunpack.c.l.b16 %v154
  %v994 = vunpack.c.h.b16 %v154
  %v995 = vunpack.c.l.b16 %v155
  %v996 = vunpack.c.h.b16 %v155
  %v997 = vunpack.c.l.b16 %v156
  %v998 = vunpack.c.h.b16 %v156
  %v999 = vunpack.c.l.b16 %v157
  %v1000 = vunpack.c.h.b16 %v157
  %v1001 = vunpack.c.l.b16 %v158
  %v1002 = vunpack.c.h.b16 %v158
  %v1003 = vunpack.c.l.b16 %v159
  %v1004 = vunpack.c.h.b16 %v159
  %v1005 = vunpack.c.l.b16 %v160
  %v1006 = vunpack.c.h.b16 %v160
  %v1007 = vunpack.c.l.b16 %v161
  %v1008 = vunpack.c.h.b16 %v161
  %v1009 = vunpack.c.l.b16 %v162
  %v1010 = vunpack.c.h.b16 %v162
  %v1011 = vunpack.c.l.b16 %v163
  %v1012 = vunpack.c.h.b16 %v163
  %v1013 = vunpack.c.l.b16 %v164
  %v1014 = vunpack.c.h.b16 %v164
  %v1015 = vunpack.c.l.b16 %v165
  %v1016 = vunpack.c.h.b16 %v165
  %v1017 = vunpack.c.l.b16 %v166
  %v1018 = vunpack.c.h.b16 %v166
  %v1019 = vunpack.c.l.b16 %v167
  %v1020 = vunpack.c.h.b16 %v167
  %v1021 = vunpack.c.l.b16 %v168
  %v1022 = vunpack.c.h.b16 %v168
  %v1023 = vunpack.c.l.b16 %v169
  %v1024 = vunpack.c.h.b16 %v169
  %v1025 = vunpack.c.l.b16 %v170
  %v1026 = vunpack.c.h.b16 %v170
  %v1027 = vunpack.c.l.b16 %v171
  %v1028 = vunpack.c.h.b16 %v171
  %v1029 = vunpack.c.l.b16 %v172
  %v1030 = vunpack.c.h.b16 %v172
  %v1031 = vunpack.c.l.b16 %v173
  %v1032 = vunpack.c.h.b16 %v173
  %v1033 = vunpack.c.l.b16 %v174
  %v1034 = vunpack.c.h.b16 %v174
  %v1035 = vunpack.c.l.b16 %v175
  %v1036 = vunpack.c.h.b16 %v175
  %v1037 = vunpack.c.l.b16 %v176
  %v1038 = vunpack.c.h.b16 %v176
  %v1039 = vunpack.c.l.b16 %v177
  %v1040 = vunpack.c.h.b16 %v177
  %v1041 = vunpack.c.l.b16 %v178
  %v1042 = vunpack.c.h.b16 %v178
  %v1043 = vunpack.c.l.b16 %v179
  %v1044 = vunpack.c.h.b16 %v179
  %v1045 = vunpack.c.l.b16 %v180
  %v1046 = vunpack.c.h.b16 %v180
  %v1047 = vunpack.c.l.b16 %v181
  %v1048 = vunpack.c.h.b16 %v181
  %v1049 = vunpack.c.l.b16 %v182
  %v1050 = vunpack.c.h.b16 %v182
  %v1051 = vunpack.c.l.b16 %v183
  %v1052 = vunpack.c.h.b16 %v183
  %v1053 = vunpack.c.l.b16 %v184
  %v1054 = vunpack.c.h.b16 %v184
  %v1055 = vunpack.c.l.b16 %v185
  %v1056 = vunpack.c.h.b16 %v185
  %v1057 = vunpack.c.l.b16 %v186
  %v1058 = vunpack.c.h.b16 %v186
  %v1059 = vunpack.c.l.b16 %v187
  %v1060 = vunpack.c.h.b16 %v187
  %v1061 = vunpack.c.l.b16 %v188
  %v1062 = vunpack.c.h.b16 %v188
  %v1063 = vunpack.c.l.b16 %v189
  %v1064 = vunpack.c.h.b16 %v189
  %v1065 = vunpack.c.l.b16 %v190
  %v1066 = vunpack.c.h.b16 %v190
  %v1067 = vunpack.c.l.b16 %v191
  %v1068 = vunpack.c.h.b16 %v191
  %v1069 = vunpack.c.l.b16 %v192
  %v1070 = vunpack.c.h.b16 %v192
  %v1071 = vunpack.c.l.b16 %v193
  %v1072 = vunpack.c.h.b16 %v193
  %v1073 = vunpack.c.l.b16 %v194
  %v1074 = vunpack.c.h.b16 %v194
  %v1075 = vunpack.c.l.b16 %v195
  %v1076 = vunpack.c.h.b16 %v195
  %v1077 = vunpack.c.l.b16 %v196
  %v1078 = vunpack.c.h.b16 %v196
  %v1079 = vunpack.c.l.b16 %v197
  %v1080 = vunpack.c.h.b16 %v197
  %v1081 = vunpack.c.l.b16 %v198
  %v1082 = vunpack.c.h.b16 %v198
  %v1083 = vunpack.c.l.b16 %v199
  %v1084 = vunpack.c.h.b16 %v199
  %v1085 = vunpack.c.l.b16 %v200
  %v1086 = vunpack.c.h.b16 %v200
  %v1087 = vunpack.c.l.b16 %v201
  %v1088 = vunpack.c.h.b16 %v201
  %v1089 = vunpack.c.l.b16 %v202
  %v1090 = vunpack.c.h.b16 %v202
  %v1091 = vunpack.c.l.b16 %v203
  %v1092 = vunpack.c.h.b16 %v203
  %v1093 = vunpack.c.l.b16 %v204
  %v1094 = vunpack.c.h.b16 %v204
  %v1095 = vunpack.c.l.b16 %v205
  %v1096 = vunpack.c.h.b16 %v205
  %v1097 = vunpack.c.l.b16 %v206
  %v1098 = vunpack.c.h.b16 %v206
  %v1099 = vunpack.c.l.b16 %v207
  %v1100 = vunpack.c.h.b16 %v207
  %v1101 = vunpack.c.l.b16 %v208
  %v1102 = vunpack.c.h.b16 %v208
  %v1103 = vunpack.c.l.b16 %v209
  %v1104 = vunpack.c.h.b16 %v209
  %v1105 = vunpack.c.l.b16 %v210
  %v1106 = vunpack.c.h.b16 %v210
  %v1107 = vunpack.c.l.b16 %v211
  %v1108 = vunpack.c.h.b16 %v211
  %v1109 = vunpack.c.l.b16 %v212
  %v1110 = vunpack.c.h.b16 %v212
  %v1111 = vunpack.c.l.b16 %v213
  %v1112 = vunpack.c.h.b16 %v213
  %v1113 = vunpack.c.l.b16 %v214
  %v1114 = vunpack.c.h.b16 %v214
  %v1115 = vunpack.c.l.b16 %v215
  %v1116 = vunpack.c.h.b16 %v215
  %v1117 = vunpack.c.l.b16 %v216
  %v1118 = vunpack.c.h.b16 %v216
  %v1119 = vunpack.c.l.b16 %v217
  %v1120 = vunpack.c.h.b16 %v217
  %v1121 = vunpack.c.l.b16 %v218
  %v1122 = vunpack.c.h.b16 %v218
  %v1123 = vunpack.c.l.b16 %v219
  %v1124 = vunpack.c.h.b16 %v219
  %v1125 = vunpack.c.l.b16 %v220
  %v1126 = vunpack.c.h.b16 %v220
  %v1127 = vunpack.c.l.b16 %v221
  %v1128 = vunpack.c.h.b16 %v221
  %v1129 = vunpack.c.l.b16 %v222
  %v1130 = vunpack.c.h.b16 %v222
  %v1131 = vunpack.c.l.b16 %v223
  %v1132 = vunpack.c.h.b16 %v223
  %v1133 = vunpack.c.l.b16 %v224
  %v1134 = vunpack.c.h.b16 %v224
  %v1135 = vunpack.c.l.b16 %v225
  %v1136 = vunpack.c.h.b16 %v225
  %v1137 = vunpack.c.l.b16 %v226
  %v1138 = vunpack.c.h.b16 %v226
  %v1139 = vunpack.c.l.b16 %v227
  %v1140 = vunpack.c.h.b16 %v227
  %v1141 = vunpack.c.l.b16 %v228
  %v1142 = vunpack.c.h.b16 %v228
  %v1143 = vunpack.c.l.b16 %v229
  %v1144 = vunpack.c.h.b16 %v229
  %v1145 = vunpack.c.l.b16 %v230
  %v1146 = vunpack.c.h.b16 %v230
  %v1147 = vunpack.c.l.b16 %v231
  %v1148 = vunpack.c.h.b16 %v231
  %v1149 = vunpack.c.l.b16 %v232
  %v1150 = vunpack.c.h.b16 %v232
  %v1151 = vunpack.c.l.b16 %v233
  %v1152 = vunpack.c.h.b16 %v233
  %v1153 = vunpack.c.l.b16 %v234
  %v1154 = vunpack.c.h.b16 %v234
  %v1155 = vunpack.c.l.b16 %v235
  %v1156 = vunpack.c.h.b16 %v235
  %v1157 = vunpack.c.l.b16 %v236
  %v1158 = vunpack.c.h.b16 %v236
  %v1159 = vunpack.c.l.b16 %v237
  %v1160 = vunpack.c.h.b16 %v237
  %v1161 = vunpack.c.l.b16 %v238
  %v1162 = vunpack.c.h.b16 %v238
  %v1163 = vunpack.c.l.b16 %v239
  %v1164 = vunpack.c.h.b16 %v239
  %v1165 = vunpack.c.l.b16 %v240
  %v1166 = vunpack.c.h.b16 %v240
  %v1167 = vunpack.c.l.b16 %v241
  %v1168 = vunpack.c.h.b16 %v241
  %v1169 = vunpack.c.l.b16 %v242
  %v1170 = vunpack.c.h.b16 %v242
  %v1171 = vunpack.c.l.b16 %v243
  %v1172 = vunpack.c.h.b16 %v243
  %v1173 = vunpack.c.l.b16 %v244
  %v1174 = vunpack.c.h.b16 %v244
  %v1175 = vunpack.c.l.b16 %v245
  %v1176 = vunpack.c.h.b16 %v245
  %v1177 = vunpack.c.l.b16 %v246
  %v1178 = vunpack.c.h.b16 %v246
  %v1179 = vunpack.c.l.b16 %v247
  %v1180 = vunpack.c.h.b16 %v247
  %v1181 = vunpack.c.l.b16 %v248
  %v1182 = vunpack.c.h.b16 %v248
  %v1183 = vunpack.c.l.b16 %v249
  %v1184 = vunpack.c.h.b16 %v249
  %v1185 = vunpack.c.l.b16 %v250
  %v1186 = vunpack.c.h.b16 %v250
  %v1187 = vunpack.c.l.b16 %v251
  %v1188 = vunpack.c.h.b16 %v251
  %v1189 = vunpack.c.l.b16 %v252
  %v1190 = vunpack.c.h.b16 %v252
  %v1191 = vunpack.c.l.b16 %v253
  %v1192 = vunpack.c.h.b16 %v253
  %v1193 = vunpack.c.l.b16 %v254
  %v1194 = vunpack.c.h.b16 %v254
  %v1195 = vunpack.c.l.b16 %v255
  %v1196 = vunpack.c.h.b16 %v255
  %v1197 = vunpack.c.l.b16 %v256
  %v1198 = vunpack.c.h.b16 %v256
  %v1199 = vunpack.c.l.b16 %v257
  %v1200 = vunpack.c.h.b16 %v257
  %v1201 = vunpack.c.l.b16 %v258
  %v1202 = vunpack.c.h.b16 %v258
  %v1203 = vunpack.c.l.b16 %v259
  %v1204 = vunpack.c.h.b16 %v259
  %v1205 = vunpack.c.l.b16 %v260
  %v1206 = vunpack.c.h.b16 %v260
  %v1207 = vunpack.c.l.b16 %v261
  %v1208 = vunpack.c.h.b16 %v261
  %v1209 = vunpack.c.l.b16 %v262
  %v1210 = vunpack.c.h.b16 %v262
  %v1211 = vunpack.c.l.b16 %v263
  %v1212 = vunpack.c.h.b16 %v263
  %v1213 = vunpack.c.l.b16 %v264
  %v1214 = vunpack.c.h.b16 %v264
  %v1215 = vunpack.c.l.b16 %v265
  %v1216 = vunpack.c.h.b16 %v265
  %v1217 = vunpack.c.l.b16 %v266
  %v1218 = vunpack.c.h.b16 %v266
  %v1219 = vunpack.c.l.b16 %v267
  %v1220 = vunpack.c.h.b16 %v267
  %v1221 = vunpack.c.l.b16 %v268
  %v1222 = vunpack.c.h.b16 %v268
  %v1223 = vunpack.c.l.b16 %v269
  %v1224 = vunpack.c.h.b16 %v269
  %v1225 = vunpack.c.l.b16 %v270
  %v1226 = vunpack.c.h.b16 %v270
  %v1227 = vunpack.c.l.b16 %v271
  %v1228 = vunpack.c.h.b16 %v271
  %v1229 = vunpack.c.l.b16 %v272
  %v1230 = vunpack.c.h.b16 %v272
  %v1231 = vunpack.c.l.b16 %v273
  %v1232 = vunpack.c.h.b16 %v273
  %v1233 = vunpack.c.l.b16 %v274
  %v1234 = vunpack.c.h.b16 %v274
  %v1235 = vunpack.c.l.b16 %v275
  %v1236 = vunpack.c.h.b16 %v275
  %v1237 = vunpack.c.l.b16 %v276
  %v1238 = vunpack.c.h.b16 %v276
  %v1239 = vunpack.c.l.b16 %v277
  %v1240 = vunpack.c.h.b16 %v277
  %v1241 = vunpack.c.l.b16 %v278
  %v1242 = vunpack.c.h.b16 %v278
  %v1243 = vunpack.c.l.b16 %v279
  %v1244 = vunpack.c.h.b16 %v279
  %v1245 = vunpack.c.l.b16 %v280
  %v1246 = vunpack.c.h.b16 %v280
  %v1247 = vunpack.c.l.b16 %v281
  %v1248 = vunpack.c.h.b16 %v281
  %v1249 = vunpack.c.l.b16 %v282
  %v1250 = vunpack.c.h.b16 %v282
  %v1251 = vunpack.c.l.b16 %v283
  %v1252 = vunpack.c.h.b16 %v283
  %v1253 = vunpack.c.l.b16 %v284
  %v1254 = vunpack.c.h.b16 %v284
  %v1255 = vunpack.c.l.b16 %v285
  %v1256 = vunpack.c.h.b16 %v285
  %v1257 = vunpack.c.l.b16 %v286
  %v1258 = vunpack.c.h.b16 %v286
  %v1259 = vunpack.c.l.b16 %v287
  %v1260 = vunpack.c.h.b16 %v287
  %v1261 = vunpack.c.l.b16 %v288
  %v1262 = vunpack.c.h.b16 %v288
  %v1263 = vunpack.c.l.b16 %v289
  %v1264 = vunpack.c.h.b16 %v289
  %v1265 = vunpack.c.l.b16 %v290
  %v1266 = vunpack.c.h.b16 %v290
  %v1267 = vunpack.c.l.b16 %v291
  %v1268 = vunpack.c.h.b16 %v291
  %v1269 = vunpack.c.l.b16 %v292
  %v1270 = vunpack.c.h.b16 %v292
  %v1271 = vunpack.c.l.b16 %v293
  %v1272 = vunpack.c.h.b16 %v293
  %v1273 = vunpack.c.l.b16 %v294
  %v1274 = vunpack.c.h.b16 %v294
  %v1275 = vunpack.c.l.b16 %v295
  %v1276 = vunpack.c.h.b16 %v295
  %v1277 = vunpack.c.l.b16 %v296
  %v1278 = vunpack.c.h.b16 %v296
  %v1279 = vunpack.c.l.b16 %v297
  %v1280 = vunpack.c.h.b16 %v297
  %v1281 = vunpack.c.l.b16 %v298
  %v1282 = vunpack.c.h.b16 %v298
  %v1283 = vunpack.c.l.b16 %v299
  %v1284 = vunpack.c.h.b16 %v299
  %v1285 = vunpack.c.l.b16 %v300
  %v1286 = vunpack.c.h.b16 %v300
  %v1287 = vunpack.c.l.b16 %v301
  %v1288 = vunpack.c.h.b16 %v301
  %v1289 = vunpack.c.l.b16 %v302
  %v1290 = vunpack.c.h.b16 %v302
  %v1291 = vunpack.c.l.b16 %v303
  %v1292 = vunpack.c.h.b16 %v303
  %v1293 = vunpack.c.l.b16 %v304
  %v1294 = vunpack.c.h.b16 %v304
  %v1295 = vunpack.c.l.b16 %v305
  %v1296 = vunpack.c.h.b16 %v305
  %v1297 = vunpack.c.l.b16 %v306
  %v1298 = vunpack.c.h.b16 %v306
  %v1299 = vunpack.c.l.b16 %v307
  %v1300 = vunpack.c.h.b16 %v307
  %v1301 = vunpack.c.l.b16 %v308
  %v1302 = vunpack.c.h.b16 %v308
  %v1303 = vunpack.c.l.b16 %v309
  %v1304 = vunpack.c.h.b16 %v309
  %v1305 = vunpack.c.l.b16 %v310
  %v1306 = vunpack.c.h.b16 %v310
  %v1307 = vunpack.c.l.b16 %v311
  %v1308 = vunpack.c.h.b16 %v311
  %v1309 = vunpack.c.l.b16 %v312
  %v1310 = vunpack.c.h.b16 %v312
  %v1311 = vunpack.c.l.b16 %v313
  %v1312 = vunpack.c.h.b16 %v313
  %v1313 = vunpack.c.l.b16 %v314
  %v1314 = vunpack.c.h.b16 %v314
  %v1315 = vunpack.c.l.b16 %v315
  %v1316 = vunpack.c.h.b16 %v315
  %v1317 = vunpack.c.l.b16 %v316
  %v1318 = vunpack.c.h.b16 %v316
  %v1319 = vunpack.c.l.b16 %v317
  %v1320 = vunpack.c.h.b16 %v317
  %v1321 = vunpack.c.l.b16 %v318
  %v1322 = vunpack.c.h.b16 %v318
  %v1323 = vunpack.c.l.b16 %v319
  %v1324 = vunpack.c.h.b16 %v319
  %v1325 = vunpack.c.l.b16 %v320
  %v1326 = vunpack.c.h.b16 %v320
  %v1327 = vunpack.c.l.b16 %v321
  %v1328 = vunpack.c.h.b16 %v321
  %v1329 = vunpack.c.l.b16 %v322
  %v1330 = vunpack.c.h.b16 %v322
  %v1331 = vunpack.c.l.b16 %v323
  %v1332 = vunpack.c.h.b16 %v323
  %v1333 = vunpack.c.l.b16 %v324
  %v1334 = vunpack.c.h.b16 %v324
  %v1335 = vunpack.c.l.b16 %v325
  %v1336 = vunpack.c.h.b16 %v325
  %v1337 = vunpack.c.l.b16 %v326
  %v1338 = vunpack.c.h.b16 %v326
  %v1339 = vunpack.c.l.b16 %v327
  %v1340 = vunpack.c.h.b16 %v327
  %v1341 = vunpack.c.l.b16 %v328
  %v1342 = vunpack.c.h.b16 %v328
  %v1343 = vunpack.c.l.b16 %v329
  %v1344 = vunpack.c.h.b16 %v329
  %v1345 = vunpack.c.l.b16 %v330
  %v1346 = vunpack.c.h.b16 %v330
  %v1347 = vunpack.c.l.b16 %v331
  %v1348 = vunpack.c.h.b16 %v331
  %v1349 = vpack.c.b16 %v775, %v773
  %v1350 = vpack.c.b16 %v776, %v774
  %v1351 = vpack.c.b16 %v779, %v777
  %v1352 = vpack.c.b16 %v780, %v778
  %v1353 = vpack.c.b16 %v783, %v781
  %v1354 = vpack.c.b16 %v784, %v782
  %v1355 = vpack.c.b16 %v787, %v785
  %v1356 = vpack.c.b16 %v788, %v786
  %v1357 = vpack.c.b16 %v791, %v789
  %v1358 = vpack.c.b16 %v792, %v790
  %v1359 = vpack.c.b16 %v795, %v793
  %v1360 = vpack.c.b16 %v796, %v794
  %v1361 = vpack.c.b16 %v799, %v797
  %v1362 = vpack.c.b16 %v800, %v798
  %v1363 = vpack.c.b16 %v803, %v801
  %v1364 = vpack.c.b16 %v804, %v802
  %v1365 = vpack.c.b16 %v807, %v805
  %v1366 = vpack.c.b16 %v808, %v806
  %v1367 = vpack.c.b16 %v811, %v809
  %v1368 = vpack.c.b16 %v812, %v810
  %v1369 = vpack.c.b16 %v815, %v813
  %v1370 = vpack.c.b16 %v816, %v814
  %v1371 = vpack.c.b16 %v819, %v817
  %v1372 = vpack.c.b16 %v820, %v818
  %v1373 = vpack.c.b16 %v823, %v821
  %v1374 = vpack.c.b16 %v824, %v822
  %v1375 = vpack.c.b16 %v827, %v825
  %v1376 = vpack.c.b16 %v828, %v826
  %v1377 = vpack.c.b16 %v831, %v829
  %v1378 = vpack.c.b16 %v832, %v830
  %v1379 = vpack.c.b16 %v835, %v833
  %v1380 = vpack.c.b16 %v836, %v834
  %v1381 = vpack.c.b16 %v839, %v837
  %v1382 = vpack.c.b16 %v840, %v838
  %v1383 = vpack.c.b16 %v843, %v841
  %v1384 = vpack.c.b16 %v844, %v842
  %v1385 = vpack.c.b16 %v847, %v845
  %v1386 = vpack.c.b16 %v848, %v846
  %v1387 = vpack.c.b16 %v851, %v849
  %v1388 = vpack.c.b16 %v852, %v850
  %v1389 = vpack.c.b16 %v855, %v853
  %v1390 = vpack.c.b16 %v856, %v854
  %v1391 = vpack.c.b16 %v859, %v857
  %v1392 = vpack.c.b16 %v860, %v858
  %v1393 = vpack.c.b16 %v863, %v861
  %v1394 = vpack.c.b16 %v864, %v862
  %v1395 = vpack.c.b16 %v867, %v865
  %v1396 = vpack.c.b16 %v868, %v866
  %v1397 = vpack.c.b16 %v871, %v869
  %v1398 = vpack.c.b16 %v872, %v870
  %v1399 = vpack.c.b16 %v875, %v873
  %v1400 = vpack.c.b16 %v876, %v874
  %v1401 = vpack.c.b16 %v879, %v877
  %v1402 = vpack.c.b16 %v880, %v878
  %v1403 = vpack.c.b16 %v883, %v881
  %v1404 = vpack.c.b16 %v884, %v882
  %v1405 = vpack.c.b16 %v887, %v885
  %v1406 = vpack.c.b16 %v888, %v886
  %v1407 = vpack.c.b16 %v891, %v889
  %v1408 = vpack.c.b16 %v892, %v890
  %v1409 = vpack.c.b16 %v895, %v893
  %v1410 = vpack.c.b16 %v896, %v894
  %v1411 = vpack.c.b16 %v899, %v897
  %v1412 = vpack.c.b16 %v900, %v898
  %v1413 = vpack.c.b16 %v903, %v901
  %v1414 = vpack.c.b16 %v904, %v902
  %v1415 = vpack.c.b16 %v907, %v905
  %v1416 = vpack.c.b16 %v908, %v906
  %v1417 = vpack.c.b16 %v911, %v909
  %v1418 = vpack.c.b16 %v912, %v910
  %v1419 = vpack.c.b16 %v915, %v913
  %v1420 = vpack.c.b16 %v916, %v914
  %v1421 = vpack.c.b16 %v919, %v917
  %v1422 = vpack.c.b16 %v920, %v918
  %v1423 = vpack.c.b16 %v923, %v921
  %v1424 = vpack.c.b16 %v924, %v922
  %v1425 = vpack.c.b16 %v927, %v925
  %v1426 = vpack.c.b16 %v928, %v926
  %v1427 = vpack.c.b16 %v931, %v929
  %v1428 = vpack.c.b16 %v932, %v930
  %v1429 = vpack.c.b16 %v935, %v933
  %v1430 = vpack.c.b16 %v936, %v934
  %v1431 = vpack.c.b16 %v939, %v937
  %v1432 = vpack.c.b16 %v940, %v938
  %v1433 = vpack.c.b16 %v943, %v941
  %v1434 = vpack.c.b16 %v944, %v942
  %v1435 = vpack.c.b16 %v947, %v945
  %v1436 = vpack.c.b16 %v948, %v946
  %v1437 = vpack.c.b16 %v951, %v949
  %v1438 = vpack.c.b16 %v952, %v950
  %v1439 = vpack.c.b16 %v955, %v953
  %v1440 = vpack.c.b16 %v956, %v954
  %v1441 = vpack.c.b16 %v959, %v957
  %v1442 = vpack.c.b16 %v960, %v958
  %v1443 = vpack.c.b16 %v963, %v961
  %v1444 = vpack.c.b16 %v964, %v962
  %v1445 = vpack.c.b16 %v967, %v965
  %v1446 = vpack.c.b16 %v968, %v966
  %v1447 = vpack.c.b16 %v971, %v969
  %v1448 = vpack.c.b16 %v972, %v970
  %v1449 = vpack.c.b16 %v975, %v973
  %v1450 = vpack.c.b16 %v976, %v974
  %v1451 = vpack.c.b16 %v979, %v977
  %v1452 = vpack.c.b16 %v980, %v978
  %v1453 = vpack.c.b16 %v983, %v981
  %v1454 = vpack.c.b16 %v984, %v982
  %v1455 = vpack.c.b16 %v987, %v985
  %v1456 = vpack.c.b16 %v988, %v986
  %v1457 = vpack.c.b16 %v991, %v989
  %v1458 = vpack.c.b16 %v992, %v990
  %v1459 = vpack.c.b16 %v995, %v993
  %v1460 = vpack.c.b16 %v996, %v994
  %v1461 = vpack.c.b16 %v999, %v997
  %v1462 = vpack.c.b16 %v1000, %v998
  %v1463 = vpack.c.b16 %v1003, %v1001
  %v1464 = vpack.c.b16 %v1004, %v1002
  %v1465 = vpack.c.b16 %v1007, %v1005
  %v1466 = vpack.c.b16 %v1008, %v1006
  %v1467 = vpack.c.b16 %v1011, %v1009
  %v1468 = vpack.c.b16 %v1012, %v1010
  %v1469 = vpack.c.b16 %v1015, %v1013
  %v1470 = vpack.c.b16 %v1016, %v1014
  %v1471 = vpack.c.b16 %v1019, %v1017
  %v1472 = vpack.c.b16 %v1020, %v1018
  %v1473 = vpack.c.b16 %v1023, %v1021
  %v1474 = vpack.c.b16 %v1024, %v1022
  %v1475 = vpack.c.b16 %v1027, %v1025
  %v1476 = vpack.c.b16 %v1028, %v1026
  %v1477 = vpack.c.b16 %v1031, %v1029
  %v1478 = vpack.c.b16 %v1032, %v1030
  %v1479 = vpack.c.b16 %v1035, %v1033
  %v1480 = vpack.c.b16 %v1036, %v1034
  %v1481 = vpack.c.b16 %v1039, %v1037
  %v1482 = vpack.c.b16 %v1040, %v1038
  %v1483 = vpack.c.b16 %v1043, %v1041
  %v1484 = vpack.c.b16 %v1044, %v1042
  %v1485 = vpack.c.b16 %v1047, %v1045
  %v1486 = vpack.c.b16 %v1048, %v1046
  %v1487 = vpack.c.b16 %v1051, %v1049
  %v1488 = vpack.c.b16 %v1052, %v1050
  %v1489 = vpack.c.b16 %v1055, %v1053
  %v1490 = vpack.c.b16 %v1056, %v1054
  %v1491 = vpack.c.b16 %v1059, %v1057
  %v1492 = vpack.c.b16 %v1060, %v1058
  %v1493 = vpack.c.b16 %v1063, %v1061
  %v1494 = vpack.c.b16 %v1064, %v1062
  %v1495 = vpack.c.b16 %v1067, %v1065
  %v1496 = vpack.c.b16 %v1068, %v1066
  %v1497 = vpack.c.b16 %v1071, %v1069
  %v1498 = vpack.c.b16 %v1072, %v1070
  %v1499 = vpack.c.b16 %v1075, %v1073
  %v1500 = vpack.c.b16 %v1076, %v1074
  %v1501 = vpack.c.b16 %v1079, %v1077
  %v1502 = vpack.c.b16 %v1080, %v1078
  %v1503 = vpack.c.b16 %v1083, %v1081
  %v1504 = vpack.c.b16 %v1084, %v1082
  %v1505 = vpack.c.b16 %v1087, %v1085
  %v1506 = vpack.c.b16 %v1088, %v1086
  %v1507 = vpack.c.b16 %v1091, %v1089
  %v1508 = vpack.c.b16 %v1092, %v1090
  %v1509 = vpack.c.b16 %v1095, %v1093
  %v1510 = vpack.c.b16 %v1096, %v1094
  %v1511 = vpack.c.b16 %v1099, %v1097
  %v1512 = vpack.c.b16 %v1100, %v1098
  %v1513 = vpack.c.b16 %v1103, %v1101
  %v1514 = vpack.c.b16 %v1104, %v1102
  %v1515 = vpack.c.b16 %v1107, %v1105
  %v1516 = vpack.c.b16 %v1108, %v1106
  %v1517 = vpack.c.b16 %v1111, %v1109
  %v1518 = vpack.c.b16 %v1112, %v1110
  %v1519 = vpack.c.b16 %v1115, %v1113
  %v1520 = vpack.c.b16 %v1116, %v1114
  %v1521 = vpack.c.b16 %v1119, %v1117
  %v1522 = vpack.c.b16 %v1120, %v1118
  %v1523 = vpack.c.b16 %v1123, %v1121
  %v1524 = vpack.c.b16 %v1124, %v1122
  %v1525 = vpack.c.b16 %v1127, %v1125
  %v1526 = vpack.c.b16 %v1128, %v1126
  %v1527 = vpack.c.b16 %v1131, %v1129
  %v1528 = vpack.c.b16 %v1132, %v1130
  %v1529 = vpack.c.b16 %v1135, %v1133
  %v1530 = vpack.c.b16 %v1136, %v1134
  %v1531 = vpack.c.b16 %v1139, %v1137
  %v1532 = vpack.c.b16 %v1140, %v1138
  %v1533 = vpack.c.b16 %v1143, %v1141
  %v1534 = vpack.c.b16 %v1144, %v1142
  %v1535 = vpack.c.b16 %v1147, %v1145
  %v1536 = vpack.c.b16 %v1148, %v1146
  %v1537 = vpack.c.b16 %v1151, %v1149
  %v1538 = vpack.c.b16 %v1152, %v1150
  %v1539 = vpack.c.b16 %v1155, %v1153
  %v1540 = vpack.c.b16 %v1156, %v1154
  %v1541 = vpack.c.b16 %v1159, %v1157
  %v1542 = vpack.c.b16 %v1160, %v1158
  %v1543 = vpack.c.b16 %v1163, %v1161
  %v1544 = vpack.c.b16 %v1164, %v1162
  %v1545 = vpack.c.b16 %v1167, %v1165
  %v1546 = vpack.c.b16 %v1168, %v1166
  %v1547 = vpack.c.b16 %v1171, %v1169
  %v1548 = vpack.c.b16 %v1172, %v1170
  %v1549 = vpack.c.b16 %v1175, %v1173
  %v1550 = vpack.c.b16 %v1176, %v1174
  %v1551 = vpack.c.b16 %v1179, %v1177
  %v1552 = vpack.c.b16 %v1180, %v1178
  %v1553 = vpack.c.b16 %v1183, %v1181
  %v1554 = vpack.c.b16 %v1184, %v1182
  %v1555 = vpack.c.b16 %v1187, %v1185
  %v1556 = vpack.c.b16 %v1188, %v1186
  %v1557 = vpack.c.b16 %v1191, %v1189
  %v1558 = vpack.c.b16 %v1192, %v1190
  %v1559 = vpack.c.b16 %v1195, %v1193
  %v1560 = vpack.c.b16 %v1196, %v1194
  %v1561 = vpack.c.b16 %v1199, %v1197
  %v1562 = vpack.c.b16 %v1200, %v1198
  %v1563 = vpack.c.b16 %v1203, %v1201
  %v1564 = vpack.c.b16 %v1204, %v1202
  %v1565 = vpack.c.b16 %v1207, %v1205
  %v1566 = vpack.c.b16 %v1208, %v1206
  %v1567 = vpack.c.b16 %v1211, %v1209
  %v1568 = vpack.c.b16 %v1212, %v1210
  %v1569 = vpack.c.b16 %v1215, %v1213
  %v1570 = vpack.c.b16 %v1216, %v1214
  %v1571 = vpack.c.b16 %v1219, %v1217
  %v1572 = vpack.c.b16 %v1220, %v1218
  %v1573 = vpack.c.b16 %v1223, %v1221
  %v1574 = vpack.c.b16 %v1224, %v1222
  %v1575 = vpack.c.b16 %v1227, %v1225
  %v1576 = vpack.c.b16 %v1228, %v1226
  %v1577 = vpack.c.b16 %v1231, %v1229
  %v1578 = vpack.c.b16 %v1232, %v1230
  %v1579 = vpack.c.b16 %v1235, %v1233
  %v1580 = vpack.c.b16 %v1236, %v1234
  %v1581 = vpack.c.b16 %v1239, %v1237
  %v1582 = vpack.c.b16 %v1240, %v1238
  %v1583 = vpack.c.b16 %v1243, %v1241
  %v1584 = vpack.c.b16 %v1244, %v1242
  %v1585 = vpack.c.b16 %v1247, %v1245
  %v1586 = vpack.c.b16 %v1248, %v1246
  %v1587 = vpack.c.b16 %v1251, %v1249
  %v1588 = vpack.c.b16 %v1252, %v1250
  %v1589 = vpack.c.b16 %v1255, %v1253
  %v1590 = vpack.c.b16 %v1256, %v1254
  %v1591 = vpack.c.b16 %v1259, %v1257
  %v1592 = vpack.c.b16 %v1260, %v1258
  %v1593 = vpack.c.b16 %v1263, %v1261
  %v1594 = vpack.c.b16 %v1264, %v1262
  %v1595 = vpack.c.b16 %v1267, %v1265
  %v1596 = vpack.c.b16 %v1268, %v1266
  %v1597 = vpack.c.b16 %v1271, %v1269
  %v1598 = vpack.c.b16 %v1272, %v1270
  %v1599 = vpack.c.b16 %v1275, %v1273
  %v1600 = vpack.c.b16 %v1276, %v1274
  %v1601 = vpack.c.b16 %v1279, %v1277
  %v1602 = vpack.c.b16 %v1280, %v1278
  %v1603 = vpack.c.b16 %v1283, %v1281
  %v1604 = vpack.c.b16 %v1284, %v1282
  %v1605 = vpack.c.b16 %v1287, %v1285
  %v1606 = vpack.c.b16 %v1288, %v1286
  %v1607 = vpack.c.b16 %v1291, %v1289
  %v1608 = vpack.c.b16 %v1292, %v1290
  %v1609 = vpack.c.b16 %v1295, %v1293
  %v1610 = vpack.c.b16 %v1296, %v1294
  %v1611 = vpack.c.b16 %v1299, %v1297
  %v1612 = vpack.c.b16 %v1300, %v1298
  %v1613 = vpack.c.b16 %v1303, %v1301
  %v1614 = vpack.c.b16 %v1304, %v1302
  %v1615 = vpack.c.b16 %v1307, %v1305
  %v1616 = vpack.c.b16 %v1308, %v1306
  %v1617 = vpack.c.b16 %v1311, %v1309
  %v1618 = vpack.c.b16 %v1312, %v1310
  %v1619 = vpack.c.b16 %v1315, %v1313
  %v1620 = vpack.c.b16 %v1316, %v1314
  %v1621 = vpack.c.b16 %v1319, %v1317
  %v1622 = vpack.c.b16 %v1320, %v1318
  %v1623 = vpack.c.b16 %v1323, %v1321
  %v1624 = vpack.c.b16 %v1324, %v1322
  %v1625 = vpack.c.b16 %v1327, %v1325
  %v1626 = vpack.c.b16 %v1328, %v1326
  %v1627 = vpack.c.b16 %v1331, %v1329
  %v1628 = vpack.c.b16 %v1332, %v1330
  %v1629 = vpack.c.b16 %v1335, %v1333
  %v1630 = vpack.c.b16 %v1336, %v1334
  %v1631 = vpack.c.b16 %v1339, %v1337
  %v1632 = vpack.c.b16 %v1340, %v1338
  %v1633 = vpack.c.b16 %v1343, %v1341
  %v1634 = vpack.c.b16 %v1344, %v1342
  %v1635 = vpack.c.b16 %v1347, %v1345
  %v1636 = vpack.c.b16 %v1348, %v1346
  %1925 = vmatpush.bf16.msra.mxu0 %v1363
  %1926 = vmatpush.bf16.msra.mxu0 %v1361
  %1927 = vmatpush.bf16.msra.mxu0 %v1359
  %1928 = vmatpush.bf16.msra.mxu0 %v1357
  %1929 = vmatpush.bf16.msra.mxu0 %v1355
  %1930 = vmatpush.bf16.msra.mxu0 %v1353
  %1931 = vmatpush.bf16.msra.mxu0 %v1351
  %1932 = vmatpush.bf16.msra.mxu0 %v1349
  %1933 = vmatmul.bf16.gmra.mxu0 %v413
  %v1934 = vpop.f32.mrf.mxu0
  %v1935 = vadd.f32 0.0, %v1934
  %v1936 = vpop.f32.mrf.mxu0
  %v1937 = vadd.f32 0.0, %v1936
  %1938 = vmatmul.bf16.gmra.mxu0 %v431
  %v1939 = vpop.f32.mrf.mxu0
  %v1940 = vadd.f32 0.0, %v1939
  %v1941 = vpop.f32.mrf.mxu0
  %1942 = vdwg.mxu0
  %1943 = vmatpush.bf16.msra.mxu0 %v1379
  %1944 = vmatpush.bf16.msra.mxu0 %v1377
  %1945 = vmatpush.bf16.msra.mxu0 %v1375
  %1946 = vmatpush.bf16.msra.mxu0 %v1373
  %1947 = vmatpush.bf16.msra.mxu0 %v1371
  %1948 = vmatpush.bf16.msra.mxu0 %v1369
  %1949 = vmatpush.bf16.msra.mxu0 %v1367
  %1950 = vmatpush.bf16.msra.mxu0 %v1365
  %1951 = vmatmul.bf16.gmra.mxu0 %v414
  %v1952 = vpop.f32.mrf.mxu0
  %v1953 = vadd.f32 %v1935, %v1952
  %v1954 = vpop.f32.mrf.mxu0
  %v1955 = vadd.f32 %v1937, %v1954
  %1956 = vmatmul.bf16.gmra.mxu0 %v432
  %v1957 = vpop.f32.mrf.mxu0
  %v1958 = vadd.f32 %v1940, %v1957
  %v1959 = vpop.f32.mrf.mxu0
  %1960 = vdwg.mxu0
  %1961 = vmatpush.bf16.msra.mxu0 %v1395
  %1962 = vmatpush.bf16.msra.mxu0 %v1393
  %1963 = vmatpush.bf16.msra.mxu0 %v1391
  %1964 = vmatpush.bf16.msra.mxu0 %v1389
  %1965 = vmatpush.bf16.msra.mxu0 %v1387
  %1966 = vmatpush.bf16.msra.mxu0 %v1385
  %1967 = vmatpush.bf16.msra.mxu0 %v1383
  %1968 = vmatpush.bf16.msra.mxu0 %v1381
  %1969 = vmatmul.bf16.gmra.mxu0 %v415
  %v1970 = vpop.f32.mrf.mxu0
  %v1971 = vadd.f32 %v1953, %v1970
  %v1972 = vpop.f32.mrf.mxu0
  %v1973 = vadd.f32 %v1955, %v1972
  %1974 = vmatmul.bf16.gmra.mxu0 %v433
  %v1975 = vpop.f32.mrf.mxu0
  %v1976 = vadd.f32 %v1958, %v1975
  %v1977 = vpop.f32.mrf.mxu0
  %1978 = vdwg.mxu0
  %1979 = vmatpush.bf16.msra.mxu0 %v1411
  %1980 = vmatpush.bf16.msra.mxu0 %v1409
  %1981 = vmatpush.bf16.msra.mxu0 %v1407
  %1982 = vmatpush.bf16.msra.mxu0 %v1405
  %1983 = vmatpush.bf16.msra.mxu0 %v1403
  %1984 = vmatpush.bf16.msra.mxu0 %v1401
  %1985 = vmatpush.bf16.msra.mxu0 %v1399
  %1986 = vmatpush.bf16.msra.mxu0 %v1397
  %1987 = vmatmul.bf16.gmra.mxu0 %v416
  %v1988 = vpop.f32.mrf.mxu0
  %v1989 = vadd.f32 %v1971, %v1988
  %v1990 = vpop.f32.mrf.mxu0
  %v1991 = vadd.f32 %v1973, %v1990
  %1992 = vmatmul.bf16.gmra.mxu0 %v434
  %v1993 = vpop.f32.mrf.mxu0
  %v1994 = vadd.f32 %v1976, %v1993
  %v1995 = vpop.f32.mrf.mxu0
  %1996 = vdwg.mxu0
  %1997 = vmatpush.bf16.msra.mxu0 %v1427
  %1998 = vmatpush.bf16.msra.mxu0 %v1425
  %1999 = vmatpush.bf16.msra.mxu0 %v1423
  %2000 = vmatpush.bf16.msra.mxu0 %v1421
  %2001 = vmatpush.bf16.msra.mxu0 %v1419
  %2002 = vmatpush.bf16.msra.mxu0 %v1417
  %2003 = vmatpush.bf16.msra.mxu0 %v1415
  %2004 = vmatpush.bf16.msra.mxu0 %v1413
  %2005 = vmatmul.bf16.gmra.mxu0 %v417
  %v2006 = vpop.f32.mrf.mxu0
  %v2007 = vadd.f32 %v1989, %v2006
  %v2008 = vpop.f32.mrf.mxu0
  %v2009 = vadd.f32 %v1991, %v2008
  %2010 = vmatmul.bf16.gmra.mxu0 %v435
  %v2011 = vpop.f32.mrf.mxu0
  %v2012 = vadd.f32 %v1994, %v2011
  %v2013 = vpop.f32.mrf.mxu0
  %2014 = vdwg.mxu0
  %2015 = vmatpush.bf16.msra.mxu0 %v1443
  %2016 = vmatpush.bf16.msra.mxu0 %v1441
  %2017 = vmatpush.bf16.msra.mxu0 %v1439
  %2018 = vmatpush.bf16.msra.mxu0 %v1437
  %2019 = vmatpush.bf16.msra.mxu0 %v1435
  %2020 = vmatpush.bf16.msra.mxu0 %v1433
  %2021 = vmatpush.bf16.msra.mxu0 %v1431
  %2022 = vmatpush.bf16.msra.mxu0 %v1429
  %2023 = vmatmul.bf16.gmra.mxu0 %v418
  %v2024 = vpop.f32.mrf.mxu0
  %v2025 = vadd.f32 %v2007, %v2024
  %v2026 = vpop.f32.mrf.mxu0
  %v2027 = vadd.f32 %v2009, %v2026
  %2028 = vmatmul.bf16.gmra.mxu0 %v436
  %v2029 = vpop.f32.mrf.mxu0
  %v2030 = vadd.f32 %v2012, %v2029
  %v2031 = vpop.f32.mrf.mxu0
  %2032 = vdwg.mxu0
  %2033 = vmatpush.bf16.msra.mxu0 %v1459
  %2034 = vmatpush.bf16.msra.mxu0 %v1457
  %2035 = vmatpush.bf16.msra.mxu0 %v1455
  %2036 = vmatpush.bf16.msra.mxu0 %v1453
  %2037 = vmatpush.bf16.msra.mxu0 %v1451
  %2038 = vmatpush.bf16.msra.mxu0 %v1449
  %2039 = vmatpush.bf16.msra.mxu0 %v1447
  %2040 = vmatpush.bf16.msra.mxu0 %v1445
  %2041 = vmatmul.bf16.gmra.mxu0 %v419
  %v2042 = vpop.f32.mrf.mxu0
  %v2043 = vadd.f32 %v2025, %v2042
  %v2044 = vpop.f32.mrf.mxu0
  %v2045 = vadd.f32 %v2027, %v2044
  %2046 = vmatmul.bf16.gmra.mxu0 %v437
  %v2047 = vpop.f32.mrf.mxu0
  %v2048 = vadd.f32 %v2030, %v2047
  %v2049 = vpop.f32.mrf.mxu0
  %2050 = vdwg.mxu0
  %2051 = vmatpush.bf16.msra.mxu0 %v1475
  %2052 = vmatpush.bf16.msra.mxu0 %v1473
  %2053 = vmatpush.bf16.msra.mxu0 %v1471
  %2054 = vmatpush.bf16.msra.mxu0 %v1469
  %2055 = vmatpush.bf16.msra.mxu0 %v1467
  %2056 = vmatpush.bf16.msra.mxu0 %v1465
  %2057 = vmatpush.bf16.msra.mxu0 %v1463
  %2058 = vmatpush.bf16.msra.mxu0 %v1461
  %2059 = vmatmul.bf16.gmra.mxu0 %v420
  %v2060 = vpop.f32.mrf.mxu0
  %v2061 = vadd.f32 %v2043, %v2060
  %v2062 = vpop.f32.mrf.mxu0
  %v2063 = vadd.f32 %v2045, %v2062
  %2064 = vmatmul.bf16.gmra.mxu0 %v438
  %v2065 = vpop.f32.mrf.mxu0
  %v2066 = vadd.f32 %v2048, %v2065
  %v2067 = vpop.f32.mrf.mxu0
  %2068 = vdwg.mxu0
  %2069 = vmatpush.bf16.msra.mxu0 %v1491
  %2070 = vmatpush.bf16.msra.mxu0 %v1489
  %2071 = vmatpush.bf16.msra.mxu0 %v1487
  %2072 = vmatpush.bf16.msra.mxu0 %v1485
  %2073 = vmatpush.bf16.msra.mxu0 %v1483
  %2074 = vmatpush.bf16.msra.mxu0 %v1481
  %2075 = vmatpush.bf16.msra.mxu0 %v1479
  %2076 = vmatpush.bf16.msra.mxu0 %v1477
  %2077 = vmatmul.bf16.gmra.mxu0 %v421
  %v2078 = vpop.f32.mrf.mxu0
  %v2079 = vadd.f32 %v2061, %v2078
  %v2080 = vpop.f32.mrf.mxu0
  %v2081 = vadd.f32 %v2063, %v2080
  %2082 = vmatmul.bf16.gmra.mxu0 %v439
  %v2083 = vpop.f32.mrf.mxu0
  %v2084 = vadd.f32 %v2066, %v2083
  %v2085 = vpop.f32.mrf.mxu0
  %2086 = vdwg.mxu0
  %2087 = vmatpush.bf16.msra.mxu0 %v1507
  %2088 = vmatpush.bf16.msra.mxu0 %v1505
  %2089 = vmatpush.bf16.msra.mxu0 %v1503
  %2090 = vmatpush.bf16.msra.mxu0 %v1501
  %2091 = vmatpush.bf16.msra.mxu0 %v1499
  %2092 = vmatpush.bf16.msra.mxu0 %v1497
  %2093 = vmatpush.bf16.msra.mxu0 %v1495
  %2094 = vmatpush.bf16.msra.mxu0 %v1493
  %2095 = vmatmul.bf16.gmra.mxu0 %v422
  %v2096 = vpop.f32.mrf.mxu0
  %v2097 = vadd.f32 %v2079, %v2096
  %v2098 = vpop.f32.mrf.mxu0
  %v2099 = vadd.f32 %v2081, %v2098
  %2100 = vmatmul.bf16.gmra.mxu0 %v440
  %v2101 = vpop.f32.mrf.mxu0
  %v2102 = vadd.f32 %v2084, %v2101
  %v2103 = vpop.f32.mrf.mxu0
  %2104 = vdwg.mxu0
  %2105 = vmatpush.bf16.msra.mxu0 %v1523
  %2106 = vmatpush.bf16.msra.mxu0 %v1521
  %2107 = vmatpush.bf16.msra.mxu0 %v1519
  %2108 = vmatpush.bf16.msra.mxu0 %v1517
  %2109 = vmatpush.bf16.msra.mxu0 %v1515
  %2110 = vmatpush.bf16.msra.mxu0 %v1513
  %2111 = vmatpush.bf16.msra.mxu0 %v1511
  %2112 = vmatpush.bf16.msra.mxu0 %v1509
  %2113 = vmatmul.bf16.gmra.mxu0 %v423
  %v2114 = vpop.f32.mrf.mxu0
  %v2115 = vadd.f32 %v2097, %v2114
  %v2116 = vpop.f32.mrf.mxu0
  %v2117 = vadd.f32 %v2099, %v2116
  %2118 = vmatmul.bf16.gmra.mxu0 %v441
  %v2119 = vpop.f32.mrf.mxu0
  %v2120 = vadd.f32 %v2102, %v2119
  %v2121 = vpop.f32.mrf.mxu0
  %2122 = vdwg.mxu0
  %2123 = vmatpush.bf16.msra.mxu0 %v1539
  %2124 = vmatpush.bf16.msra.mxu0 %v1537
  %2125 = vmatpush.bf16.msra.mxu0 %v1535
  %2126 = vmatpush.bf16.msra.mxu0 %v1533
  %2127 = vmatpush.bf16.msra.mxu0 %v1531
  %2128 = vmatpush.bf16.msra.mxu0 %v1529
  %2129 = vmatpush.bf16.msra.mxu0 %v1527
  %2130 = vmatpush.bf16.msra.mxu0 %v1525
  %2131 = vmatmul.bf16.gmra.mxu0 %v424
  %v2132 = vpop.f32.mrf.mxu0
  %v2133 = vadd.f32 %v2115, %v2132
  %v2134 = vpop.f32.mrf.mxu0
  %v2135 = vadd.f32 %v2117, %v2134
  %2136 = vmatmul.bf16.gmra.mxu0 %v442
  %v2137 = vpop.f32.mrf.mxu0
  %v2138 = vadd.f32 %v2120, %v2137
  %v2139 = vpop.f32.mrf.mxu0
  %2140 = vdwg.mxu0
  %2141 = vmatpush.bf16.msra.mxu0 %v1555
  %2142 = vmatpush.bf16.msra.mxu0 %v1553
  %2143 = vmatpush.bf16.msra.mxu0 %v1551
  %2144 = vmatpush.bf16.msra.mxu0 %v1549
  %2145 = vmatpush.bf16.msra.mxu0 %v1547
  %2146 = vmatpush.bf16.msra.mxu0 %v1545
  %2147 = vmatpush.bf16.msra.mxu0 %v1543
  %2148 = vmatpush.bf16.msra.mxu0 %v1541
  %2149 = vmatmul.bf16.gmra.mxu0 %v425
  %v2150 = vpop.f32.mrf.mxu0
  %v2151 = vadd.f32 %v2133, %v2150
  %v2152 = vpop.f32.mrf.mxu0
  %v2153 = vadd.f32 %v2135, %v2152
  %2154 = vmatmul.bf16.gmra.mxu0 %v443
  %v2155 = vpop.f32.mrf.mxu0
  %v2156 = vadd.f32 %v2138, %v2155
  %v2157 = vpop.f32.mrf.mxu0
  %2158 = vdwg.mxu0
  %2159 = vmatpush.bf16.msra.mxu0 %v1571
  %2160 = vmatpush.bf16.msra.mxu0 %v1569
  %2161 = vmatpush.bf16.msra.mxu0 %v1567
  %2162 = vmatpush.bf16.msra.mxu0 %v1565
  %2163 = vmatpush.bf16.msra.mxu0 %v1563
  %2164 = vmatpush.bf16.msra.mxu0 %v1561
  %2165 = vmatpush.bf16.msra.mxu0 %v1559
  %2166 = vmatpush.bf16.msra.mxu0 %v1557
  %2167 = vmatmul.bf16.gmra.mxu0 %v426
  %v2168 = vpop.f32.mrf.mxu0
  %v2169 = vadd.f32 %v2151, %v2168
  %v2170 = vpop.f32.mrf.mxu0
  %v2171 = vadd.f32 %v2153, %v2170
  %2172 = vmatmul.bf16.gmra.mxu0 %v444
  %v2173 = vpop.f32.mrf.mxu0
  %v2174 = vadd.f32 %v2156, %v2173
  %v2175 = vpop.f32.mrf.mxu0
  %2176 = vdwg.mxu0
  %2177 = vmatpush.bf16.msra.mxu0 %v1587
  %2178 = vmatpush.bf16.msra.mxu0 %v1585
  %2179 = vmatpush.bf16.msra.mxu0 %v1583
  %2180 = vmatpush.bf16.msra.mxu0 %v1581
  %2181 = vmatpush.bf16.msra.mxu0 %v1579
  %2182 = vmatpush.bf16.msra.mxu0 %v1577
  %2183 = vmatpush.bf16.msra.mxu0 %v1575
  %2184 = vmatpush.bf16.msra.mxu0 %v1573
  %2185 = vmatmul.bf16.gmra.mxu0 %v427
  %v2186 = vpop.f32.mrf.mxu0
  %v2187 = vadd.f32 %v2169, %v2186
  %v2188 = vpop.f32.mrf.mxu0
  %v2189 = vadd.f32 %v2171, %v2188
  %2190 = vmatmul.bf16.gmra.mxu0 %v445
  %v2191 = vpop.f32.mrf.mxu0
  %v2192 = vadd.f32 %v2174, %v2191
  %v2193 = vpop.f32.mrf.mxu0
  %2194 = vdwg.mxu0
  %2195 = vmatpush.bf16.msra.mxu0 %v1603
  %2196 = vmatpush.bf16.msra.mxu0 %v1601
  %2197 = vmatpush.bf16.msra.mxu0 %v1599
  %2198 = vmatpush.bf16.msra.mxu0 %v1597
  %2199 = vmatpush.bf16.msra.mxu0 %v1595
  %2200 = vmatpush.bf16.msra.mxu0 %v1593
  %2201 = vmatpush.bf16.msra.mxu0 %v1591
  %2202 = vmatpush.bf16.msra.mxu0 %v1589
  %2203 = vmatmul.bf16.gmra.mxu0 %v428
  %v2204 = vpop.f32.mrf.mxu0
  %v2205 = vadd.f32 %v2187, %v2204
  %v2206 = vpop.f32.mrf.mxu0
  %v2207 = vadd.f32 %v2189, %v2206
  %2208 = vmatmul.bf16.gmra.mxu0 %v446
  %v2209 = vpop.f32.mrf.mxu0
  %v2210 = vadd.f32 %v2192, %v2209
  %v2211 = vpop.f32.mrf.mxu0
  %2212 = vdwg.mxu0
  %2213 = vmatpush.bf16.msra.mxu0 %v1619
  %2214 = vmatpush.bf16.msra.mxu0 %v1617
  %2215 = vmatpush.bf16.msra.mxu0 %v1615
  %2216 = vmatpush.bf16.msra.mxu0 %v1613
  %2217 = vmatpush.bf16.msra.mxu0 %v1611
  %2218 = vmatpush.bf16.msra.mxu0 %v1609
  %2219 = vmatpush.bf16.msra.mxu0 %v1607
  %2220 = vmatpush.bf16.msra.mxu0 %v1605
  %2221 = vmatmul.bf16.gmra.mxu0 %v429
  %v2222 = vpop.f32.mrf.mxu0
  %v2223 = vadd.f32 %v2205, %v2222
  %v2224 = vpop.f32.mrf.mxu0
  %v2225 = vadd.f32 %v2207, %v2224
  %2226 = vmatmul.bf16.gmra.mxu0 %v447
  %v2227 = vpop.f32.mrf.mxu0
  %v2228 = vadd.f32 %v2210, %v2227
  %v2229 = vpop.f32.mrf.mxu0
  %2230 = vdwg.mxu0
  %2231 = vmatpush.bf16.msra.mxu0 %v1635
  %2232 = vmatpush.bf16.msra.mxu0 %v1633
  %2233 = vmatpush.bf16.msra.mxu0 %v1631
  %2234 = vmatpush.bf16.msra.mxu0 %v1629
  %2235 = vmatpush.bf16.msra.mxu0 %v1627
  %2236 = vmatpush.bf16.msra.mxu0 %v1625
  %2237 = vmatpush.bf16.msra.mxu0 %v1623
  %2238 = vmatpush.bf16.msra.mxu0 %v1621
  %2239 = vmatmul.bf16.gmra.mxu0 %v430
  %v2240 = vpop.f32.mrf.mxu0
  %v2241 = vadd.f32 %v2223, %v2240
  %v2242 = vpop.f32.mrf.mxu0
  %v2243 = vadd.f32 %v2225, %v2242
  %2244 = vmatmul.bf16.gmra.mxu0 %v448
  %v2245 = vpop.f32.mrf.mxu0
  %v2246 = vadd.f32 %v2228, %v2245
  %v2247 = vpop.f32.mrf.mxu0
  %2248 = vdwg.mxu0
  %2249 = vmatpush.bf16.msra.mxu0 %v1364
  %2250 = vmatpush.bf16.msra.mxu0 %v1362
  %2251 = vmatpush.bf16.msra.mxu0 %v1360
  %2252 = vmatpush.bf16.msra.mxu0 %v1358
  %2253 = vmatpush.bf16.msra.mxu0 %v1356
  %2254 = vmatpush.bf16.msra.mxu0 %v1354
  %2255 = vmatpush.bf16.msra.mxu0 %v1352
  %2256 = vmatpush.bf16.msra.mxu0 %v1350
  %2257 = vmatmul.bf16.gmra.mxu0 %v413
  %v2258 = vpop.f32.mrf.mxu0
  %v2259 = vadd.f32 0.0, %v2258
  %v2260 = vpop.f32.mrf.mxu0
  %v2261 = vadd.f32 0.0, %v2260
  %2262 = vmatmul.bf16.gmra.mxu0 %v431
  %v2263 = vpop.f32.mrf.mxu0
  %v2264 = vadd.f32 0.0, %v2263
  %v2265 = vpop.f32.mrf.mxu0
  %2266 = vdwg.mxu0
  %2267 = vmatpush.bf16.msra.mxu0 %v1380
  %2268 = vmatpush.bf16.msra.mxu0 %v1378
  %2269 = vmatpush.bf16.msra.mxu0 %v1376
  %2270 = vmatpush.bf16.msra.mxu0 %v1374
  %2271 = vmatpush.bf16.msra.mxu0 %v1372
  %2272 = vmatpush.bf16.msra.mxu0 %v1370
  %2273 = vmatpush.bf16.msra.mxu0 %v1368
  %2274 = vmatpush.bf16.msra.mxu0 %v1366
  %2275 = vmatmul.bf16.gmra.mxu0 %v414
  %v2276 = vpop.f32.mrf.mxu0
  %v2277 = vadd.f32 %v2259, %v2276
  %v2278 = vpop.f32.mrf.mxu0
  %v2279 = vadd.f32 %v2261, %v2278
  %2280 = vmatmul.bf16.gmra.mxu0 %v432
  %v2281 = vpop.f32.mrf.mxu0
  %v2282 = vadd.f32 %v2264, %v2281
  %v2283 = vpop.f32.mrf.mxu0
  %2284 = vdwg.mxu0
  %2285 = vmatpush.bf16.msra.mxu0 %v1396
  %2286 = vmatpush.bf16.msra.mxu0 %v1394
  %2287 = vmatpush.bf16.msra.mxu0 %v1392
  %2288 = vmatpush.bf16.msra.mxu0 %v1390
  %2289 = vmatpush.bf16.msra.mxu0 %v1388
  %2290 = vmatpush.bf16.msra.mxu0 %v1386
  %2291 = vmatpush.bf16.msra.mxu0 %v1384
  %2292 = vmatpush.bf16.msra.mxu0 %v1382
  %2293 = vmatmul.bf16.gmra.mxu0 %v415
  %v2294 = vpop.f32.mrf.mxu0
  %v2295 = vadd.f32 %v2277, %v2294
  %v2296 = vpop.f32.mrf.mxu0
  %v2297 = vadd.f32 %v2279, %v2296
  %2298 = vmatmul.bf16.gmra.mxu0 %v433
  %v2299 = vpop.f32.mrf.mxu0
  %v2300 = vadd.f32 %v2282, %v2299
  %v2301 = vpop.f32.mrf.mxu0
  %2302 = vdwg.mxu0
  %2303 = vmatpush.bf16.msra.mxu0 %v1412
  %2304 = vmatpush.bf16.msra.mxu0 %v1410
  %2305 = vmatpush.bf16.msra.mxu0 %v1408
  %2306 = vmatpush.bf16.msra.mxu0 %v1406
  %2307 = vmatpush.bf16.msra.mxu0 %v1404
  %2308 = vmatpush.bf16.msra.mxu0 %v1402
  %2309 = vmatpush.bf16.msra.mxu0 %v1400
  %2310 = vmatpush.bf16.msra.mxu0 %v1398
  %2311 = vmatmul.bf16.gmra.mxu0 %v416
  %v2312 = vpop.f32.mrf.mxu0
  %v2313 = vadd.f32 %v2295, %v2312
  %v2314 = vpop.f32.mrf.mxu0
  %v2315 = vadd.f32 %v2297, %v2314
  %2316 = vmatmul.bf16.gmra.mxu0 %v434
  %v2317 = vpop.f32.mrf.mxu0
  %v2318 = vadd.f32 %v2300, %v2317
  %v2319 = vpop.f32.mrf.mxu0
  %2320 = vdwg.mxu0
  %2321 = vmatpush.bf16.msra.mxu0 %v1428
  %2322 = vmatpush.bf16.msra.mxu0 %v1426
  %2323 = vmatpush.bf16.msra.mxu0 %v1424
  %2324 = vmatpush.bf16.msra.mxu0 %v1422
  %2325 = vmatpush.bf16.msra.mxu0 %v1420
  %2326 = vmatpush.bf16.msra.mxu0 %v1418
  %2327 = vmatpush.bf16.msra.mxu0 %v1416
  %2328 = vmatpush.bf16.msra.mxu0 %v1414
  %2329 = vmatmul.bf16.gmra.mxu0 %v417
  %v2330 = vpop.f32.mrf.mxu0
  %v2331 = vadd.f32 %v2313, %v2330
  %v2332 = vpop.f32.mrf.mxu0
  %v2333 = vadd.f32 %v2315, %v2332
  %2334 = vmatmul.bf16.gmra.mxu0 %v435
  %v2335 = vpop.f32.mrf.mxu0
  %v2336 = vadd.f32 %v2318, %v2335
  %v2337 = vpop.f32.mrf.mxu0
  %2338 = vdwg.mxu0
  %2339 = vmatpush.bf16.msra.mxu0 %v1444
  %2340 = vmatpush.bf16.msra.mxu0 %v1442
  %2341 = vmatpush.bf16.msra.mxu0 %v1440
  %2342 = vmatpush.bf16.msra.mxu0 %v1438
  %2343 = vmatpush.bf16.msra.mxu0 %v1436
  %2344 = vmatpush.bf16.msra.mxu0 %v1434
  %2345 = vmatpush.bf16.msra.mxu0 %v1432
  %2346 = vmatpush.bf16.msra.mxu0 %v1430
  %2347 = vmatmul.bf16.gmra.mxu0 %v418
  %v2348 = vpop.f32.mrf.mxu0
  %v2349 = vadd.f32 %v2331, %v2348
  %v2350 = vpop.f32.mrf.mxu0
  %v2351 = vadd.f32 %v2333, %v2350
  %2352 = vmatmul.bf16.gmra.mxu0 %v436
  %v2353 = vpop.f32.mrf.mxu0
  %v2354 = vadd.f32 %v2336, %v2353
  %v2355 = vpop.f32.mrf.mxu0
  %2356 = vdwg.mxu0
  %2357 = vmatpush.bf16.msra.mxu0 %v1460
  %2358 = vmatpush.bf16.msra.mxu0 %v1458
  %2359 = vmatpush.bf16.msra.mxu0 %v1456
  %2360 = vmatpush.bf16.msra.mxu0 %v1454
  %2361 = vmatpush.bf16.msra.mxu0 %v1452
  %2362 = vmatpush.bf16.msra.mxu0 %v1450
  %2363 = vmatpush.bf16.msra.mxu0 %v1448
  %2364 = vmatpush.bf16.msra.mxu0 %v1446
  %2365 = vmatmul.bf16.gmra.mxu0 %v419
  %v2366 = vpop.f32.mrf.mxu0
  %v2367 = vadd.f32 %v2349, %v2366
  %v2368 = vpop.f32.mrf.mxu0
  %v2369 = vadd.f32 %v2351, %v2368
  %2370 = vmatmul.bf16.gmra.mxu0 %v437
  %v2371 = vpop.f32.mrf.mxu0
  %v2372 = vadd.f32 %v2354, %v2371
  %v2373 = vpop.f32.mrf.mxu0
  %2374 = vdwg.mxu0
  %2375 = vmatpush.bf16.msra.mxu0 %v1476
  %2376 = vmatpush.bf16.msra.mxu0 %v1474
  %2377 = vmatpush.bf16.msra.mxu0 %v1472
  %2378 = vmatpush.bf16.msra.mxu0 %v1470
  %2379 = vmatpush.bf16.msra.mxu0 %v1468
  %2380 = vmatpush.bf16.msra.mxu0 %v1466
  %2381 = vmatpush.bf16.msra.mxu0 %v1464
  %2382 = vmatpush.bf16.msra.mxu0 %v1462
  %2383 = vmatmul.bf16.gmra.mxu0 %v420
  %v2384 = vpop.f32.mrf.mxu0
  %v2385 = vadd.f32 %v2367, %v2384
  %v2386 = vpop.f32.mrf.mxu0
  %v2387 = vadd.f32 %v2369, %v2386
  %2388 = vmatmul.bf16.gmra.mxu0 %v438
  %v2389 = vpop.f32.mrf.mxu0
  %v2390 = vadd.f32 %v2372, %v2389
  %v2391 = vpop.f32.mrf.mxu0
  %2392 = vdwg.mxu0
  %2393 = vmatpush.bf16.msra.mxu0 %v1492
  %2394 = vmatpush.bf16.msra.mxu0 %v1490
  %2395 = vmatpush.bf16.msra.mxu0 %v1488
  %2396 = vmatpush.bf16.msra.mxu0 %v1486
  %2397 = vmatpush.bf16.msra.mxu0 %v1484
  %2398 = vmatpush.bf16.msra.mxu0 %v1482
  %2399 = vmatpush.bf16.msra.mxu0 %v1480
  %2400 = vmatpush.bf16.msra.mxu0 %v1478
  %2401 = vmatmul.bf16.gmra.mxu0 %v421
  %v2402 = vpop.f32.mrf.mxu0
  %v2403 = vadd.f32 %v2385, %v2402
  %v2404 = vpop.f32.mrf.mxu0
  %v2405 = vadd.f32 %v2387, %v2404
  %2406 = vmatmul.bf16.gmra.mxu0 %v439
  %v2407 = vpop.f32.mrf.mxu0
  %v2408 = vadd.f32 %v2390, %v2407
  %v2409 = vpop.f32.mrf.mxu0
  %2410 = vdwg.mxu0
  %2411 = vmatpush.bf16.msra.mxu0 %v1508
  %2412 = vmatpush.bf16.msra.mxu0 %v1506
  %2413 = vmatpush.bf16.msra.mxu0 %v1504
  %2414 = vmatpush.bf16.msra.mxu0 %v1502
  %2415 = vmatpush.bf16.msra.mxu0 %v1500
  %2416 = vmatpush.bf16.msra.mxu0 %v1498
  %2417 = vmatpush.bf16.msra.mxu0 %v1496
  %2418 = vmatpush.bf16.msra.mxu0 %v1494
  %2419 = vmatmul.bf16.gmra.mxu0 %v422
  %v2420 = vpop.f32.mrf.mxu0
  %v2421 = vadd.f32 %v2403, %v2420
  %v2422 = vpop.f32.mrf.mxu0
  %v2423 = vadd.f32 %v2405, %v2422
  %2424 = vmatmul.bf16.gmra.mxu0 %v440
  %v2425 = vpop.f32.mrf.mxu0
  %v2426 = vadd.f32 %v2408, %v2425
  %v2427 = vpop.f32.mrf.mxu0
  %2428 = vdwg.mxu0
  %2429 = vmatpush.bf16.msra.mxu0 %v1524
  %2430 = vmatpush.bf16.msra.mxu0 %v1522
  %2431 = vmatpush.bf16.msra.mxu0 %v1520
  %2432 = vmatpush.bf16.msra.mxu0 %v1518
  %2433 = vmatpush.bf16.msra.mxu0 %v1516
  %2434 = vmatpush.bf16.msra.mxu0 %v1514
  %2435 = vmatpush.bf16.msra.mxu0 %v1512
  %2436 = vmatpush.bf16.msra.mxu0 %v1510
  %2437 = vmatmul.bf16.gmra.mxu0 %v423
  %v2438 = vpop.f32.mrf.mxu0
  %v2439 = vadd.f32 %v2421, %v2438
  %v2440 = vpop.f32.mrf.mxu0
  %v2441 = vadd.f32 %v2423, %v2440
  %2442 = vmatmul.bf16.gmra.mxu0 %v441
  %v2443 = vpop.f32.mrf.mxu0
  %v2444 = vadd.f32 %v2426, %v2443
  %v2445 = vpop.f32.mrf.mxu0
  %2446 = vdwg.mxu0
  %2447 = vmatpush.bf16.msra.mxu0 %v1540
  %2448 = vmatpush.bf16.msra.mxu0 %v1538
  %2449 = vmatpush.bf16.msra.mxu0 %v1536
  %2450 = vmatpush.bf16.msra.mxu0 %v1534
  %2451 = vmatpush.bf16.msra.mxu0 %v1532
  %2452 = vmatpush.bf16.msra.mxu0 %v1530
  %2453 = vmatpush.bf16.msra.mxu0 %v1528
  %2454 = vmatpush.bf16.msra.mxu0 %v1526
  %2455 = vmatmul.bf16.gmra.mxu0 %v424
  %v2456 = vpop.f32.mrf.mxu0
  %v2457 = vadd.f32 %v2439, %v2456
  %v2458 = vpop.f32.mrf.mxu0
  %v2459 = vadd.f32 %v2441, %v2458
  %2460 = vmatmul.bf16.gmra.mxu0 %v442
  %v2461 = vpop.f32.mrf.mxu0
  %v2462 = vadd.f32 %v2444, %v2461
  %v2463 = vpop.f32.mrf.mxu0
  %2464 = vdwg.mxu0
  %2465 = vmatpush.bf16.msra.mxu0 %v1556
  %2466 = vmatpush.bf16.msra.mxu0 %v1554
  %2467 = vmatpush.bf16.msra.mxu0 %v1552
  %2468 = vmatpush.bf16.msra.mxu0 %v1550
  %2469 = vmatpush.bf16.msra.mxu0 %v1548
  %2470 = vmatpush.bf16.msra.mxu0 %v1546
  %2471 = vmatpush.bf16.msra.mxu0 %v1544
  %2472 = vmatpush.bf16.msra.mxu0 %v1542
  %2473 = vmatmul.bf16.gmra.mxu0 %v425
  %v2474 = vpop.f32.mrf.mxu0
  %v2475 = vadd.f32 %v2457, %v2474
  %v2476 = vpop.f32.mrf.mxu0
  %v2477 = vadd.f32 %v2459, %v2476
  %2478 = vmatmul.bf16.gmra.mxu0 %v443
  %v2479 = vpop.f32.mrf.mxu0
  %v2480 = vadd.f32 %v2462, %v2479
  %v2481 = vpop.f32.mrf.mxu0
  %2482 = vdwg.mxu0
  %2483 = vmatpush.bf16.msra.mxu0 %v1572
  %2484 = vmatpush.bf16.msra.mxu0 %v1570
  %2485 = vmatpush.bf16.msra.mxu0 %v1568
  %2486 = vmatpush.bf16.msra.mxu0 %v1566
  %2487 = vmatpush.bf16.msra.mxu0 %v1564
  %2488 = vmatpush.bf16.msra.mxu0 %v1562
  %2489 = vmatpush.bf16.msra.mxu0 %v1560
  %2490 = vmatpush.bf16.msra.mxu0 %v1558
  %2491 = vmatmul.bf16.gmra.mxu0 %v426
  %v2492 = vpop.f32.mrf.mxu0
  %v2493 = vadd.f32 %v2475, %v2492
  %v2494 = vpop.f32.mrf.mxu0
  %v2495 = vadd.f32 %v2477, %v2494
  %2496 = vmatmul.bf16.gmra.mxu0 %v444
  %v2497 = vpop.f32.mrf.mxu0
  %v2498 = vadd.f32 %v2480, %v2497
  %v2499 = vpop.f32.mrf.mxu0
  %2500 = vdwg.mxu0
  %2501 = vmatpush.bf16.msra.mxu0 %v1588
  %2502 = vmatpush.bf16.msra.mxu0 %v1586
  %2503 = vmatpush.bf16.msra.mxu0 %v1584
  %2504 = vmatpush.bf16.msra.mxu0 %v1582
  %2505 = vmatpush.bf16.msra.mxu0 %v1580
  %2506 = vmatpush.bf16.msra.mxu0 %v1578
  %2507 = vmatpush.bf16.msra.mxu0 %v1576
  %2508 = vmatpush.bf16.msra.mxu0 %v1574
  %2509 = vmatmul.bf16.gmra.mxu0 %v427
  %v2510 = vpop.f32.mrf.mxu0
  %v2511 = vadd.f32 %v2493, %v2510
  %v2512 = vpop.f32.mrf.mxu0
  %v2513 = vadd.f32 %v2495, %v2512
  %2514 = vmatmul.bf16.gmra.mxu0 %v445
  %v2515 = vpop.f32.mrf.mxu0
  %v2516 = vadd.f32 %v2498, %v2515
  %v2517 = vpop.f32.mrf.mxu0
  %2518 = vdwg.mxu0
  %2519 = vmatpush.bf16.msra.mxu0 %v1604
  %2520 = vmatpush.bf16.msra.mxu0 %v1602
  %2521 = vmatpush.bf16.msra.mxu0 %v1600
  %2522 = vmatpush.bf16.msra.mxu0 %v1598
  %2523 = vmatpush.bf16.msra.mxu0 %v1596
  %2524 = vmatpush.bf16.msra.mxu0 %v1594
  %2525 = vmatpush.bf16.msra.mxu0 %v1592
  %2526 = vmatpush.bf16.msra.mxu0 %v1590
  %2527 = vmatmul.bf16.gmra.mxu0 %v428
  %v2528 = vpop.f32.mrf.mxu0
  %v2529 = vadd.f32 %v2511, %v2528
  %v2530 = vpop.f32.mrf.mxu0
  %v2531 = vadd.f32 %v2513, %v2530
  %2532 = vmatmul.bf16.gmra.mxu0 %v446
  %v2533 = vpop.f32.mrf.mxu0
  %v2534 = vadd.f32 %v2516, %v2533
  %v2535 = vpop.f32.mrf.mxu0
  %2536 = vdwg.mxu0
  %2537 = vmatpush.bf16.msra.mxu0 %v1620
  %2538 = vmatpush.bf16.msra.mxu0 %v1618
  %2539 = vmatpush.bf16.msra.mxu0 %v1616
  %2540 = vmatpush.bf16.msra.mxu0 %v1614
  %2541 = vmatpush.bf16.msra.mxu0 %v1612
  %2542 = vmatpush.bf16.msra.mxu0 %v1610
  %2543 = vmatpush.bf16.msra.mxu0 %v1608
  %2544 = vmatpush.bf16.msra.mxu0 %v1606
  %2545 = vmatmul.bf16.gmra.mxu0 %v429
  %v2546 = vpop.f32.mrf.mxu0
  %v2547 = vadd.f32 %v2529, %v2546
  %v2548 = vpop.f32.mrf.mxu0
  %v2549 = vadd.f32 %v2531, %v2548
  %2550 = vmatmul.bf16.gmra.mxu0 %v447
  %v2551 = vpop.f32.mrf.mxu0
  %v2552 = vadd.f32 %v2534, %v2551
  %v2553 = vpop.f32.mrf.mxu0
  %2554 = vdwg.mxu0
  %2555 = vmatpush.bf16.msra.mxu0 %v1636
  %2556 = vmatpush.bf16.msra.mxu0 %v1634
  %2557 = vmatpush.bf16.msra.mxu0 %v1632
  %2558 = vmatpush.bf16.msra.mxu0 %v1630
  %2559 = vmatpush.bf16.msra.mxu0 %v1628
  %2560 = vmatpush.bf16.msra.mxu0 %v1626
  %2561 = vmatpush.bf16.msra.mxu0 %v1624
  %2562 = vmatpush.bf16.msra.mxu0 %v1622
  %2563 = vmatmul.bf16.gmra.mxu0 %v430
  %v2564 = vpop.f32.mrf.mxu0
  %v2565 = vadd.f32 %v2547, %v2564
  %v2566 = vpop.f32.mrf.mxu0
  %v2567 = vadd.f32 %v2549, %v2566
  %2568 = vmatmul.bf16.gmra.mxu0 %v448
  %v2569 = vpop.f32.mrf.mxu0
  %v2570 = vadd.f32 %v2552, %v2569
  %v2571 = vpop.f32.mrf.mxu0
  %2572 = vdwg.mxu0
  %v2573 = vld [vmem:[%s2] sm:$0x3]
  %v2575 = vperm.slane %v2573, 0
  %v2576 = vperm.slane %v2573, 1
  %v2579 = vmul.f32 %v2241, %v2575
  %v2580 = vmul.f32 %v2565, %v2576
  %v2581 = vmul.f32 %v2243, %v2575
  %v2582 = vmul.f32 %v2567, %v2576
  %v2583 = vmul.f32 %v2246, %v2575
  %v2584 = vmul.f32 %v2570, %v2576
  %v2585 = vld [vmem:[%s3] sm:$0x3]
  %v2587 = vperm.slane %v2585, 0
  %v2588 = vperm.slane %v2585, 1
  %v2591 = vadd.f32 %v2579, %v2587
  %v2592 = vadd.f32 %v2580, %v2588
  %v2593 = vadd.f32 %v2581, %v2587
  %v2594 = vadd.f32 %v2582, %v2588
  %v2595 = vadd.f32 %v2583, %v2587
  %v2596 = vadd.f32 %v2584, %v2588
  %2597 = vst [vmem:[%s4] sm:$0xff] %v2591
  %2598 = vst [vmem:[%s4 + $0x8] sm:$0xff] %v2592
  %2599 = vst [vmem:[%s4 + $0x10] sm:$0xff] %v2593
  %2600 = vst [vmem:[%s4 + $0x18] sm:$0xff] %v2594
  %2601 = vst [vmem:[%s4 + $0x20] sm:$0xff] %v2595
  %2602 = vst [vmem:[%s4 + $0x28] sm:$0xff] %v2596
  // Predicated region
  $region18: #{capsule_network_forward.8} parent=0 // pred_check
    _
  $region19: #{capsule_network_forward.8} parent=0 // pred_check_branch
    %2604 = sbr.rel (0) target = $region21
  $region20: #{capsule_network_forward.8} parent=0 // pred_region
    _
  $region21: #{capsule_network_forward.8} parent=0 // pred_fallthru
    _
  // Predicated region
  $region22: #{capsule_network_forward.8} parent=0 // pred_check
    _
  $region23: #{capsule_network_forward.8} parent=0 // pred_check_branch
    %2606 = sbr.rel (0) target = $region25
  $region24: #{capsule_network_forward.8} parent=0 // pred_region
    _
  $region25: #{capsule_network_forward.8} parent=0 // pred_fallthru
    _

// kernel: capsule_network_forward.9
$region0: #{capsule_network_forward.9}
  #allocation0 [shape = 'u32[]', space=smem, size = 0x4, offset = 0x4, fixed_abs, tag = 'smem constant byte address 0x4 - core index']
  #allocation1 [shape = 'u32[72,128]{1,0:T(1,128)}', space=vmem, size = 0x9000, scoped, tag = 'internal scratch']
  %s0 = inlined_call_operand.vmem [shape: f32[2,12,144], index: 0, kind: input, shape index: {}]
  %s1 = inlined_call_operand.vmem [shape: f32[12,64,144], index: 1, kind: input, shape index: {}]
  %s2 = inlined_call_operand.vmem [shape: f32[64,4], index: 2, kind: input, shape index: {}]
  %s3 = inlined_call_operand.vmem [shape: f32[4,64], index: 3, kind: input, shape index: {}]
  %s4 = inlined_call_operand.vmem [shape: f32[2,64,1], index: 4, kind: output, shape index: {}]
  %s5 = sld [smem:[#allocation0]]
  $region49: #{capsule_network_forward.9} parent=0
    _
  %s7 = ssub.s32 1, %s5
  %s8 = scalar_select 0, %s7, %s5
  loop: start=0, step=1, limit=4
  $region2: #{capsule_network_forward.9} parent=0 // loop_pre_header
    _
  $region3: #{capsule_network_forward.9} parent=0 // loop_header
    %s10 = sphi 0, %s14
    %p11 = scmp.ge.s32.totalorder %s10, 4
    %s20 = sphi 0, %s22
    %s23 = sphi 0, %s20
    %s24 = sphi 0, %s23
    %s40 = sphi 0, %s24
    %s44 = sphi 0, %s44
    %s46 = sphi 0, %s44
    %s47 = sphi 0, %s46
    %s61 = sphi 0, %s47
    %s65 = sphi 0, %s65
    %s67 = sphi 0, %s65
    %s68 = sphi 0, %s67
    %s82 = sphi 0, %s68
    %s86 = sphi 0, %s86
    %s88 = sphi 0, %s86
    %s89 = sphi 0, %s88
    %s103 = sphi 0, %s89
    %s109 = sphi 0, %s111
    %s112 = sphi 0, %s109
    %s113 = sphi 0, %s112
    %s129 = sphi 0, %s113
  $region4: #{capsule_network_forward.9} parent=0 // loop_header_branch
    %13 = sbr.rel (%p11) target = $region8
  $region5: #{capsule_network_forward.9} parent=0 // loop_body
    %s15 = ssub.s32 %s10, 1
    %s16 = ssub.s32 %s10, 2
    %s17 = sadd.s32 %s10, 1
    %s18 = ssub.s32 %s10, %s17
    %p19 = scmp.eq.s32.totalorder %s18, 0
    %s21 = sadd.s32 %s20, 1
    %s22 = scalar_select %p19, %s20, %s21
    %p25 = pneg %p19
    %p26 = scmp.eq.s32.totalorder %s10, 1
    %p27 = por %p25, %p26
    %p28 = scmp.ne.s32.totalorder %s20, %s23
    %p29 = scmp.eq.s32.totalorder %s10, 0
    %p30 = por %p28, %p29
    %p31 = scmp.ne.s32.totalorder %s20, %s23
    %p32 = scmp.eq.s32.totalorder %s15, 1
    %p33 = por %p31, %p32
    %p34 = scmp.ne.s32.totalorder %s23, %s24
    %p35 = scmp.eq.s32.totalorder %s15, 0
    %p36 = por %p34, %p35
    %p37 = scmp.ne.s32.totalorder %s23, %s24
    %p38 = scmp.eq.s32.totalorder %s16, 1
    %p39 = por %p37, %p38
    %p41 = scmp.ne.s32.totalorder %s24, %s40
    %p42 = scmp.eq.s32.totalorder %s16, 0
    %p43 = por %p41, %p42
    %s45 = sadd.s32 %s44, 1
    %p48 = scmp.eq.s32.totalorder %s10, 1
    %p49 = scmp.ne.s32.totalorder %s44, %s46
    %p50 = scmp.eq.s32.totalorder %s10, 0
    %p51 = por %p49, %p50
    %p52 = scmp.ne.s32.totalorder %s44, %s46
    %p53 = scmp.eq.s32.totalorder %s15, 1
    %p54 = por %p52, %p53
    %p55 = scmp.ne.s32.totalorder %s46, %s47
    %p56 = scmp.eq.s32.totalorder %s15, 0
    %p57 = por %p55, %p56
    %p58 = scmp.ne.s32.totalorder %s46, %s47
    %p59 = scmp.eq.s32.totalorder %s16, 1
    %p60 = por %p58, %p59
    %p62 = scmp.ne.s32.totalorder %s47, %s61
    %p63 = scmp.eq.s32.totalorder %s16, 0
    %p64 = por %p62, %p63
    %s66 = sadd.s32 %s65, 1
    %p69 = scmp.eq.s32.totalorder %s10, 1
    %p70 = scmp.ne.s32.totalorder %s65, %s67
    %p71 = scmp.eq.s32.totalorder %s10, 0
    %p72 = por %p70, %p71
    %p73 = scmp.ne.s32.totalorder %s65, %s67
    %p74 = scmp.eq.s32.totalorder %s15, 1
    %p75 = por %p73, %p74
    %p76 = scmp.ne.s32.totalorder %s67, %s68
    %p77 = scmp.eq.s32.totalorder %s15, 0
    %p78 = por %p76, %p77
    %p79 = scmp.ne.s32.totalorder %s67, %s68
    %p80 = scmp.eq.s32.totalorder %s16, 1
    %p81 = por %p79, %p80
    %p83 = scmp.ne.s32.totalorder %s68, %s82
    %p84 = scmp.eq.s32.totalorder %s16, 0
    %p85 = por %p83, %p84
    %s87 = sadd.s32 %s86, 1
    %p90 = scmp.eq.s32.totalorder %s10, 1
    %p91 = scmp.ne.s32.totalorder %s86, %s88
    %p92 = scmp.eq.s32.totalorder %s10, 0
    %p93 = por %p91, %p92
    %p94 = scmp.ne.s32.totalorder %s86, %s88
    %p95 = scmp.eq.s32.totalorder %s15, 1
    %p96 = por %p94, %p95
    %p97 = scmp.ne.s32.totalorder %s88, %s89
    %p98 = scmp.eq.s32.totalorder %s15, 0
    %p99 = por %p97, %p98
    %p100 = scmp.ne.s32.totalorder %s88, %s89
    %p101 = scmp.eq.s32.totalorder %s16, 1
    %p102 = por %p100, %p101
    %p104 = scmp.ne.s32.totalorder %s89, %s103
    %p105 = scmp.eq.s32.totalorder %s16, 0
    %p106 = por %p104, %p105
    %s107 = ssub.s32 %s10, %s17
    %p108 = scmp.eq.s32.totalorder %s107, 0
    %s110 = sadd.s32 %s109, 1
    %s111 = scalar_select %p108, %s109, %s110
    %p114 = pneg %p108
    %p115 = scmp.eq.s32.totalorder %s10, 1
    %p116 = por %p114, %p115
    %p117 = scmp.ne.s32.totalorder %s109, %s112
    %p118 = scmp.eq.s32.totalorder %s10, 0
    %p119 = por %p117, %p118
    %p120 = scmp.ne.s32.totalorder %s109, %s112
    %p121 = scmp.eq.s32.totalorder %s15, 1
    %p122 = por %p120, %p121
    %p123 = scmp.ne.s32.totalorder %s112, %s113
    %p124 = scmp.eq.s32.totalorder %s15, 0
    %p125 = por %p123, %p124
    %p126 = scmp.ne.s32.totalorder %s112, %s113
    %p127 = scmp.eq.s32.totalorder %s16, 1
    %p128 = por %p126, %p127
    %p130 = scmp.ne.s32.totalorder %s113, %s129
    %p131 = scmp.eq.s32.totalorder %s16, 0
    %p132 = por %p130, %p131
    %p133 = scmp.le.s32.totalorder 1, %s10
    %p134 = scmp.lt.s32.totalorder %s10, 3
    %p135 = pnand %p133, %p134
    %p136 = pneg %p135
    // Predicated region
    $region9: #{capsule_network_forward.9} parent=5 // pred_check
      _
    $region10: #{capsule_network_forward.9} parent=5 // pred_check_branch
      %138 = sbr.rel (%p135) target = $region12
    $region11: #{capsule_network_forward.9} parent=5 // pred_region
      %s139 = ssub.s32 %s10, 1
      // Predicated region
      $region13: #{capsule_network_forward.9} parent=11 // pred_check
        %p140 = pneg %p57
      $region14: #{capsule_network_forward.9} parent=11 // pred_check_branch
        %142 = sbr.rel (%p140) target = $region16
      $region15: #{capsule_network_forward.9} parent=11 // pred_region
        _
      $region16: #{capsule_network_forward.9} parent=11 // pred_fallthru
        _
      // Predicated region
      $region17: #{capsule_network_forward.9} parent=11 // pred_check
        %p143 = pneg %p78
      $region18: #{capsule_network_forward.9} parent=11 // pred_check_branch
        %145 = sbr.rel (%p143) target = $region20
      $region19: #{capsule_network_forward.9} parent=11 // pred_region
        _
      $region20: #{capsule_network_forward.9} parent=11 // pred_fallthru
        _
      // Predicated region
      $region21: #{capsule_network_forward.9} parent=11 // pred_check
        %p146 = pneg %p99
      $region22: #{capsule_network_forward.9} parent=11 // pred_check_branch
        %148 = sbr.rel (%p146) target = $region24
      $region23: #{capsule_network_forward.9} parent=11 // pred_region
        _
      $region24: #{capsule_network_forward.9} parent=11 // pred_fallthru
        _
    $region12: #{capsule_network_forward.9} parent=5 // pred_fallthru
      _
    %p149 = scmp.lt.s32.totalorder %s10, 2
    // Predicated region
    $region25: #{capsule_network_forward.9} parent=5 // pred_check
      %p150 = pneg %p149
    $region26: #{capsule_network_forward.9} parent=5 // pred_check_branch
      %152 = sbr.rel (%p150) target = $region28
    $region27: #{capsule_network_forward.9} parent=5 // pred_region
      // Predicated region
      $region29: #{capsule_network_forward.9} parent=27 // pred_check
        %p153 = pneg %p30
      $region30: #{capsule_network_forward.9} parent=27 // pred_check_branch
        %155 = sbr.rel (%p153) target = $region32
      $region31: #{capsule_network_forward.9} parent=27 // pred_region
        %p156 = scmp.lt.s32.totalorder %s10, 1
        %s157 = scalar_select %p156, %s10, 1
        %s158 = smul.addr %s157, 4
        %s159 = smul.addr %s158, 8
        %s160 = scalar_lea.vmem %s0, %s159
      $region32: #{capsule_network_forward.9} parent=27 // pred_fallthru
        _
    $region28: #{capsule_network_forward.9} parent=5 // pred_fallthru
      _
    %p161 = scmp.le.s32.totalorder 1, %s10
    %p162 = scmp.lt.s32.totalorder %s10, 3
    %p163 = pnand %p161, %p162
    %p164 = pneg %p163
    // Predicated region
    $region33: #{capsule_network_forward.9} parent=5 // pred_check
      _
    $region34: #{capsule_network_forward.9} parent=5 // pred_check_branch
      %166 = sbr.rel (%p163) target = $region36
    $region35: #{capsule_network_forward.9} parent=5 // pred_region
      %s167 = ssub.s32 %s10, 1
      %p168 = scmp.lt.s32.totalorder %s15, 1
      %s169 = scalar_select %p168, %s15, 1
      %s170 = smul.addr %s169, 4
      %s171 = smul.addr %s170, 8
      %s172 = scalar_lea.vmem %s0, %s171
      %p173 = pneg %p36
      %p174 = pneg %p33
      %p175 = pneg %p57
      %p176 = pneg %p54
      %p177 = pneg %p78
      %p178 = pneg %p75
      %p179 = pneg %p99
      %p180 = pneg %p96
      %p181 = pneg %p125
      %p182 = pneg %p122
      %p183 = scmp.lt.s32.totalorder %s15, 1
      %s184 = scalar_select %p183, %s15, 1
      %s185 = smul.addr %s184, 8
      %s186 = smul.addr %s185, 8
      %s187 = scalar_lea.vmem %s4, %s186
      %p188 = scmp.lt.s32.totalorder %s15, 1
      %s189 = scalar_select %p188, %s15, 1
      %s190 = smul.addr %s189, 4
      %s191 = smul.addr %s190, 8
      %s192 = scalar_lea.vmem %s0, %s191
      %p193 = scmp.lt.s32.totalorder %s15, 1
      %s194 = scalar_select %p193, %s15, 1
      %s195 = smul.addr %s194, 8
      %s196 = smul.addr %s195, 8
      %s197 = scalar_lea.vmem %s4, %s196
      %v198 = vld [vmem:[%s192] sm:$0xff]
      %v199 = vld [vmem:[%s192 + $0x8] sm:$0xff]
      %v200 = vld [vmem:[%s192 + $0x10] sm:$0xf]
      %v201 = vld [vmem:[%s192 + $0x18] sm:$0xf]
      %v202 = vmul.f32 %v198, %v198
      %v203 = vmul.f32 %v199, %v199
      %v204 = vmul.f32 %v200, %v200
      %v205 = vmul.f32 %v201, %v201
      %vm206 = vcmask 1043456
      %v207 = vsel %vm206, %v204, 0.0
      %v208 = vadd.f32 %v202, %v207
      %v209 = vrot.slane %v208, 4
      %v210 = vadd.f32 %v208, %v209
      %v211 = vrot.slane %v210, 2
      %v212 = vadd.f32 %v210, %v211
      %v213 = vrot.slane %v212, 1
      %v214 = vadd.f32 %v212, %v213
      %vm215 = vcmask 130048
      %v216 = vsel %vm215, %v203, 0.0
      %vm217 = vcmask 125952
      %v218 = vsel %vm217, %v205, 0.0
      %v219 = vadd.f32 %v216, %v218
      %v220 = vrot.slane %v219, 4
      %v221 = vadd.f32 %v219, %v220
      %v222 = vrot.slane %v221, 2
      %v223 = vadd.f32 %v221, %v222
      %v224 = vrot.slane %v223, 1
      %v225 = vadd.f32 %v223, %v224
      %v226 = vadd.f32 %v214, 1e-06
      %v227 = vadd.f32 %v225, 1e-06
      %v228 = vrsqrt.pop %v226
      %v229 = vmul.f32 %v228, %v226
      %v230 = vmul.f32 %v229, %v228
      %v231 = vmul.f32 0.5, %v230
      %v232 = vsub.f32 1.5, %v231
      %v233 = vmul.f32 %v228, %v232
      %vm234 = vweird.f32 %v226
      %vm235 = vweird.f32 %v228
      %vm236 = vmor %vm234, %vm235
      %v237 = vsel %vm236, %v228, %v233
      %v238 = vrsqrt.pop %v227
      %v239 = vmul.f32 %v238, %v227
      %v240 = vmul.f32 %v239, %v238
      %v241 = vmul.f32 0.5, %v240
      %v242 = vsub.f32 1.5, %v241
      %v243 = vmul.f32 %v238, %v242
      %vm244 = vweird.f32 %v227
      %vm245 = vweird.f32 %v238
      %vm246 = vmor %vm244, %vm245
      %v247 = vsel %vm246, %v238, %v243
      %v248 = vmul.f32 %v214, %v237
      %v249 = vmul.f32 %v225, %v247
      %v250 = vadd.f32 %v214, 1.0
      %v251 = vadd.f32 %v225, 1.0
      %v252 = vrcp.pop %v250
      %v253 = vmul.f32 %v250, %v252
      %v254 = vsub.f32 1.0, %v253
      %v255 = vmul.f32 %v252, %v254
      %v256 = vadd.f32 %v252, %v255
      %vm257 = vweird.f32 %v250
      %vm258 = vweird.f32 %v252
      %vm259 = vmor %vm257, %vm258
      %v260 = vsel %vm259, %v252, %v256
      %v261 = vand.u32 2147483647, %v250
      %vm262 = vcmp.eq.f32.partialorder %v261, 8.507059e+37
      %v263 = vand.u32 %v250, 2147483648
      %v264 = vor.u32 1.1754944e-38, %v263
      %v265 = vsel %vm262, %v264, %v260
      %v266 = vmul.f32 %v248, %v265
      %v267 = vrcp.pop %v251
      %v268 = vmul.f32 %v251, %v267
      %v269 = vsub.f32 1.0, %v268
      %v270 = vmul.f32 %v267, %v269
      %v271 = vadd.f32 %v267, %v270
      %vm272 = vweird.f32 %v251
      %vm273 = vweird.f32 %v267
      %vm274 = vmor %vm272, %vm273
      %v275 = vsel %vm274, %v267, %v271
      %v276 = vand.u32 2147483647, %v251
      %vm277 = vcmp.eq.f32.partialorder %v276, 8.507059e+37
      %v278 = vand.u32 %v251, 2147483648
      %v279 = vor.u32 1.1754944e-38, %v278
      %v280 = vsel %vm277, %v279, %v275
      %v281 = vmul.f32 %v249, %v280
      %v282 = vmul.f32 %v198, %v266
      %v283 = vmul.f32 %v199, %v281
      %v284 = vmul.f32 %v200, %v266
      %v285 = vmul.f32 %v201, %v281
      %v286 = vld [vmem:[%s1] sm:$0xff]
      %v287 = vld [vmem:[%s1 + $0x8] sm:$0xff]
      %v288 = vld [vmem:[%s1 + $0x10] sm:$0xff]
      %v289 = vld [vmem:[%s1 + $0x18] sm:$0xff]
      %v290 = vld [vmem:[%s1 + $0x20] sm:$0xff]
      %v291 = vld [vmem:[%s1 + $0x28] sm:$0xff]
      %v292 = vld [vmem:[%s1 + $0x30] sm:$0xff]
      %v293 = vld [vmem:[%s1 + $0x38] sm:$0xff]
      %v294 = vld [vmem:[%s1 + $0x40] sm:$0xff]
      %v295 = vld [vmem:[%s1 + $0x48] sm:$0xff]
      %v296 = vld [vmem:[%s1 + $0x50] sm:$0xff]
      %v297 = vld [vmem:[%s1 + $0x58] sm:$0xff]
      %v298 = vld [vmem:[%s1 + $0x60] sm:$0xff]
      %v299 = vld [vmem:[%s1 + $0x68] sm:$0xff]
      %v300 = vld [vmem:[%s1 + $0x70] sm:$0xff]
      %v301 = vld [vmem:[%s1 + $0x78] sm:$0xff]
      %v302 = vperm.slane %v282, 0
      %v303 = vperm.slane %v283, 0
      %v304 = vmul.f32 %v286, %v302
      %v305 = vmul.f32 %v287, %v303
      %v306 = vmul.f32 %v288, %v302
      %v307 = vmul.f32 %v289, %v303
      %v308 = vmul.f32 %v290, %v302
      %v309 = vmul.f32 %v291, %v303
      %v310 = vmul.f32 %v292, %v302
      %v311 = vmul.f32 %v293, %v303
      %v312 = vmul.f32 %v294, %v302
      %v313 = vmul.f32 %v295, %v303
      %v314 = vmul.f32 %v296, %v302
      %v315 = vmul.f32 %v297, %v303
      %v316 = vmul.f32 %v298, %v302
      %v317 = vmul.f32 %v299, %v303
      %v318 = vmul.f32 %v300, %v302
      %v319 = vmul.f32 %v301, %v303
      %s320 = scalar_lea.vmem %s1, 128
      %v321 = vld [vmem:[%s320] sm:$0xff]
      %v322 = vld [vmem:[%s320 + $0x8] sm:$0xff]
      %v323 = vld [vmem:[%s320 + $0x10] sm:$0xff]
      %v324 = vld [vmem:[%s320 + $0x18] sm:$0xff]
      %v325 = vld [vmem:[%s320 + $0x20] sm:$0xff]
      %v326 = vld [vmem:[%s320 + $0x28] sm:$0xff]
      %v327 = vld [vmem:[%s320 + $0x30] sm:$0xff]
      %v328 = vld [vmem:[%s320 + $0x38] sm:$0xff]
      %v329 = vld [vmem:[%s320 + $0x40] sm:$0xff]
      %v330 = vld [vmem:[%s320 + $0x48] sm:$0xff]
      %v331 = vld [vmem:[%s320 + $0x50] sm:$0xff]
      %v332 = vld [vmem:[%s320 + $0x58] sm:$0xff]
      %v333 = vld [vmem:[%s320 + $0x60] sm:$0xff]
      %v334 = vld [vmem:[%s320 + $0x68] sm:$0xff]
      %v335 = vld [vmem:[%s320 + $0x70] sm:$0xff]
      %v336 = vld [vmem:[%s320 + $0x78] sm:$0xff]
      %v337 = vperm.slane %v282, 1
      %v338 = vperm.slane %v283, 1
      %v339 = vmul.f32 %v321, %v337
      %v340 = vmul.f32 %v322, %v338
      %v341 = vmul.f32 %v323, %v337
      %v342 = vmul.f32 %v324, %v338
      %v343 = vmul.f32 %v325, %v337
      %v344 = vmul.f32 %v326, %v338
      %v345 = vmul.f32 %v327, %v337
      %v346 = vmul.f32 %v328, %v338
      %v347 = vmul.f32 %v329, %v337
      %v348 = vmul.f32 %v330, %v338
      %v349 = vmul.f32 %v331, %v337
      %v350 = vmul.f32 %v332, %v338
      %v351 = vmul.f32 %v333, %v337
      %v352 = vmul.f32 %v334, %v338
      %v353 = vmul.f32 %v335, %v337
      %v354 = vmul.f32 %v336, %v338
      %v355 = vadd.f32 %v304, %v339
      %v356 = vadd.f32 %v305, %v340
      %v357 = vadd.f32 %v306, %v341
      %v358 = vadd.f32 %v307, %v342
      %v359 = vadd.f32 %v308, %v343
      %v360 = vadd.f32 %v309, %v344
      %v361 = vadd.f32 %v310, %v345
      %v362 = vadd.f32 %v311, %v346
      %v363 = vadd.f32 %v312, %v347
      %v364 = vadd.f32 %v313, %v348
      %v365 = vadd.f32 %v314, %v349
      %v366 = vadd.f32 %v315, %v350
      %v367 = vadd.f32 %v316, %v351
      %v368 = vadd.f32 %v317, %v352
      %v369 = vadd.f32 %v318, %v353
      %v370 = vadd.f32 %v319, %v354
      %s371 = scalar_lea.vmem %s1, 256
      %v372 = vld [vmem:[%s371] sm:$0xff]
      %v373 = vld [vmem:[%s371 + $0x8] sm:$0xff]
      %v374 = vld [vmem:[%s371 + $0x10] sm:$0xff]
      %v375 = vld [vmem:[%s371 + $0x18] sm:$0xff]
      %v376 = vld [vmem:[%s371 + $0x20] sm:$0xff]
      %v377 = vld [vmem:[%s371 + $0x28] sm:$0xff]
      %v378 = vld [vmem:[%s371 + $0x30] sm:$0xff]
      %v379 = vld [vmem:[%s371 + $0x38] sm:$0xff]
      %v380 = vld [vmem:[%s371 + $0x40] sm:$0xff]
      %v381 = vld [vmem:[%s371 + $0x48] sm:$0xff]
      %v382 = vld [vmem:[%s371 + $0x50] sm:$0xff]
      %v383 = vld [vmem:[%s371 + $0x58] sm:$0xff]
      %v384 = vld [vmem:[%s371 + $0x60] sm:$0xff]
      %v385 = vld [vmem:[%s371 + $0x68] sm:$0xff]
      %v386 = vld [vmem:[%s371 + $0x70] sm:$0xff]
      %v387 = vld [vmem:[%s371 + $0x78] sm:$0xff]
      %v388 = vperm.slane %v282, 2
      %v389 = vperm.slane %v283, 2
      %v390 = vmul.f32 %v372, %v388
      %v391 = vmul.f32 %v373, %v389
      %v392 = vmul.f32 %v374, %v388
      %v393 = vmul.f32 %v375, %v389
      %v394 = vmul.f32 %v376, %v388
      %v395 = vmul.f32 %v377, %v389
      %v396 = vmul.f32 %v378, %v388
      %v397 = vmul.f32 %v379, %v389
      %v398 = vmul.f32 %v380, %v388
      %v399 = vmul.f32 %v381, %v389
      %v400 = vmul.f32 %v382, %v388
      %v401 = vmul.f32 %v383, %v389
      %v402 = vmul.f32 %v384, %v388
      %v403 = vmul.f32 %v385, %v389
      %v404 = vmul.f32 %v386, %v388
      %v405 = vmul.f32 %v387, %v389
      %v406 = vadd.f32 %v355, %v390
      %v407 = vadd.f32 %v356, %v391
      %v408 = vadd.f32 %v357, %v392
      %v409 = vadd.f32 %v358, %v393
      %v410 = vadd.f32 %v359, %v394
      %v411 = vadd.f32 %v360, %v395
      %v412 = vadd.f32 %v361, %v396
      %v413 = vadd.f32 %v362, %v397
      %v414 = vadd.f32 %v363, %v398
      %v415 = vadd.f32 %v364, %v399
      %v416 = vadd.f32 %v365, %v400
      %v417 = vadd.f32 %v366, %v401
      %v418 = vadd.f32 %v367, %v402
      %v419 = vadd.f32 %v368, %v403
      %v420 = vadd.f32 %v369, %v404
      %v421 = vadd.f32 %v370, %v405
      %s422 = scalar_lea.vmem %s1, 384
      %v423 = vld [vmem:[%s422] sm:$0xff]
      %v424 = vld [vmem:[%s422 + $0x8] sm:$0xff]
      %v425 = vld [vmem:[%s422 + $0x10] sm:$0xff]
      %v426 = vld [vmem:[%s422 + $0x18] sm:$0xff]
      %v427 = vld [vmem:[%s422 + $0x20] sm:$0xff]
      %v428 = vld [vmem:[%s422 + $0x28] sm:$0xff]
      %v429 = vld [vmem:[%s422 + $0x30] sm:$0xff]
      %v430 = vld [vmem:[%s422 + $0x38] sm:$0xff]
      %v431 = vld [vmem:[%s422 + $0x40] sm:$0xff]
      %v432 = vld [vmem:[%s422 + $0x48] sm:$0xff]
      %v433 = vld [vmem:[%s422 + $0x50] sm:$0xff]
      %v434 = vld [vmem:[%s422 + $0x58] sm:$0xff]
      %v435 = vld [vmem:[%s422 + $0x60] sm:$0xff]
      %v436 = vld [vmem:[%s422 + $0x68] sm:$0xff]
      %v437 = vld [vmem:[%s422 + $0x70] sm:$0xff]
      %v438 = vld [vmem:[%s422 + $0x78] sm:$0xff]
      %v439 = vperm.slane %v282, 3
      %v440 = vperm.slane %v283, 3
      %v441 = vmul.f32 %v423, %v439
      %v442 = vmul.f32 %v424, %v440
      %v443 = vmul.f32 %v425, %v439
      %v444 = vmul.f32 %v426, %v440
      %v445 = vmul.f32 %v427, %v439
      %v446 = vmul.f32 %v428, %v440
      %v447 = vmul.f32 %v429, %v439
      %v448 = vmul.f32 %v430, %v440
      %v449 = vmul.f32 %v431, %v439
      %v450 = vmul.f32 %v432, %v440
      %v451 = vmul.f32 %v433, %v439
      %v452 = vmul.f32 %v434, %v440
      %v453 = vmul.f32 %v435, %v439
      %v454 = vmul.f32 %v436, %v440
      %v455 = vmul.f32 %v437, %v439
      %v456 = vmul.f32 %v438, %v440
      %v457 = vadd.f32 %v406, %v441
      %v458 = vadd.f32 %v407, %v442
      %v459 = vadd.f32 %v408, %v443
      %v460 = vadd.f32 %v409, %v444
      %v461 = vadd.f32 %v410, %v445
      %v462 = vadd.f32 %v411, %v446
      %v463 = vadd.f32 %v412, %v447
      %v464 = vadd.f32 %v413, %v448
      %v465 = vadd.f32 %v414, %v449
      %v466 = vadd.f32 %v415, %v450
      %v467 = vadd.f32 %v416, %v451
      %v468 = vadd.f32 %v417, %v452
      %v469 = vadd.f32 %v418, %v453
      %v470 = vadd.f32 %v419, %v454
      %v471 = vadd.f32 %v420, %v455
      %v472 = vadd.f32 %v421, %v456
      %s473 = scalar_lea.vmem %s1, 512
      %v474 = vld [vmem:[%s473] sm:$0xff]
      %v475 = vld [vmem:[%s473 + $0x8] sm:$0xff]
      %v476 = vld [vmem:[%s473 + $0x10] sm:$0xff]
      %v477 = vld [vmem:[%s473 + $0x18] sm:$0xff]
      %v478 = vld [vmem:[%s473 + $0x20] sm:$0xff]
      %v479 = vld [vmem:[%s473 + $0x28] sm:$0xff]
      %v480 = vld [vmem:[%s473 + $0x30] sm:$0xff]
      %v481 = vld [vmem:[%s473 + $0x38] sm:$0xff]
      %v482 = vld [vmem:[%s473 + $0x40] sm:$0xff]
      %v483 = vld [vmem:[%s473 + $0x48] sm:$0xff]
      %v484 = vld [vmem:[%s473 + $0x50] sm:$0xff]
      %v485 = vld [vmem:[%s473 + $0x58] sm:$0xff]
      %v486 = vld [vmem:[%s473 + $0x60] sm:$0xff]
      %v487 = vld [vmem:[%s473 + $0x68] sm:$0xff]
      %v488 = vld [vmem:[%s473 + $0x70] sm:$0xff]
      %v489 = vld [vmem:[%s473 + $0x78] sm:$0xff]
      %v490 = vperm.slane %v282, 4
      %v491 = vperm.slane %v283, 4
      %v492 = vmul.f32 %v474, %v490
      %v493 = vmul.f32 %v475, %v491
      %v494 = vmul.f32 %v476, %v490
      %v495 = vmul.f32 %v477, %v491
      %v496 = vmul.f32 %v478, %v490
      %v497 = vmul.f32 %v479, %v491
      %v498 = vmul.f32 %v480, %v490
      %v499 = vmul.f32 %v481, %v491
      %v500 = vmul.f32 %v482, %v490
      %v501 = vmul.f32 %v483, %v491
      %v502 = vmul.f32 %v484, %v490
      %v503 = vmul.f32 %v485, %v491
      %v504 = vmul.f32 %v486, %v490
      %v505 = vmul.f32 %v487, %v491
      %v506 = vmul.f32 %v488, %v490
      %v507 = vmul.f32 %v489, %v491
      %v508 = vadd.f32 %v457, %v492
      %v509 = vadd.f32 %v458, %v493
      %v510 = vadd.f32 %v459, %v494
      %v511 = vadd.f32 %v460, %v495
      %v512 = vadd.f32 %v461, %v496
      %v513 = vadd.f32 %v462, %v497
      %v514 = vadd.f32 %v463, %v498
      %v515 = vadd.f32 %v464, %v499
      %v516 = vadd.f32 %v465, %v500
      %v517 = vadd.f32 %v466, %v501
      %v518 = vadd.f32 %v467, %v502
      %v519 = vadd.f32 %v468, %v503
      %v520 = vadd.f32 %v469, %v504
      %v521 = vadd.f32 %v470, %v505
      %v522 = vadd.f32 %v471, %v506
      %v523 = vadd.f32 %v472, %v507
      %s524 = scalar_lea.vmem %s1, 640
      %v525 = vld [vmem:[%s524] sm:$0xff]
      %v526 = vld [vmem:[%s524 + $0x8] sm:$0xff]
      %v527 = vld [vmem:[%s524 + $0x10] sm:$0xff]
      %v528 = vld [vmem:[%s524 + $0x18] sm:$0xff]
      %v529 = vld [vmem:[%s524 + $0x20] sm:$0xff]
      %v530 = vld [vmem:[%s524 + $0x28] sm:$0xff]
      %v531 = vld [vmem:[%s524 + $0x30] sm:$0xff]
      %v532 = vld [vmem:[%s524 + $0x38] sm:$0xff]
      %v533 = vld [vmem:[%s524 + $0x40] sm:$0xff]
      %v534 = vld [vmem:[%s524 + $0x48] sm:$0xff]
      %v535 = vld [vmem:[%s524 + $0x50] sm:$0xff]
      %v536 = vld [vmem:[%s524 + $0x58] sm:$0xff]
      %v537 = vld [vmem:[%s524 + $0x60] sm:$0xff]
      %v538 = vld [vmem:[%s524 + $0x68] sm:$0xff]
      %v539 = vld [vmem:[%s524 + $0x70] sm:$0xff]
      %v540 = vld [vmem:[%s524 + $0x78] sm:$0xff]
      %v541 = vperm.slane %v282, 5
      %v542 = vperm.slane %v283, 5
      %v543 = vmul.f32 %v525, %v541
      %v544 = vmul.f32 %v526, %v542
      %v545 = vmul.f32 %v527, %v541
      %v546 = vmul.f32 %v528, %v542
      %v547 = vmul.f32 %v529, %v541
      %v548 = vmul.f32 %v530, %v542
      %v549 = vmul.f32 %v531, %v541
      %v550 = vmul.f32 %v532, %v542
      %v551 = vmul.f32 %v533, %v541
      %v552 = vmul.f32 %v534, %v542
      %v553 = vmul.f32 %v535, %v541
      %v554 = vmul.f32 %v536, %v542
      %v555 = vmul.f32 %v537, %v541
      %v556 = vmul.f32 %v538, %v542
      %v557 = vmul.f32 %v539, %v541
      %v558 = vmul.f32 %v540, %v542
      %v559 = vadd.f32 %v508, %v543
      %v560 = vadd.f32 %v509, %v544
      %v561 = vadd.f32 %v510, %v545
      %v562 = vadd.f32 %v511, %v546
      %v563 = vadd.f32 %v512, %v547
      %v564 = vadd.f32 %v513, %v548
      %v565 = vadd.f32 %v514, %v549
      %v566 = vadd.f32 %v515, %v550
      %v567 = vadd.f32 %v516, %v551
      %v568 = vadd.f32 %v517, %v552
      %v569 = vadd.f32 %v518, %v553
      %v570 = vadd.f32 %v519, %v554
      %v571 = vadd.f32 %v520, %v555
      %v572 = vadd.f32 %v521, %v556
      %v573 = vadd.f32 %v522, %v557
      %v574 = vadd.f32 %v523, %v558
      %s575 = scalar_lea.vmem %s1, 768
      %v576 = vld [vmem:[%s575] sm:$0xff]
      %v577 = vld [vmem:[%s575 + $0x8] sm:$0xff]
      %v578 = vld [vmem:[%s575 + $0x10] sm:$0xff]
      %v579 = vld [vmem:[%s575 + $0x18] sm:$0xff]
      %v580 = vld [vmem:[%s575 + $0x20] sm:$0xff]
      %v581 = vld [vmem:[%s575 + $0x28] sm:$0xff]
      %v582 = vld [vmem:[%s575 + $0x30] sm:$0xff]
      %v583 = vld [vmem:[%s575 + $0x38] sm:$0xff]
      %v584 = vld [vmem:[%s575 + $0x40] sm:$0xff]
      %v585 = vld [vmem:[%s575 + $0x48] sm:$0xff]
      %v586 = vld [vmem:[%s575 + $0x50] sm:$0xff]
      %v587 = vld [vmem:[%s575 + $0x58] sm:$0xff]
      %v588 = vld [vmem:[%s575 + $0x60] sm:$0xff]
      %v589 = vld [vmem:[%s575 + $0x68] sm:$0xff]
      %v590 = vld [vmem:[%s575 + $0x70] sm:$0xff]
      %v591 = vld [vmem:[%s575 + $0x78] sm:$0xff]
      %v592 = vperm.slane %v282, 6
      %v593 = vperm.slane %v283, 6
      %v594 = vmul.f32 %v576, %v592
      %v595 = vmul.f32 %v577, %v593
      %v596 = vmul.f32 %v578, %v592
      %v597 = vmul.f32 %v579, %v593
      %v598 = vmul.f32 %v580, %v592
      %v599 = vmul.f32 %v581, %v593
      %v600 = vmul.f32 %v582, %v592
      %v601 = vmul.f32 %v583, %v593
      %v602 = vmul.f32 %v584, %v592
      %v603 = vmul.f32 %v585, %v593
      %v604 = vmul.f32 %v586, %v592
      %v605 = vmul.f32 %v587, %v593
      %v606 = vmul.f32 %v588, %v592
      %v607 = vmul.f32 %v589, %v593
      %v608 = vmul.f32 %v590, %v592
      %v609 = vmul.f32 %v591, %v593
      %v610 = vadd.f32 %v559, %v594
      %v611 = vadd.f32 %v560, %v595
      %v612 = vadd.f32 %v561, %v596
      %v613 = vadd.f32 %v562, %v597
      %v614 = vadd.f32 %v563, %v598
      %v615 = vadd.f32 %v564, %v599
      %v616 = vadd.f32 %v565, %v600
      %v617 = vadd.f32 %v566, %v601
      %v618 = vadd.f32 %v567, %v602
      %v619 = vadd.f32 %v568, %v603
      %v620 = vadd.f32 %v569, %v604
      %v621 = vadd.f32 %v570, %v605
      %v622 = vadd.f32 %v571, %v606
      %v623 = vadd.f32 %v572, %v607
      %v624 = vadd.f32 %v573, %v608
      %v625 = vadd.f32 %v574, %v609
      %s626 = scalar_lea.vmem %s1, 896
      %v627 = vld [vmem:[%s626] sm:$0xff]
      %v628 = vld [vmem:[%s626 + $0x8] sm:$0xff]
      %v629 = vld [vmem:[%s626 + $0x10] sm:$0xff]
      %v630 = vld [vmem:[%s626 + $0x18] sm:$0xff]
      %v631 = vld [vmem:[%s626 + $0x20] sm:$0xff]
      %v632 = vld [vmem:[%s626 + $0x28] sm:$0xff]
      %v633 = vld [vmem:[%s626 + $0x30] sm:$0xff]
      %v634 = vld [vmem:[%s626 + $0x38] sm:$0xff]
      %v635 = vld [vmem:[%s626 + $0x40] sm:$0xff]
      %v636 = vld [vmem:[%s626 + $0x48] sm:$0xff]
      %v637 = vld [vmem:[%s626 + $0x50] sm:$0xff]
      %v638 = vld [vmem:[%s626 + $0x58] sm:$0xff]
      %v639 = vld [vmem:[%s626 + $0x60] sm:$0xff]
      %v640 = vld [vmem:[%s626 + $0x68] sm:$0xff]
      %v641 = vld [vmem:[%s626 + $0x70] sm:$0xff]
      %v642 = vld [vmem:[%s626 + $0x78] sm:$0xff]
      %v643 = vperm.slane %v282, 7
      %v644 = vperm.slane %v283, 7
      %v645 = vmul.f32 %v627, %v643
      %v646 = vmul.f32 %v628, %v644
      %v647 = vmul.f32 %v629, %v643
      %v648 = vmul.f32 %v630, %v644
      %v649 = vmul.f32 %v631, %v643
      %v650 = vmul.f32 %v632, %v644
      %v651 = vmul.f32 %v633, %v643
      %v652 = vmul.f32 %v634, %v644
      %v653 = vmul.f32 %v635, %v643
      %v654 = vmul.f32 %v636, %v644
      %v655 = vmul.f32 %v637, %v643
      %v656 = vmul.f32 %v638, %v644
      %v657 = vmul.f32 %v639, %v643
      %v658 = vmul.f32 %v640, %v644
      %v659 = vmul.f32 %v641, %v643
      %v660 = vmul.f32 %v642, %v644
      %v661 = vadd.f32 %v610, %v645
      %v662 = vadd.f32 %v611, %v646
      %v663 = vadd.f32 %v612, %v647
      %v664 = vadd.f32 %v613, %v648
      %v665 = vadd.f32 %v614, %v649
      %v666 = vadd.f32 %v615, %v650
      %v667 = vadd.f32 %v616, %v651
      %v668 = vadd.f32 %v617, %v652
      %v669 = vadd.f32 %v618, %v653
      %v670 = vadd.f32 %v619, %v654
      %v671 = vadd.f32 %v620, %v655
      %v672 = vadd.f32 %v621, %v656
      %v673 = vadd.f32 %v622, %v657
      %v674 = vadd.f32 %v623, %v658
      %v675 = vadd.f32 %v624, %v659
      %v676 = vadd.f32 %v625, %v660
      %s677 = scalar_lea.vmem %s1, 1024
      %v678 = vld [vmem:[%s677] sm:$0xff]
      %v679 = vld [vmem:[%s677 + $0x8] sm:$0xff]
      %v680 = vld [vmem:[%s677 + $0x10] sm:$0xff]
      %v681 = vld [vmem:[%s677 + $0x18] sm:$0xff]
      %v682 = vld [vmem:[%s677 + $0x20] sm:$0xff]
      %v683 = vld [vmem:[%s677 + $0x28] sm:$0xff]
      %v684 = vld [vmem:[%s677 + $0x30] sm:$0xff]
      %v685 = vld [vmem:[%s677 + $0x38] sm:$0xff]
      %v686 = vld [vmem:[%s677 + $0x40] sm:$0xff]
      %v687 = vld [vmem:[%s677 + $0x48] sm:$0xff]
      %v688 = vld [vmem:[%s677 + $0x50] sm:$0xff]
      %v689 = vld [vmem:[%s677 + $0x58] sm:$0xff]
      %v690 = vld [vmem:[%s677 + $0x60] sm:$0xff]
      %v691 = vld [vmem:[%s677 + $0x68] sm:$0xff]
      %v692 = vld [vmem:[%s677 + $0x70] sm:$0xff]
      %v693 = vld [vmem:[%s677 + $0x78] sm:$0xff]
      %v694 = vperm.slane %v284, 0
      %v695 = vperm.slane %v285, 0
      %v696 = vmul.f32 %v678, %v694
      %v697 = vmul.f32 %v679, %v695
      %v698 = vmul.f32 %v680, %v694
      %v699 = vmul.f32 %v681, %v695
      %v700 = vmul.f32 %v682, %v694
      %v701 = vmul.f32 %v683, %v695
      %v702 = vmul.f32 %v684, %v694
      %v703 = vmul.f32 %v685, %v695
      %v704 = vmul.f32 %v686, %v694
      %v705 = vmul.f32 %v687, %v695
      %v706 = vmul.f32 %v688, %v694
      %v707 = vmul.f32 %v689, %v695
      %v708 = vmul.f32 %v690, %v694
      %v709 = vmul.f32 %v691, %v695
      %v710 = vmul.f32 %v692, %v694
      %v711 = vmul.f32 %v693, %v695
      %v712 = vadd.f32 %v661, %v696
      %v713 = vadd.f32 %v662, %v697
      %v714 = vadd.f32 %v663, %v698
      %v715 = vadd.f32 %v664, %v699
      %v716 = vadd.f32 %v665, %v700
      %v717 = vadd.f32 %v666, %v701
      %v718 = vadd.f32 %v667, %v702
      %v719 = vadd.f32 %v668, %v703
      %v720 = vadd.f32 %v669, %v704
      %v721 = vadd.f32 %v670, %v705
      %v722 = vadd.f32 %v671, %v706
      %v723 = vadd.f32 %v672, %v707
      %v724 = vadd.f32 %v673, %v708
      %v725 = vadd.f32 %v674, %v709
      %v726 = vadd.f32 %v675, %v710
      %v727 = vadd.f32 %v676, %v711
      %s728 = scalar_lea.vmem %s1, 1152
      %v729 = vld [vmem:[%s728] sm:$0xff]
      %v730 = vld [vmem:[%s728 + $0x8] sm:$0xff]
      %v731 = vld [vmem:[%s728 + $0x10] sm:$0xff]
      %v732 = vld [vmem:[%s728 + $0x18] sm:$0xff]
      %v733 = vld [vmem:[%s728 + $0x20] sm:$0xff]
      %v734 = vld [vmem:[%s728 + $0x28] sm:$0xff]
      %v735 = vld [vmem:[%s728 + $0x30] sm:$0xff]
      %v736 = vld [vmem:[%s728 + $0x38] sm:$0xff]
      %v737 = vld [vmem:[%s728 + $0x40] sm:$0xff]
      %v738 = vld [vmem:[%s728 + $0x48] sm:$0xff]
      %v739 = vld [vmem:[%s728 + $0x50] sm:$0xff]
      %v740 = vld [vmem:[%s728 + $0x58] sm:$0xff]
      %v741 = vld [vmem:[%s728 + $0x60] sm:$0xff]
      %v742 = vld [vmem:[%s728 + $0x68] sm:$0xff]
      %v743 = vld [vmem:[%s728 + $0x70] sm:$0xff]
      %v744 = vld [vmem:[%s728 + $0x78] sm:$0xff]
      %v745 = vperm.slane %v284, 1
      %v746 = vperm.slane %v285, 1
      %v747 = vmul.f32 %v729, %v745
      %v748 = vmul.f32 %v730, %v746
      %v749 = vmul.f32 %v731, %v745
      %v750 = vmul.f32 %v732, %v746
      %v751 = vmul.f32 %v733, %v745
      %v752 = vmul.f32 %v734, %v746
      %v753 = vmul.f32 %v735, %v745
      %v754 = vmul.f32 %v736, %v746
      %v755 = vmul.f32 %v737, %v745
      %v756 = vmul.f32 %v738, %v746
      %v757 = vmul.f32 %v739, %v745
      %v758 = vmul.f32 %v740, %v746
      %v759 = vmul.f32 %v741, %v745
      %v760 = vmul.f32 %v742, %v746
      %v761 = vmul.f32 %v743, %v745
      %v762 = vmul.f32 %v744, %v746
      %v763 = vadd.f32 %v712, %v747
      %v764 = vadd.f32 %v713, %v748
      %v765 = vadd.f32 %v714, %v749
      %v766 = vadd.f32 %v715, %v750
      %v767 = vadd.f32 %v716, %v751
      %v768 = vadd.f32 %v717, %v752
      %v769 = vadd.f32 %v718, %v753
      %v770 = vadd.f32 %v719, %v754
      %v771 = vadd.f32 %v720, %v755
      %v772 = vadd.f32 %v721, %v756
      %v773 = vadd.f32 %v722, %v757
      %v774 = vadd.f32 %v723, %v758
      %v775 = vadd.f32 %v724, %v759
      %v776 = vadd.f32 %v725, %v760
      %v777 = vadd.f32 %v726, %v761
      %v778 = vadd.f32 %v727, %v762
      %s779 = scalar_lea.vmem %s1, 1280
      %v780 = vld [vmem:[%s779] sm:$0xff]
      %v781 = vld [vmem:[%s779 + $0x8] sm:$0xff]
      %v782 = vld [vmem:[%s779 + $0x10] sm:$0xff]
      %v783 = vld [vmem:[%s779 + $0x18] sm:$0xff]
      %v784 = vld [vmem:[%s779 + $0x20] sm:$0xff]
      %v785 = vld [vmem:[%s779 + $0x28] sm:$0xff]
      %v786 = vld [vmem:[%s779 + $0x30] sm:$0xff]
      %v787 = vld [vmem:[%s779 + $0x38] sm:$0xff]
      %v788 = vld [vmem:[%s779 + $0x40] sm:$0xff]
      %v789 = vld [vmem:[%s779 + $0x48] sm:$0xff]
      %v790 = vld [vmem:[%s779 + $0x50] sm:$0xff]
      %v791 = vld [vmem:[%s779 + $0x58] sm:$0xff]
      %v792 = vld [vmem:[%s779 + $0x60] sm:$0xff]
      %v793 = vld [vmem:[%s779 + $0x68] sm:$0xff]
      %v794 = vld [vmem:[%s779 + $0x70] sm:$0xff]
      %v795 = vld [vmem:[%s779 + $0x78] sm:$0xff]
      %v796 = vperm.slane %v284, 2
      %v797 = vperm.slane %v285, 2
      %v798 = vmul.f32 %v780, %v796
      %v799 = vmul.f32 %v781, %v797
      %v800 = vmul.f32 %v782, %v796
      %v801 = vmul.f32 %v783, %v797
      %v802 = vmul.f32 %v784, %v796
      %v803 = vmul.f32 %v785, %v797
      %v804 = vmul.f32 %v786, %v796
      %v805 = vmul.f32 %v787, %v797
      %v806 = vmul.f32 %v788, %v796
      %v807 = vmul.f32 %v789, %v797
      %v808 = vmul.f32 %v790, %v796
      %v809 = vmul.f32 %v791, %v797
      %v810 = vmul.f32 %v792, %v796
      %v811 = vmul.f32 %v793, %v797
      %v812 = vmul.f32 %v794, %v796
      %v813 = vmul.f32 %v795, %v797
      %v814 = vadd.f32 %v763, %v798
      %v815 = vadd.f32 %v764, %v799
      %v816 = vadd.f32 %v765, %v800
      %v817 = vadd.f32 %v766, %v801
      %v818 = vadd.f32 %v767, %v802
      %v819 = vadd.f32 %v768, %v803
      %v820 = vadd.f32 %v769, %v804
      %v821 = vadd.f32 %v770, %v805
      %v822 = vadd.f32 %v771, %v806
      %v823 = vadd.f32 %v772, %v807
      %v824 = vadd.f32 %v773, %v808
      %v825 = vadd.f32 %v774, %v809
      %v826 = vadd.f32 %v775, %v810
      %v827 = vadd.f32 %v776, %v811
      %v828 = vadd.f32 %v777, %v812
      %v829 = vadd.f32 %v778, %v813
      %s830 = scalar_lea.vmem %s1, 1408
      %v831 = vld [vmem:[%s830] sm:$0xff]
      %v832 = vld [vmem:[%s830 + $0x8] sm:$0xff]
      %v833 = vld [vmem:[%s830 + $0x10] sm:$0xff]
      %v834 = vld [vmem:[%s830 + $0x18] sm:$0xff]
      %v835 = vld [vmem:[%s830 + $0x20] sm:$0xff]
      %v836 = vld [vmem:[%s830 + $0x28] sm:$0xff]
      %v837 = vld [vmem:[%s830 + $0x30] sm:$0xff]
      %v838 = vld [vmem:[%s830 + $0x38] sm:$0xff]
      %v839 = vld [vmem:[%s830 + $0x40] sm:$0xff]
      %v840 = vld [vmem:[%s830 + $0x48] sm:$0xff]
      %v841 = vld [vmem:[%s830 + $0x50] sm:$0xff]
      %v842 = vld [vmem:[%s830 + $0x58] sm:$0xff]
      %v843 = vld [vmem:[%s830 + $0x60] sm:$0xff]
      %v844 = vld [vmem:[%s830 + $0x68] sm:$0xff]
      %v845 = vld [vmem:[%s830 + $0x70] sm:$0xff]
      %v846 = vld [vmem:[%s830 + $0x78] sm:$0xff]
      %v847 = vperm.slane %v284, 3
      %v848 = vperm.slane %v285, 3
      %v849 = vmul.f32 %v831, %v847
      %v850 = vmul.f32 %v832, %v848
      %v851 = vmul.f32 %v833, %v847
      %v852 = vmul.f32 %v834, %v848
      %v853 = vmul.f32 %v835, %v847
      %v854 = vmul.f32 %v836, %v848
      %v855 = vmul.f32 %v837, %v847
      %v856 = vmul.f32 %v838, %v848
      %v857 = vmul.f32 %v839, %v847
      %v858 = vmul.f32 %v840, %v848
      %v859 = vmul.f32 %v841, %v847
      %v860 = vmul.f32 %v842, %v848
      %v861 = vmul.f32 %v843, %v847
      %v862 = vmul.f32 %v844, %v848
      %v863 = vmul.f32 %v845, %v847
      %v864 = vmul.f32 %v846, %v848
      %v865 = vadd.f32 %v814, %v849
      %v866 = vadd.f32 %v815, %v850
      %v867 = vadd.f32 %v816, %v851
      %v868 = vadd.f32 %v817, %v852
      %v869 = vadd.f32 %v818, %v853
      %v870 = vadd.f32 %v819, %v854
      %v871 = vadd.f32 %v820, %v855
      %v872 = vadd.f32 %v821, %v856
      %v873 = vadd.f32 %v822, %v857
      %v874 = vadd.f32 %v823, %v858
      %v875 = vadd.f32 %v824, %v859
      %v876 = vadd.f32 %v825, %v860
      %v877 = vadd.f32 %v826, %v861
      %v878 = vadd.f32 %v827, %v862
      %v879 = vadd.f32 %v828, %v863
      %v880 = vadd.f32 %v829, %v864
      %v881 = vld [vmem:[%s2] sm:$0xff]
      %v882 = vld [vmem:[%s2 + $0x8] sm:$0xff]
      %v883 = vld [vmem:[%s2 + $0x10] sm:$0xff]
      %v884 = vld [vmem:[%s2 + $0x18] sm:$0xff]
      %v885 = vld [vmem:[%s2 + $0x20] sm:$0xff]
      %v886 = vld [vmem:[%s2 + $0x28] sm:$0xff]
      %v887 = vld [vmem:[%s2 + $0x30] sm:$0xff]
      %v888 = vld [vmem:[%s2 + $0x38] sm:$0xff]
      %v889 = vld [vmem:[%s3] sm:$0xf]
      %v890 = vsel %vm206, 1.0, 0.0
      %v891 = vrot.slane %v890, 4
      %v892 = vadd.f32 %v890, %v891
      %v893 = vrot.slane %v892, 2
      %v894 = vadd.f32 %v892, %v893
      %v895 = vrot.slane %v894, 1
      %v896 = vadd.f32 %v894, %v895
      %v897 = vrcp.pop %v896
      %v898 = vmul.f32 %v896, %v897
      %v899 = vsub.f32 1.0, %v898
      %v900 = vmul.f32 %v897, %v899
      %v901 = vadd.f32 %v897, %v900
      %vm902 = vweird.f32 %v896
      %vm903 = vweird.f32 %v897
      %vm904 = vmor %vm902, %vm903
      %v905 = vsel %vm904, %v897, %v901
      %v906 = vand.u32 2147483647, %v896
      %vm907 = vcmp.eq.f32.partialorder %v906, 8.507059e+37
      %v908 = vand.u32 %v896, 2147483648
      %v909 = vor.u32 1.1754944e-38, %v908
      %v910 = vsel %vm907, %v909, %v905
      %v911 = vmul.f32 1.0, %v910
      %vm912 = vcmask 31744
      %v914 = vsel %vm912, %v881, 0
      %v917 = vsel %vm912, %v882, 0
      %v920 = vsel %vm912, %v883, 0
      %v923 = vsel %vm912, %v884, 0
      %v926 = vsel %vm912, %v885, 0
      %v929 = vsel %vm912, %v886, 0
      %v932 = vsel %vm912, %v887, 0
      %v935 = vsel %vm912, %v888, 0
      %v938 = vsel %vm206, %v911, 0
      %940 = vmatpush.msra.mxu0 0.0
      %941 = vmatpush.msra.mxu0 0.0
      %942 = vmatpush.msra.mxu0 0.0
      %943 = vmatpush.msra.mxu0 0.0
      %944 = vmatpush.msra.mxu0 0.0
      %945 = vmatpush.msra.mxu0 0.0
      %946 = vmatpush.msra.mxu0 0.0
      %947 = vmatpush.msra.mxu0 0.0
      %948 = vmatpush.msra.mxu0 0.0
      %949 = vmatpush.msra.mxu0 0.0
      %950 = vmatpush.msra.mxu0 0.0
      %951 = vmatpush.msra.mxu0 0.0
      %952 = vmatpush.msra.mxu0 0.0
      %953 = vmatpush.msra.mxu0 0.0
      %954 = vmatpush.msra.mxu0 0.0
      %955 = vmatpush.msra.mxu0 %v938
      %956 = vmatmul.f32.gmra.mxu0 %v914
      %v957 = vpop.f32.mrf.mxu0
      %v958 = vadd.f32 0.0, %v957
      %959 = vmatmul.f32.gmra.mxu0 %v917
      %v960 = vpop.f32.mrf.mxu0
      %v961 = vadd.f32 0.0, %v960
      %962 = vmatmul.f32.gmra.mxu0 %v920
      %v963 = vpop.f32.mrf.mxu0
      %v964 = vadd.f32 0.0, %v963
      %965 = vmatmul.f32.gmra.mxu0 %v923
      %v966 = vpop.f32.mrf.mxu0
      %v967 = vadd.f32 0.0, %v966
      %968 = vmatmul.f32.gmra.mxu0 %v926
      %v969 = vpop.f32.mrf.mxu0
      %v970 = vadd.f32 0.0, %v969
      %971 = vmatmul.f32.gmra.mxu0 %v929
      %v972 = vpop.f32.mrf.mxu0
      %v973 = vadd.f32 0.0, %v972
      %974 = vmatmul.f32.gmra.mxu0 %v932
      %v975 = vpop.f32.mrf.mxu0
      %v976 = vadd.f32 0.0, %v975
      %977 = vmatmul.f32.gmra.mxu0 %v935
      %v978 = vpop.f32.mrf.mxu0
      %v979 = vadd.f32 0.0, %v978
      %980 = vdwg.mxu0
      %v981 = vmul.f32 %v958, %v865
      %v982 = vmul.f32 %v958, %v866
      %v983 = vmul.f32 %v961, %v867
      %v984 = vmul.f32 %v961, %v868
      %v985 = vmul.f32 %v964, %v869
      %v986 = vmul.f32 %v964, %v870
      %v987 = vmul.f32 %v967, %v871
      %v988 = vmul.f32 %v967, %v872
      %v989 = vmul.f32 %v970, %v873
      %v990 = vmul.f32 %v970, %v874
      %v991 = vmul.f32 %v973, %v875
      %v992 = vmul.f32 %v973, %v876
      %v993 = vmul.f32 %v976, %v877
      %v994 = vmul.f32 %v976, %v878
      %v995 = vmul.f32 %v979, %v879
      %v996 = vmul.f32 %v979, %v880
      %v997 = vsel %vm215, %v982, 0.0
      %v998 = vadd.f32 %v981, %v997
      %999 = vadd.xlane.f32.xlu0 %v998
      %v1000 = vpop.xlane.xlu0 %999
      %v1001 = vsel %vm215, %v984, 0.0
      %v1002 = vadd.f32 %v983, %v1001
      %1003 = vadd.xlane.f32.xlu0 %v1002
      %v1004 = vpop.xlane.xlu0 %1003
      %v1005 = vsel %vm215, %v986, 0.0
      %v1006 = vadd.f32 %v985, %v1005
      %1007 = vadd.xlane.f32.xlu0 %v1006
      %v1008 = vpop.xlane.xlu0 %1007
      %v1009 = vsel %vm215, %v988, 0.0
      %v1010 = vadd.f32 %v987, %v1009
      %1011 = vadd.xlane.f32.xlu0 %v1010
      %v1012 = vpop.xlane.xlu0 %1011
      %v1013 = vsel %vm215, %v990, 0.0
      %v1014 = vadd.f32 %v989, %v1013
      %1015 = vadd.xlane.f32.xlu0 %v1014
      %v1016 = vpop.xlane.xlu0 %1015
      %v1017 = vsel %vm215, %v992, 0.0
      %v1018 = vadd.f32 %v991, %v1017
      %1019 = vadd.xlane.f32.xlu0 %v1018
      %v1020 = vpop.xlane.xlu0 %1019
      %v1021 = vsel %vm215, %v994, 0.0
      %v1022 = vadd.f32 %v993, %v1021
      %1023 = vadd.xlane.f32.xlu0 %v1022
      %v1024 = vpop.xlane.xlu0 %1023
      %v1025 = vsel %vm215, %v996, 0.0
      %v1026 = vadd.f32 %v995, %v1025
      %1027 = vadd.xlane.f32.xlu0 %v1026
      %v1028 = vpop.xlane.xlu0 %1027
      %v1029 = vmul.f32 %v1000, %v1000
      %v1030 = vmul.f32 %v1004, %v1004
      %v1031 = vmul.f32 %v1008, %v1008
      %v1032 = vmul.f32 %v1012, %v1012
      %v1033 = vmul.f32 %v1016, %v1016
      %v1034 = vmul.f32 %v1020, %v1020
      %v1035 = vmul.f32 %v1024, %v1024
      %v1036 = vmul.f32 %v1028, %v1028
      %vm1037 = vcmask 523264
      %v1039 = vsel %vm1037, %v889, 0
      %1041 = vmatpush.msra.mxu0 0.0
      %1042 = vmatpush.msra.mxu0 0.0
      %1043 = vmatpush.msra.mxu0 0.0
      %1044 = vmatpush.msra.mxu0 0.0
      %1045 = vmatpush.msra.mxu0 0.0
      %1046 = vmatpush.msra.mxu0 0.0
      %1047 = vmatpush.msra.mxu0 0.0
      %1048 = vmatpush.msra.mxu0 0.0
      %1049 = vmatpush.msra.mxu0 %v1036
      %1050 = vmatpush.msra.mxu0 %v1035
      %1051 = vmatpush.msra.mxu0 %v1034
      %1052 = vmatpush.msra.mxu0 %v1033
      %1053 = vmatpush.msra.mxu0 %v1032
      %1054 = vmatpush.msra.mxu0 %v1031
      %1055 = vmatpush.msra.mxu0 %v1030
      %1056 = vmatpush.msra.mxu0 %v1029
      %1057 = vmatmul.f32.gmra.mxu0 %v1039
      %v1058 = vpop.f32.mrf.mxu0
      %v1059 = vadd.f32 0.0, %v1058
      %1060 = vdwg.mxu0
      %v1061 = vadd.f32 %v1059, 1e-06
      %v1062 = vrsqrt.pop %v1061
      %v1063 = vmul.f32 %v1062, %v1061
      %v1064 = vmul.f32 %v1063, %v1062
      %v1065 = vmul.f32 0.5, %v1064
      %v1066 = vsub.f32 1.5, %v1065
      %v1067 = vmul.f32 %v1062, %v1066
      %vm1068 = vweird.f32 %v1061
      %vm1069 = vweird.f32 %v1062
      %vm1070 = vmor %vm1068, %vm1069
      %v1071 = vsel %vm1070, %v1062, %v1067
      %v1072 = vmul.f32 %v1059, %v1071
      %v1073 = vadd.f32 %v1059, 1.0
      %v1074 = vrcp.pop %v1073
      %v1075 = vmul.f32 %v1073, %v1074
      %v1076 = vsub.f32 1.0, %v1075
      %v1077 = vmul.f32 %v1074, %v1076
      %v1078 = vadd.f32 %v1074, %v1077
      %vm1079 = vweird.f32 %v1073
      %vm1080 = vweird.f32 %v1074
      %vm1081 = vmor %vm1079, %vm1080
      %v1082 = vsel %vm1081, %v1074, %v1078
      %v1083 = vand.u32 2147483647, %v1073
      %vm1084 = vcmp.eq.f32.partialorder %v1083, 8.507059e+37
      %v1085 = vand.u32 %v1073, 2147483648
      %v1086 = vor.u32 1.1754944e-38, %v1085
      %v1087 = vsel %vm1084, %v1086, %v1082
      %v1088 = vmul.f32 %v1072, %v1087
      %v1090 = vsel %vm206, %v1088, 0
      %1092 = vmatpush.msra.mxu0 0.0
      %1093 = vmatpush.msra.mxu0 0.0
      %1094 = vmatpush.msra.mxu0 0.0
      %1095 = vmatpush.msra.mxu0 0.0
      %1096 = vmatpush.msra.mxu0 0.0
      %1097 = vmatpush.msra.mxu0 0.0
      %1098 = vmatpush.msra.mxu0 0.0
      %1099 = vmatpush.msra.mxu0 0.0
      %1100 = vmatpush.msra.mxu0 0.0
      %1101 = vmatpush.msra.mxu0 0.0
      %1102 = vmatpush.msra.mxu0 0.0
      %1103 = vmatpush.msra.mxu0 0.0
      %1104 = vmatpush.msra.mxu0 0.0
      %1105 = vmatpush.msra.mxu0 0.0
      %1106 = vmatpush.msra.mxu0 0.0
      %1107 = vmatpush.msra.mxu0 %v1090
      %1108 = vmatmul.f32.gmra.mxu0 %v914
      %v1109 = vpop.f32.mrf.mxu0
      %v1110 = vadd.f32 0.0, %v1109
      %1111 = vmatmul.f32.gmra.mxu0 %v917
      %v1112 = vpop.f32.mrf.mxu0
      %v1113 = vadd.f32 0.0, %v1112
      %1114 = vmatmul.f32.gmra.mxu0 %v920
      %v1115 = vpop.f32.mrf.mxu0
      %v1116 = vadd.f32 0.0, %v1115
      %1117 = vmatmul.f32.gmra.mxu0 %v923
      %v1118 = vpop.f32.mrf.mxu0
      %v1119 = vadd.f32 0.0, %v1118
      %1120 = vmatmul.f32.gmra.mxu0 %v926
      %v1121 = vpop.f32.mrf.mxu0
      %v1122 = vadd.f32 0.0, %v1121
      %1123 = vmatmul.f32.gmra.mxu0 %v929
      %v1124 = vpop.f32.mrf.mxu0
      %v1125 = vadd.f32 0.0, %v1124
      %1126 = vmatmul.f32.gmra.mxu0 %v932
      %v1127 = vpop.f32.mrf.mxu0
      %v1128 = vadd.f32 0.0, %v1127
      %1129 = vmatmul.f32.gmra.mxu0 %v935
      %v1130 = vpop.f32.mrf.mxu0
      %v1131 = vadd.f32 0.0, %v1130
      %1132 = vdwg.mxu0
      %v1133 = vmul.f32 %v1000, %v1110
      %v1134 = vmul.f32 %v1004, %v1113
      %v1135 = vmul.f32 %v1008, %v1116
      %v1136 = vmul.f32 %v1012, %v1119
      %v1137 = vmul.f32 %v1016, %v1122
      %v1138 = vmul.f32 %v1020, %v1125
      %v1139 = vmul.f32 %v1024, %v1128
      %v1140 = vmul.f32 %v1028, %v1131
      %1142 = vset.pattern.permute.xlu0 0
      %1143 = vperm.xlu0 %1142, %v1133
      %v1144 = vpop.permute.xlu0 %1143
      %1147 = vset.pattern.permute.xlu0 0
      %1148 = vperm.xlu0 %1147, %v1134
      %v1149 = vpop.permute.xlu0 %1148
      %1152 = vset.pattern.permute.xlu0 0
      %1153 = vperm.xlu0 %1152, %v1135
      %v1154 = vpop.permute.xlu0 %1153
      %1157 = vset.pattern.permute.xlu0 0
      %1158 = vperm.xlu0 %1157, %v1136
      %v1159 = vpop.permute.xlu0 %1158
      %1162 = vset.pattern.permute.xlu0 0
      %1163 = vperm.xlu0 %1162, %v1137
      %v1164 = vpop.permute.xlu0 %1163
      %1167 = vset.pattern.permute.xlu0 0
      %1168 = vperm.xlu0 %1167, %v1138
      %v1169 = vpop.permute.xlu0 %1168
      %1172 = vset.pattern.permute.xlu0 0
      %1173 = vperm.xlu0 %1172, %v1139
      %v1174 = vpop.permute.xlu0 %1173
      %1177 = vset.pattern.permute.xlu0 0
      %1178 = vperm.xlu0 %1177, %v1140
      %v1179 = vpop.permute.xlu0 %1178
      %v1181 = vmul.f32 %v1144, %v865
      %v1182 = vmul.f32 %v1144, %v866
      %v1183 = vmul.f32 %v1149, %v867
      %v1184 = vmul.f32 %v1149, %v868
      %v1185 = vmul.f32 %v1154, %v869
      %v1186 = vmul.f32 %v1154, %v870
      %v1187 = vmul.f32 %v1159, %v871
      %v1188 = vmul.f32 %v1159, %v872
      %v1189 = vmul.f32 %v1164, %v873
      %v1190 = vmul.f32 %v1164, %v874
      %v1191 = vmul.f32 %v1169, %v875
      %v1192 = vmul.f32 %v1169, %v876
      %v1193 = vmul.f32 %v1174, %v877
      %v1194 = vmul.f32 %v1174, %v878
      %v1195 = vmul.f32 %v1179, %v879
      %v1196 = vmul.f32 %v1179, %v880
      %1197 = vmatpush.msra.mxu0 0.0
      %1198 = vmatpush.msra.mxu0 0.0
      %1199 = vmatpush.msra.mxu0 0.0
      %1200 = vmatpush.msra.mxu0 0.0
      %1201 = vmatpush.msra.mxu0 0.0
      %1202 = vmatpush.msra.mxu0 0.0
      %1203 = vmatpush.msra.mxu0 0.0
      %1204 = vmatpush.msra.mxu0 0.0
      %1205 = vmatpush.msra.mxu0 %v1195
      %1206 = vmatpush.msra.mxu0 %v1193
      %1207 = vmatpush.msra.mxu0 %v1191
      %1208 = vmatpush.msra.mxu0 %v1189
      %1209 = vmatpush.msra.mxu0 %v1187
      %1210 = vmatpush.msra.mxu0 %v1185
      %1211 = vmatpush.msra.mxu0 %v1183
      %1212 = vmatpush.msra.mxu0 %v1181
      %1213 = vmatmul.f32.gmra.mxu0 %v1039
      %v1214 = vpop.f32.mrf.mxu0
      %v1215 = vadd.f32 0.0, %v1214
      %1216 = vdwg.mxu0
      %1217 = vmatpush.msra.mxu0 0.0
      %1218 = vmatpush.msra.mxu0 0.0
      %1219 = vmatpush.msra.mxu0 0.0
      %1220 = vmatpush.msra.mxu0 0.0
      %1221 = vmatpush.msra.mxu0 0.0
      %1222 = vmatpush.msra.mxu0 0.0
      %1223 = vmatpush.msra.mxu0 0.0
      %1224 = vmatpush.msra.mxu0 0.0
      %1225 = vmatpush.msra.mxu0 %v1196
      %1226 = vmatpush.msra.mxu0 %v1194
      %1227 = vmatpush.msra.mxu0 %v1192
      %1228 = vmatpush.msra.mxu0 %v1190
      %1229 = vmatpush.msra.mxu0 %v1188
      %1230 = vmatpush.msra.mxu0 %v1186
      %1231 = vmatpush.msra.mxu0 %v1184
      %1232 = vmatpush.msra.mxu0 %v1182
      %1233 = vmatmul.f32.gmra.mxu0 %v1039
      %v1234 = vpop.f32.mrf.mxu0
      %v1235 = vadd.f32 0.0, %v1234
      %1236 = vdwg.mxu0
      %v1237 = vsel %vm206, %v1215, -inf
      %v1238 = vrot.slane %v1237, 4
      %v1239 = vmax.f32 %v1237, %v1238
      %v1240 = vrot.slane %v1239, 2
      %v1241 = vmax.f32 %v1239, %v1240
      %v1242 = vrot.slane %v1241, 1
      %v1243 = vmax.f32 %v1241, %v1242
      %v1244 = vsel %vm217, %v1235, -inf
      %v1245 = vrot.slane %v1244, 4
      %v1246 = vmax.f32 %v1244, %v1245
      %v1247 = vrot.slane %v1246, 2
      %v1248 = vmax.f32 %v1246, %v1247
      %v1249 = vrot.slane %v1248, 1
      %v1250 = vmax.f32 %v1248, %v1249
      %v1251 = vsub.f32 %v1215, %v1243
      %v1252 = vsub.f32 %v1235, %v1250
      %v1253 = vmul.f32 %v1251, 1.442695
      %v1254 = vpow.pop %v1253
      %v1255 = vmul.f32 %v1252, 1.442695
      %v1256 = vpow.pop %v1255
      %v1257 = vsel %vm206, %v1254, 0.0
      %v1258 = vrot.slane %v1257, 4
      %v1259 = vadd.f32 %v1257, %v1258
      %v1260 = vrot.slane %v1259, 2
      %v1261 = vadd.f32 %v1259, %v1260
      %v1262 = vrot.slane %v1261, 1
      %v1263 = vadd.f32 %v1261, %v1262
      %v1264 = vsel %vm217, %v1256, 0.0
      %v1265 = vrot.slane %v1264, 4
      %v1266 = vadd.f32 %v1264, %v1265
      %v1267 = vrot.slane %v1266, 2
      %v1268 = vadd.f32 %v1266, %v1267
      %v1269 = vrot.slane %v1268, 1
      %v1270 = vadd.f32 %v1268, %v1269
      %v1271 = vrcp.pop %v1263
      %v1272 = vmul.f32 %v1263, %v1271
      %v1273 = vsub.f32 1.0, %v1272
      %v1274 = vmul.f32 %v1271, %v1273
      %v1275 = vadd.f32 %v1271, %v1274
      %vm1276 = vweird.f32 %v1263
      %vm1277 = vweird.f32 %v1271
      %vm1278 = vmor %vm1276, %vm1277
      %v1279 = vsel %vm1278, %v1271, %v1275
      %v1280 = vand.u32 2147483647, %v1263
      %vm1281 = vcmp.eq.f32.partialorder %v1280, 8.507059e+37
      %v1282 = vand.u32 %v1263, 2147483648
      %v1283 = vor.u32 1.1754944e-38, %v1282
      %v1284 = vsel %vm1281, %v1283, %v1279
      %v1285 = vmul.f32 %v1254, %v1284
      %v1286 = vrcp.pop %v1270
      %v1287 = vmul.f32 %v1270, %v1286
      %v1288 = vsub.f32 1.0, %v1287
      %v1289 = vmul.f32 %v1286, %v1288
      %v1290 = vadd.f32 %v1286, %v1289
      %vm1291 = vweird.f32 %v1270
      %vm1292 = vweird.f32 %v1286
      %vm1293 = vmor %vm1291, %vm1292
      %v1294 = vsel %vm1293, %v1286, %v1290
      %v1295 = vand.u32 2147483647, %v1270
      %vm1296 = vcmp.eq.f32.partialorder %v1295, 8.507059e+37
      %v1297 = vand.u32 %v1270, 2147483648
      %v1298 = vor.u32 1.1754944e-38, %v1297
      %v1299 = vsel %vm1296, %v1298, %v1294
      %v1300 = vmul.f32 %v1256, %v1299
      %v1302 = vsel %vm206, %v1285, 0
      %v1305 = vsel %vm206, %v1300, 0
      %1307 = vmatpush.msra.mxu0 0.0
      %1308 = vmatpush.msra.mxu0 0.0
      %1309 = vmatpush.msra.mxu0 0.0
      %1310 = vmatpush.msra.mxu0 0.0
      %1311 = vmatpush.msra.mxu0 0.0
      %1312 = vmatpush.msra.mxu0 0.0
      %1313 = vmatpush.msra.mxu0 0.0
      %1314 = vmatpush.msra.mxu0 0.0
      %1315 = vmatpush.msra.mxu0 0.0
      %1316 = vmatpush.msra.mxu0 0.0
      %1317 = vmatpush.msra.mxu0 0.0
      %1318 = vmatpush.msra.mxu0 0.0
      %1319 = vmatpush.msra.mxu0 0.0
      %1320 = vmatpush.msra.mxu0 0.0
      %1321 = vmatpush.msra.mxu0 0.0
      %1322 = vmatpush.msra.mxu0 %v1302
      %1323 = vmatmul.f32.gmra.mxu0 %v914
      %v1324 = vpop.f32.mrf.mxu0
      %v1325 = vadd.f32 0.0, %v1324
      %1326 = vmatmul.f32.gmra.mxu0 %v917
      %v1327 = vpop.f32.mrf.mxu0
      %v1328 = vadd.f32 0.0, %v1327
      %1329 = vmatmul.f32.gmra.mxu0 %v920
      %v1330 = vpop.f32.mrf.mxu0
      %v1331 = vadd.f32 0.0, %v1330
      %1332 = vmatmul.f32.gmra.mxu0 %v923
      %v1333 = vpop.f32.mrf.mxu0
      %v1334 = vadd.f32 0.0, %v1333
      %1335 = vmatmul.f32.gmra.mxu0 %v926
      %v1336 = vpop.f32.mrf.mxu0
      %v1337 = vadd.f32 0.0, %v1336
      %1338 = vmatmul.f32.gmra.mxu0 %v929
      %v1339 = vpop.f32.mrf.mxu0
      %v1340 = vadd.f32 0.0, %v1339
      %1341 = vmatmul.f32.gmra.mxu0 %v932
      %v1342 = vpop.f32.mrf.mxu0
      %v1343 = vadd.f32 0.0, %v1342
      %1344 = vmatmul.f32.gmra.mxu0 %v935
      %v1345 = vpop.f32.mrf.mxu0
      %v1346 = vadd.f32 0.0, %v1345
      %1347 = vdwg.mxu0
      %1348 = vmatpush.msra.mxu0 0.0
      %1349 = vmatpush.msra.mxu0 0.0
      %1350 = vmatpush.msra.mxu0 0.0
      %1351 = vmatpush.msra.mxu0 0.0
      %1352 = vmatpush.msra.mxu0 0.0
      %1353 = vmatpush.msra.mxu0 0.0
      %1354 = vmatpush.msra.mxu0 0.0
      %1355 = vmatpush.msra.mxu0 0.0
      %1356 = vmatpush.msra.mxu0 0.0
      %1357 = vmatpush.msra.mxu0 0.0
      %1358 = vmatpush.msra.mxu0 0.0
      %1359 = vmatpush.msra.mxu0 0.0
      %1360 = vmatpush.msra.mxu0 0.0
      %1361 = vmatpush.msra.mxu0 0.0
      %1362 = vmatpush.msra.mxu0 0.0
      %1363 = vmatpush.msra.mxu0 %v1305
      %1364 = vmatmul.f32.gmra.mxu0 %v914
      %v1365 = vpop.f32.mrf.mxu0
      %v1366 = vadd.f32 0.0, %v1365
      %1367 = vmatmul.f32.gmra.mxu0 %v917
      %v1368 = vpop.f32.mrf.mxu0
      %v1369 = vadd.f32 0.0, %v1368
      %1370 = vmatmul.f32.gmra.mxu0 %v920
      %v1371 = vpop.f32.mrf.mxu0
      %v1372 = vadd.f32 0.0, %v1371
      %1373 = vmatmul.f32.gmra.mxu0 %v923
      %v1374 = vpop.f32.mrf.mxu0
      %v1375 = vadd.f32 0.0, %v1374
      %1376 = vmatmul.f32.gmra.mxu0 %v926
      %v1377 = vpop.f32.mrf.mxu0
      %v1378 = vadd.f32 0.0, %v1377
      %1379 = vmatmul.f32.gmra.mxu0 %v929
      %v1380 = vpop.f32.mrf.mxu0
      %v1381 = vadd.f32 0.0, %v1380
      %1382 = vmatmul.f32.gmra.mxu0 %v932
      %v1383 = vpop.f32.mrf.mxu0
      %v1384 = vadd.f32 0.0, %v1383
      %1385 = vmatmul.f32.gmra.mxu0 %v935
      %v1386 = vpop.f32.mrf.mxu0
      %v1387 = vadd.f32 0.0, %v1386
      %1388 = vdwg.mxu0
      %v1389 = vmul.f32 %v1325, %v865
      %v1390 = vmul.f32 %v1366, %v866
      %v1391 = vmul.f32 %v1328, %v867
      %v1392 = vmul.f32 %v1369, %v868
      %v1393 = vmul.f32 %v1331, %v869
      %v1394 = vmul.f32 %v1372, %v870
      %v1395 = vmul.f32 %v1334, %v871
      %v1396 = vmul.f32 %v1375, %v872
      %v1397 = vmul.f32 %v1337, %v873
      %v1398 = vmul.f32 %v1378, %v874
      %v1399 = vmul.f32 %v1340, %v875
      %v1400 = vmul.f32 %v1381, %v876
      %v1401 = vmul.f32 %v1343, %v877
      %v1402 = vmul.f32 %v1384, %v878
      %v1403 = vmul.f32 %v1346, %v879
      %v1404 = vmul.f32 %v1387, %v880
      %v1405 = vsel %vm215, %v1390, 0.0
      %v1406 = vadd.f32 %v1389, %v1405
      %1407 = vadd.xlane.f32.xlu0 %v1406
      %v1408 = vpop.xlane.xlu0 %1407
      %v1409 = vsel %vm215, %v1392, 0.0
      %v1410 = vadd.f32 %v1391, %v1409
      %1411 = vadd.xlane.f32.xlu0 %v1410
      %v1412 = vpop.xlane.xlu0 %1411
      %v1413 = vsel %vm215, %v1394, 0.0
      %v1414 = vadd.f32 %v1393, %v1413
      %1415 = vadd.xlane.f32.xlu0 %v1414
      %v1416 = vpop.xlane.xlu0 %1415
      %v1417 = vsel %vm215, %v1396, 0.0
      %v1418 = vadd.f32 %v1395, %v1417
      %1419 = vadd.xlane.f32.xlu0 %v1418
      %v1420 = vpop.xlane.xlu0 %1419
      %v1421 = vsel %vm215, %v1398, 0.0
      %v1422 = vadd.f32 %v1397, %v1421
      %1423 = vadd.xlane.f32.xlu0 %v1422
      %v1424 = vpop.xlane.xlu0 %1423
      %v1425 = vsel %vm215, %v1400, 0.0
      %v1426 = vadd.f32 %v1399, %v1425
      %1427 = vadd.xlane.f32.xlu0 %v1426
      %v1428 = vpop.xlane.xlu0 %1427
      %v1429 = vsel %vm215, %v1402, 0.0
      %v1430 = vadd.f32 %v1401, %v1429
      %1431 = vadd.xlane.f32.xlu0 %v1430
      %v1432 = vpop.xlane.xlu0 %1431
      %v1433 = vsel %vm215, %v1404, 0.0
      %v1434 = vadd.f32 %v1403, %v1433
      %1435 = vadd.xlane.f32.xlu0 %v1434
      %v1436 = vpop.xlane.xlu0 %1435
      %v1437 = vmul.f32 %v1408, %v1408
      %v1438 = vmul.f32 %v1412, %v1412
      %v1439 = vmul.f32 %v1416, %v1416
      %v1440 = vmul.f32 %v1420, %v1420
      %v1441 = vmul.f32 %v1424, %v1424
      %v1442 = vmul.f32 %v1428, %v1428
      %v1443 = vmul.f32 %v1432, %v1432
      %v1444 = vmul.f32 %v1436, %v1436
      %1445 = vmatpush.msra.mxu0 0.0
      %1446 = vmatpush.msra.mxu0 0.0
      %1447 = vmatpush.msra.mxu0 0.0
      %1448 = vmatpush.msra.mxu0 0.0
      %1449 = vmatpush.msra.mxu0 0.0
      %1450 = vmatpush.msra.mxu0 0.0
      %1451 = vmatpush.msra.mxu0 0.0
      %1452 = vmatpush.msra.mxu0 0.0
      %1453 = vmatpush.msra.mxu0 %v1444
      %1454 = vmatpush.msra.mxu0 %v1443
      %1455 = vmatpush.msra.mxu0 %v1442
      %1456 = vmatpush.msra.mxu0 %v1441
      %1457 = vmatpush.msra.mxu0 %v1440
      %1458 = vmatpush.msra.mxu0 %v1439
      %1459 = vmatpush.msra.mxu0 %v1438
      %1460 = vmatpush.msra.mxu0 %v1437
      %1461 = vmatmul.f32.gmra.mxu0 %v1039
      %v1462 = vpop.f32.mrf.mxu0
      %v1463 = vadd.f32 0.0, %v1462
      %1464 = vdwg.mxu0
      %v1465 = vadd.f32 %v1463, 1e-06
      %v1466 = vrsqrt.pop %v1465
      %v1467 = vmul.f32 %v1466, %v1465
      %v1468 = vmul.f32 %v1467, %v1466
      %v1469 = vmul.f32 0.5, %v1468
      %v1470 = vsub.f32 1.5, %v1469
      %v1471 = vmul.f32 %v1466, %v1470
      %vm1472 = vweird.f32 %v1465
      %vm1473 = vweird.f32 %v1466
      %vm1474 = vmor %vm1472, %vm1473
      %v1475 = vsel %vm1474, %v1466, %v1471
      %v1476 = vmul.f32 %v1463, %v1475
      %v1477 = vadd.f32 %v1463, 1.0
      %v1478 = vrcp.pop %v1477
      %v1479 = vmul.f32 %v1477, %v1478
      %v1480 = vsub.f32 1.0, %v1479
      %v1481 = vmul.f32 %v1478, %v1480
      %v1482 = vadd.f32 %v1478, %v1481
      %vm1483 = vweird.f32 %v1477
      %vm1484 = vweird.f32 %v1478
      %vm1485 = vmor %vm1483, %vm1484
      %v1486 = vsel %vm1485, %v1478, %v1482
      %v1487 = vand.u32 2147483647, %v1477
      %vm1488 = vcmp.eq.f32.partialorder %v1487, 8.507059e+37
      %v1489 = vand.u32 %v1477, 2147483648
      %v1490 = vor.u32 1.1754944e-38, %v1489
      %v1491 = vsel %vm1488, %v1490, %v1486
      %v1492 = vmul.f32 %v1476, %v1491
      %v1494 = vsel %vm206, %v1492, 0
      %1496 = vmatpush.msra.mxu0 0.0
      %1497 = vmatpush.msra.mxu0 0.0
      %1498 = vmatpush.msra.mxu0 0.0
      %1499 = vmatpush.msra.mxu0 0.0
      %1500 = vmatpush.msra.mxu0 0.0
      %1501 = vmatpush.msra.mxu0 0.0
      %1502 = vmatpush.msra.mxu0 0.0
      %1503 = vmatpush.msra.mxu0 0.0
      %1504 = vmatpush.msra.mxu0 0.0
      %1505 = vmatpush.msra.mxu0 0.0
      %1506 = vmatpush.msra.mxu0 0.0
      %1507 = vmatpush.msra.mxu0 0.0
      %1508 = vmatpush.msra.mxu0 0.0
      %1509 = vmatpush.msra.mxu0 0.0
      %1510 = vmatpush.msra.mxu0 0.0
      %1511 = vmatpush.msra.mxu0 %v1494
      %1512 = vmatmul.f32.gmra.mxu0 %v914
      %v1513 = vpop.f32.mrf.mxu0
      %v1514 = vadd.f32 0.0, %v1513
      %1515 = vmatmul.f32.gmra.mxu0 %v917
      %v1516 = vpop.f32.mrf.mxu0
      %v1517 = vadd.f32 0.0, %v1516
      %1518 = vmatmul.f32.gmra.mxu0 %v920
      %v1519 = vpop.f32.mrf.mxu0
      %v1520 = vadd.f32 0.0, %v1519
      %1521 = vmatmul.f32.gmra.mxu0 %v923
      %v1522 = vpop.f32.mrf.mxu0
      %v1523 = vadd.f32 0.0, %v1522
      %1524 = vmatmul.f32.gmra.mxu0 %v926
      %v1525 = vpop.f32.mrf.mxu0
      %v1526 = vadd.f32 0.0, %v1525
      %1527 = vmatmul.f32.gmra.mxu0 %v929
      %v1528 = vpop.f32.mrf.mxu0
      %v1529 = vadd.f32 0.0, %v1528
      %1530 = vmatmul.f32.gmra.mxu0 %v932
      %v1531 = vpop.f32.mrf.mxu0
      %v1532 = vadd.f32 0.0, %v1531
      %1533 = vmatmul.f32.gmra.mxu0 %v935
      %v1534 = vpop.f32.mrf.mxu0
      %v1535 = vadd.f32 0.0, %v1534
      %1536 = vdwg.mxu0
      %v1537 = vmul.f32 %v1408, %v1514
      %v1538 = vmul.f32 %v1412, %v1517
      %v1539 = vmul.f32 %v1416, %v1520
      %v1540 = vmul.f32 %v1420, %v1523
      %v1541 = vmul.f32 %v1424, %v1526
      %v1542 = vmul.f32 %v1428, %v1529
      %v1543 = vmul.f32 %v1432, %v1532
      %v1544 = vmul.f32 %v1436, %v1535
      %1546 = vset.pattern.permute.xlu0 0
      %1547 = vperm.xlu0 %1546, %v1537
      %v1548 = vpop.permute.xlu0 %1547
      %1551 = vset.pattern.permute.xlu0 0
      %1552 = vperm.xlu0 %1551, %v1538
      %v1553 = vpop.permute.xlu0 %1552
      %1556 = vset.pattern.permute.xlu0 0
      %1557 = vperm.xlu0 %1556, %v1539
      %v1558 = vpop.permute.xlu0 %1557
      %1561 = vset.pattern.permute.xlu0 0
      %1562 = vperm.xlu0 %1561, %v1540
      %v1563 = vpop.permute.xlu0 %1562
      %1566 = vset.pattern.permute.xlu0 0
      %1567 = vperm.xlu0 %1566, %v1541
      %v1568 = vpop.permute.xlu0 %1567
      %1571 = vset.pattern.permute.xlu0 0
      %1572 = vperm.xlu0 %1571, %v1542
      %v1573 = vpop.permute.xlu0 %1572
      %1576 = vset.pattern.permute.xlu0 0
      %1577 = vperm.xlu0 %1576, %v1543
      %v1578 = vpop.permute.xlu0 %1577
      %1581 = vset.pattern.permute.xlu0 0
      %1582 = vperm.xlu0 %1581, %v1544
      %v1583 = vpop.permute.xlu0 %1582
      %v1585 = vmul.f32 %v1548, %v865
      %v1586 = vmul.f32 %v1548, %v866
      %v1587 = vmul.f32 %v1553, %v867
      %v1588 = vmul.f32 %v1553, %v868
      %v1589 = vmul.f32 %v1558, %v869
      %v1590 = vmul.f32 %v1558, %v870
      %v1591 = vmul.f32 %v1563, %v871
      %v1592 = vmul.f32 %v1563, %v872
      %v1593 = vmul.f32 %v1568, %v873
      %v1594 = vmul.f32 %v1568, %v874
      %v1595 = vmul.f32 %v1573, %v875
      %v1596 = vmul.f32 %v1573, %v876
      %v1597 = vmul.f32 %v1578, %v877
      %v1598 = vmul.f32 %v1578, %v878
      %v1599 = vmul.f32 %v1583, %v879
      %v1600 = vmul.f32 %v1583, %v880
      %1601 = vmatpush.msra.mxu0 0.0
      %1602 = vmatpush.msra.mxu0 0.0
      %1603 = vmatpush.msra.mxu0 0.0
      %1604 = vmatpush.msra.mxu0 0.0
      %1605 = vmatpush.msra.mxu0 0.0
      %1606 = vmatpush.msra.mxu0 0.0
      %1607 = vmatpush.msra.mxu0 0.0
      %1608 = vmatpush.msra.mxu0 0.0
      %1609 = vmatpush.msra.mxu0 %v1599
      %1610 = vmatpush.msra.mxu0 %v1597
      %1611 = vmatpush.msra.mxu0 %v1595
      %1612 = vmatpush.msra.mxu0 %v1593
      %1613 = vmatpush.msra.mxu0 %v1591
      %1614 = vmatpush.msra.mxu0 %v1589
      %1615 = vmatpush.msra.mxu0 %v1587
      %1616 = vmatpush.msra.mxu0 %v1585
      %1617 = vmatmul.f32.gmra.mxu0 %v1039
      %v1618 = vpop.f32.mrf.mxu0
      %v1619 = vadd.f32 0.0, %v1618
      %1620 = vdwg.mxu0
      %1621 = vmatpush.msra.mxu0 0.0
      %1622 = vmatpush.msra.mxu0 0.0
      %1623 = vmatpush.msra.mxu0 0.0
      %1624 = vmatpush.msra.mxu0 0.0
      %1625 = vmatpush.msra.mxu0 0.0
      %1626 = vmatpush.msra.mxu0 0.0
      %1627 = vmatpush.msra.mxu0 0.0
      %1628 = vmatpush.msra.mxu0 0.0
      %1629 = vmatpush.msra.mxu0 %v1600
      %1630 = vmatpush.msra.mxu0 %v1598
      %1631 = vmatpush.msra.mxu0 %v1596
      %1632 = vmatpush.msra.mxu0 %v1594
      %1633 = vmatpush.msra.mxu0 %v1592
      %1634 = vmatpush.msra.mxu0 %v1590
      %1635 = vmatpush.msra.mxu0 %v1588
      %1636 = vmatpush.msra.mxu0 %v1586
      %1637 = vmatmul.f32.gmra.mxu0 %v1039
      %v1638 = vpop.f32.mrf.mxu0
      %v1639 = vadd.f32 0.0, %v1638
      %1640 = vdwg.mxu0
      %v1641 = vadd.f32 %v1215, %v1619
      %v1642 = vadd.f32 %v1235, %v1639
      %v1643 = vsel %vm206, %v1641, -inf
      %v1644 = vrot.slane %v1643, 4
      %v1645 = vmax.f32 %v1643, %v1644
      %v1646 = vrot.slane %v1645, 2
      %v1647 = vmax.f32 %v1645, %v1646
      %v1648 = vrot.slane %v1647, 1
      %v1649 = vmax.f32 %v1647, %v1648
      %v1650 = vsel %vm217, %v1642, -inf
      %v1651 = vrot.slane %v1650, 4
      %v1652 = vmax.f32 %v1650, %v1651
      %v1653 = vrot.slane %v1652, 2
      %v1654 = vmax.f32 %v1652, %v1653
      %v1655 = vrot.slane %v1654, 1
      %v1656 = vmax.f32 %v1654, %v1655
      %v1657 = vsub.f32 %v1641, %v1649
      %v1658 = vsub.f32 %v1642, %v1656
      %v1659 = vmul.f32 %v1657, 1.442695
      %v1660 = vpow.pop %v1659
      %v1661 = vmul.f32 %v1658, 1.442695
      %v1662 = vpow.pop %v1661
      %v1663 = vsel %vm206, %v1660, 0.0
      %v1664 = vrot.slane %v1663, 4
      %v1665 = vadd.f32 %v1663, %v1664
      %v1666 = vrot.slane %v1665, 2
      %v1667 = vadd.f32 %v1665, %v1666
      %v1668 = vrot.slane %v1667, 1
      %v1669 = vadd.f32 %v1667, %v1668
      %v1670 = vsel %vm217, %v1662, 0.0
      %v1671 = vrot.slane %v1670, 4
      %v1672 = vadd.f32 %v1670, %v1671
      %v1673 = vrot.slane %v1672, 2
      %v1674 = vadd.f32 %v1672, %v1673
      %v1675 = vrot.slane %v1674, 1
      %v1676 = vadd.f32 %v1674, %v1675
      %v1677 = vrcp.pop %v1669
      %v1678 = vmul.f32 %v1669, %v1677
      %v1679 = vsub.f32 1.0, %v1678
      %v1680 = vmul.f32 %v1677, %v1679
      %v1681 = vadd.f32 %v1677, %v1680
      %vm1682 = vweird.f32 %v1669
      %vm1683 = vweird.f32 %v1677
      %vm1684 = vmor %vm1682, %vm1683
      %v1685 = vsel %vm1684, %v1677, %v1681
      %v1686 = vand.u32 2147483647, %v1669
      %vm1687 = vcmp.eq.f32.partialorder %v1686, 8.507059e+37
      %v1688 = vand.u32 %v1669, 2147483648
      %v1689 = vor.u32 1.1754944e-38, %v1688
      %v1690 = vsel %vm1687, %v1689, %v1685
      %v1691 = vmul.f32 %v1660, %v1690
      %v1692 = vrcp.pop %v1676
      %v1693 = vmul.f32 %v1676, %v1692
      %v1694 = vsub.f32 1.0, %v1693
      %v1695 = vmul.f32 %v1692, %v1694
      %v1696 = vadd.f32 %v1692, %v1695
      %vm1697 = vweird.f32 %v1676
      %vm1698 = vweird.f32 %v1692
      %vm1699 = vmor %vm1697, %vm1698
      %v1700 = vsel %vm1699, %v1692, %v1696
      %v1701 = vand.u32 2147483647, %v1676
      %vm1702 = vcmp.eq.f32.partialorder %v1701, 8.507059e+37
      %v1703 = vand.u32 %v1676, 2147483648
      %v1704 = vor.u32 1.1754944e-38, %v1703
      %v1705 = vsel %vm1702, %v1704, %v1700
      %v1706 = vmul.f32 %v1662, %v1705
      %v1708 = vsel %vm206, %v1691, 0
      %v1711 = vsel %vm206, %v1706, 0
      %1713 = vmatpush.msra.mxu0 0.0
      %1714 = vmatpush.msra.mxu0 0.0
      %1715 = vmatpush.msra.mxu0 0.0
      %1716 = vmatpush.msra.mxu0 0.0
      %1717 = vmatpush.msra.mxu0 0.0
      %1718 = vmatpush.msra.mxu0 0.0
      %1719 = vmatpush.msra.mxu0 0.0
      %1720 = vmatpush.msra.mxu0 0.0
      %1721 = vmatpush.msra.mxu0 0.0
      %1722 = vmatpush.msra.mxu0 0.0
      %1723 = vmatpush.msra.mxu0 0.0
      %1724 = vmatpush.msra.mxu0 0.0
      %1725 = vmatpush.msra.mxu0 0.0
      %1726 = vmatpush.msra.mxu0 0.0
      %1727 = vmatpush.msra.mxu0 0.0
      %1728 = vmatpush.msra.mxu0 %v1708
      %1729 = vmatmul.f32.gmra.mxu0 %v914
      %v1730 = vpop.f32.mrf.mxu0
      %v1731 = vadd.f32 0.0, %v1730
      %1732 = vmatmul.f32.gmra.mxu0 %v917
      %v1733 = vpop.f32.mrf.mxu0
      %v1734 = vadd.f32 0.0, %v1733
      %1735 = vmatmul.f32.gmra.mxu0 %v920
      %v1736 = vpop.f32.mrf.mxu0
      %v1737 = vadd.f32 0.0, %v1736
      %1738 = vmatmul.f32.gmra.mxu0 %v923
      %v1739 = vpop.f32.mrf.mxu0
      %v1740 = vadd.f32 0.0, %v1739
      %1741 = vmatmul.f32.gmra.mxu0 %v926
      %v1742 = vpop.f32.mrf.mxu0
      %v1743 = vadd.f32 0.0, %v1742
      %1744 = vmatmul.f32.gmra.mxu0 %v929
      %v1745 = vpop.f32.mrf.mxu0
      %v1746 = vadd.f32 0.0, %v1745
      %1747 = vmatmul.f32.gmra.mxu0 %v932
      %v1748 = vpop.f32.mrf.mxu0
      %v1749 = vadd.f32 0.0, %v1748
      %1750 = vmatmul.f32.gmra.mxu0 %v935
      %v1751 = vpop.f32.mrf.mxu0
      %v1752 = vadd.f32 0.0, %v1751
      %1753 = vdwg.mxu0
      %1754 = vmatpush.msra.mxu0 0.0
      %1755 = vmatpush.msra.mxu0 0.0
      %1756 = vmatpush.msra.mxu0 0.0
      %1757 = vmatpush.msra.mxu0 0.0
      %1758 = vmatpush.msra.mxu0 0.0
      %1759 = vmatpush.msra.mxu0 0.0
      %1760 = vmatpush.msra.mxu0 0.0
      %1761 = vmatpush.msra.mxu0 0.0
      %1762 = vmatpush.msra.mxu0 0.0
      %1763 = vmatpush.msra.mxu0 0.0
      %1764 = vmatpush.msra.mxu0 0.0
      %1765 = vmatpush.msra.mxu0 0.0
      %1766 = vmatpush.msra.mxu0 0.0
      %1767 = vmatpush.msra.mxu0 0.0
      %1768 = vmatpush.msra.mxu0 0.0
      %1769 = vmatpush.msra.mxu0 %v1711
      %1770 = vmatmul.f32.gmra.mxu0 %v914
      %v1771 = vpop.f32.mrf.mxu0
      %v1772 = vadd.f32 0.0, %v1771
      %1773 = vmatmul.f32.gmra.mxu0 %v917
      %v1774 = vpop.f32.mrf.mxu0
      %v1775 = vadd.f32 0.0, %v1774
      %1776 = vmatmul.f32.gmra.mxu0 %v920
      %v1777 = vpop.f32.mrf.mxu0
      %v1778 = vadd.f32 0.0, %v1777
      %1779 = vmatmul.f32.gmra.mxu0 %v923
      %v1780 = vpop.f32.mrf.mxu0
      %v1781 = vadd.f32 0.0, %v1780
      %1782 = vmatmul.f32.gmra.mxu0 %v926
      %v1783 = vpop.f32.mrf.mxu0
      %v1784 = vadd.f32 0.0, %v1783
      %1785 = vmatmul.f32.gmra.mxu0 %v929
      %v1786 = vpop.f32.mrf.mxu0
      %v1787 = vadd.f32 0.0, %v1786
      %1788 = vmatmul.f32.gmra.mxu0 %v932
      %v1789 = vpop.f32.mrf.mxu0
      %v1790 = vadd.f32 0.0, %v1789
      %1791 = vmatmul.f32.gmra.mxu0 %v935
      %v1792 = vpop.f32.mrf.mxu0
      %v1793 = vadd.f32 0.0, %v1792
      %1794 = vdwg.mxu0
      %v1795 = vmul.f32 %v1731, %v865
      %v1796 = vmul.f32 %v1772, %v866
      %v1797 = vmul.f32 %v1734, %v867
      %v1798 = vmul.f32 %v1775, %v868
      %v1799 = vmul.f32 %v1737, %v869
      %v1800 = vmul.f32 %v1778, %v870
      %v1801 = vmul.f32 %v1740, %v871
      %v1802 = vmul.f32 %v1781, %v872
      %v1803 = vmul.f32 %v1743, %v873
      %v1804 = vmul.f32 %v1784, %v874
      %v1805 = vmul.f32 %v1746, %v875
      %v1806 = vmul.f32 %v1787, %v876
      %v1807 = vmul.f32 %v1749, %v877
      %v1808 = vmul.f32 %v1790, %v878
      %v1809 = vmul.f32 %v1752, %v879
      %v1810 = vmul.f32 %v1793, %v880
      %v1811 = vsel %vm215, %v1796, 0.0
      %v1812 = vadd.f32 %v1795, %v1811
      %1813 = vadd.xlane.f32.xlu0 %v1812
      %v1814 = vpop.xlane.xlu0 %1813
      %v1815 = vsel %vm215, %v1798, 0.0
      %v1816 = vadd.f32 %v1797, %v1815
      %1817 = vadd.xlane.f32.xlu0 %v1816
      %v1818 = vpop.xlane.xlu0 %1817
      %v1819 = vsel %vm215, %v1800, 0.0
      %v1820 = vadd.f32 %v1799, %v1819
      %1821 = vadd.xlane.f32.xlu0 %v1820
      %v1822 = vpop.xlane.xlu0 %1821
      %v1823 = vsel %vm215, %v1802, 0.0
      %v1824 = vadd.f32 %v1801, %v1823
      %1825 = vadd.xlane.f32.xlu0 %v1824
      %v1826 = vpop.xlane.xlu0 %1825
      %v1827 = vsel %vm215, %v1804, 0.0
      %v1828 = vadd.f32 %v1803, %v1827
      %1829 = vadd.xlane.f32.xlu0 %v1828
      %v1830 = vpop.xlane.xlu0 %1829
      %v1831 = vsel %vm215, %v1806, 0.0
      %v1832 = vadd.f32 %v1805, %v1831
      %1833 = vadd.xlane.f32.xlu0 %v1832
      %v1834 = vpop.xlane.xlu0 %1833
      %v1835 = vsel %vm215, %v1808, 0.0
      %v1836 = vadd.f32 %v1807, %v1835
      %1837 = vadd.xlane.f32.xlu0 %v1836
      %v1838 = vpop.xlane.xlu0 %1837
      %v1839 = vsel %vm215, %v1810, 0.0
      %v1840 = vadd.f32 %v1809, %v1839
      %1841 = vadd.xlane.f32.xlu0 %v1840
      %v1842 = vpop.xlane.xlu0 %1841
      %v1843 = vmul.f32 %v1814, %v1814
      %v1844 = vmul.f32 %v1818, %v1818
      %v1845 = vmul.f32 %v1822, %v1822
      %v1846 = vmul.f32 %v1826, %v1826
      %v1847 = vmul.f32 %v1830, %v1830
      %v1848 = vmul.f32 %v1834, %v1834
      %v1849 = vmul.f32 %v1838, %v1838
      %v1850 = vmul.f32 %v1842, %v1842
      %1851 = vmatpush.msra.mxu0 0.0
      %1852 = vmatpush.msra.mxu0 0.0
      %1853 = vmatpush.msra.mxu0 0.0
      %1854 = vmatpush.msra.mxu0 0.0
      %1855 = vmatpush.msra.mxu0 0.0
      %1856 = vmatpush.msra.mxu0 0.0
      %1857 = vmatpush.msra.mxu0 0.0
      %1858 = vmatpush.msra.mxu0 0.0
      %1859 = vmatpush.msra.mxu0 %v1850
      %1860 = vmatpush.msra.mxu0 %v1849
      %1861 = vmatpush.msra.mxu0 %v1848
      %1862 = vmatpush.msra.mxu0 %v1847
      %1863 = vmatpush.msra.mxu0 %v1846
      %1864 = vmatpush.msra.mxu0 %v1845
      %1865 = vmatpush.msra.mxu0 %v1844
      %1866 = vmatpush.msra.mxu0 %v1843
      %1867 = vmatmul.f32.gmra.mxu0 %v1039
      %v1868 = vpop.f32.mrf.mxu0
      %v1869 = vadd.f32 0.0, %v1868
      %1870 = vdwg.mxu0
      %v1871 = vadd.f32 %v1869, 1e-06
      %v1872 = vrsqrt.pop %v1871
      %v1873 = vmul.f32 %v1872, %v1871
      %v1874 = vmul.f32 %v1873, %v1872
      %v1875 = vmul.f32 0.5, %v1874
      %v1876 = vsub.f32 1.5, %v1875
      %v1877 = vmul.f32 %v1872, %v1876
      %vm1878 = vweird.f32 %v1871
      %vm1879 = vweird.f32 %v1872
      %vm1880 = vmor %vm1878, %vm1879
      %v1881 = vsel %vm1880, %v1872, %v1877
      %v1882 = vmul.f32 %v1869, %v1881
      %v1883 = vadd.f32 %v1869, 1.0
      %v1884 = vrcp.pop %v1883
      %v1885 = vmul.f32 %v1883, %v1884
      %v1886 = vsub.f32 1.0, %v1885
      %v1887 = vmul.f32 %v1884, %v1886
      %v1888 = vadd.f32 %v1884, %v1887
      %vm1889 = vweird.f32 %v1883
      %vm1890 = vweird.f32 %v1884
      %vm1891 = vmor %vm1889, %vm1890
      %v1892 = vsel %vm1891, %v1884, %v1888
      %v1893 = vand.u32 2147483647, %v1883
      %vm1894 = vcmp.eq.f32.partialorder %v1893, 8.507059e+37
      %v1895 = vand.u32 %v1883, 2147483648
      %v1896 = vor.u32 1.1754944e-38, %v1895
      %v1897 = vsel %vm1894, %v1896, %v1892
      %v1898 = vmul.f32 %v1882, %v1897
      %v1900 = vsel %vm206, %v1898, 0
      %1902 = vmatpush.msra.mxu0 0.0
      %1903 = vmatpush.msra.mxu0 0.0
      %1904 = vmatpush.msra.mxu0 0.0
      %1905 = vmatpush.msra.mxu0 0.0
      %1906 = vmatpush.msra.mxu0 0.0
      %1907 = vmatpush.msra.mxu0 0.0
      %1908 = vmatpush.msra.mxu0 0.0
      %1909 = vmatpush.msra.mxu0 0.0
      %1910 = vmatpush.msra.mxu0 0.0
      %1911 = vmatpush.msra.mxu0 0.0
      %1912 = vmatpush.msra.mxu0 0.0
      %1913 = vmatpush.msra.mxu0 0.0
      %1914 = vmatpush.msra.mxu0 0.0
      %1915 = vmatpush.msra.mxu0 0.0
      %1916 = vmatpush.msra.mxu0 0.0
      %1917 = vmatpush.msra.mxu0 %v1900
      %1918 = vmatmul.f32.gmra.mxu0 %v914
      %v1919 = vpop.f32.mrf.mxu0
      %v1920 = vadd.f32 0.0, %v1919
      %1921 = vmatmul.f32.gmra.mxu0 %v917
      %v1922 = vpop.f32.mrf.mxu0
      %v1923 = vadd.f32 0.0, %v1922
      %1924 = vmatmul.f32.gmra.mxu0 %v920
      %v1925 = vpop.f32.mrf.mxu0
      %v1926 = vadd.f32 0.0, %v1925
      %1927 = vmatmul.f32.gmra.mxu0 %v923
      %v1928 = vpop.f32.mrf.mxu0
      %v1929 = vadd.f32 0.0, %v1928
      %1930 = vmatmul.f32.gmra.mxu0 %v926
      %v1931 = vpop.f32.mrf.mxu0
      %v1932 = vadd.f32 0.0, %v1931
      %1933 = vmatmul.f32.gmra.mxu0 %v929
      %v1934 = vpop.f32.mrf.mxu0
      %v1935 = vadd.f32 0.0, %v1934
      %1936 = vmatmul.f32.gmra.mxu0 %v932
      %v1937 = vpop.f32.mrf.mxu0
      %v1938 = vadd.f32 0.0, %v1937
      %1939 = vmatmul.f32.gmra.mxu0 %v935
      %v1940 = vpop.f32.mrf.mxu0
      %v1941 = vadd.f32 0.0, %v1940
      %1942 = vdwg.mxu0
      %v1943 = vmul.f32 %v1814, %v1920
      %v1944 = vmul.f32 %v1818, %v1923
      %v1945 = vmul.f32 %v1822, %v1926
      %v1946 = vmul.f32 %v1826, %v1929
      %v1947 = vmul.f32 %v1830, %v1932
      %v1948 = vmul.f32 %v1834, %v1935
      %v1949 = vmul.f32 %v1838, %v1938
      %v1950 = vmul.f32 %v1842, %v1941
      %vm1951 = vcmask 7168
      %1952 = vst.msk [vmem:[%s197] sm:$0xff] %vm1951, %v1943
      %1953 = vst.msk [vmem:[%s197 + $0x8] sm:$0xff] %vm1951, %v1944
      %1954 = vst.msk [vmem:[%s197 + $0x10] sm:$0xff] %vm1951, %v1945
      %1955 = vst.msk [vmem:[%s197 + $0x18] sm:$0xff] %vm1951, %v1946
      %1956 = vst.msk [vmem:[%s197 + $0x20] sm:$0xff] %vm1951, %v1947
      %1957 = vst.msk [vmem:[%s197 + $0x28] sm:$0xff] %vm1951, %v1948
      %1958 = vst.msk [vmem:[%s197 + $0x30] sm:$0xff] %vm1951, %v1949
      %1959 = vst.msk [vmem:[%s197 + $0x38] sm:$0xff] %vm1951, %v1950
      %p1960 = scmp.lt.s32.totalorder %s15, 1
      %s1961 = scalar_select %p1960, %s15, 1
      %s1962 = smul.addr %s1961, 8
      %s1963 = smul.addr %s1962, 8
      %s1964 = scalar_lea.vmem %s4, %s1963
      // Predicated region
      $region37: #{capsule_network_forward.9} parent=35 // pred_check
        %p1965 = pneg %p122
      $region38: #{capsule_network_forward.9} parent=35 // pred_check_branch
        %1967 = sbr.rel (%p1965) target = $region40
      $region39: #{capsule_network_forward.9} parent=35 // pred_region
        _
      $region40: #{capsule_network_forward.9} parent=35 // pred_fallthru
        _
    $region36: #{capsule_network_forward.9} parent=5 // pred_fallthru
      _
    %p1968 = scmp.le.s32.totalorder 2, %s10
    // Predicated region
    $region41: #{capsule_network_forward.9} parent=5 // pred_check
      %p1969 = pneg %p1968
    $region42: #{capsule_network_forward.9} parent=5 // pred_check_branch
      %1971 = sbr.rel (%p1969) target = $region44
    $region43: #{capsule_network_forward.9} parent=5 // pred_region
      %s1972 = ssub.s32 %s10, 2
      // Predicated region
      $region45: #{capsule_network_forward.9} parent=43 // pred_check
        %p1973 = pneg %p128
      $region46: #{capsule_network_forward.9} parent=43 // pred_check_branch
        %1975 = sbr.rel (%p1973) target = $region48
      $region47: #{capsule_network_forward.9} parent=43 // pred_region
        %p1976 = scmp.lt.s32.totalorder %s16, 1
        %s1977 = scalar_select %p1976, %s16, 1
        %s1978 = smul.addr %s1977, 8
        %s1979 = smul.addr %s1978, 8
        %s1980 = scalar_lea.vmem %s4, %s1979
      $region48: #{capsule_network_forward.9} parent=43 // pred_fallthru
        _
    $region44: #{capsule_network_forward.9} parent=5 // pred_fallthru
      _
  $region6: #{capsule_network_forward.9} parent=0 // loop_footer
    %s14 = sadd.s32 1, %s10
  $region7: #{capsule_network_forward.9} parent=0 // loop_footer_branch
    %9 = sbr.rel target = $region3
  $region8: #{capsule_network_forward.9} parent=0 // loop_exit
    _

</llo_original>
